<compile_context>
chip_gen: v6e
topology: v6e:2x2x1
jax: 0.10.0
libtpu: 0.0.40
codegen_flags: <defaults>
</compile_context>

<pallas_src>
import functools

import jax
import jax.numpy as jnp
from jax.experimental import pallas as pl
from jax.experimental.pallas import tpu as pltpu

ARCHS = {
    'resnet18':  ('basic',      [2, 2, 2, 2]),
    'resnet34':  ('basic',      [3, 4, 6, 3]),
    'resnet50':  ('bottleneck', [3, 4, 6, 3]),
    'resnet101': ('bottleneck', [3, 4, 23, 3]),
    'resnet152': ('bottleneck', [3, 8, 36, 3]),
}

_LANE = 128


def _round_up(x, m):
    return (x + m - 1) // m * m


def _cpad(c):
    return _round_up(c, _LANE)


# ----------------------------- Pallas kernels -----------------------------

def _conv_mm_kernel(*refs, relu, has_res):
    """(tm, tk) @ (tk, tn) MXU matmul with K-grid accumulation and a fused
    epilogue: BN affine (+ residual add) (+ ReLU)."""
    if has_res:
        x_ref, w_ref, scale_ref, bias_ref, res_ref, o_ref, acc_ref = refs
    else:
        x_ref, w_ref, scale_ref, bias_ref, o_ref, acc_ref = refs
        res_ref = None

    k = pl.program_id(2)

    @pl.when(k == 0)
    def _():
        acc_ref[...] = jnp.zeros_like(acc_ref)

    acc_ref[...] += jnp.dot(x_ref[...], w_ref[...],
                            preferred_element_type=jnp.float32)

    @pl.when(k == pl.num_programs(2) - 1)
    def _():
        y = acc_ref[...] * scale_ref[...] + bias_ref[...]
        if has_res:
            y = y + res_ref[...].astype(jnp.float32)
        if relu:
            y = jnp.maximum(y, 0.0)
        o_ref[...] = y.astype(o_ref.dtype)


def _maxpool_kernel(x_ref, o_ref):
    # x: (9, tm, C) window planes -> max over the leading 3x3-window axis.
    o_ref[...] = jnp.max(x_ref[...], axis=0)


def _global_avgpool_kernel(x_ref, o_ref):
    # x: (1, H*W, C) -> (1, 1, C) mean over spatial == AdaptiveAvgPool2d((1,1)).
    o_ref[...] = jnp.mean(x_ref[...].astype(jnp.float32), axis=1, keepdims=True)


# ----------------------------- wrappers (glue) -----------------------------

def _im2col(x, kh, kw, stride, padding):
    """NHWC patch extraction (XLA-side data movement; matmul is in-kernel)."""
    n, h, w, c = x.shape
    xp = jnp.pad(x, ((0, 0), (padding, padding), (padding, padding), (0, 0)))
    ho = (h + 2 * padding - kh) // stride + 1
    wo = (w + 2 * padding - kw) // stride + 1
    cols = []
    for i in range(kh):
        for j in range(kw):
            cols.append(xp[:, i:i + (ho - 1) * stride + 1:stride,
                            j:j + (wo - 1) * stride + 1:stride, :])
    cols = jnp.concatenate(cols, axis=-1)  # (N, Ho, Wo, kh*kw*C)
    return cols, (n, ho, wo)


def _conv_tiles(m, k, n):
    """Tile sizes honoring the (8,128) rule, sized well under 16 MiB VMEM so a
    single tile set works on v5e (16 MiB scoped), v6e (32 MiB) and v7x (64 MiB
    physical, 2 TCs fed via the parallel M/N axes)."""
    if m >= 1024:
        tm = 512
    elif m >= 512:
        tm = 256
    else:
        tm = _round_up(m, 8)
    m_pad = _round_up(m, tm)

    if k % _LANE == 0:
        tk = _LANE
        for c in range(min(k, 512) // _LANE, 0, -1):
            if k % (c * _LANE) == 0:
                tk = c * _LANE
                break
        k_pad = k
    else:
        tk = min(512, _round_up(k, _LANE))
        k_pad = _round_up(k, tk)

    tn = 256 if n % 256 == 0 else _LANE
    return tm, tk, tn, m_pad, k_pad


def conv_bn(x, p, *, stride, padding, relu, residual=None):
    """Conv2d(bias=False) + folded BatchNorm (+ fused residual add) (+ ReLU).

    x, residual: NHWC bf16 with padded channels.  Returns NHWC bf16 (padded
    channels, exactly zero in the pad region)."""
    w = p['w']                                  # (kh, kw, Cin_pad, Cout_pad) bf16
    kh, kw, cinp, coutp = w.shape
    n = x.shape[0]

    if kh == 1 and kw == 1:
        xs = x[:, ::stride, ::stride, :] if stride != 1 else x
        _, ho, wo, _ = xs.shape
        cols = xs.reshape(n * ho * wo, cinp)          # no im2col expansion
    else:
        cols, (_, ho, wo) = _im2col(x, kh, kw, stride, padding)
        cols = cols.reshape(n * ho * wo, kh * kw * cinp)

    m = n * ho * wo
    k = cols.shape[1]
    tm, tk, tn, m_pad, k_pad = _conv_tiles(m, k, coutp)

    wm = w.reshape(k, coutp)
    if k_pad != k:
        cols = jnp.pad(cols, ((0, 0), (0, k_pad - k)))
        wm = jnp.pad(wm, ((0, k_pad - k), (0, 0)))
    if m_pad != m:
        cols = jnp.pad(cols, ((0, m_pad - m), (0, 0)))

    in_arrays = [cols, wm, p['scale'], p['bias']]
    in_specs = [
        pl.BlockSpec((tm, tk), lambda i, j, kk: (i, kk)),
        pl.BlockSpec((tk, tn), lambda i, j, kk: (kk, j)),
        pl.BlockSpec((1, tn), lambda i, j, kk: (0, j)),
        pl.BlockSpec((1, tn), lambda i, j, kk: (0, j)),
    ]
    has_res = residual is not None
    if has_res:
        res = residual.reshape(m, coutp)
        if m_pad != m:
            res = jnp.pad(res, ((0, m_pad - m), (0, 0)))
        in_arrays.append(res)
        in_specs.append(pl.BlockSpec((tm, tn), lambda i, j, kk: (i, j)))

    bytes_accessed = 2 * (m_pad * k_pad + k_pad * coutp
                          + m_pad * coutp * (2 if has_res else 1)) + 8 * coutp
    cost = pl.CostEstimate(flops=2 * m_pad * k_pad * coutp,
                           transcendentals=0,
                           bytes_accessed=int(bytes_accessed))

    out = pl.pallas_call(
        functools.partial(_conv_mm_kernel, relu=relu, has_res=has_res),
        out_shape=jax.ShapeDtypeStruct((m_pad, coutp), x.dtype),
        grid=(m_pad // tm, coutp // tn, k_pad // tk),
        in_specs=in_specs,
        out_specs=pl.BlockSpec((tm, tn), lambda i, j, kk: (i, j)),
        scratch_shapes=[pltpu.VMEM((tm, tn), jnp.float32)],
        compiler_params=pltpu.CompilerParams(
            dimension_semantics=("parallel", "parallel", "arbitrary")),
        cost_estimate=cost,
    )(*in_arrays)
    return out[:m].reshape(n, ho, wo, coutp)


def maxpool_3x3_s2(x):
    """MaxPool2d(kernel_size=3, stride=2, padding=1) in NHWC (padded channels)."""
    n, h, w, c = x.shape
    neg = float(jnp.finfo(x.dtype).min)
    xp = jnp.pad(x, ((0, 0), (1, 1), (1, 1), (0, 0)), constant_values=neg)
    ho = (h + 2 - 3) // 2 + 1
    wo = (w + 2 - 3) // 2 + 1
    pats = [xp[:, di:di + 2 * (ho - 1) + 1:2, dj:dj + 2 * (wo - 1) + 1:2, :]
            for di in range(3) for dj in range(3)]
    pats = jnp.stack(pats, axis=0).reshape(9, n * ho * wo, c)  # window axis leading

    m = n * ho * wo
    tm = 512 if m >= 512 else _round_up(m, 8)
    m_pad = _round_up(m, tm)
    if m_pad != m:
        pats = jnp.pad(pats, ((0, 0), (0, m_pad - m), (0, 0)), constant_values=neg)

    out = pl.pallas_call(
        _maxpool_kernel,
        out_shape=jax.ShapeDtypeStruct((m_pad, c), x.dtype),
        grid=(m_pad // tm,),
        in_specs=[pl.BlockSpec((9, tm, c), lambda i: (0, i, 0))],
        out_specs=pl.BlockSpec((tm, c), lambda i: (i, 0)),
        compiler_params=pltpu.CompilerParams(dimension_semantics=("parallel",)),
    )(pats)
    return out[:m].reshape(n, ho, wo, c)


def global_avg_pool(x):
    """AdaptiveAvgPool2d((1,1)) + view(N, -1), accumulated in f32."""
    n, h, w, c = x.shape
    xr = x.reshape(n, h * w, c)
    out = pl.pallas_call(
        _global_avgpool_kernel,
        out_shape=jax.ShapeDtypeStruct((n, 1, c), jnp.float32),
        grid=(n,),
        in_specs=[pl.BlockSpec((1, h * w, c), lambda i: (i, 0, 0))],
        out_specs=pl.BlockSpec((1, 1, c), lambda i: (i, 0, 0)),
        compiler_params=pltpu.CompilerParams(dimension_semantics=("parallel",)),
    )(xr)
    return out.reshape(n, c)


# ----------------------------- parameters -----------------------------

def _conv_bn_params(key, kh, kw, cin, cout, cin_pad, cout_pad):
    kw_, kb, kg, km, kv = jax.random.split(key, 5)
    fan_in = kh * kw * cin
    w = jax.random.normal(kw_, (kh, kw, cin, cout), jnp.float32) * jnp.sqrt(1.0 / fan_in)
    gamma = 1.0 + 0.1 * jax.random.normal(kg, (cout,), jnp.float32)
    beta = 0.1 * jax.random.normal(kb, (cout,), jnp.float32)
    running_mean = 0.1 * jax.random.normal(km, (cout,), jnp.float32)
    running_var = 0.5 + jax.random.uniform(kv, (cout,), jnp.float32)
    # fold inference-mode BN into an affine transform (f32)
    scale = gamma / jnp.sqrt(running_var + 1e-5)
    bias = beta - running_mean * scale
    # bf16 weights, zero-padded channels (padded outputs stay exactly zero)
    w = jnp.pad(w.astype(jnp.bfloat16),
                ((0, 0), (0, 0), (0, cin_pad - cin), (0, cout_pad - cout)))
    scale = jnp.pad(scale, (0, cout_pad - cout)).reshape(1, cout_pad)
    bias = jnp.pad(bias, (0, cout_pad - cout)).reshape(1, cout_pad)
    return {'w': w, 'scale': scale, 'bias': bias}


# ----------------------------- EncoderCNN -----------------------------

class EncoderCNN:
    """Pallas-TPU port of the PyTorch EncoderCNN (ResNet backbone w/o avgpool+fc,
    followed by AdaptiveAvgPool2d((1,1)) + flatten when features='pool')."""

    def __init__(self, resnet_arch='resnet101', base_width=8, in_channels=3, seed=0):
        if resnet_arch not in ARCHS:
            raise ValueError(
                f'Unsupported resnet architecture: {resnet_arch}. '
                f'Supported architectures: {list(ARCHS.keys())}')
        self.block_type, self.layers = ARCHS[resnet_arch]
        self.expansion = 4 if self.block_type == 'bottleneck' else 1

        base_key = jax.random.PRNGKey(seed)
        counter = [0]

        def nk():
            counter[0] += 1
            return jax.random.fold_in(base_key, counter[0])

        params = {'stem': _conv_bn_params(nk(), 7, 7, in_channels, base_width,
                                          in_channels, _cpad(base_width))}
        cfg = []
        inplanes = base_width
        for s, (nblocks, stride0) in enumerate(zip(self.layers, (1, 2, 2, 2))):
            planes = base_width * (2 ** s)
            stage_cfg = []
            for b in range(nblocks):
                stride = stride0 if b == 0 else 1
                name = f'layer{s + 1}.{b}'
                needs_ds = (stride != 1) or (inplanes != planes * self.expansion)
                if self.block_type == 'bottleneck':
                    params[name + '.conv1'] = _conv_bn_params(
                        nk(), 1, 1, inplanes, planes, _cpad(inplanes), _cpad(planes))
                    params[name + '.conv2'] = _conv_bn_params(
                        nk(), 3, 3, planes, planes, _cpad(planes), _cpad(planes))
                    params[name + '.conv3'] = _conv_bn_params(
                        nk(), 1, 1, planes, planes * 4, _cpad(planes), _cpad(planes * 4))
                else:
                    params[name + '.conv1'] = _conv_bn_params(
                        nk(), 3, 3, inplanes, planes, _cpad(inplanes), _cpad(planes))
                    params[name + '.conv2'] = _conv_bn_params(
                        nk(), 3, 3, planes, planes, _cpad(planes), _cpad(planes))
                if needs_ds:
                    params[name + '.downsample'] = _conv_bn_params(
                        nk(), 1, 1, inplanes, planes * self.expansion,
                        _cpad(inplanes), _cpad(planes * self.expansion))
                stage_cfg.append((name, stride, needs_ds))
                inplanes = planes * self.expansion
            cfg.append(stage_cfg)

        self.params = params
        self.cfg = cfg
        self.out_channels = inplanes
        self._fwd_pool = jax.jit(functools.partial(self._forward, features='pool'))
        self._fwd_raw = jax.jit(functools.partial(self._forward, features='raw'))

    def _block(self, params, name, stride, needs_ds, x):
        if needs_ds:
            identity = conv_bn(x, params[name + '.downsample'],
                               stride=stride, padding=0, relu=False)
        else:
            identity = x
        if self.block_type == 'bottleneck':
            out = conv_bn(x, params[name + '.conv1'], stride=1, padding=0, relu=True)
            out = conv_bn(out, params[name + '.conv2'], stride=stride, padding=1, relu=True)
            # residual add + ReLU fused into the last conv's epilogue
            out = conv_bn(out, params[name + '.conv3'], stride=1, padding=0,
                          relu=True, residual=identity)
        else:
            out = conv_bn(x, params[name + '.conv1'], stride=stride, padding=1, relu=True)
            out = conv_bn(out, params[name + '.conv2'], stride=1, padding=1,
                          relu=True, residual=identity)
        return out

    def _forward(self, params, images, *, features):
        # images: NCHW (PyTorch) -> NHWC bf16 for the kernels.
        x = jnp.transpose(images, (0, 2, 3, 1)).astype(jnp.bfloat16)
        x = conv_bn(x, params['stem'], stride=2, padding=3, relu=True)
        x = maxpool_3x3_s2(x)
        for stage_cfg in self.cfg:
            for name, stride, needs_ds in stage_cfg:
                x = self._block(params, name, stride, needs_ds, x)
        if features == 'pool':
            pooled = global_avg_pool(x)                    # (N, C_pad) f32
            return pooled[:, :self.out_channels]           # == out.view(N, -1)
        x = x[..., :self.out_channels].astype(jnp.float32)
        return jnp.transpose(x, (0, 3, 1, 2))              # NCHW feature map

    def __call__(self, images, features='pool'):
        if features == 'pool':
            return self._fwd_pool(self.params, images)
        return self._fwd_raw(self.params, images)


# ----------------------------- demo -----------------------------

if __name__ == "__main__":
    key = jax.random.PRNGKey(0)
    # NCHW images (PyTorch convention); small spatial/channel sizes for the demo.
    images = jax.random.normal(key, (2, 3, 32, 32), dtype=jnp.float32)

    enc = EncoderCNN(resnet_arch='resnet101', base_width=8, in_channels=3, seed=0)
    feats = enc(images, features='pool')
    feats = jax.block_until_ready(feats)

    assert feats.shape == (2, enc.out_channels), feats.shape
    assert bool(jnp.all(jnp.isfinite(feats)))
    print("KERNEL_OK")
</pallas_src>

<mosaic_0001>
module attributes {stable_mosaic.version = 11 : i64} {
  func.func @_conv_mm_kernel(%arg0: i32, %arg1: i32, %arg2: i32, %arg3: memref<256x256xbf16, #tpu.memory_space<vmem>>, %arg4: memref<256x128xbf16, #tpu.memory_space<vmem>>, %arg5: memref<1x128xf32, #tpu.memory_space<vmem>>, %arg6: memref<1x128xf32, #tpu.memory_space<vmem>>, %arg7: memref<256x128xbf16, #tpu.memory_space<vmem>>, %arg8: memref<256x128xf32, #tpu.memory_space<vmem>>) attributes {dimension_semantics = [#tpu.dimension_semantics<parallel>, #tpu.dimension_semantics<parallel>, #tpu.dimension_semantics<arbitrary>], iteration_bounds = array<i64: 2, 1, 1>, scalar_prefetch = 0 : i64, scratch_operands = 1 : i64, tpu.core_type = #tpu.core_type<tc>, window_params = [{transform_indices = @transform_0, window_bounds = array<i64: 256, 256>}, {transform_indices = @transform_1, window_bounds = array<i64: 256, 128>}, {transform_indices = @transform_2, window_bounds = array<i64: 1, 128>}, {transform_indices = @transform_3, window_bounds = array<i64: 1, 128>}, {transform_indices = @transform_4, window_bounds = array<i64: 256, 128>}]} {
    %c0_i32 = arith.constant 0 : i32
    %0 = arith.cmpi eq, %arg2, %c0_i32 : i32
    %1 = arith.extui %0 : i1 to i32
    %c0_i32_0 = arith.constant 0 : i32
    %2 = arith.cmpi ne, %1, %c0_i32_0 : i32
    scf.if %2 {
      %cst_10 = arith.constant 0.000000e+00 : f32
      %12 = vector.broadcast %cst_10 : f32 to vector<256x128xf32>
      %c0_11 = arith.constant 0 : index
      %c0_12 = arith.constant 0 : index
      %13 = vector.load %arg8[%c0_11, %c0_12] : memref<256x128xf32, #tpu.memory_space<vmem>>, vector<256x128xf32>
      tpu.vector_store %arg8[%c0_11, %c0_12], %12 {strides = array<i32>} : memref<256x128xf32, #tpu.memory_space<vmem>>, vector<256x128xf32>,
    } else {
    }
    %c0 = arith.constant 0 : index
    %c0_1 = arith.constant 0 : index
    %3 = vector.load %arg8[%c0, %c0_1] : memref<256x128xf32, #tpu.memory_space<vmem>>, vector<256x128xf32>
    %c0_2 = arith.constant 0 : index
    %c0_3 = arith.constant 0 : index
    %4 = vector.load %arg3[%c0_2, %c0_3] : memref<256x256xbf16, #tpu.memory_space<vmem>>, vector<256x256xbf16>
    %c0_4 = arith.constant 0 : index
    %c0_5 = arith.constant 0 : index
    %5 = vector.load %arg4[%c0_4, %c0_5] : memref<256x128xbf16, #tpu.memory_space<vmem>>, vector<256x128xbf16>
    %cst = arith.constant dense<0.000000e+00> : vector<256x128xf32>
    %6 = tpu.matmul %4, %5, %cst {dimension_numbers = #tpu.dot_dimension_numbers<[1], [0], [0], [1], [0, 0, 1, 1], [], []>} : vector<256x256xbf16>, vector<256x128xbf16>, vector<256x128xf32> -> vector<256x128xf32>
    %7 = arith.addf %3, %6 : vector<256x128xf32>
    %c0_6 = arith.constant 0 : index
    %c0_7 = arith.constant 0 : index
    %8 = vector.load %arg8[%c0_6, %c0_7] : memref<256x128xf32, #tpu.memory_space<vmem>>, vector<256x128xf32>
    tpu.vector_store %arg8[%c0_6, %c0_7], %7 {strides = array<i32>} : memref<256x128xf32, #tpu.memory_space<vmem>>, vector<256x128xf32>,
    %c0_i32_8 = arith.constant 0 : i32
    %9 = arith.cmpi eq, %arg2, %c0_i32_8 : i32
    %10 = arith.extui %9 : i1 to i32
    %c0_i32_9 = arith.constant 0 : i32
    %11 = arith.cmpi ne, %10, %c0_i32_9 : i32
    scf.if %11 {
      %c0_10 = arith.constant 0 : index
      %c0_11 = arith.constant 0 : index
      %12 = vector.load %arg8[%c0_10, %c0_11] : memref<256x128xf32, #tpu.memory_space<vmem>>, vector<256x128xf32>
      %c0_12 = arith.constant 0 : index
      %c0_13 = arith.constant 0 : index
      %13 = vector.load %arg5[%c0_12, %c0_13] : memref<1x128xf32, #tpu.memory_space<vmem>>, vector<1x128xf32>
      %14 = vector.broadcast %13 : vector<1x128xf32> to vector<256x128xf32>
      %15 = arith.mulf %12, %14 : vector<256x128xf32>
      %c0_14 = arith.constant 0 : index
      %c0_15 = arith.constant 0 : index
      %16 = vector.load %arg6[%c0_14, %c0_15] : memref<1x128xf32, #tpu.memory_space<vmem>>, vector<1x128xf32>
      %17 = vector.broadcast %16 : vector<1x128xf32> to vector<256x128xf32>
      %18 = arith.addf %15, %17 : vector<256x128xf32>
      %cst_16 = arith.constant 0.000000e+00 : f32
      %19 = vector.broadcast %cst_16 : f32 to vector<256x128xf32>
      %20 = arith.maximumf %18, %19 : vector<256x128xf32>
      %21 = arith.truncf %20 : vector<256x128xf32> to vector<256x128xbf16>
      %c0_17 = arith.constant 0 : index
      %c0_18 = arith.constant 0 : index
      %22 = vector.load %arg7[%c0_17, %c0_18] : memref<256x128xbf16, #tpu.memory_space<vmem>>, vector<256x128xbf16>
      tpu.vector_store %arg7[%c0_17, %c0_18], %21 {strides = array<i32>} : memref<256x128xbf16, #tpu.memory_space<vmem>>, vector<256x128xbf16>,
    } else {
    }
    return
  }
  func.func @transform_0(%arg0: i32, %arg1: i32, %arg2: i32) -> (i32, i32) {
    %c0_i32 = arith.constant 0 : i32
    return %arg0, %arg2 : i32, i32
  }
  func.func @transform_1(%arg0: i32, %arg1: i32, %arg2: i32) -> (i32, i32) {
    %c0_i32 = arith.constant 0 : i32
    return %arg2, %arg1 : i32, i32
  }
  func.func @transform_2(%arg0: i32, %arg1: i32, %arg2: i32) -> (i32, i32) {
    %c0_i32 = arith.constant 0 : i32
    %c0_i32_0 = arith.constant 0 : i32
    return %c0_i32, %arg1 : i32, i32
  }
  func.func @transform_3(%arg0: i32, %arg1: i32, %arg2: i32) -> (i32, i32) {
    %c0_i32 = arith.constant 0 : i32
    %c0_i32_0 = arith.constant 0 : i32
    return %c0_i32, %arg1 : i32, i32
  }
  func.func @transform_4(%arg0: i32, %arg1: i32, %arg2: i32) -> (i32, i32) {
    %c0_i32 = arith.constant 0 : i32
    return %arg0, %arg1 : i32, i32
  }
}

module attributes {stable_mosaic.version = 11 : i64} {
  func.func @_maxpool_kernel(%arg0: i32, %arg1: memref<9x128x128xbf16, #tpu.memory_space<vmem>>, %arg2: memref<128x128xbf16, #tpu.memory_space<vmem>>) attributes {dimension_semantics = [#tpu.dimension_semantics<parallel>], iteration_bounds = array<i64: 1>, scalar_prefetch = 0 : i64, scratch_operands = 0 : i64, tpu.core_type = #tpu.core_type<tc>, window_params = [{transform_indices = @transform_0, window_bounds = array<i64: 9, 128, 128>}, {transform_indices = @transform_1, window_bounds = array<i64: 128, 128>}]} {
    %c0 = arith.constant 0 : index
    %c0_0 = arith.constant 0 : index
    %c0_1 = arith.constant 0 : index
    %0 = vector.load %arg1[%c0, %c0_0, %c0_1] : memref<9x128x128xbf16, #tpu.memory_space<vmem>>, vector<9x128x128xbf16>
    %cst = arith.constant dense<0xFF80> : vector<128x128xbf16>
    %1 = vector.multi_reduction <maximumf>, %0, %cst [0] : vector<9x128x128xbf16> to vector<128x128xbf16>
    %c0_2 = arith.constant 0 : index
    %c0_3 = arith.constant 0 : index
    %2 = vector.load %arg2[%c0_2, %c0_3] : memref<128x128xbf16, #tpu.memory_space<vmem>>, vector<128x128xbf16>
    tpu.vector_store %arg2[%c0_2, %c0_3], %1 {strides = array<i32>} : memref<128x128xbf16, #tpu.memory_space<vmem>>, vector<128x128xbf16>,
    return
  }
  func.func @transform_0(%arg0: i32) -> (i32, i32, i32) {
    %c0_i32 = arith.constant 0 : i32
    %c0_i32_0 = arith.constant 0 : i32
    %c0_i32_1 = arith.constant 0 : i32
    return %c0_i32, %arg0, %c0_i32_0 : i32, i32, i32
  }
  func.func @transform_1(%arg0: i32) -> (i32, i32) {
    %c0_i32 = arith.constant 0 : i32
    %c0_i32_0 = arith.constant 0 : i32
    return %arg0, %c0_i32 : i32, i32
  }
}

module attributes {stable_mosaic.version = 11 : i64} {
  func.func @_conv_mm_kernel(%arg0: i32, %arg1: i32, %arg2: i32, %arg3: memref<128x128xbf16, #tpu.memory_space<vmem>>, %arg4: memref<128x128xbf16, #tpu.memory_space<vmem>>, %arg5: memref<1x128xf32, #tpu.memory_space<vmem>>, %arg6: memref<1x128xf32, #tpu.memory_space<vmem>>, %arg7: memref<128x128xbf16, #tpu.memory_space<vmem>>, %arg8: memref<128x128xf32, #tpu.memory_space<vmem>>) attributes {dimension_semantics = [#tpu.dimension_semantics<parallel>, #tpu.dimension_semantics<parallel>, #tpu.dimension_semantics<arbitrary>], iteration_bounds = array<i64: 1, 1, 1>, scalar_prefetch = 0 : i64, scratch_operands = 1 : i64, tpu.core_type = #tpu.core_type<tc>, window_params = [{transform_indices = @transform_0, window_bounds = array<i64: 128, 128>}, {transform_indices = @transform_1, window_bounds = array<i64: 128, 128>}, {transform_indices = @transform_2, window_bounds = array<i64: 1, 128>}, {transform_indices = @transform_3, window_bounds = array<i64: 1, 128>}, {transform_indices = @transform_4, window_bounds = array<i64: 128, 128>}]} {
    %c0_i32 = arith.constant 0 : i32
    %0 = arith.cmpi eq, %arg2, %c0_i32 : i32
    %1 = arith.extui %0 : i1 to i32
    %c0_i32_0 = arith.constant 0 : i32
    %2 = arith.cmpi ne, %1, %c0_i32_0 : i32
    scf.if %2 {
      %cst_10 = arith.constant 0.000000e+00 : f32
      %12 = vector.broadcast %cst_10 : f32 to vector<128x128xf32>
      %c0_11 = arith.constant 0 : index
      %c0_12 = arith.constant 0 : index
      %13 = vector.load %arg8[%c0_11, %c0_12] : memref<128x128xf32, #tpu.memory_space<vmem>>, vector<128x128xf32>
      tpu.vector_store %arg8[%c0_11, %c0_12], %12 {strides = array<i32>} : memref<128x128xf32, #tpu.memory_space<vmem>>, vector<128x128xf32>,
    } else {
    }
    %c0 = arith.constant 0 : index
    %c0_1 = arith.constant 0 : index
    %3 = vector.load %arg8[%c0, %c0_1] : memref<128x128xf32, #tpu.memory_space<vmem>>, vector<128x128xf32>
    %c0_2 = arith.constant 0 : index
    %c0_3 = arith.constant 0 : index
    %4 = vector.load %arg3[%c0_2, %c0_3] : memref<128x128xbf16, #tpu.memory_space<vmem>>, vector<128x128xbf16>
    %c0_4 = arith.constant 0 : index
    %c0_5 = arith.constant 0 : index
    %5 = vector.load %arg4[%c0_4, %c0_5] : memref<128x128xbf16, #tpu.memory_space<vmem>>, vector<128x128xbf16>
    %cst = arith.constant dense<0.000000e+00> : vector<128x128xf32>
    %6 = tpu.matmul %4, %5, %cst {dimension_numbers = #tpu.dot_dimension_numbers<[1], [0], [0], [1], [0, 0, 1, 1], [], []>} : vector<128x128xbf16>, vector<128x128xbf16>, vector<128x128xf32> -> vector<128x128xf32>
    %7 = arith.addf %3, %6 : vector<128x128xf32>
    %c0_6 = arith.constant 0 : index
    %c0_7 = arith.constant 0 : index
    %8 = vector.load %arg8[%c0_6, %c0_7] : memref<128x128xf32, #tpu.memory_space<vmem>>, vector<128x128xf32>
    tpu.vector_store %arg8[%c0_6, %c0_7], %7 {strides = array<i32>} : memref<128x128xf32, #tpu.memory_space<vmem>>, vector<128x128xf32>,
    %c0_i32_8 = arith.constant 0 : i32
    %9 = arith.cmpi eq, %arg2, %c0_i32_8 : i32
    %10 = arith.extui %9 : i1 to i32
    %c0_i32_9 = arith.constant 0 : i32
    %11 = arith.cmpi ne, %10, %c0_i32_9 : i32
    scf.if %11 {
      %c0_10 = arith.constant 0 : index
      %c0_11 = arith.constant 0 : index
      %12 = vector.load %arg8[%c0_10, %c0_11] : memref<128x128xf32, #tpu.memory_space<vmem>>, vector<128x128xf32>
      %c0_12 = arith.constant 0 : index
      %c0_13 = arith.constant 0 : index
      %13 = vector.load %arg5[%c0_12, %c0_13] : memref<1x128xf32, #tpu.memory_space<vmem>>, vector<1x128xf32>
      %14 = vector.broadcast %13 : vector<1x128xf32> to vector<128x128xf32>
      %15 = arith.mulf %12, %14 : vector<128x128xf32>
      %c0_14 = arith.constant 0 : index
      %c0_15 = arith.constant 0 : index
      %16 = vector.load %arg6[%c0_14, %c0_15] : memref<1x128xf32, #tpu.memory_space<vmem>>, vector<1x128xf32>
      %17 = vector.broadcast %16 : vector<1x128xf32> to vector<128x128xf32>
      %18 = arith.addf %15, %17 : vector<128x128xf32>
      %cst_16 = arith.constant 0.000000e+00 : f32
      %19 = vector.broadcast %cst_16 : f32 to vector<128x128xf32>
      %20 = arith.maximumf %18, %19 : vector<128x128xf32>
      %21 = arith.truncf %20 : vector<128x128xf32> to vector<128x128xbf16>
      %c0_17 = arith.constant 0 : index
      %c0_18 = arith.constant 0 : index
      %22 = vector.load %arg7[%c0_17, %c0_18] : memref<128x128xbf16, #tpu.memory_space<vmem>>, vector<128x128xbf16>
      tpu.vector_store %arg7[%c0_17, %c0_18], %21 {strides = array<i32>} : memref<128x128xbf16, #tpu.memory_space<vmem>>, vector<128x128xbf16>,
    } else {
    }
    return
  }
  func.func @transform_0(%arg0: i32, %arg1: i32, %arg2: i32) -> (i32, i32) {
    %c0_i32 = arith.constant 0 : i32
    return %arg0, %arg2 : i32, i32
  }
  func.func @transform_1(%arg0: i32, %arg1: i32, %arg2: i32) -> (i32, i32) {
    %c0_i32 = arith.constant 0 : i32
    return %arg2, %arg1 : i32, i32
  }
  func.func @transform_2(%arg0: i32, %arg1: i32, %arg2: i32) -> (i32, i32) {
    %c0_i32 = arith.constant 0 : i32
    %c0_i32_0 = arith.constant 0 : i32
    return %c0_i32, %arg1 : i32, i32
  }
  func.func @transform_3(%arg0: i32, %arg1: i32, %arg2: i32) -> (i32, i32) {
    %c0_i32 = arith.constant 0 : i32
    %c0_i32_0 = arith.constant 0 : i32
    return %c0_i32, %arg1 : i32, i32
  }
  func.func @transform_4(%arg0: i32, %arg1: i32, %arg2: i32) -> (i32, i32) {
    %c0_i32 = arith.constant 0 : i32
    return %arg0, %arg1 : i32, i32
  }
}

module attributes {stable_mosaic.version = 11 : i64} {
  func.func @_conv_mm_kernel(%arg0: i32, %arg1: i32, %arg2: i32, %arg3: memref<128x384xbf16, #tpu.memory_space<vmem>>, %arg4: memref<384x128xbf16, #tpu.memory_space<vmem>>, %arg5: memref<1x128xf32, #tpu.memory_space<vmem>>, %arg6: memref<1x128xf32, #tpu.memory_space<vmem>>, %arg7: memref<128x128xbf16, #tpu.memory_space<vmem>>, %arg8: memref<128x128xf32, #tpu.memory_space<vmem>>) attributes {dimension_semantics = [#tpu.dimension_semantics<parallel>, #tpu.dimension_semantics<parallel>, #tpu.dimension_semantics<arbitrary>], iteration_bounds = array<i64: 1, 1, 3>, scalar_prefetch = 0 : i64, scratch_operands = 1 : i64, tpu.core_type = #tpu.core_type<tc>, window_params = [{transform_indices = @transform_0, window_bounds = array<i64: 128, 384>}, {transform_indices = @transform_1, window_bounds = array<i64: 384, 128>}, {transform_indices = @transform_2, window_bounds = array<i64: 1, 128>}, {transform_indices = @transform_3, window_bounds = array<i64: 1, 128>}, {transform_indices = @transform_4, window_bounds = array<i64: 128, 128>}]} {
    %c0_i32 = arith.constant 0 : i32
    %0 = arith.cmpi eq, %arg2, %c0_i32 : i32
    %1 = arith.extui %0 : i1 to i32
    %c0_i32_0 = arith.constant 0 : i32
    %2 = arith.cmpi ne, %1, %c0_i32_0 : i32
    scf.if %2 {
      %cst_9 = arith.constant 0.000000e+00 : f32
      %12 = vector.broadcast %cst_9 : f32 to vector<128x128xf32>
      %c0_10 = arith.constant 0 : index
      %c0_11 = arith.constant 0 : index
      %13 = vector.load %arg8[%c0_10, %c0_11] : memref<128x128xf32, #tpu.memory_space<vmem>>, vector<128x128xf32>
      tpu.vector_store %arg8[%c0_10, %c0_11], %12 {strides = array<i32>} : memref<128x128xf32, #tpu.memory_space<vmem>>, vector<128x128xf32>,
    } else {
    }
    %c0 = arith.constant 0 : index
    %c0_1 = arith.constant 0 : index
    %3 = vector.load %arg8[%c0, %c0_1] : memref<128x128xf32, #tpu.memory_space<vmem>>, vector<128x128xf32>
    %c0_2 = arith.constant 0 : index
    %c0_3 = arith.constant 0 : index
    %4 = vector.load %arg3[%c0_2, %c0_3] : memref<128x384xbf16, #tpu.memory_space<vmem>>, vector<128x384xbf16>
    %c0_4 = arith.constant 0 : index
    %c0_5 = arith.constant 0 : index
    %5 = vector.load %arg4[%c0_4, %c0_5] : memref<384x128xbf16, #tpu.memory_space<vmem>>, vector<384x128xbf16>
    %cst = arith.constant dense<0.000000e+00> : vector<128x128xf32>
    %6 = tpu.matmul %4, %5, %cst {dimension_numbers = #tpu.dot_dimension_numbers<[1], [0], [0], [1], [0, 0, 1, 1], [], []>} : vector<128x384xbf16>, vector<384x128xbf16>, vector<128x128xf32> -> vector<128x128xf32>
    %7 = arith.addf %3, %6 : vector<128x128xf32>
    %c0_6 = arith.constant 0 : index
    %c0_7 = arith.constant 0 : index
    %8 = vector.load %arg8[%c0_6, %c0_7] : memref<128x128xf32, #tpu.memory_space<vmem>>, vector<128x128xf32>
    tpu.vector_store %arg8[%c0_6, %c0_7], %7 {strides = array<i32>} : memref<128x128xf32, #tpu.memory_space<vmem>>, vector<128x128xf32>,
    %c2_i32 = arith.constant 2 : i32
    %9 = arith.cmpi eq, %arg2, %c2_i32 : i32
    %10 = arith.extui %9 : i1 to i32
    %c0_i32_8 = arith.constant 0 : i32
    %11 = arith.cmpi ne, %10, %c0_i32_8 : i32
    scf.if %11 {
      %c0_9 = arith.constant 0 : index
      %c0_10 = arith.constant 0 : index
      %12 = vector.load %arg8[%c0_9, %c0_10] : memref<128x128xf32, #tpu.memory_space<vmem>>, vector<128x128xf32>
      %c0_11 = arith.constant 0 : index
      %c0_12 = arith.constant 0 : index
      %13 = vector.load %arg5[%c0_11, %c0_12] : memref<1x128xf32, #tpu.memory_space<vmem>>, vector<1x128xf32>
      %14 = vector.broadcast %13 : vector<1x128xf32> to vector<128x128xf32>
      %15 = arith.mulf %12, %14 : vector<128x128xf32>
      %c0_13 = arith.constant 0 : index
      %c0_14 = arith.constant 0 : index
      %16 = vector.load %arg6[%c0_13, %c0_14] : memref<1x128xf32, #tpu.memory_space<vmem>>, vector<1x128xf32>
      %17 = vector.broadcast %16 : vector<1x128xf32> to vector<128x128xf32>
      %18 = arith.addf %15, %17 : vector<128x128xf32>
      %cst_15 = arith.constant 0.000000e+00 : f32
      %19 = vector.broadcast %cst_15 : f32 to vector<128x128xf32>
      %20 = arith.maximumf %18, %19 : vector<128x128xf32>
      %21 = arith.truncf %20 : vector<128x128xf32> to vector<128x128xbf16>
      %c0_16 = arith.constant 0 : index
      %c0_17 = arith.constant 0 : index
      %22 = vector.load %arg7[%c0_16, %c0_17] : memref<128x128xbf16, #tpu.memory_space<vmem>>, vector<128x128xbf16>
      tpu.vector_store %arg7[%c0_16, %c0_17], %21 {strides = array<i32>} : memref<128x128xbf16, #tpu.memory_space<vmem>>, vector<128x128xbf16>,
    } else {
    }
    return
  }
  func.func @transform_0(%arg0: i32, %arg1: i32, %arg2: i32) -> (i32, i32) {
    %c0_i32 = arith.constant 0 : i32
    return %arg0, %arg2 : i32, i32
  }
  func.func @transform_1(%arg0: i32, %arg1: i32, %arg2: i32) -> (i32, i32) {
    %c0_i32 = arith.constant 0 : i32
    return %arg2, %arg1 : i32, i32
  }
  func.func @transform_2(%arg0: i32, %arg1: i32, %arg2: i32) -> (i32, i32) {
    %c0_i32 = arith.constant 0 : i32
    %c0_i32_0 = arith.constant 0 : i32
    return %c0_i32, %arg1 : i32, i32
  }
  func.func @transform_3(%arg0: i32, %arg1: i32, %arg2: i32) -> (i32, i32) {
    %c0_i32 = arith.constant 0 : i32
    %c0_i32_0 = arith.constant 0 : i32
    return %c0_i32, %arg1 : i32, i32
  }
  func.func @transform_4(%arg0: i32, %arg1: i32, %arg2: i32) -> (i32, i32) {
    %c0_i32 = arith.constant 0 : i32
    return %arg0, %arg1 : i32, i32
  }
}

module attributes {stable_mosaic.version = 11 : i64} {
  func.func @_conv_mm_kernel(%arg0: i32, %arg1: i32, %arg2: i32, %arg3: memref<128x128xbf16, #tpu.memory_space<vmem>>, %arg4: memref<128x128xbf16, #tpu.memory_space<vmem>>, %arg5: memref<1x128xf32, #tpu.memory_space<vmem>>, %arg6: memref<1x128xf32, #tpu.memory_space<vmem>>, %arg7: memref<128x128xbf16, #tpu.memory_space<vmem>>, %arg8: memref<128x128xbf16, #tpu.memory_space<vmem>>, %arg9: memref<128x128xf32, #tpu.memory_space<vmem>>) attributes {dimension_semantics = [#tpu.dimension_semantics<parallel>, #tpu.dimension_semantics<parallel>, #tpu.dimension_semantics<arbitrary>], iteration_bounds = array<i64: 1, 1, 1>, scalar_prefetch = 0 : i64, scratch_operands = 1 : i64, tpu.core_type = #tpu.core_type<tc>, window_params = [{transform_indices = @transform_0, window_bounds = array<i64: 128, 128>}, {transform_indices = @transform_1, window_bounds = array<i64: 128, 128>}, {transform_indices = @transform_2, window_bounds = array<i64: 1, 128>}, {transform_indices = @transform_3, window_bounds = array<i64: 1, 128>}, {transform_indices = @transform_4, window_bounds = array<i64: 128, 128>}, {transform_indices = @transform_5, window_bounds = array<i64: 128, 128>}]} {
    %c0_i32 = arith.constant 0 : i32
    %0 = arith.cmpi eq, %arg2, %c0_i32 : i32
    %1 = arith.extui %0 : i1 to i32
    %c0_i32_0 = arith.constant 0 : i32
    %2 = arith.cmpi ne, %1, %c0_i32_0 : i32
    scf.if %2 {
      %cst_10 = arith.constant 0.000000e+00 : f32
      %12 = vector.broadcast %cst_10 : f32 to vector<128x128xf32>
      %c0_11 = arith.constant 0 : index
      %c0_12 = arith.constant 0 : index
      %13 = vector.load %arg9[%c0_11, %c0_12] : memref<128x128xf32, #tpu.memory_space<vmem>>, vector<128x128xf32>
      tpu.vector_store %arg9[%c0_11, %c0_12], %12 {strides = array<i32>} : memref<128x128xf32, #tpu.memory_space<vmem>>, vector<128x128xf32>,
    } else {
    }
    %c0 = arith.constant 0 : index
    %c0_1 = arith.constant 0 : index
    %3 = vector.load %arg9[%c0, %c0_1] : memref<128x128xf32, #tpu.memory_space<vmem>>, vector<128x128xf32>
    %c0_2 = arith.constant 0 : index
    %c0_3 = arith.constant 0 : index
    %4 = vector.load %arg3[%c0_2, %c0_3] : memref<128x128xbf16, #tpu.memory_space<vmem>>, vector<128x128xbf16>
    %c0_4 = arith.constant 0 : index
    %c0_5 = arith.constant 0 : index
    %5 = vector.load %arg4[%c0_4, %c0_5] : memref<128x128xbf16, #tpu.memory_space<vmem>>, vector<128x128xbf16>
    %cst = arith.constant dense<0.000000e+00> : vector<128x128xf32>
    %6 = tpu.matmul %4, %5, %cst {dimension_numbers = #tpu.dot_dimension_numbers<[1], [0], [0], [1], [0, 0, 1, 1], [], []>} : vector<128x128xbf16>, vector<128x128xbf16>, vector<128x128xf32> -> vector<128x128xf32>
    %7 = arith.addf %3, %6 : vector<128x128xf32>
    %c0_6 = arith.constant 0 : index
    %c0_7 = arith.constant 0 : index
    %8 = vector.load %arg9[%c0_6, %c0_7] : memref<128x128xf32, #tpu.memory_space<vmem>>, vector<128x128xf32>
    tpu.vector_store %arg9[%c0_6, %c0_7], %7 {strides = array<i32>} : memref<128x128xf32, #tpu.memory_space<vmem>>, vector<128x128xf32>,
    %c0_i32_8 = arith.constant 0 : i32
    %9 = arith.cmpi eq, %arg2, %c0_i32_8 : i32
    %10 = arith.extui %9 : i1 to i32
    %c0_i32_9 = arith.constant 0 : i32
    %11 = arith.cmpi ne, %10, %c0_i32_9 : i32
    scf.if %11 {
      %c0_10 = arith.constant 0 : index
      %c0_11 = arith.constant 0 : index
      %12 = vector.load %arg9[%c0_10, %c0_11] : memref<128x128xf32, #tpu.memory_space<vmem>>, vector<128x128xf32>
      %c0_12 = arith.constant 0 : index
      %c0_13 = arith.constant 0 : index
      %13 = vector.load %arg5[%c0_12, %c0_13] : memref<1x128xf32, #tpu.memory_space<vmem>>, vector<1x128xf32>
      %14 = vector.broadcast %13 : vector<1x128xf32> to vector<128x128xf32>
      %15 = arith.mulf %12, %14 : vector<128x128xf32>
      %c0_14 = arith.constant 0 : index
      %c0_15 = arith.constant 0 : index
      %16 = vector.load %arg6[%c0_14, %c0_15] : memref<1x128xf32, #tpu.memory_space<vmem>>, vector<1x128xf32>
      %17 = vector.broadcast %16 : vector<1x128xf32> to vector<128x128xf32>
      %18 = arith.addf %15, %17 : vector<128x128xf32>
      %c0_16 = arith.constant 0 : index
      %c0_17 = arith.constant 0 : index
      %19 = vector.load %arg7[%c0_16, %c0_17] : memref<128x128xbf16, #tpu.memory_space<vmem>>, vector<128x128xbf16>
      %20 = arith.extf %19 : vector<128x128xbf16> to vector<128x128xf32>
      %21 = arith.addf %18, %20 : vector<128x128xf32>
      %cst_18 = arith.constant 0.000000e+00 : f32
      %22 = vector.broadcast %cst_18 : f32 to vector<128x128xf32>
      %23 = arith.maximumf %21, %22 : vector<128x128xf32>
      %24 = arith.truncf %23 : vector<128x128xf32> to vector<128x128xbf16>
      %c0_19 = arith.constant 0 : index
      %c0_20 = arith.constant 0 : index
      %25 = vector.load %arg8[%c0_19, %c0_20] : memref<128x128xbf16, #tpu.memory_space<vmem>>, vector<128x128xbf16>
      tpu.vector_store %arg8[%c0_19, %c0_20], %24 {strides = array<i32>} : memref<128x128xbf16, #tpu.memory_space<vmem>>, vector<128x128xbf16>,
    } else {
    }
    return
  }
  func.func @transform_0(%arg0: i32, %arg1: i32, %arg2: i32) -> (i32, i32) {
    %c0_i32 = arith.constant 0 : i32
    return %arg0, %arg2 : i32, i32
  }
  func.func @transform_1(%arg0: i32, %arg1: i32, %arg2: i32) -> (i32, i32) {
    %c0_i32 = arith.constant 0 : i32
    return %arg2, %arg1 : i32, i32
  }
  func.func @transform_2(%arg0: i32, %arg1: i32, %arg2: i32) -> (i32, i32) {
    %c0_i32 = arith.constant 0 : i32
    %c0_i32_0 = arith.constant 0 : i32
    return %c0_i32, %arg1 : i32, i32
  }
  func.func @transform_3(%arg0: i32, %arg1: i32, %arg2: i32) -> (i32, i32) {
    %c0_i32 = arith.constant 0 : i32
    %c0_i32_0 = arith.constant 0 : i32
    return %c0_i32, %arg1 : i32, i32
  }
  func.func @transform_4(%arg0: i32, %arg1: i32, %arg2: i32) -> (i32, i32) {
    %c0_i32 = arith.constant 0 : i32
    return %arg0, %arg1 : i32, i32
  }
  func.func @transform_5(%arg0: i32, %arg1: i32, %arg2: i32) -> (i32, i32) {
    %c0_i32 = arith.constant 0 : i32
    return %arg0, %arg1 : i32, i32
  }
}

module attributes {stable_mosaic.version = 11 : i64} {
  func.func @_conv_mm_kernel(%arg0: i32, %arg1: i32, %arg2: i32, %arg3: memref<128x128xbf16, #tpu.memory_space<vmem>>, %arg4: memref<128x128xbf16, #tpu.memory_space<vmem>>, %arg5: memref<1x128xf32, #tpu.memory_space<vmem>>, %arg6: memref<1x128xf32, #tpu.memory_space<vmem>>, %arg7: memref<128x128xbf16, #tpu.memory_space<vmem>>, %arg8: memref<128x128xf32, #tpu.memory_space<vmem>>) attributes {dimension_semantics = [#tpu.dimension_semantics<parallel>, #tpu.dimension_semantics<parallel>, #tpu.dimension_semantics<arbitrary>], iteration_bounds = array<i64: 1, 1, 1>, scalar_prefetch = 0 : i64, scratch_operands = 1 : i64, tpu.core_type = #tpu.core_type<tc>, window_params = [{transform_indices = @transform_0, window_bounds = array<i64: 128, 128>}, {transform_indices = @transform_1, window_bounds = array<i64: 128, 128>}, {transform_indices = @transform_2, window_bounds = array<i64: 1, 128>}, {transform_indices = @transform_3, window_bounds = array<i64: 1, 128>}, {transform_indices = @transform_4, window_bounds = array<i64: 128, 128>}]} {
    %c0_i32 = arith.constant 0 : i32
    %0 = arith.cmpi eq, %arg2, %c0_i32 : i32
    %1 = arith.extui %0 : i1 to i32
    %c0_i32_0 = arith.constant 0 : i32
    %2 = arith.cmpi ne, %1, %c0_i32_0 : i32
    scf.if %2 {
      %cst_10 = arith.constant 0.000000e+00 : f32
      %12 = vector.broadcast %cst_10 : f32 to vector<128x128xf32>
      %c0_11 = arith.constant 0 : index
      %c0_12 = arith.constant 0 : index
      %13 = vector.load %arg8[%c0_11, %c0_12] : memref<128x128xf32, #tpu.memory_space<vmem>>, vector<128x128xf32>
      tpu.vector_store %arg8[%c0_11, %c0_12], %12 {strides = array<i32>} : memref<128x128xf32, #tpu.memory_space<vmem>>, vector<128x128xf32>,
    } else {
    }
    %c0 = arith.constant 0 : index
    %c0_1 = arith.constant 0 : index
    %3 = vector.load %arg8[%c0, %c0_1] : memref<128x128xf32, #tpu.memory_space<vmem>>, vector<128x128xf32>
    %c0_2 = arith.constant 0 : index
    %c0_3 = arith.constant 0 : index
    %4 = vector.load %arg3[%c0_2, %c0_3] : memref<128x128xbf16, #tpu.memory_space<vmem>>, vector<128x128xbf16>
    %c0_4 = arith.constant 0 : index
    %c0_5 = arith.constant 0 : index
    %5 = vector.load %arg4[%c0_4, %c0_5] : memref<128x128xbf16, #tpu.memory_space<vmem>>, vector<128x128xbf16>
    %cst = arith.constant dense<0.000000e+00> : vector<128x128xf32>
    %6 = tpu.matmul %4, %5, %cst {dimension_numbers = #tpu.dot_dimension_numbers<[1], [0], [0], [1], [0, 0, 1, 1], [], []>} : vector<128x128xbf16>, vector<128x128xbf16>, vector<128x128xf32> -> vector<128x128xf32>
    %7 = arith.addf %3, %6 : vector<128x128xf32>
    %c0_6 = arith.constant 0 : index
    %c0_7 = arith.constant 0 : index
    %8 = vector.load %arg8[%c0_6, %c0_7] : memref<128x128xf32, #tpu.memory_space<vmem>>, vector<128x128xf32>
    tpu.vector_store %arg8[%c0_6, %c0_7], %7 {strides = array<i32>} : memref<128x128xf32, #tpu.memory_space<vmem>>, vector<128x128xf32>,
    %c0_i32_8 = arith.constant 0 : i32
    %9 = arith.cmpi eq, %arg2, %c0_i32_8 : i32
    %10 = arith.extui %9 : i1 to i32
    %c0_i32_9 = arith.constant 0 : i32
    %11 = arith.cmpi ne, %10, %c0_i32_9 : i32
    scf.if %11 {
      %c0_10 = arith.constant 0 : index
      %c0_11 = arith.constant 0 : index
      %12 = vector.load %arg8[%c0_10, %c0_11] : memref<128x128xf32, #tpu.memory_space<vmem>>, vector<128x128xf32>
      %c0_12 = arith.constant 0 : index
      %c0_13 = arith.constant 0 : index
      %13 = vector.load %arg5[%c0_12, %c0_13] : memref<1x128xf32, #tpu.memory_space<vmem>>, vector<1x128xf32>
      %14 = vector.broadcast %13 : vector<1x128xf32> to vector<128x128xf32>
      %15 = arith.mulf %12, %14 : vector<128x128xf32>
      %c0_14 = arith.constant 0 : index
      %c0_15 = arith.constant 0 : index
      %16 = vector.load %arg6[%c0_14, %c0_15] : memref<1x128xf32, #tpu.memory_space<vmem>>, vector<1x128xf32>
      %17 = vector.broadcast %16 : vector<1x128xf32> to vector<128x128xf32>
      %18 = arith.addf %15, %17 : vector<128x128xf32>
      %19 = arith.truncf %18 : vector<128x128xf32> to vector<128x128xbf16>
      %c0_16 = arith.constant 0 : index
      %c0_17 = arith.constant 0 : index
      %20 = vector.load %arg7[%c0_16, %c0_17] : memref<128x128xbf16, #tpu.memory_space<vmem>>, vector<128x128xbf16>
      tpu.vector_store %arg7[%c0_16, %c0_17], %19 {strides = array<i32>} : memref<128x128xbf16, #tpu.memory_space<vmem>>, vector<128x128xbf16>,
    } else {
    }
    return
  }
  func.func @transform_0(%arg0: i32, %arg1: i32, %arg2: i32) -> (i32, i32) {
    %c0_i32 = arith.constant 0 : i32
    return %arg0, %arg2 : i32, i32
  }
  func.func @transform_1(%arg0: i32, %arg1: i32, %arg2: i32) -> (i32, i32) {
    %c0_i32 = arith.constant 0 : i32
    return %arg2, %arg1 : i32, i32
  }
  func.func @transform_2(%arg0: i32, %arg1: i32, %arg2: i32) -> (i32, i32) {
    %c0_i32 = arith.constant 0 : i32
    %c0_i32_0 = arith.constant 0 : i32
    return %c0_i32, %arg1 : i32, i32
  }
  func.func @transform_3(%arg0: i32, %arg1: i32, %arg2: i32) -> (i32, i32) {
    %c0_i32 = arith.constant 0 : i32
    %c0_i32_0 = arith.constant 0 : i32
    return %c0_i32, %arg1 : i32, i32
  }
  func.func @transform_4(%arg0: i32, %arg1: i32, %arg2: i32) -> (i32, i32) {
    %c0_i32 = arith.constant 0 : i32
    return %arg0, %arg1 : i32, i32
  }
}

module attributes {stable_mosaic.version = 11 : i64} {
  func.func @_conv_mm_kernel(%arg0: i32, %arg1: i32, %arg2: i32, %arg3: memref<32x128xbf16, #tpu.memory_space<vmem>>, %arg4: memref<128x128xbf16, #tpu.memory_space<vmem>>, %arg5: memref<1x128xf32, #tpu.memory_space<vmem>>, %arg6: memref<1x128xf32, #tpu.memory_space<vmem>>, %arg7: memref<32x128xbf16, #tpu.memory_space<vmem>>, %arg8: memref<32x128xf32, #tpu.memory_space<vmem>>) attributes {dimension_semantics = [#tpu.dimension_semantics<parallel>, #tpu.dimension_semantics<parallel>, #tpu.dimension_semantics<arbitrary>], iteration_bounds = array<i64: 1, 1, 1>, scalar_prefetch = 0 : i64, scratch_operands = 1 : i64, tpu.core_type = #tpu.core_type<tc>, window_params = [{transform_indices = @transform_0, window_bounds = array<i64: 32, 128>}, {transform_indices = @transform_1, window_bounds = array<i64: 128, 128>}, {transform_indices = @transform_2, window_bounds = array<i64: 1, 128>}, {transform_indices = @transform_3, window_bounds = array<i64: 1, 128>}, {transform_indices = @transform_4, window_bounds = array<i64: 32, 128>}]} {
    %c0_i32 = arith.constant 0 : i32
    %0 = arith.cmpi eq, %arg2, %c0_i32 : i32
    %1 = arith.extui %0 : i1 to i32
    %c0_i32_0 = arith.constant 0 : i32
    %2 = arith.cmpi ne, %1, %c0_i32_0 : i32
    scf.if %2 {
      %cst_10 = arith.constant 0.000000e+00 : f32
      %12 = vector.broadcast %cst_10 : f32 to vector<32x128xf32>
      %c0_11 = arith.constant 0 : index
      %c0_12 = arith.constant 0 : index
      %13 = vector.load %arg8[%c0_11, %c0_12] : memref<32x128xf32, #tpu.memory_space<vmem>>, vector<32x128xf32>
      tpu.vector_store %arg8[%c0_11, %c0_12], %12 {strides = array<i32>} : memref<32x128xf32, #tpu.memory_space<vmem>>, vector<32x128xf32>,
    } else {
    }
    %c0 = arith.constant 0 : index
    %c0_1 = arith.constant 0 : index
    %3 = vector.load %arg8[%c0, %c0_1] : memref<32x128xf32, #tpu.memory_space<vmem>>, vector<32x128xf32>
    %c0_2 = arith.constant 0 : index
    %c0_3 = arith.constant 0 : index
    %4 = vector.load %arg3[%c0_2, %c0_3] : memref<32x128xbf16, #tpu.memory_space<vmem>>, vector<32x128xbf16>
    %c0_4 = arith.constant 0 : index
    %c0_5 = arith.constant 0 : index
    %5 = vector.load %arg4[%c0_4, %c0_5] : memref<128x128xbf16, #tpu.memory_space<vmem>>, vector<128x128xbf16>
    %cst = arith.constant dense<0.000000e+00> : vector<32x128xf32>
    %6 = tpu.matmul %4, %5, %cst {dimension_numbers = #tpu.dot_dimension_numbers<[1], [0], [0], [1], [0, 0, 1, 1], [], []>} : vector<32x128xbf16>, vector<128x128xbf16>, vector<32x128xf32> -> vector<32x128xf32>
    %7 = arith.addf %3, %6 : vector<32x128xf32>
    %c0_6 = arith.constant 0 : index
    %c0_7 = arith.constant 0 : index
    %8 = vector.load %arg8[%c0_6, %c0_7] : memref<32x128xf32, #tpu.memory_space<vmem>>, vector<32x128xf32>
    tpu.vector_store %arg8[%c0_6, %c0_7], %7 {strides = array<i32>} : memref<32x128xf32, #tpu.memory_space<vmem>>, vector<32x128xf32>,
    %c0_i32_8 = arith.constant 0 : i32
    %9 = arith.cmpi eq, %arg2, %c0_i32_8 : i32
    %10 = arith.extui %9 : i1 to i32
    %c0_i32_9 = arith.constant 0 : i32
    %11 = arith.cmpi ne, %10, %c0_i32_9 : i32
    scf.if %11 {
      %c0_10 = arith.constant 0 : index
      %c0_11 = arith.constant 0 : index
      %12 = vector.load %arg8[%c0_10, %c0_11] : memref<32x128xf32, #tpu.memory_space<vmem>>, vector<32x128xf32>
      %c0_12 = arith.constant 0 : index
      %c0_13 = arith.constant 0 : index
      %13 = vector.load %arg5[%c0_12, %c0_13] : memref<1x128xf32, #tpu.memory_space<vmem>>, vector<1x128xf32>
      %14 = vector.broadcast %13 : vector<1x128xf32> to vector<32x128xf32>
      %15 = arith.mulf %12, %14 : vector<32x128xf32>
      %c0_14 = arith.constant 0 : index
      %c0_15 = arith.constant 0 : index
      %16 = vector.load %arg6[%c0_14, %c0_15] : memref<1x128xf32, #tpu.memory_space<vmem>>, vector<1x128xf32>
      %17 = vector.broadcast %16 : vector<1x128xf32> to vector<32x128xf32>
      %18 = arith.addf %15, %17 : vector<32x128xf32>
      %19 = arith.truncf %18 : vector<32x128xf32> to vector<32x128xbf16>
      %c0_16 = arith.constant 0 : index
      %c0_17 = arith.constant 0 : index
      %20 = vector.load %arg7[%c0_16, %c0_17] : memref<32x128xbf16, #tpu.memory_space<vmem>>, vector<32x128xbf16>
      tpu.vector_store %arg7[%c0_16, %c0_17], %19 {strides = array<i32>} : memref<32x128xbf16, #tpu.memory_space<vmem>>, vector<32x128xbf16>,
    } else {
    }
    return
  }
  func.func @transform_0(%arg0: i32, %arg1: i32, %arg2: i32) -> (i32, i32) {
    %c0_i32 = arith.constant 0 : i32
    return %arg0, %arg2 : i32, i32
  }
  func.func @transform_1(%arg0: i32, %arg1: i32, %arg2: i32) -> (i32, i32) {
    %c0_i32 = arith.constant 0 : i32
    return %arg2, %arg1 : i32, i32
  }
  func.func @transform_2(%arg0: i32, %arg1: i32, %arg2: i32) -> (i32, i32) {
    %c0_i32 = arith.constant 0 : i32
    %c0_i32_0 = arith.constant 0 : i32
    return %c0_i32, %arg1 : i32, i32
  }
  func.func @transform_3(%arg0: i32, %arg1: i32, %arg2: i32) -> (i32, i32) {
    %c0_i32 = arith.constant 0 : i32
    %c0_i32_0 = arith.constant 0 : i32
    return %c0_i32, %arg1 : i32, i32
  }
  func.func @transform_4(%arg0: i32, %arg1: i32, %arg2: i32) -> (i32, i32) {
    %c0_i32 = arith.constant 0 : i32
    return %arg0, %arg1 : i32, i32
  }
}

module attributes {stable_mosaic.version = 11 : i64} {
  func.func @_conv_mm_kernel(%arg0: i32, %arg1: i32, %arg2: i32, %arg3: memref<32x384xbf16, #tpu.memory_space<vmem>>, %arg4: memref<384x128xbf16, #tpu.memory_space<vmem>>, %arg5: memref<1x128xf32, #tpu.memory_space<vmem>>, %arg6: memref<1x128xf32, #tpu.memory_space<vmem>>, %arg7: memref<32x128xbf16, #tpu.memory_space<vmem>>, %arg8: memref<32x128xf32, #tpu.memory_space<vmem>>) attributes {dimension_semantics = [#tpu.dimension_semantics<parallel>, #tpu.dimension_semantics<parallel>, #tpu.dimension_semantics<arbitrary>], iteration_bounds = array<i64: 1, 1, 3>, scalar_prefetch = 0 : i64, scratch_operands = 1 : i64, tpu.core_type = #tpu.core_type<tc>, window_params = [{transform_indices = @transform_0, window_bounds = array<i64: 32, 384>}, {transform_indices = @transform_1, window_bounds = array<i64: 384, 128>}, {transform_indices = @transform_2, window_bounds = array<i64: 1, 128>}, {transform_indices = @transform_3, window_bounds = array<i64: 1, 128>}, {transform_indices = @transform_4, window_bounds = array<i64: 32, 128>}]} {
    %c0_i32 = arith.constant 0 : i32
    %0 = arith.cmpi eq, %arg2, %c0_i32 : i32
    %1 = arith.extui %0 : i1 to i32
    %c0_i32_0 = arith.constant 0 : i32
    %2 = arith.cmpi ne, %1, %c0_i32_0 : i32
    scf.if %2 {
      %cst_9 = arith.constant 0.000000e+00 : f32
      %12 = vector.broadcast %cst_9 : f32 to vector<32x128xf32>
      %c0_10 = arith.constant 0 : index
      %c0_11 = arith.constant 0 : index
      %13 = vector.load %arg8[%c0_10, %c0_11] : memref<32x128xf32, #tpu.memory_space<vmem>>, vector<32x128xf32>
      tpu.vector_store %arg8[%c0_10, %c0_11], %12 {strides = array<i32>} : memref<32x128xf32, #tpu.memory_space<vmem>>, vector<32x128xf32>,
    } else {
    }
    %c0 = arith.constant 0 : index
    %c0_1 = arith.constant 0 : index
    %3 = vector.load %arg8[%c0, %c0_1] : memref<32x128xf32, #tpu.memory_space<vmem>>, vector<32x128xf32>
    %c0_2 = arith.constant 0 : index
    %c0_3 = arith.constant 0 : index
    %4 = vector.load %arg3[%c0_2, %c0_3] : memref<32x384xbf16, #tpu.memory_space<vmem>>, vector<32x384xbf16>
    %c0_4 = arith.constant 0 : index
    %c0_5 = arith.constant 0 : index
    %5 = vector.load %arg4[%c0_4, %c0_5] : memref<384x128xbf16, #tpu.memory_space<vmem>>, vector<384x128xbf16>
    %cst = arith.constant dense<0.000000e+00> : vector<32x128xf32>
    %6 = tpu.matmul %4, %5, %cst {dimension_numbers = #tpu.dot_dimension_numbers<[1], [0], [0], [1], [0, 0, 1, 1], [], []>} : vector<32x384xbf16>, vector<384x128xbf16>, vector<32x128xf32> -> vector<32x128xf32>
    %7 = arith.addf %3, %6 : vector<32x128xf32>
    %c0_6 = arith.constant 0 : index
    %c0_7 = arith.constant 0 : index
    %8 = vector.load %arg8[%c0_6, %c0_7] : memref<32x128xf32, #tpu.memory_space<vmem>>, vector<32x128xf32>
    tpu.vector_store %arg8[%c0_6, %c0_7], %7 {strides = array<i32>} : memref<32x128xf32, #tpu.memory_space<vmem>>, vector<32x128xf32>,
    %c2_i32 = arith.constant 2 : i32
    %9 = arith.cmpi eq, %arg2, %c2_i32 : i32
    %10 = arith.extui %9 : i1 to i32
    %c0_i32_8 = arith.constant 0 : i32
    %11 = arith.cmpi ne, %10, %c0_i32_8 : i32
    scf.if %11 {
      %c0_9 = arith.constant 0 : index
      %c0_10 = arith.constant 0 : index
      %12 = vector.load %arg8[%c0_9, %c0_10] : memref<32x128xf32, #tpu.memory_space<vmem>>, vector<32x128xf32>
      %c0_11 = arith.constant 0 : index
      %c0_12 = arith.constant 0 : index
      %13 = vector.load %arg5[%c0_11, %c0_12] : memref<1x128xf32, #tpu.memory_space<vmem>>, vector<1x128xf32>
      %14 = vector.broadcast %13 : vector<1x128xf32> to vector<32x128xf32>
      %15 = arith.mulf %12, %14 : vector<32x128xf32>
      %c0_13 = arith.constant 0 : index
      %c0_14 = arith.constant 0 : index
      %16 = vector.load %arg6[%c0_13, %c0_14] : memref<1x128xf32, #tpu.memory_space<vmem>>, vector<1x128xf32>
      %17 = vector.broadcast %16 : vector<1x128xf32> to vector<32x128xf32>
      %18 = arith.addf %15, %17 : vector<32x128xf32>
      %cst_15 = arith.constant 0.000000e+00 : f32
      %19 = vector.broadcast %cst_15 : f32 to vector<32x128xf32>
      %20 = arith.maximumf %18, %19 : vector<32x128xf32>
      %21 = arith.truncf %20 : vector<32x128xf32> to vector<32x128xbf16>
      %c0_16 = arith.constant 0 : index
      %c0_17 = arith.constant 0 : index
      %22 = vector.load %arg7[%c0_16, %c0_17] : memref<32x128xbf16, #tpu.memory_space<vmem>>, vector<32x128xbf16>
      tpu.vector_store %arg7[%c0_16, %c0_17], %21 {strides = array<i32>} : memref<32x128xbf16, #tpu.memory_space<vmem>>, vector<32x128xbf16>,
    } else {
    }
    return
  }
  func.func @transform_0(%arg0: i32, %arg1: i32, %arg2: i32) -> (i32, i32) {
    %c0_i32 = arith.constant 0 : i32
    return %arg0, %arg2 : i32, i32
  }
  func.func @transform_1(%arg0: i32, %arg1: i32, %arg2: i32) -> (i32, i32) {
    %c0_i32 = arith.constant 0 : i32
    return %arg2, %arg1 : i32, i32
  }
  func.func @transform_2(%arg0: i32, %arg1: i32, %arg2: i32) -> (i32, i32) {
    %c0_i32 = arith.constant 0 : i32
    %c0_i32_0 = arith.constant 0 : i32
    return %c0_i32, %arg1 : i32, i32
  }
  func.func @transform_3(%arg0: i32, %arg1: i32, %arg2: i32) -> (i32, i32) {
    %c0_i32 = arith.constant 0 : i32
    %c0_i32_0 = arith.constant 0 : i32
    return %c0_i32, %arg1 : i32, i32
  }
  func.func @transform_4(%arg0: i32, %arg1: i32, %arg2: i32) -> (i32, i32) {
    %c0_i32 = arith.constant 0 : i32
    return %arg0, %arg1 : i32, i32
  }
}

module attributes {stable_mosaic.version = 11 : i64} {
  func.func @_conv_mm_kernel(%arg0: i32, %arg1: i32, %arg2: i32, %arg3: memref<32x128xbf16, #tpu.memory_space<vmem>>, %arg4: memref<128x128xbf16, #tpu.memory_space<vmem>>, %arg5: memref<1x128xf32, #tpu.memory_space<vmem>>, %arg6: memref<1x128xf32, #tpu.memory_space<vmem>>, %arg7: memref<32x128xbf16, #tpu.memory_space<vmem>>, %arg8: memref<32x128xbf16, #tpu.memory_space<vmem>>, %arg9: memref<32x128xf32, #tpu.memory_space<vmem>>) attributes {dimension_semantics = [#tpu.dimension_semantics<parallel>, #tpu.dimension_semantics<parallel>, #tpu.dimension_semantics<arbitrary>], iteration_bounds = array<i64: 1, 1, 1>, scalar_prefetch = 0 : i64, scratch_operands = 1 : i64, tpu.core_type = #tpu.core_type<tc>, window_params = [{transform_indices = @transform_0, window_bounds = array<i64: 32, 128>}, {transform_indices = @transform_1, window_bounds = array<i64: 128, 128>}, {transform_indices = @transform_2, window_bounds = array<i64: 1, 128>}, {transform_indices = @transform_3, window_bounds = array<i64: 1, 128>}, {transform_indices = @transform_4, window_bounds = array<i64: 32, 128>}, {transform_indices = @transform_5, window_bounds = array<i64: 32, 128>}]} {
    %c0_i32 = arith.constant 0 : i32
    %0 = arith.cmpi eq, %arg2, %c0_i32 : i32
    %1 = arith.extui %0 : i1 to i32
    %c0_i32_0 = arith.constant 0 : i32
    %2 = arith.cmpi ne, %1, %c0_i32_0 : i32
    scf.if %2 {
      %cst_10 = arith.constant 0.000000e+00 : f32
      %12 = vector.broadcast %cst_10 : f32 to vector<32x128xf32>
      %c0_11 = arith.constant 0 : index
      %c0_12 = arith.constant 0 : index
      %13 = vector.load %arg9[%c0_11, %c0_12] : memref<32x128xf32, #tpu.memory_space<vmem>>, vector<32x128xf32>
      tpu.vector_store %arg9[%c0_11, %c0_12], %12 {strides = array<i32>} : memref<32x128xf32, #tpu.memory_space<vmem>>, vector<32x128xf32>,
    } else {
    }
    %c0 = arith.constant 0 : index
    %c0_1 = arith.constant 0 : index
    %3 = vector.load %arg9[%c0, %c0_1] : memref<32x128xf32, #tpu.memory_space<vmem>>, vector<32x128xf32>
    %c0_2 = arith.constant 0 : index
    %c0_3 = arith.constant 0 : index
    %4 = vector.load %arg3[%c0_2, %c0_3] : memref<32x128xbf16, #tpu.memory_space<vmem>>, vector<32x128xbf16>
    %c0_4 = arith.constant 0 : index
    %c0_5 = arith.constant 0 : index
    %5 = vector.load %arg4[%c0_4, %c0_5] : memref<128x128xbf16, #tpu.memory_space<vmem>>, vector<128x128xbf16>
    %cst = arith.constant dense<0.000000e+00> : vector<32x128xf32>
    %6 = tpu.matmul %4, %5, %cst {dimension_numbers = #tpu.dot_dimension_numbers<[1], [0], [0], [1], [0, 0, 1, 1], [], []>} : vector<32x128xbf16>, vector<128x128xbf16>, vector<32x128xf32> -> vector<32x128xf32>
    %7 = arith.addf %3, %6 : vector<32x128xf32>
    %c0_6 = arith.constant 0 : index
    %c0_7 = arith.constant 0 : index
    %8 = vector.load %arg9[%c0_6, %c0_7] : memref<32x128xf32, #tpu.memory_space<vmem>>, vector<32x128xf32>
    tpu.vector_store %arg9[%c0_6, %c0_7], %7 {strides = array<i32>} : memref<32x128xf32, #tpu.memory_space<vmem>>, vector<32x128xf32>,
    %c0_i32_8 = arith.constant 0 : i32
    %9 = arith.cmpi eq, %arg2, %c0_i32_8 : i32
    %10 = arith.extui %9 : i1 to i32
    %c0_i32_9 = arith.constant 0 : i32
    %11 = arith.cmpi ne, %10, %c0_i32_9 : i32
    scf.if %11 {
      %c0_10 = arith.constant 0 : index
      %c0_11 = arith.constant 0 : index
      %12 = vector.load %arg9[%c0_10, %c0_11] : memref<32x128xf32, #tpu.memory_space<vmem>>, vector<32x128xf32>
      %c0_12 = arith.constant 0 : index
      %c0_13 = arith.constant 0 : index
      %13 = vector.load %arg5[%c0_12, %c0_13] : memref<1x128xf32, #tpu.memory_space<vmem>>, vector<1x128xf32>
      %14 = vector.broadcast %13 : vector<1x128xf32> to vector<32x128xf32>
      %15 = arith.mulf %12, %14 : vector<32x128xf32>
      %c0_14 = arith.constant 0 : index
      %c0_15 = arith.constant 0 : index
      %16 = vector.load %arg6[%c0_14, %c0_15] : memref<1x128xf32, #tpu.memory_space<vmem>>, vector<1x128xf32>
      %17 = vector.broadcast %16 : vector<1x128xf32> to vector<32x128xf32>
      %18 = arith.addf %15, %17 : vector<32x128xf32>
      %c0_16 = arith.constant 0 : index
      %c0_17 = arith.constant 0 : index
      %19 = vector.load %arg7[%c0_16, %c0_17] : memref<32x128xbf16, #tpu.memory_space<vmem>>, vector<32x128xbf16>
      %20 = arith.extf %19 : vector<32x128xbf16> to vector<32x128xf32>
      %21 = arith.addf %18, %20 : vector<32x128xf32>
      %cst_18 = arith.constant 0.000000e+00 : f32
      %22 = vector.broadcast %cst_18 : f32 to vector<32x128xf32>
      %23 = arith.maximumf %21, %22 : vector<32x128xf32>
      %24 = arith.truncf %23 : vector<32x128xf32> to vector<32x128xbf16>
      %c0_19 = arith.constant 0 : index
      %c0_20 = arith.constant 0 : index
      %25 = vector.load %arg8[%c0_19, %c0_20] : memref<32x128xbf16, #tpu.memory_space<vmem>>, vector<32x128xbf16>
      tpu.vector_store %arg8[%c0_19, %c0_20], %24 {strides = array<i32>} : memref<32x128xbf16, #tpu.memory_space<vmem>>, vector<32x128xbf16>,
    } else {
    }
    return
  }
  func.func @transform_0(%arg0: i32, %arg1: i32, %arg2: i32) -> (i32, i32) {
    %c0_i32 = arith.constant 0 : i32
    return %arg0, %arg2 : i32, i32
  }
  func.func @transform_1(%arg0: i32, %arg1: i32, %arg2: i32) -> (i32, i32) {
    %c0_i32 = arith.constant 0 : i32
    return %arg2, %arg1 : i32, i32
  }
  func.func @transform_2(%arg0: i32, %arg1: i32, %arg2: i32) -> (i32, i32) {
    %c0_i32 = arith.constant 0 : i32
    %c0_i32_0 = arith.constant 0 : i32
    return %c0_i32, %arg1 : i32, i32
  }
  func.func @transform_3(%arg0: i32, %arg1: i32, %arg2: i32) -> (i32, i32) {
    %c0_i32 = arith.constant 0 : i32
    %c0_i32_0 = arith.constant 0 : i32
    return %c0_i32, %arg1 : i32, i32
  }
  func.func @transform_4(%arg0: i32, %arg1: i32, %arg2: i32) -> (i32, i32) {
    %c0_i32 = arith.constant 0 : i32
    return %arg0, %arg1 : i32, i32
  }
  func.func @transform_5(%arg0: i32, %arg1: i32, %arg2: i32) -> (i32, i32) {
    %c0_i32 = arith.constant 0 : i32
    return %arg0, %arg1 : i32, i32
  }
}

module attributes {stable_mosaic.version = 11 : i64} {
  func.func @_conv_mm_kernel(%arg0: i32, %arg1: i32, %arg2: i32, %arg3: memref<32x128xbf16, #tpu.memory_space<vmem>>, %arg4: memref<128x128xbf16, #tpu.memory_space<vmem>>, %arg5: memref<1x128xf32, #tpu.memory_space<vmem>>, %arg6: memref<1x128xf32, #tpu.memory_space<vmem>>, %arg7: memref<32x128xbf16, #tpu.memory_space<vmem>>, %arg8: memref<32x128xf32, #tpu.memory_space<vmem>>) attributes {dimension_semantics = [#tpu.dimension_semantics<parallel>, #tpu.dimension_semantics<parallel>, #tpu.dimension_semantics<arbitrary>], iteration_bounds = array<i64: 1, 1, 1>, scalar_prefetch = 0 : i64, scratch_operands = 1 : i64, tpu.core_type = #tpu.core_type<tc>, window_params = [{transform_indices = @transform_0, window_bounds = array<i64: 32, 128>}, {transform_indices = @transform_1, window_bounds = array<i64: 128, 128>}, {transform_indices = @transform_2, window_bounds = array<i64: 1, 128>}, {transform_indices = @transform_3, window_bounds = array<i64: 1, 128>}, {transform_indices = @transform_4, window_bounds = array<i64: 32, 128>}]} {
    %c0_i32 = arith.constant 0 : i32
    %0 = arith.cmpi eq, %arg2, %c0_i32 : i32
    %1 = arith.extui %0 : i1 to i32
    %c0_i32_0 = arith.constant 0 : i32
    %2 = arith.cmpi ne, %1, %c0_i32_0 : i32
    scf.if %2 {
      %cst_10 = arith.constant 0.000000e+00 : f32
      %12 = vector.broadcast %cst_10 : f32 to vector<32x128xf32>
      %c0_11 = arith.constant 0 : index
      %c0_12 = arith.constant 0 : index
      %13 = vector.load %arg8[%c0_11, %c0_12] : memref<32x128xf32, #tpu.memory_space<vmem>>, vector<32x128xf32>
      tpu.vector_store %arg8[%c0_11, %c0_12], %12 {strides = array<i32>} : memref<32x128xf32, #tpu.memory_space<vmem>>, vector<32x128xf32>,
    } else {
    }
    %c0 = arith.constant 0 : index
    %c0_1 = arith.constant 0 : index
    %3 = vector.load %arg8[%c0, %c0_1] : memref<32x128xf32, #tpu.memory_space<vmem>>, vector<32x128xf32>
    %c0_2 = arith.constant 0 : index
    %c0_3 = arith.constant 0 : index
    %4 = vector.load %arg3[%c0_2, %c0_3] : memref<32x128xbf16, #tpu.memory_space<vmem>>, vector<32x128xbf16>
    %c0_4 = arith.constant 0 : index
    %c0_5 = arith.constant 0 : index
    %5 = vector.load %arg4[%c0_4, %c0_5] : memref<128x128xbf16, #tpu.memory_space<vmem>>, vector<128x128xbf16>
    %cst = arith.constant dense<0.000000e+00> : vector<32x128xf32>
    %6 = tpu.matmul %4, %5, %cst {dimension_numbers = #tpu.dot_dimension_numbers<[1], [0], [0], [1], [0, 0, 1, 1], [], []>} : vector<32x128xbf16>, vector<128x128xbf16>, vector<32x128xf32> -> vector<32x128xf32>
    %7 = arith.addf %3, %6 : vector<32x128xf32>
    %c0_6 = arith.constant 0 : index
    %c0_7 = arith.constant 0 : index
    %8 = vector.load %arg8[%c0_6, %c0_7] : memref<32x128xf32, #tpu.memory_space<vmem>>, vector<32x128xf32>
    tpu.vector_store %arg8[%c0_6, %c0_7], %7 {strides = array<i32>} : memref<32x128xf32, #tpu.memory_space<vmem>>, vector<32x128xf32>,
    %c0_i32_8 = arith.constant 0 : i32
    %9 = arith.cmpi eq, %arg2, %c0_i32_8 : i32
    %10 = arith.extui %9 : i1 to i32
    %c0_i32_9 = arith.constant 0 : i32
    %11 = arith.cmpi ne, %10, %c0_i32_9 : i32
    scf.if %11 {
      %c0_10 = arith.constant 0 : index
      %c0_11 = arith.constant 0 : index
      %12 = vector.load %arg8[%c0_10, %c0_11] : memref<32x128xf32, #tpu.memory_space<vmem>>, vector<32x128xf32>
      %c0_12 = arith.constant 0 : index
      %c0_13 = arith.constant 0 : index
      %13 = vector.load %arg5[%c0_12, %c0_13] : memref<1x128xf32, #tpu.memory_space<vmem>>, vector<1x128xf32>
      %14 = vector.broadcast %13 : vector<1x128xf32> to vector<32x128xf32>
      %15 = arith.mulf %12, %14 : vector<32x128xf32>
      %c0_14 = arith.constant 0 : index
      %c0_15 = arith.constant 0 : index
      %16 = vector.load %arg6[%c0_14, %c0_15] : memref<1x128xf32, #tpu.memory_space<vmem>>, vector<1x128xf32>
      %17 = vector.broadcast %16 : vector<1x128xf32> to vector<32x128xf32>
      %18 = arith.addf %15, %17 : vector<32x128xf32>
      %cst_16 = arith.constant 0.000000e+00 : f32
      %19 = vector.broadcast %cst_16 : f32 to vector<32x128xf32>
      %20 = arith.maximumf %18, %19 : vector<32x128xf32>
      %21 = arith.truncf %20 : vector<32x128xf32> to vector<32x128xbf16>
      %c0_17 = arith.constant 0 : index
      %c0_18 = arith.constant 0 : index
      %22 = vector.load %arg7[%c0_17, %c0_18] : memref<32x128xbf16, #tpu.memory_space<vmem>>, vector<32x128xbf16>
      tpu.vector_store %arg7[%c0_17, %c0_18], %21 {strides = array<i32>} : memref<32x128xbf16, #tpu.memory_space<vmem>>, vector<32x128xbf16>,
    } else {
    }
    return
  }
  func.func @transform_0(%arg0: i32, %arg1: i32, %arg2: i32) -> (i32, i32) {
    %c0_i32 = arith.constant 0 : i32
    return %arg0, %arg2 : i32, i32
  }
  func.func @transform_1(%arg0: i32, %arg1: i32, %arg2: i32) -> (i32, i32) {
    %c0_i32 = arith.constant 0 : i32
    return %arg2, %arg1 : i32, i32
  }
  func.func @transform_2(%arg0: i32, %arg1: i32, %arg2: i32) -> (i32, i32) {
    %c0_i32 = arith.constant 0 : i32
    %c0_i32_0 = arith.constant 0 : i32
    return %c0_i32, %arg1 : i32, i32
  }
  func.func @transform_3(%arg0: i32, %arg1: i32, %arg2: i32) -> (i32, i32) {
    %c0_i32 = arith.constant 0 : i32
    %c0_i32_0 = arith.constant 0 : i32
    return %c0_i32, %arg1 : i32, i32
  }
  func.func @transform_4(%arg0: i32, %arg1: i32, %arg2: i32) -> (i32, i32) {
    %c0_i32 = arith.constant 0 : i32
    return %arg0, %arg1 : i32, i32
  }
}

module attributes {stable_mosaic.version = 11 : i64} {
  func.func @_conv_mm_kernel(%arg0: i32, %arg1: i32, %arg2: i32, %arg3: memref<8x384xbf16, #tpu.memory_space<vmem>>, %arg4: memref<384x128xbf16, #tpu.memory_space<vmem>>, %arg5: memref<1x128xf32, #tpu.memory_space<vmem>>, %arg6: memref<1x128xf32, #tpu.memory_space<vmem>>, %arg7: memref<8x128xbf16, #tpu.memory_space<vmem>>, %arg8: memref<8x128xf32, #tpu.memory_space<vmem>>) attributes {dimension_semantics = [#tpu.dimension_semantics<parallel>, #tpu.dimension_semantics<parallel>, #tpu.dimension_semantics<arbitrary>], iteration_bounds = array<i64: 1, 1, 3>, scalar_prefetch = 0 : i64, scratch_operands = 1 : i64, tpu.core_type = #tpu.core_type<tc>, window_params = [{transform_indices = @transform_0, window_bounds = array<i64: 8, 384>}, {transform_indices = @transform_1, window_bounds = array<i64: 384, 128>}, {transform_indices = @transform_2, window_bounds = array<i64: 1, 128>}, {transform_indices = @transform_3, window_bounds = array<i64: 1, 128>}, {transform_indices = @transform_4, window_bounds = array<i64: 8, 128>}]} {
    %c0_i32 = arith.constant 0 : i32
    %0 = arith.cmpi eq, %arg2, %c0_i32 : i32
    %1 = arith.extui %0 : i1 to i32
    %c0_i32_0 = arith.constant 0 : i32
    %2 = arith.cmpi ne, %1, %c0_i32_0 : i32
    scf.if %2 {
      %cst_9 = arith.constant 0.000000e+00 : f32
      %12 = vector.broadcast %cst_9 : f32 to vector<8x128xf32>
      %c0_10 = arith.constant 0 : index
      %c0_11 = arith.constant 0 : index
      %13 = vector.load %arg8[%c0_10, %c0_11] : memref<8x128xf32, #tpu.memory_space<vmem>>, vector<8x128xf32>
      tpu.vector_store %arg8[%c0_10, %c0_11], %12 {strides = array<i32>} : memref<8x128xf32, #tpu.memory_space<vmem>>, vector<8x128xf32>,
    } else {
    }
    %c0 = arith.constant 0 : index
    %c0_1 = arith.constant 0 : index
    %3 = vector.load %arg8[%c0, %c0_1] : memref<8x128xf32, #tpu.memory_space<vmem>>, vector<8x128xf32>
    %c0_2 = arith.constant 0 : index
    %c0_3 = arith.constant 0 : index
    %4 = vector.load %arg3[%c0_2, %c0_3] : memref<8x384xbf16, #tpu.memory_space<vmem>>, vector<8x384xbf16>
    %c0_4 = arith.constant 0 : index
    %c0_5 = arith.constant 0 : index
    %5 = vector.load %arg4[%c0_4, %c0_5] : memref<384x128xbf16, #tpu.memory_space<vmem>>, vector<384x128xbf16>
    %cst = arith.constant dense<0.000000e+00> : vector<8x128xf32>
    %6 = tpu.matmul %4, %5, %cst {dimension_numbers = #tpu.dot_dimension_numbers<[1], [0], [0], [1], [0, 0, 1, 1], [], []>} : vector<8x384xbf16>, vector<384x128xbf16>, vector<8x128xf32> -> vector<8x128xf32>
    %7 = arith.addf %3, %6 : vector<8x128xf32>
    %c0_6 = arith.constant 0 : index
    %c0_7 = arith.constant 0 : index
    %8 = vector.load %arg8[%c0_6, %c0_7] : memref<8x128xf32, #tpu.memory_space<vmem>>, vector<8x128xf32>
    tpu.vector_store %arg8[%c0_6, %c0_7], %7 {strides = array<i32>} : memref<8x128xf32, #tpu.memory_space<vmem>>, vector<8x128xf32>,
    %c2_i32 = arith.constant 2 : i32
    %9 = arith.cmpi eq, %arg2, %c2_i32 : i32
    %10 = arith.extui %9 : i1 to i32
    %c0_i32_8 = arith.constant 0 : i32
    %11 = arith.cmpi ne, %10, %c0_i32_8 : i32
    scf.if %11 {
      %c0_9 = arith.constant 0 : index
      %c0_10 = arith.constant 0 : index
      %12 = vector.load %arg8[%c0_9, %c0_10] : memref<8x128xf32, #tpu.memory_space<vmem>>, vector<8x128xf32>
      %c0_11 = arith.constant 0 : index
      %c0_12 = arith.constant 0 : index
      %13 = vector.load %arg5[%c0_11, %c0_12] : memref<1x128xf32, #tpu.memory_space<vmem>>, vector<1x128xf32>
      %14 = vector.broadcast %13 : vector<1x128xf32> to vector<8x128xf32>
      %15 = arith.mulf %12, %14 : vector<8x128xf32>
      %c0_13 = arith.constant 0 : index
      %c0_14 = arith.constant 0 : index
      %16 = vector.load %arg6[%c0_13, %c0_14] : memref<1x128xf32, #tpu.memory_space<vmem>>, vector<1x128xf32>
      %17 = vector.broadcast %16 : vector<1x128xf32> to vector<8x128xf32>
      %18 = arith.addf %15, %17 : vector<8x128xf32>
      %cst_15 = arith.constant 0.000000e+00 : f32
      %19 = vector.broadcast %cst_15 : f32 to vector<8x128xf32>
      %20 = arith.maximumf %18, %19 : vector<8x128xf32>
      %21 = arith.truncf %20 : vector<8x128xf32> to vector<8x128xbf16>
      %c0_16 = arith.constant 0 : index
      %c0_17 = arith.constant 0 : index
      %22 = vector.load %arg7[%c0_16, %c0_17] : memref<8x128xbf16, #tpu.memory_space<vmem>>, vector<8x128xbf16>
      tpu.vector_store %arg7[%c0_16, %c0_17], %21 {strides = array<i32>} : memref<8x128xbf16, #tpu.memory_space<vmem>>, vector<8x128xbf16>,
    } else {
    }
    return
  }
  func.func @transform_0(%arg0: i32, %arg1: i32, %arg2: i32) -> (i32, i32) {
    %c0_i32 = arith.constant 0 : i32
    return %arg0, %arg2 : i32, i32
  }
  func.func @transform_1(%arg0: i32, %arg1: i32, %arg2: i32) -> (i32, i32) {
    %c0_i32 = arith.constant 0 : i32
    return %arg2, %arg1 : i32, i32
  }
  func.func @transform_2(%arg0: i32, %arg1: i32, %arg2: i32) -> (i32, i32) {
    %c0_i32 = arith.constant 0 : i32
    %c0_i32_0 = arith.constant 0 : i32
    return %c0_i32, %arg1 : i32, i32
  }
  func.func @transform_3(%arg0: i32, %arg1: i32, %arg2: i32) -> (i32, i32) {
    %c0_i32 = arith.constant 0 : i32
    %c0_i32_0 = arith.constant 0 : i32
    return %c0_i32, %arg1 : i32, i32
  }
  func.func @transform_4(%arg0: i32, %arg1: i32, %arg2: i32) -> (i32, i32) {
    %c0_i32 = arith.constant 0 : i32
    return %arg0, %arg1 : i32, i32
  }
}

module attributes {stable_mosaic.version = 11 : i64} {
  func.func @_conv_mm_kernel(%arg0: i32, %arg1: i32, %arg2: i32, %arg3: memref<8x128xbf16, #tpu.memory_space<vmem>>, %arg4: memref<128x128xbf16, #tpu.memory_space<vmem>>, %arg5: memref<1x128xf32, #tpu.memory_space<vmem>>, %arg6: memref<1x128xf32, #tpu.memory_space<vmem>>, %arg7: memref<8x128xbf16, #tpu.memory_space<vmem>>, %arg8: memref<8x128xf32, #tpu.memory_space<vmem>>) attributes {dimension_semantics = [#tpu.dimension_semantics<parallel>, #tpu.dimension_semantics<parallel>, #tpu.dimension_semantics<arbitrary>], iteration_bounds = array<i64: 1, 1, 1>, scalar_prefetch = 0 : i64, scratch_operands = 1 : i64, tpu.core_type = #tpu.core_type<tc>, window_params = [{transform_indices = @transform_0, window_bounds = array<i64: 8, 128>}, {transform_indices = @transform_1, window_bounds = array<i64: 128, 128>}, {transform_indices = @transform_2, window_bounds = array<i64: 1, 128>}, {transform_indices = @transform_3, window_bounds = array<i64: 1, 128>}, {transform_indices = @transform_4, window_bounds = array<i64: 8, 128>}]} {
    %c0_i32 = arith.constant 0 : i32
    %0 = arith.cmpi eq, %arg2, %c0_i32 : i32
    %1 = arith.extui %0 : i1 to i32
    %c0_i32_0 = arith.constant 0 : i32
    %2 = arith.cmpi ne, %1, %c0_i32_0 : i32
    scf.if %2 {
      %cst_10 = arith.constant 0.000000e+00 : f32
      %12 = vector.broadcast %cst_10 : f32 to vector<8x128xf32>
      %c0_11 = arith.constant 0 : index
      %c0_12 = arith.constant 0 : index
      %13 = vector.load %arg8[%c0_11, %c0_12] : memref<8x128xf32, #tpu.memory_space<vmem>>, vector<8x128xf32>
      tpu.vector_store %arg8[%c0_11, %c0_12], %12 {strides = array<i32>} : memref<8x128xf32, #tpu.memory_space<vmem>>, vector<8x128xf32>,
    } else {
    }
    %c0 = arith.constant 0 : index
    %c0_1 = arith.constant 0 : index
    %3 = vector.load %arg8[%c0, %c0_1] : memref<8x128xf32, #tpu.memory_space<vmem>>, vector<8x128xf32>
    %c0_2 = arith.constant 0 : index
    %c0_3 = arith.constant 0 : index
    %4 = vector.load %arg3[%c0_2, %c0_3] : memref<8x128xbf16, #tpu.memory_space<vmem>>, vector<8x128xbf16>
    %c0_4 = arith.constant 0 : index
    %c0_5 = arith.constant 0 : index
    %5 = vector.load %arg4[%c0_4, %c0_5] : memref<128x128xbf16, #tpu.memory_space<vmem>>, vector<128x128xbf16>
    %cst = arith.constant dense<0.000000e+00> : vector<8x128xf32>
    %6 = tpu.matmul %4, %5, %cst {dimension_numbers = #tpu.dot_dimension_numbers<[1], [0], [0], [1], [0, 0, 1, 1], [], []>} : vector<8x128xbf16>, vector<128x128xbf16>, vector<8x128xf32> -> vector<8x128xf32>
    %7 = arith.addf %3, %6 : vector<8x128xf32>
    %c0_6 = arith.constant 0 : index
    %c0_7 = arith.constant 0 : index
    %8 = vector.load %arg8[%c0_6, %c0_7] : memref<8x128xf32, #tpu.memory_space<vmem>>, vector<8x128xf32>
    tpu.vector_store %arg8[%c0_6, %c0_7], %7 {strides = array<i32>} : memref<8x128xf32, #tpu.memory_space<vmem>>, vector<8x128xf32>,
    %c0_i32_8 = arith.constant 0 : i32
    %9 = arith.cmpi eq, %arg2, %c0_i32_8 : i32
    %10 = arith.extui %9 : i1 to i32
    %c0_i32_9 = arith.constant 0 : i32
    %11 = arith.cmpi ne, %10, %c0_i32_9 : i32
    scf.if %11 {
      %c0_10 = arith.constant 0 : index
      %c0_11 = arith.constant 0 : index
      %12 = vector.load %arg8[%c0_10, %c0_11] : memref<8x128xf32, #tpu.memory_space<vmem>>, vector<8x128xf32>
      %c0_12 = arith.constant 0 : index
      %c0_13 = arith.constant 0 : index
      %13 = vector.load %arg5[%c0_12, %c0_13] : memref<1x128xf32, #tpu.memory_space<vmem>>, vector<1x128xf32>
      %14 = vector.broadcast %13 : vector<1x128xf32> to vector<8x128xf32>
      %15 = arith.mulf %12, %14 : vector<8x128xf32>
      %c0_14 = arith.constant 0 : index
      %c0_15 = arith.constant 0 : index
      %16 = vector.load %arg6[%c0_14, %c0_15] : memref<1x128xf32, #tpu.memory_space<vmem>>, vector<1x128xf32>
      %17 = vector.broadcast %16 : vector<1x128xf32> to vector<8x128xf32>
      %18 = arith.addf %15, %17 : vector<8x128xf32>
      %19 = arith.truncf %18 : vector<8x128xf32> to vector<8x128xbf16>
      %c0_16 = arith.constant 0 : index
      %c0_17 = arith.constant 0 : index
      %20 = vector.load %arg7[%c0_16, %c0_17] : memref<8x128xbf16, #tpu.memory_space<vmem>>, vector<8x128xbf16>
      tpu.vector_store %arg7[%c0_16, %c0_17], %19 {strides = array<i32>} : memref<8x128xbf16, #tpu.memory_space<vmem>>, vector<8x128xbf16>,
    } else {
    }
    return
  }
  func.func @transform_0(%arg0: i32, %arg1: i32, %arg2: i32) -> (i32, i32) {
    %c0_i32 = arith.constant 0 : i32
    return %arg0, %arg2 : i32, i32
  }
  func.func @transform_1(%arg0: i32, %arg1: i32, %arg2: i32) -> (i32, i32) {
    %c0_i32 = arith.constant 0 : i32
    return %arg2, %arg1 : i32, i32
  }
  func.func @transform_2(%arg0: i32, %arg1: i32, %arg2: i32) -> (i32, i32) {
    %c0_i32 = arith.constant 0 : i32
    %c0_i32_0 = arith.constant 0 : i32
    return %c0_i32, %arg1 : i32, i32
  }
  func.func @transform_3(%arg0: i32, %arg1: i32, %arg2: i32) -> (i32, i32) {
    %c0_i32 = arith.constant 0 : i32
    %c0_i32_0 = arith.constant 0 : i32
    return %c0_i32, %arg1 : i32, i32
  }
  func.func @transform_4(%arg0: i32, %arg1: i32, %arg2: i32) -> (i32, i32) {
    %c0_i32 = arith.constant 0 : i32
    return %arg0, %arg1 : i32, i32
  }
}

module attributes {stable_mosaic.version = 11 : i64} {
  func.func @_conv_mm_kernel(%arg0: i32, %arg1: i32, %arg2: i32, %arg3: memref<8x128xbf16, #tpu.memory_space<vmem>>, %arg4: memref<128x128xbf16, #tpu.memory_space<vmem>>, %arg5: memref<1x128xf32, #tpu.memory_space<vmem>>, %arg6: memref<1x128xf32, #tpu.memory_space<vmem>>, %arg7: memref<8x128xbf16, #tpu.memory_space<vmem>>, %arg8: memref<8x128xbf16, #tpu.memory_space<vmem>>, %arg9: memref<8x128xf32, #tpu.memory_space<vmem>>) attributes {dimension_semantics = [#tpu.dimension_semantics<parallel>, #tpu.dimension_semantics<parallel>, #tpu.dimension_semantics<arbitrary>], iteration_bounds = array<i64: 1, 1, 1>, scalar_prefetch = 0 : i64, scratch_operands = 1 : i64, tpu.core_type = #tpu.core_type<tc>, window_params = [{transform_indices = @transform_0, window_bounds = array<i64: 8, 128>}, {transform_indices = @transform_1, window_bounds = array<i64: 128, 128>}, {transform_indices = @transform_2, window_bounds = array<i64: 1, 128>}, {transform_indices = @transform_3, window_bounds = array<i64: 1, 128>}, {transform_indices = @transform_4, window_bounds = array<i64: 8, 128>}, {transform_indices = @transform_5, window_bounds = array<i64: 8, 128>}]} {
    %c0_i32 = arith.constant 0 : i32
    %0 = arith.cmpi eq, %arg2, %c0_i32 : i32
    %1 = arith.extui %0 : i1 to i32
    %c0_i32_0 = arith.constant 0 : i32
    %2 = arith.cmpi ne, %1, %c0_i32_0 : i32
    scf.if %2 {
      %cst_10 = arith.constant 0.000000e+00 : f32
      %12 = vector.broadcast %cst_10 : f32 to vector<8x128xf32>
      %c0_11 = arith.constant 0 : index
      %c0_12 = arith.constant 0 : index
      %13 = vector.load %arg9[%c0_11, %c0_12] : memref<8x128xf32, #tpu.memory_space<vmem>>, vector<8x128xf32>
      tpu.vector_store %arg9[%c0_11, %c0_12], %12 {strides = array<i32>} : memref<8x128xf32, #tpu.memory_space<vmem>>, vector<8x128xf32>,
    } else {
    }
    %c0 = arith.constant 0 : index
    %c0_1 = arith.constant 0 : index
    %3 = vector.load %arg9[%c0, %c0_1] : memref<8x128xf32, #tpu.memory_space<vmem>>, vector<8x128xf32>
    %c0_2 = arith.constant 0 : index
    %c0_3 = arith.constant 0 : index
    %4 = vector.load %arg3[%c0_2, %c0_3] : memref<8x128xbf16, #tpu.memory_space<vmem>>, vector<8x128xbf16>
    %c0_4 = arith.constant 0 : index
    %c0_5 = arith.constant 0 : index
    %5 = vector.load %arg4[%c0_4, %c0_5] : memref<128x128xbf16, #tpu.memory_space<vmem>>, vector<128x128xbf16>
    %cst = arith.constant dense<0.000000e+00> : vector<8x128xf32>
    %6 = tpu.matmul %4, %5, %cst {dimension_numbers = #tpu.dot_dimension_numbers<[1], [0], [0], [1], [0, 0, 1, 1], [], []>} : vector<8x128xbf16>, vector<128x128xbf16>, vector<8x128xf32> -> vector<8x128xf32>
    %7 = arith.addf %3, %6 : vector<8x128xf32>
    %c0_6 = arith.constant 0 : index
    %c0_7 = arith.constant 0 : index
    %8 = vector.load %arg9[%c0_6, %c0_7] : memref<8x128xf32, #tpu.memory_space<vmem>>, vector<8x128xf32>
    tpu.vector_store %arg9[%c0_6, %c0_7], %7 {strides = array<i32>} : memref<8x128xf32, #tpu.memory_space<vmem>>, vector<8x128xf32>,
    %c0_i32_8 = arith.constant 0 : i32
    %9 = arith.cmpi eq, %arg2, %c0_i32_8 : i32
    %10 = arith.extui %9 : i1 to i32
    %c0_i32_9 = arith.constant 0 : i32
    %11 = arith.cmpi ne, %10, %c0_i32_9 : i32
    scf.if %11 {
      %c0_10 = arith.constant 0 : index
      %c0_11 = arith.constant 0 : index
      %12 = vector.load %arg9[%c0_10, %c0_11] : memref<8x128xf32, #tpu.memory_space<vmem>>, vector<8x128xf32>
      %c0_12 = arith.constant 0 : index
      %c0_13 = arith.constant 0 : index
      %13 = vector.load %arg5[%c0_12, %c0_13] : memref<1x128xf32, #tpu.memory_space<vmem>>, vector<1x128xf32>
      %14 = vector.broadcast %13 : vector<1x128xf32> to vector<8x128xf32>
      %15 = arith.mulf %12, %14 : vector<8x128xf32>
      %c0_14 = arith.constant 0 : index
      %c0_15 = arith.constant 0 : index
      %16 = vector.load %arg6[%c0_14, %c0_15] : memref<1x128xf32, #tpu.memory_space<vmem>>, vector<1x128xf32>
      %17 = vector.broadcast %16 : vector<1x128xf32> to vector<8x128xf32>
      %18 = arith.addf %15, %17 : vector<8x128xf32>
      %c0_16 = arith.constant 0 : index
      %c0_17 = arith.constant 0 : index
      %19 = vector.load %arg7[%c0_16, %c0_17] : memref<8x128xbf16, #tpu.memory_space<vmem>>, vector<8x128xbf16>
      %20 = arith.extf %19 : vector<8x128xbf16> to vector<8x128xf32>
      %21 = arith.addf %18, %20 : vector<8x128xf32>
      %cst_18 = arith.constant 0.000000e+00 : f32
      %22 = vector.broadcast %cst_18 : f32 to vector<8x128xf32>
      %23 = arith.maximumf %21, %22 : vector<8x128xf32>
      %24 = arith.truncf %23 : vector<8x128xf32> to vector<8x128xbf16>
      %c0_19 = arith.constant 0 : index
      %c0_20 = arith.constant 0 : index
      %25 = vector.load %arg8[%c0_19, %c0_20] : memref<8x128xbf16, #tpu.memory_space<vmem>>, vector<8x128xbf16>
      tpu.vector_store %arg8[%c0_19, %c0_20], %24 {strides = array<i32>} : memref<8x128xbf16, #tpu.memory_space<vmem>>, vector<8x128xbf16>,
    } else {
    }
    return
  }
  func.func @transform_0(%arg0: i32, %arg1: i32, %arg2: i32) -> (i32, i32) {
    %c0_i32 = arith.constant 0 : i32
    return %arg0, %arg2 : i32, i32
  }
  func.func @transform_1(%arg0: i32, %arg1: i32, %arg2: i32) -> (i32, i32) {
    %c0_i32 = arith.constant 0 : i32
    return %arg2, %arg1 : i32, i32
  }
  func.func @transform_2(%arg0: i32, %arg1: i32, %arg2: i32) -> (i32, i32) {
    %c0_i32 = arith.constant 0 : i32
    %c0_i32_0 = arith.constant 0 : i32
    return %c0_i32, %arg1 : i32, i32
  }
  func.func @transform_3(%arg0: i32, %arg1: i32, %arg2: i32) -> (i32, i32) {
    %c0_i32 = arith.constant 0 : i32
    %c0_i32_0 = arith.constant 0 : i32
    return %c0_i32, %arg1 : i32, i32
  }
  func.func @transform_4(%arg0: i32, %arg1: i32, %arg2: i32) -> (i32, i32) {
    %c0_i32 = arith.constant 0 : i32
    return %arg0, %arg1 : i32, i32
  }
  func.func @transform_5(%arg0: i32, %arg1: i32, %arg2: i32) -> (i32, i32) {
    %c0_i32 = arith.constant 0 : i32
    return %arg0, %arg1 : i32, i32
  }
}

module attributes {stable_mosaic.version = 11 : i64} {
  func.func @_conv_mm_kernel(%arg0: i32, %arg1: i32, %arg2: i32, %arg3: memref<8x128xbf16, #tpu.memory_space<vmem>>, %arg4: memref<128x128xbf16, #tpu.memory_space<vmem>>, %arg5: memref<1x128xf32, #tpu.memory_space<vmem>>, %arg6: memref<1x128xf32, #tpu.memory_space<vmem>>, %arg7: memref<8x128xbf16, #tpu.memory_space<vmem>>, %arg8: memref<8x128xf32, #tpu.memory_space<vmem>>) attributes {dimension_semantics = [#tpu.dimension_semantics<parallel>, #tpu.dimension_semantics<parallel>, #tpu.dimension_semantics<arbitrary>], iteration_bounds = array<i64: 1, 1, 1>, scalar_prefetch = 0 : i64, scratch_operands = 1 : i64, tpu.core_type = #tpu.core_type<tc>, window_params = [{transform_indices = @transform_0, window_bounds = array<i64: 8, 128>}, {transform_indices = @transform_1, window_bounds = array<i64: 128, 128>}, {transform_indices = @transform_2, window_bounds = array<i64: 1, 128>}, {transform_indices = @transform_3, window_bounds = array<i64: 1, 128>}, {transform_indices = @transform_4, window_bounds = array<i64: 8, 128>}]} {
    %c0_i32 = arith.constant 0 : i32
    %0 = arith.cmpi eq, %arg2, %c0_i32 : i32
    %1 = arith.extui %0 : i1 to i32
    %c0_i32_0 = arith.constant 0 : i32
    %2 = arith.cmpi ne, %1, %c0_i32_0 : i32
    scf.if %2 {
      %cst_10 = arith.constant 0.000000e+00 : f32
      %12 = vector.broadcast %cst_10 : f32 to vector<8x128xf32>
      %c0_11 = arith.constant 0 : index
      %c0_12 = arith.constant 0 : index
      %13 = vector.load %arg8[%c0_11, %c0_12] : memref<8x128xf32, #tpu.memory_space<vmem>>, vector<8x128xf32>
      tpu.vector_store %arg8[%c0_11, %c0_12], %12 {strides = array<i32>} : memref<8x128xf32, #tpu.memory_space<vmem>>, vector<8x128xf32>,
    } else {
    }
    %c0 = arith.constant 0 : index
    %c0_1 = arith.constant 0 : index
    %3 = vector.load %arg8[%c0, %c0_1] : memref<8x128xf32, #tpu.memory_space<vmem>>, vector<8x128xf32>
    %c0_2 = arith.constant 0 : index
    %c0_3 = arith.constant 0 : index
    %4 = vector.load %arg3[%c0_2, %c0_3] : memref<8x128xbf16, #tpu.memory_space<vmem>>, vector<8x128xbf16>
    %c0_4 = arith.constant 0 : index
    %c0_5 = arith.constant 0 : index
    %5 = vector.load %arg4[%c0_4, %c0_5] : memref<128x128xbf16, #tpu.memory_space<vmem>>, vector<128x128xbf16>
    %cst = arith.constant dense<0.000000e+00> : vector<8x128xf32>
    %6 = tpu.matmul %4, %5, %cst {dimension_numbers = #tpu.dot_dimension_numbers<[1], [0], [0], [1], [0, 0, 1, 1], [], []>} : vector<8x128xbf16>, vector<128x128xbf16>, vector<8x128xf32> -> vector<8x128xf32>
    %7 = arith.addf %3, %6 : vector<8x128xf32>
    %c0_6 = arith.constant 0 : index
    %c0_7 = arith.constant 0 : index
    %8 = vector.load %arg8[%c0_6, %c0_7] : memref<8x128xf32, #tpu.memory_space<vmem>>, vector<8x128xf32>
    tpu.vector_store %arg8[%c0_6, %c0_7], %7 {strides = array<i32>} : memref<8x128xf32, #tpu.memory_space<vmem>>, vector<8x128xf32>,
    %c0_i32_8 = arith.constant 0 : i32
    %9 = arith.cmpi eq, %arg2, %c0_i32_8 : i32
    %10 = arith.extui %9 : i1 to i32
    %c0_i32_9 = arith.constant 0 : i32
    %11 = arith.cmpi ne, %10, %c0_i32_9 : i32
    scf.if %11 {
      %c0_10 = arith.constant 0 : index
      %c0_11 = arith.constant 0 : index
      %12 = vector.load %arg8[%c0_10, %c0_11] : memref<8x128xf32, #tpu.memory_space<vmem>>, vector<8x128xf32>
      %c0_12 = arith.constant 0 : index
      %c0_13 = arith.constant 0 : index
      %13 = vector.load %arg5[%c0_12, %c0_13] : memref<1x128xf32, #tpu.memory_space<vmem>>, vector<1x128xf32>
      %14 = vector.broadcast %13 : vector<1x128xf32> to vector<8x128xf32>
      %15 = arith.mulf %12, %14 : vector<8x128xf32>
      %c0_14 = arith.constant 0 : index
      %c0_15 = arith.constant 0 : index
      %16 = vector.load %arg6[%c0_14, %c0_15] : memref<1x128xf32, #tpu.memory_space<vmem>>, vector<1x128xf32>
      %17 = vector.broadcast %16 : vector<1x128xf32> to vector<8x128xf32>
      %18 = arith.addf %15, %17 : vector<8x128xf32>
      %cst_16 = arith.constant 0.000000e+00 : f32
      %19 = vector.broadcast %cst_16 : f32 to vector<8x128xf32>
      %20 = arith.maximumf %18, %19 : vector<8x128xf32>
      %21 = arith.truncf %20 : vector<8x128xf32> to vector<8x128xbf16>
      %c0_17 = arith.constant 0 : index
      %c0_18 = arith.constant 0 : index
      %22 = vector.load %arg7[%c0_17, %c0_18] : memref<8x128xbf16, #tpu.memory_space<vmem>>, vector<8x128xbf16>
      tpu.vector_store %arg7[%c0_17, %c0_18], %21 {strides = array<i32>} : memref<8x128xbf16, #tpu.memory_space<vmem>>, vector<8x128xbf16>,
    } else {
    }
    return
  }
  func.func @transform_0(%arg0: i32, %arg1: i32, %arg2: i32) -> (i32, i32) {
    %c0_i32 = arith.constant 0 : i32
    return %arg0, %arg2 : i32, i32
  }
  func.func @transform_1(%arg0: i32, %arg1: i32, %arg2: i32) -> (i32, i32) {
    %c0_i32 = arith.constant 0 : i32
    return %arg2, %arg1 : i32, i32
  }
  func.func @transform_2(%arg0: i32, %arg1: i32, %arg2: i32) -> (i32, i32) {
    %c0_i32 = arith.constant 0 : i32
    %c0_i32_0 = arith.constant 0 : i32
    return %c0_i32, %arg1 : i32, i32
  }
  func.func @transform_3(%arg0: i32, %arg1: i32, %arg2: i32) -> (i32, i32) {
    %c0_i32 = arith.constant 0 : i32
    %c0_i32_0 = arith.constant 0 : i32
    return %c0_i32, %arg1 : i32, i32
  }
  func.func @transform_4(%arg0: i32, %arg1: i32, %arg2: i32) -> (i32, i32) {
    %c0_i32 = arith.constant 0 : i32
    return %arg0, %arg1 : i32, i32
  }
}

module attributes {stable_mosaic.version = 11 : i64} {
  func.func @_conv_mm_kernel(%arg0: i32, %arg1: i32, %arg2: i32, %arg3: memref<8x384xbf16, #tpu.memory_space<vmem>>, %arg4: memref<384x128xbf16, #tpu.memory_space<vmem>>, %arg5: memref<1x128xf32, #tpu.memory_space<vmem>>, %arg6: memref<1x128xf32, #tpu.memory_space<vmem>>, %arg7: memref<8x128xbf16, #tpu.memory_space<vmem>>, %arg8: memref<8x128xf32, #tpu.memory_space<vmem>>) attributes {dimension_semantics = [#tpu.dimension_semantics<parallel>, #tpu.dimension_semantics<parallel>, #tpu.dimension_semantics<arbitrary>], iteration_bounds = array<i64: 1, 1, 3>, scalar_prefetch = 0 : i64, scratch_operands = 1 : i64, tpu.core_type = #tpu.core_type<tc>, window_params = [{transform_indices = @transform_0, window_bounds = array<i64: 8, 384>}, {transform_indices = @transform_1, window_bounds = array<i64: 384, 128>}, {transform_indices = @transform_2, window_bounds = array<i64: 1, 128>}, {transform_indices = @transform_3, window_bounds = array<i64: 1, 128>}, {transform_indices = @transform_4, window_bounds = array<i64: 8, 128>}]} {
    %c0_i32 = arith.constant 0 : i32
    %0 = arith.cmpi eq, %arg2, %c0_i32 : i32
    %1 = arith.extui %0 : i1 to i32
    %c0_i32_0 = arith.constant 0 : i32
    %2 = arith.cmpi ne, %1, %c0_i32_0 : i32
    scf.if %2 {
      %cst_9 = arith.constant 0.000000e+00 : f32
      %12 = vector.broadcast %cst_9 : f32 to vector<8x128xf32>
      %c0_10 = arith.constant 0 : index
      %c0_11 = arith.constant 0 : index
      %13 = vector.load %arg8[%c0_10, %c0_11] : memref<8x128xf32, #tpu.memory_space<vmem>>, vector<8x128xf32>
      tpu.vector_store %arg8[%c0_10, %c0_11], %12 {strides = array<i32>} : memref<8x128xf32, #tpu.memory_space<vmem>>, vector<8x128xf32>,
    } else {
    }
    %c0 = arith.constant 0 : index
    %c0_1 = arith.constant 0 : index
    %3 = vector.load %arg8[%c0, %c0_1] : memref<8x128xf32, #tpu.memory_space<vmem>>, vector<8x128xf32>
    %c0_2 = arith.constant 0 : index
    %c0_3 = arith.constant 0 : index
    %4 = vector.load %arg3[%c0_2, %c0_3] : memref<8x384xbf16, #tpu.memory_space<vmem>>, vector<8x384xbf16>
    %c0_4 = arith.constant 0 : index
    %c0_5 = arith.constant 0 : index
    %5 = vector.load %arg4[%c0_4, %c0_5] : memref<384x128xbf16, #tpu.memory_space<vmem>>, vector<384x128xbf16>
    %cst = arith.constant dense<0.000000e+00> : vector<8x128xf32>
    %6 = tpu.matmul %4, %5, %cst {dimension_numbers = #tpu.dot_dimension_numbers<[1], [0], [0], [1], [0, 0, 1, 1], [], []>} : vector<8x384xbf16>, vector<384x128xbf16>, vector<8x128xf32> -> vector<8x128xf32>
    %7 = arith.addf %3, %6 : vector<8x128xf32>
    %c0_6 = arith.constant 0 : index
    %c0_7 = arith.constant 0 : index
    %8 = vector.load %arg8[%c0_6, %c0_7] : memref<8x128xf32, #tpu.memory_space<vmem>>, vector<8x128xf32>
    tpu.vector_store %arg8[%c0_6, %c0_7], %7 {strides = array<i32>} : memref<8x128xf32, #tpu.memory_space<vmem>>, vector<8x128xf32>,
    %c2_i32 = arith.constant 2 : i32
    %9 = arith.cmpi eq, %arg2, %c2_i32 : i32
    %10 = arith.extui %9 : i1 to i32
    %c0_i32_8 = arith.constant 0 : i32
    %11 = arith.cmpi ne, %10, %c0_i32_8 : i32
    scf.if %11 {
      %c0_9 = arith.constant 0 : index
      %c0_10 = arith.constant 0 : index
      %12 = vector.load %arg8[%c0_9, %c0_10] : memref<8x128xf32, #tpu.memory_space<vmem>>, vector<8x128xf32>
      %c0_11 = arith.constant 0 : index
      %c0_12 = arith.constant 0 : index
      %13 = vector.load %arg5[%c0_11, %c0_12] : memref<1x128xf32, #tpu.memory_space<vmem>>, vector<1x128xf32>
      %14 = vector.broadcast %13 : vector<1x128xf32> to vector<8x128xf32>
      %15 = arith.mulf %12, %14 : vector<8x128xf32>
      %c0_13 = arith.constant 0 : index
      %c0_14 = arith.constant 0 : index
      %16 = vector.load %arg6[%c0_13, %c0_14] : memref<1x128xf32, #tpu.memory_space<vmem>>, vector<1x128xf32>
      %17 = vector.broadcast %16 : vector<1x128xf32> to vector<8x128xf32>
      %18 = arith.addf %15, %17 : vector<8x128xf32>
      %cst_15 = arith.constant 0.000000e+00 : f32
      %19 = vector.broadcast %cst_15 : f32 to vector<8x128xf32>
      %20 = arith.maximumf %18, %19 : vector<8x128xf32>
      %21 = arith.truncf %20 : vector<8x128xf32> to vector<8x128xbf16>
      %c0_16 = arith.constant 0 : index
      %c0_17 = arith.constant 0 : index
      %22 = vector.load %arg7[%c0_16, %c0_17] : memref<8x128xbf16, #tpu.memory_space<vmem>>, vector<8x128xbf16>
      tpu.vector_store %arg7[%c0_16, %c0_17], %21 {strides = array<i32>} : memref<8x128xbf16, #tpu.memory_space<vmem>>, vector<8x128xbf16>,
    } else {
    }
    return
  }
  func.func @transform_0(%arg0: i32, %arg1: i32, %arg2: i32) -> (i32, i32) {
    %c0_i32 = arith.constant 0 : i32
    return %arg0, %arg2 : i32, i32
  }
  func.func @transform_1(%arg0: i32, %arg1: i32, %arg2: i32) -> (i32, i32) {
    %c0_i32 = arith.constant 0 : i32
    return %arg2, %arg1 : i32, i32
  }
  func.func @transform_2(%arg0: i32, %arg1: i32, %arg2: i32) -> (i32, i32) {
    %c0_i32 = arith.constant 0 : i32
    %c0_i32_0 = arith.constant 0 : i32
    return %c0_i32, %arg1 : i32, i32
  }
  func.func @transform_3(%arg0: i32, %arg1: i32, %arg2: i32) -> (i32, i32) {
    %c0_i32 = arith.constant 0 : i32
    %c0_i32_0 = arith.constant 0 : i32
    return %c0_i32, %arg1 : i32, i32
  }
  func.func @transform_4(%arg0: i32, %arg1: i32, %arg2: i32) -> (i32, i32) {
    %c0_i32 = arith.constant 0 : i32
    return %arg0, %arg1 : i32, i32
  }
}

module attributes {stable_mosaic.version = 11 : i64} {
  func.func @_conv_mm_kernel(%arg0: i32, %arg1: i32, %arg2: i32, %arg3: memref<8x128xbf16, #tpu.memory_space<vmem>>, %arg4: memref<128x256xbf16, #tpu.memory_space<vmem>>, %arg5: memref<1x256xf32, #tpu.memory_space<vmem>>, %arg6: memref<1x256xf32, #tpu.memory_space<vmem>>, %arg7: memref<8x256xbf16, #tpu.memory_space<vmem>>, %arg8: memref<8x256xf32, #tpu.memory_space<vmem>>) attributes {dimension_semantics = [#tpu.dimension_semantics<parallel>, #tpu.dimension_semantics<parallel>, #tpu.dimension_semantics<arbitrary>], iteration_bounds = array<i64: 1, 1, 1>, scalar_prefetch = 0 : i64, scratch_operands = 1 : i64, tpu.core_type = #tpu.core_type<tc>, window_params = [{transform_indices = @transform_0, window_bounds = array<i64: 8, 128>}, {transform_indices = @transform_1, window_bounds = array<i64: 128, 256>}, {transform_indices = @transform_2, window_bounds = array<i64: 1, 256>}, {transform_indices = @transform_3, window_bounds = array<i64: 1, 256>}, {transform_indices = @transform_4, window_bounds = array<i64: 8, 256>}]} {
    %c0_i32 = arith.constant 0 : i32
    %0 = arith.cmpi eq, %arg2, %c0_i32 : i32
    %1 = arith.extui %0 : i1 to i32
    %c0_i32_0 = arith.constant 0 : i32
    %2 = arith.cmpi ne, %1, %c0_i32_0 : i32
    scf.if %2 {
      %cst_10 = arith.constant 0.000000e+00 : f32
      %12 = vector.broadcast %cst_10 : f32 to vector<8x256xf32>
      %c0_11 = arith.constant 0 : index
      %c0_12 = arith.constant 0 : index
      %13 = vector.load %arg8[%c0_11, %c0_12] : memref<8x256xf32, #tpu.memory_space<vmem>>, vector<8x256xf32>
      tpu.vector_store %arg8[%c0_11, %c0_12], %12 {strides = array<i32>} : memref<8x256xf32, #tpu.memory_space<vmem>>, vector<8x256xf32>,
    } else {
    }
    %c0 = arith.constant 0 : index
    %c0_1 = arith.constant 0 : index
    %3 = vector.load %arg8[%c0, %c0_1] : memref<8x256xf32, #tpu.memory_space<vmem>>, vector<8x256xf32>
    %c0_2 = arith.constant 0 : index
    %c0_3 = arith.constant 0 : index
    %4 = vector.load %arg3[%c0_2, %c0_3] : memref<8x128xbf16, #tpu.memory_space<vmem>>, vector<8x128xbf16>
    %c0_4 = arith.constant 0 : index
    %c0_5 = arith.constant 0 : index
    %5 = vector.load %arg4[%c0_4, %c0_5] : memref<128x256xbf16, #tpu.memory_space<vmem>>, vector<128x256xbf16>
    %cst = arith.constant dense<0.000000e+00> : vector<8x256xf32>
    %6 = tpu.matmul %4, %5, %cst {dimension_numbers = #tpu.dot_dimension_numbers<[1], [0], [0], [1], [0, 0, 1, 1], [], []>} : vector<8x128xbf16>, vector<128x256xbf16>, vector<8x256xf32> -> vector<8x256xf32>
    %7 = arith.addf %3, %6 : vector<8x256xf32>
    %c0_6 = arith.constant 0 : index
    %c0_7 = arith.constant 0 : index
    %8 = vector.load %arg8[%c0_6, %c0_7] : memref<8x256xf32, #tpu.memory_space<vmem>>, vector<8x256xf32>
    tpu.vector_store %arg8[%c0_6, %c0_7], %7 {strides = array<i32>} : memref<8x256xf32, #tpu.memory_space<vmem>>, vector<8x256xf32>,
    %c0_i32_8 = arith.constant 0 : i32
    %9 = arith.cmpi eq, %arg2, %c0_i32_8 : i32
    %10 = arith.extui %9 : i1 to i32
    %c0_i32_9 = arith.constant 0 : i32
    %11 = arith.cmpi ne, %10, %c0_i32_9 : i32
    scf.if %11 {
      %c0_10 = arith.constant 0 : index
      %c0_11 = arith.constant 0 : index
      %12 = vector.load %arg8[%c0_10, %c0_11] : memref<8x256xf32, #tpu.memory_space<vmem>>, vector<8x256xf32>
      %c0_12 = arith.constant 0 : index
      %c0_13 = arith.constant 0 : index
      %13 = vector.load %arg5[%c0_12, %c0_13] : memref<1x256xf32, #tpu.memory_space<vmem>>, vector<1x256xf32>
      %14 = vector.broadcast %13 : vector<1x256xf32> to vector<8x256xf32>
      %15 = arith.mulf %12, %14 : vector<8x256xf32>
      %c0_14 = arith.constant 0 : index
      %c0_15 = arith.constant 0 : index
      %16 = vector.load %arg6[%c0_14, %c0_15] : memref<1x256xf32, #tpu.memory_space<vmem>>, vector<1x256xf32>
      %17 = vector.broadcast %16 : vector<1x256xf32> to vector<8x256xf32>
      %18 = arith.addf %15, %17 : vector<8x256xf32>
      %19 = arith.truncf %18 : vector<8x256xf32> to vector<8x256xbf16>
      %c0_16 = arith.constant 0 : index
      %c0_17 = arith.constant 0 : index
      %20 = vector.load %arg7[%c0_16, %c0_17] : memref<8x256xbf16, #tpu.memory_space<vmem>>, vector<8x256xbf16>
      tpu.vector_store %arg7[%c0_16, %c0_17], %19 {strides = array<i32>} : memref<8x256xbf16, #tpu.memory_space<vmem>>, vector<8x256xbf16>,
    } else {
    }
    return
  }
  func.func @transform_0(%arg0: i32, %arg1: i32, %arg2: i32) -> (i32, i32) {
    %c0_i32 = arith.constant 0 : i32
    return %arg0, %arg2 : i32, i32
  }
  func.func @transform_1(%arg0: i32, %arg1: i32, %arg2: i32) -> (i32, i32) {
    %c0_i32 = arith.constant 0 : i32
    return %arg2, %arg1 : i32, i32
  }
  func.func @transform_2(%arg0: i32, %arg1: i32, %arg2: i32) -> (i32, i32) {
    %c0_i32 = arith.constant 0 : i32
    %c0_i32_0 = arith.constant 0 : i32
    return %c0_i32, %arg1 : i32, i32
  }
  func.func @transform_3(%arg0: i32, %arg1: i32, %arg2: i32) -> (i32, i32) {
    %c0_i32 = arith.constant 0 : i32
    %c0_i32_0 = arith.constant 0 : i32
    return %c0_i32, %arg1 : i32, i32
  }
  func.func @transform_4(%arg0: i32, %arg1: i32, %arg2: i32) -> (i32, i32) {
    %c0_i32 = arith.constant 0 : i32
    return %arg0, %arg1 : i32, i32
  }
}

module attributes {stable_mosaic.version = 11 : i64} {
  func.func @_conv_mm_kernel(%arg0: i32, %arg1: i32, %arg2: i32, %arg3: memref<8x128xbf16, #tpu.memory_space<vmem>>, %arg4: memref<128x256xbf16, #tpu.memory_space<vmem>>, %arg5: memref<1x256xf32, #tpu.memory_space<vmem>>, %arg6: memref<1x256xf32, #tpu.memory_space<vmem>>, %arg7: memref<8x256xbf16, #tpu.memory_space<vmem>>, %arg8: memref<8x256xbf16, #tpu.memory_space<vmem>>, %arg9: memref<8x256xf32, #tpu.memory_space<vmem>>) attributes {dimension_semantics = [#tpu.dimension_semantics<parallel>, #tpu.dimension_semantics<parallel>, #tpu.dimension_semantics<arbitrary>], iteration_bounds = array<i64: 1, 1, 1>, scalar_prefetch = 0 : i64, scratch_operands = 1 : i64, tpu.core_type = #tpu.core_type<tc>, window_params = [{transform_indices = @transform_0, window_bounds = array<i64: 8, 128>}, {transform_indices = @transform_1, window_bounds = array<i64: 128, 256>}, {transform_indices = @transform_2, window_bounds = array<i64: 1, 256>}, {transform_indices = @transform_3, window_bounds = array<i64: 1, 256>}, {transform_indices = @transform_4, window_bounds = array<i64: 8, 256>}, {transform_indices = @transform_5, window_bounds = array<i64: 8, 256>}]} {
    %c0_i32 = arith.constant 0 : i32
    %0 = arith.cmpi eq, %arg2, %c0_i32 : i32
    %1 = arith.extui %0 : i1 to i32
    %c0_i32_0 = arith.constant 0 : i32
    %2 = arith.cmpi ne, %1, %c0_i32_0 : i32
    scf.if %2 {
      %cst_10 = arith.constant 0.000000e+00 : f32
      %12 = vector.broadcast %cst_10 : f32 to vector<8x256xf32>
      %c0_11 = arith.constant 0 : index
      %c0_12 = arith.constant 0 : index
      %13 = vector.load %arg9[%c0_11, %c0_12] : memref<8x256xf32, #tpu.memory_space<vmem>>, vector<8x256xf32>
      tpu.vector_store %arg9[%c0_11, %c0_12], %12 {strides = array<i32>} : memref<8x256xf32, #tpu.memory_space<vmem>>, vector<8x256xf32>,
    } else {
    }
    %c0 = arith.constant 0 : index
    %c0_1 = arith.constant 0 : index
    %3 = vector.load %arg9[%c0, %c0_1] : memref<8x256xf32, #tpu.memory_space<vmem>>, vector<8x256xf32>
    %c0_2 = arith.constant 0 : index
    %c0_3 = arith.constant 0 : index
    %4 = vector.load %arg3[%c0_2, %c0_3] : memref<8x128xbf16, #tpu.memory_space<vmem>>, vector<8x128xbf16>
    %c0_4 = arith.constant 0 : index
    %c0_5 = arith.constant 0 : index
    %5 = vector.load %arg4[%c0_4, %c0_5] : memref<128x256xbf16, #tpu.memory_space<vmem>>, vector<128x256xbf16>
    %cst = arith.constant dense<0.000000e+00> : vector<8x256xf32>
    %6 = tpu.matmul %4, %5, %cst {dimension_numbers = #tpu.dot_dimension_numbers<[1], [0], [0], [1], [0, 0, 1, 1], [], []>} : vector<8x128xbf16>, vector<128x256xbf16>, vector<8x256xf32> -> vector<8x256xf32>
    %7 = arith.addf %3, %6 : vector<8x256xf32>
    %c0_6 = arith.constant 0 : index
    %c0_7 = arith.constant 0 : index
    %8 = vector.load %arg9[%c0_6, %c0_7] : memref<8x256xf32, #tpu.memory_space<vmem>>, vector<8x256xf32>
    tpu.vector_store %arg9[%c0_6, %c0_7], %7 {strides = array<i32>} : memref<8x256xf32, #tpu.memory_space<vmem>>, vector<8x256xf32>,
    %c0_i32_8 = arith.constant 0 : i32
    %9 = arith.cmpi eq, %arg2, %c0_i32_8 : i32
    %10 = arith.extui %9 : i1 to i32
    %c0_i32_9 = arith.constant 0 : i32
    %11 = arith.cmpi ne, %10, %c0_i32_9 : i32
    scf.if %11 {
      %c0_10 = arith.constant 0 : index
      %c0_11 = arith.constant 0 : index
      %12 = vector.load %arg9[%c0_10, %c0_11] : memref<8x256xf32, #tpu.memory_space<vmem>>, vector<8x256xf32>
      %c0_12 = arith.constant 0 : index
      %c0_13 = arith.constant 0 : index
      %13 = vector.load %arg5[%c0_12, %c0_13] : memref<1x256xf32, #tpu.memory_space<vmem>>, vector<1x256xf32>
      %14 = vector.broadcast %13 : vector<1x256xf32> to vector<8x256xf32>
      %15 = arith.mulf %12, %14 : vector<8x256xf32>
      %c0_14 = arith.constant 0 : index
      %c0_15 = arith.constant 0 : index
      %16 = vector.load %arg6[%c0_14, %c0_15] : memref<1x256xf32, #tpu.memory_space<vmem>>, vector<1x256xf32>
      %17 = vector.broadcast %16 : vector<1x256xf32> to vector<8x256xf32>
      %18 = arith.addf %15, %17 : vector<8x256xf32>
      %c0_16 = arith.constant 0 : index
      %c0_17 = arith.constant 0 : index
      %19 = vector.load %arg7[%c0_16, %c0_17] : memref<8x256xbf16, #tpu.memory_space<vmem>>, vector<8x256xbf16>
      %20 = arith.extf %19 : vector<8x256xbf16> to vector<8x256xf32>
      %21 = arith.addf %18, %20 : vector<8x256xf32>
      %cst_18 = arith.constant 0.000000e+00 : f32
      %22 = vector.broadcast %cst_18 : f32 to vector<8x256xf32>
      %23 = arith.maximumf %21, %22 : vector<8x256xf32>
      %24 = arith.truncf %23 : vector<8x256xf32> to vector<8x256xbf16>
      %c0_19 = arith.constant 0 : index
      %c0_20 = arith.constant 0 : index
      %25 = vector.load %arg8[%c0_19, %c0_20] : memref<8x256xbf16, #tpu.memory_space<vmem>>, vector<8x256xbf16>
      tpu.vector_store %arg8[%c0_19, %c0_20], %24 {strides = array<i32>} : memref<8x256xbf16, #tpu.memory_space<vmem>>, vector<8x256xbf16>,
    } else {
    }
    return
  }
  func.func @transform_0(%arg0: i32, %arg1: i32, %arg2: i32) -> (i32, i32) {
    %c0_i32 = arith.constant 0 : i32
    return %arg0, %arg2 : i32, i32
  }
  func.func @transform_1(%arg0: i32, %arg1: i32, %arg2: i32) -> (i32, i32) {
    %c0_i32 = arith.constant 0 : i32
    return %arg2, %arg1 : i32, i32
  }
  func.func @transform_2(%arg0: i32, %arg1: i32, %arg2: i32) -> (i32, i32) {
    %c0_i32 = arith.constant 0 : i32
    %c0_i32_0 = arith.constant 0 : i32
    return %c0_i32, %arg1 : i32, i32
  }
  func.func @transform_3(%arg0: i32, %arg1: i32, %arg2: i32) -> (i32, i32) {
    %c0_i32 = arith.constant 0 : i32
    %c0_i32_0 = arith.constant 0 : i32
    return %c0_i32, %arg1 : i32, i32
  }
  func.func @transform_4(%arg0: i32, %arg1: i32, %arg2: i32) -> (i32, i32) {
    %c0_i32 = arith.constant 0 : i32
    return %arg0, %arg1 : i32, i32
  }
  func.func @transform_5(%arg0: i32, %arg1: i32, %arg2: i32) -> (i32, i32) {
    %c0_i32 = arith.constant 0 : i32
    return %arg0, %arg1 : i32, i32
  }
}

module attributes {stable_mosaic.version = 11 : i64} {
  func.func @_conv_mm_kernel(%arg0: i32, %arg1: i32, %arg2: i32, %arg3: memref<8x256xbf16, #tpu.memory_space<vmem>>, %arg4: memref<256x128xbf16, #tpu.memory_space<vmem>>, %arg5: memref<1x128xf32, #tpu.memory_space<vmem>>, %arg6: memref<1x128xf32, #tpu.memory_space<vmem>>, %arg7: memref<8x128xbf16, #tpu.memory_space<vmem>>, %arg8: memref<8x128xf32, #tpu.memory_space<vmem>>) attributes {dimension_semantics = [#tpu.dimension_semantics<parallel>, #tpu.dimension_semantics<parallel>, #tpu.dimension_semantics<arbitrary>], iteration_bounds = array<i64: 1, 1, 1>, scalar_prefetch = 0 : i64, scratch_operands = 1 : i64, tpu.core_type = #tpu.core_type<tc>, window_params = [{transform_indices = @transform_0, window_bounds = array<i64: 8, 256>}, {transform_indices = @transform_1, window_bounds = array<i64: 256, 128>}, {transform_indices = @transform_2, window_bounds = array<i64: 1, 128>}, {transform_indices = @transform_3, window_bounds = array<i64: 1, 128>}, {transform_indices = @transform_4, window_bounds = array<i64: 8, 128>}]} {
    %c0_i32 = arith.constant 0 : i32
    %0 = arith.cmpi eq, %arg2, %c0_i32 : i32
    %1 = arith.extui %0 : i1 to i32
    %c0_i32_0 = arith.constant 0 : i32
    %2 = arith.cmpi ne, %1, %c0_i32_0 : i32
    scf.if %2 {
      %cst_10 = arith.constant 0.000000e+00 : f32
      %12 = vector.broadcast %cst_10 : f32 to vector<8x128xf32>
      %c0_11 = arith.constant 0 : index
      %c0_12 = arith.constant 0 : index
      %13 = vector.load %arg8[%c0_11, %c0_12] : memref<8x128xf32, #tpu.memory_space<vmem>>, vector<8x128xf32>
      tpu.vector_store %arg8[%c0_11, %c0_12], %12 {strides = array<i32>} : memref<8x128xf32, #tpu.memory_space<vmem>>, vector<8x128xf32>,
    } else {
    }
    %c0 = arith.constant 0 : index
    %c0_1 = arith.constant 0 : index
    %3 = vector.load %arg8[%c0, %c0_1] : memref<8x128xf32, #tpu.memory_space<vmem>>, vector<8x128xf32>
    %c0_2 = arith.constant 0 : index
    %c0_3 = arith.constant 0 : index
    %4 = vector.load %arg3[%c0_2, %c0_3] : memref<8x256xbf16, #tpu.memory_space<vmem>>, vector<8x256xbf16>
    %c0_4 = arith.constant 0 : index
    %c0_5 = arith.constant 0 : index
    %5 = vector.load %arg4[%c0_4, %c0_5] : memref<256x128xbf16, #tpu.memory_space<vmem>>, vector<256x128xbf16>
    %cst = arith.constant dense<0.000000e+00> : vector<8x128xf32>
    %6 = tpu.matmul %4, %5, %cst {dimension_numbers = #tpu.dot_dimension_numbers<[1], [0], [0], [1], [0, 0, 1, 1], [], []>} : vector<8x256xbf16>, vector<256x128xbf16>, vector<8x128xf32> -> vector<8x128xf32>
    %7 = arith.addf %3, %6 : vector<8x128xf32>
    %c0_6 = arith.constant 0 : index
    %c0_7 = arith.constant 0 : index
    %8 = vector.load %arg8[%c0_6, %c0_7] : memref<8x128xf32, #tpu.memory_space<vmem>>, vector<8x128xf32>
    tpu.vector_store %arg8[%c0_6, %c0_7], %7 {strides = array<i32>} : memref<8x128xf32, #tpu.memory_space<vmem>>, vector<8x128xf32>,
    %c0_i32_8 = arith.constant 0 : i32
    %9 = arith.cmpi eq, %arg2, %c0_i32_8 : i32
    %10 = arith.extui %9 : i1 to i32
    %c0_i32_9 = arith.constant 0 : i32
    %11 = arith.cmpi ne, %10, %c0_i32_9 : i32
    scf.if %11 {
      %c0_10 = arith.constant 0 : index
      %c0_11 = arith.constant 0 : index
      %12 = vector.load %arg8[%c0_10, %c0_11] : memref<8x128xf32, #tpu.memory_space<vmem>>, vector<8x128xf32>
      %c0_12 = arith.constant 0 : index
      %c0_13 = arith.constant 0 : index
      %13 = vector.load %arg5[%c0_12, %c0_13] : memref<1x128xf32, #tpu.memory_space<vmem>>, vector<1x128xf32>
      %14 = vector.broadcast %13 : vector<1x128xf32> to vector<8x128xf32>
      %15 = arith.mulf %12, %14 : vector<8x128xf32>
      %c0_14 = arith.constant 0 : index
      %c0_15 = arith.constant 0 : index
      %16 = vector.load %arg6[%c0_14, %c0_15] : memref<1x128xf32, #tpu.memory_space<vmem>>, vector<1x128xf32>
      %17 = vector.broadcast %16 : vector<1x128xf32> to vector<8x128xf32>
      %18 = arith.addf %15, %17 : vector<8x128xf32>
      %cst_16 = arith.constant 0.000000e+00 : f32
      %19 = vector.broadcast %cst_16 : f32 to vector<8x128xf32>
      %20 = arith.maximumf %18, %19 : vector<8x128xf32>
      %21 = arith.truncf %20 : vector<8x128xf32> to vector<8x128xbf16>
      %c0_17 = arith.constant 0 : index
      %c0_18 = arith.constant 0 : index
      %22 = vector.load %arg7[%c0_17, %c0_18] : memref<8x128xbf16, #tpu.memory_space<vmem>>, vector<8x128xbf16>
      tpu.vector_store %arg7[%c0_17, %c0_18], %21 {strides = array<i32>} : memref<8x128xbf16, #tpu.memory_space<vmem>>, vector<8x128xbf16>,
    } else {
    }
    return
  }
  func.func @transform_0(%arg0: i32, %arg1: i32, %arg2: i32) -> (i32, i32) {
    %c0_i32 = arith.constant 0 : i32
    return %arg0, %arg2 : i32, i32
  }
  func.func @transform_1(%arg0: i32, %arg1: i32, %arg2: i32) -> (i32, i32) {
    %c0_i32 = arith.constant 0 : i32
    return %arg2, %arg1 : i32, i32
  }
  func.func @transform_2(%arg0: i32, %arg1: i32, %arg2: i32) -> (i32, i32) {
    %c0_i32 = arith.constant 0 : i32
    %c0_i32_0 = arith.constant 0 : i32
    return %c0_i32, %arg1 : i32, i32
  }
  func.func @transform_3(%arg0: i32, %arg1: i32, %arg2: i32) -> (i32, i32) {
    %c0_i32 = arith.constant 0 : i32
    %c0_i32_0 = arith.constant 0 : i32
    return %c0_i32, %arg1 : i32, i32
  }
  func.func @transform_4(%arg0: i32, %arg1: i32, %arg2: i32) -> (i32, i32) {
    %c0_i32 = arith.constant 0 : i32
    return %arg0, %arg1 : i32, i32
  }
}

module attributes {stable_mosaic.version = 11 : i64} {
  func.func @_global_avgpool_kernel(%arg0: i32, %arg1: memref<1x1x256xbf16, #tpu.memory_space<vmem>>, %arg2: memref<1x1x256xf32, #tpu.memory_space<vmem>>) attributes {dimension_semantics = [#tpu.dimension_semantics<parallel>], iteration_bounds = array<i64: 2>, scalar_prefetch = 0 : i64, scratch_operands = 0 : i64, tpu.core_type = #tpu.core_type<tc>, window_params = [{transform_indices = @transform_0, window_bounds = array<i64: 1, 1, 256>}, {transform_indices = @transform_1, window_bounds = array<i64: 1, 1, 256>}]} {
    %c0 = arith.constant 0 : index
    %c0_0 = arith.constant 0 : index
    %c0_1 = arith.constant 0 : index
    %0 = vector.load %arg1[%c0, %c0_0, %c0_1] : memref<1x1x256xbf16, #tpu.memory_space<vmem>>, vector<1x1x256xbf16>
    %1 = arith.extf %0 : vector<1x1x256xbf16> to vector<1x1x256xf32>
    %cst = arith.constant dense<0.000000e+00> : vector<1x256xf32>
    %2 = vector.multi_reduction <add>, %1, %cst [1] : vector<1x1x256xf32> to vector<1x256xf32>
    %3 = vector.shape_cast %2 : vector<1x256xf32> to vector<1x1x256xf32>
    %cst_2 = arith.constant 1.000000e+00 : f32
    %4 = vector.broadcast %cst_2 : f32 to vector<1x1x256xf32>
    %5 = arith.divf %3, %4 : vector<1x1x256xf32>
    %c0_3 = arith.constant 0 : index
    %c0_4 = arith.constant 0 : index
    %c0_5 = arith.constant 0 : index
    %6 = vector.load %arg2[%c0_3, %c0_4, %c0_5] : memref<1x1x256xf32, #tpu.memory_space<vmem>>, vector<1x1x256xf32>
    tpu.vector_store %arg2[%c0_3, %c0_4, %c0_5], %5 {strides = array<i32>} : memref<1x1x256xf32, #tpu.memory_space<vmem>>, vector<1x1x256xf32>,
    return
  }
  func.func @transform_0(%arg0: i32) -> (i32, i32, i32) {
    %c0_i32 = arith.constant 0 : i32
    %c0_i32_0 = arith.constant 0 : i32
    %c0_i32_1 = arith.constant 0 : i32
    return %arg0, %c0_i32, %c0_i32_0 : i32, i32, i32
  }
  func.func @transform_1(%arg0: i32) -> (i32, i32, i32) {
    %c0_i32 = arith.constant 0 : i32
    %c0_i32_0 = arith.constant 0 : i32
    %c0_i32_1 = arith.constant 0 : i32
    return %arg0, %c0_i32, %c0_i32_0 : i32, i32, i32
  }
}

</mosaic_0001>

<llo_original>
// kernel: _forward.106
$region0: #{_forward.106}
  #allocation0 [shape = 'u32[]', space=smem, size = 0x4, offset = 0x4, fixed_abs, tag = 'smem constant byte address 0x4 - core index']
  #allocation1 [shape = 'u32[144,128]{1,0:T(1,128)}', space=vmem, size = 0x12000, scoped, tag = 'internal scratch']
  #allocation2 [shape = 'f32[256,128]{1,0:T(8,128)}', space=vmem, size = 0x20000, scoped, tag = 'scratch operand']
  %s0 = inlined_call_operand.vmem [shape: bf16[512,256], index: 0, kind: input, shape index: {}]
  %s1 = inlined_call_operand.vmem [shape: bf16[256,128], index: 1, kind: input, shape index: {}]
  %s2 = inlined_call_operand.vmem [shape: f32[1,128], index: 2, kind: input, shape index: {}]
  %s3 = inlined_call_operand.vmem [shape: f32[1,128], index: 3, kind: input, shape index: {}]
  %s4 = inlined_call_operand.vmem [shape: bf16[512,128], index: 4, kind: output, shape index: {}]
  %s5 = sld [smem:[#allocation0]]
  $region57: #{_forward.106} parent=0
    _
  %s7 = ssub.s32 1, %s5
  %s8 = scalar_select 0, %s7, %s5
  loop: start=0, step=1, limit=4
  $region2: #{_forward.106} parent=0 // loop_pre_header
    _
  $region3: #{_forward.106} parent=0 // loop_header
    %s10 = sphi 0, %s14
    %p11 = scmp.ge.s32.totalorder %s10, 4
    %s17 = sphi 0, %s36
    %s18 = sphi 0, %s32
    %s19 = sphi 0, %s28
    %s20 = sphi 0, %s17
    %s21 = sphi 0, %s18
    %s22 = sphi 0, %s19
    %s23 = sphi 0, %s20
    %s24 = sphi 0, %s21
    %s25 = sphi 0, %s22
    %s41 = sphi 0, %s43
    %s44 = sphi 0, %s41
    %s45 = sphi 0, %s44
    %s61 = sphi 0, %s45
    %s69 = sphi 0, %s71
    %s72 = sphi 0, %s69
    %s73 = sphi 0, %s72
    %s89 = sphi 0, %s73
    %s95 = sphi 0, %s97
    %s98 = sphi 0, %s95
    %s99 = sphi 0, %s98
    %s115 = sphi 0, %s99
    %s121 = sphi 0, %s123
    %s124 = sphi 0, %s121
    %s125 = sphi 0, %s124
    %s141 = sphi 0, %s125
    %s149 = sphi 0, %s151
    %s152 = sphi 0, %s149
    %s153 = sphi 0, %s152
    %s169 = sphi 0, %s153
  $region4: #{_forward.106} parent=0 // loop_header_branch
    %13 = sbr.rel (%p11) target = $region8
  $region5: #{_forward.106} parent=0 // loop_body
    %s15 = ssub.s32 %s10, 1
    %s16 = ssub.s32 %s10, 2
    %s26 = sadd.s32 1, %s19
    %p27 = scmp.ge.s32.totalorder %s26, 1
    %s28 = scalar_select %p27, 0, %s26
    %s29 = sadd.s32 1, %s18
    %s30 = scalar_select %p27, %s29, %s18
    %p31 = scmp.ge.s32.totalorder %s30, 1
    %s32 = scalar_select %p31, 0, %s30
    %s33 = sadd.s32 1, %s17
    %s34 = scalar_select %p31, %s33, %s17
    %p35 = scmp.ge.s32.totalorder %s34, 2
    %s36 = scalar_select %p35, 0, %s34
    %s37 = ssub.s32 %s17, %s36
    %s38 = ssub.s32 %s19, %s28
    %s39 = sor.u32 %s37, %s38
    %p40 = scmp.eq.s32.totalorder %s39, 0
    %s42 = sadd.s32 %s41, 1
    %s43 = scalar_select %p40, %s41, %s42
    %p46 = pneg %p40
    %p47 = scmp.eq.s32.totalorder %s10, 1
    %p48 = por %p46, %p47
    %p49 = scmp.ne.s32.totalorder %s41, %s44
    %p50 = scmp.eq.s32.totalorder %s10, 0
    %p51 = por %p49, %p50
    %p52 = scmp.ne.s32.totalorder %s41, %s44
    %p53 = scmp.eq.s32.totalorder %s15, 1
    %p54 = por %p52, %p53
    %p55 = scmp.ne.s32.totalorder %s44, %s45
    %p56 = scmp.eq.s32.totalorder %s15, 0
    %p57 = por %p55, %p56
    %p58 = scmp.ne.s32.totalorder %s44, %s45
    %p59 = scmp.eq.s32.totalorder %s16, 1
    %p60 = por %p58, %p59
    %p62 = scmp.ne.s32.totalorder %s45, %s61
    %p63 = scmp.eq.s32.totalorder %s16, 0
    %p64 = por %p62, %p63
    %s65 = ssub.s32 %s19, %s28
    %s66 = ssub.s32 %s18, %s32
    %s67 = sor.u32 %s65, %s66
    %p68 = scmp.eq.s32.totalorder %s67, 0
    %s70 = sadd.s32 %s69, 1
    %s71 = scalar_select %p68, %s69, %s70
    %p74 = pneg %p68
    %p75 = scmp.eq.s32.totalorder %s10, 1
    %p76 = por %p74, %p75
    %p77 = scmp.ne.s32.totalorder %s69, %s72
    %p78 = scmp.eq.s32.totalorder %s10, 0
    %p79 = por %p77, %p78
    %p80 = scmp.ne.s32.totalorder %s69, %s72
    %p81 = scmp.eq.s32.totalorder %s15, 1
    %p82 = por %p80, %p81
    %p83 = scmp.ne.s32.totalorder %s72, %s73
    %p84 = scmp.eq.s32.totalorder %s15, 0
    %p85 = por %p83, %p84
    %p86 = scmp.ne.s32.totalorder %s72, %s73
    %p87 = scmp.eq.s32.totalorder %s16, 1
    %p88 = por %p86, %p87
    %p90 = scmp.ne.s32.totalorder %s73, %s89
    %p91 = scmp.eq.s32.totalorder %s16, 0
    %p92 = por %p90, %p91
    %s93 = ssub.s32 %s18, %s32
    %p94 = scmp.eq.s32.totalorder %s93, 0
    %s96 = sadd.s32 %s95, 1
    %s97 = scalar_select %p94, %s95, %s96
    %p100 = pneg %p94
    %p101 = scmp.eq.s32.totalorder %s10, 1
    %p102 = por %p100, %p101
    %p103 = scmp.ne.s32.totalorder %s95, %s98
    %p104 = scmp.eq.s32.totalorder %s10, 0
    %p105 = por %p103, %p104
    %p106 = scmp.ne.s32.totalorder %s95, %s98
    %p107 = scmp.eq.s32.totalorder %s15, 1
    %p108 = por %p106, %p107
    %p109 = scmp.ne.s32.totalorder %s98, %s99
    %p110 = scmp.eq.s32.totalorder %s15, 0
    %p111 = por %p109, %p110
    %p112 = scmp.ne.s32.totalorder %s98, %s99
    %p113 = scmp.eq.s32.totalorder %s16, 1
    %p114 = por %p112, %p113
    %p116 = scmp.ne.s32.totalorder %s99, %s115
    %p117 = scmp.eq.s32.totalorder %s16, 0
    %p118 = por %p116, %p117
    %s119 = ssub.s32 %s18, %s32
    %p120 = scmp.eq.s32.totalorder %s119, 0
    %s122 = sadd.s32 %s121, 1
    %s123 = scalar_select %p120, %s121, %s122
    %p126 = pneg %p120
    %p127 = scmp.eq.s32.totalorder %s10, 1
    %p128 = por %p126, %p127
    %p129 = scmp.ne.s32.totalorder %s121, %s124
    %p130 = scmp.eq.s32.totalorder %s10, 0
    %p131 = por %p129, %p130
    %p132 = scmp.ne.s32.totalorder %s121, %s124
    %p133 = scmp.eq.s32.totalorder %s15, 1
    %p134 = por %p132, %p133
    %p135 = scmp.ne.s32.totalorder %s124, %s125
    %p136 = scmp.eq.s32.totalorder %s15, 0
    %p137 = por %p135, %p136
    %p138 = scmp.ne.s32.totalorder %s124, %s125
    %p139 = scmp.eq.s32.totalorder %s16, 1
    %p140 = por %p138, %p139
    %p142 = scmp.ne.s32.totalorder %s125, %s141
    %p143 = scmp.eq.s32.totalorder %s16, 0
    %p144 = por %p142, %p143
    %s145 = ssub.s32 %s17, %s36
    %s146 = ssub.s32 %s18, %s32
    %s147 = sor.u32 %s145, %s146
    %p148 = scmp.eq.s32.totalorder %s147, 0
    %s150 = sadd.s32 %s149, 1
    %s151 = scalar_select %p148, %s149, %s150
    %p154 = pneg %p148
    %p155 = scmp.eq.s32.totalorder %s10, 1
    %p156 = por %p154, %p155
    %p157 = scmp.ne.s32.totalorder %s149, %s152
    %p158 = scmp.eq.s32.totalorder %s10, 0
    %p159 = por %p157, %p158
    %p160 = scmp.ne.s32.totalorder %s149, %s152
    %p161 = scmp.eq.s32.totalorder %s15, 1
    %p162 = por %p160, %p161
    %p163 = scmp.ne.s32.totalorder %s152, %s153
    %p164 = scmp.eq.s32.totalorder %s15, 0
    %p165 = por %p163, %p164
    %p166 = scmp.ne.s32.totalorder %s152, %s153
    %p167 = scmp.eq.s32.totalorder %s16, 1
    %p168 = por %p166, %p167
    %p170 = scmp.ne.s32.totalorder %s153, %s169
    %p171 = scmp.eq.s32.totalorder %s16, 0
    %p172 = por %p170, %p171
    %p173 = scmp.le.s32.totalorder 1, %s10
    %p174 = scmp.lt.s32.totalorder %s10, 3
    %p175 = pnand %p173, %p174
    %p176 = pneg %p175
    // Predicated region
    $region9: #{_forward.106} parent=5 // pred_check
      _
    $region10: #{_forward.106} parent=5 // pred_check_branch
      %178 = sbr.rel (%p175) target = $region12
    $region11: #{_forward.106} parent=5 // pred_region
      %s179 = ssub.s32 %s10, 1
      // Predicated region
      $region13: #{_forward.106} parent=11 // pred_check
        %p180 = pneg %p85
      $region14: #{_forward.106} parent=11 // pred_check_branch
        %182 = sbr.rel (%p180) target = $region16
      $region15: #{_forward.106} parent=11 // pred_region
        %s183 = smul.u32 32, %s22
        %p184 = scmp.lt.s32.totalorder %s183, 31
        %s185 = scalar_select %p184, %s183, 31
        %p186 = scmp.lt.s32.totalorder %s21, 0
        %s187 = scalar_select %p186, %s21, 0
        %s188 = sadd.s32 %s187, %s185
        %s189 = smul.addr %s188, 4
        %s190 = scalar_lea.vmem %s1, %s189
        %s191 = smul.u32 32, %s22
      $region16: #{_forward.106} parent=11 // pred_fallthru
        _
      // Predicated region
      $region17: #{_forward.106} parent=11 // pred_check
        %p192 = pneg %p111
      $region18: #{_forward.106} parent=11 // pred_check_branch
        %194 = sbr.rel (%p192) target = $region20
      $region19: #{_forward.106} parent=11 // pred_region
        %p195 = scmp.lt.s32.totalorder %s21, 0
        %s196 = scalar_select %p195, %s21, 0
        %s197 = scalar_lea.vmem %s2, %s196
      $region20: #{_forward.106} parent=11 // pred_fallthru
        _
      // Predicated region
      $region21: #{_forward.106} parent=11 // pred_check
        %p198 = pneg %p137
      $region22: #{_forward.106} parent=11 // pred_check_branch
        %200 = sbr.rel (%p198) target = $region24
      $region23: #{_forward.106} parent=11 // pred_region
        %p201 = scmp.lt.s32.totalorder %s21, 0
        %s202 = scalar_select %p201, %s21, 0
        %s203 = scalar_lea.vmem %s3, %s202
      $region24: #{_forward.106} parent=11 // pred_fallthru
        _
    $region12: #{_forward.106} parent=5 // pred_fallthru
      _
    %p204 = scmp.lt.s32.totalorder %s10, 2
    // Predicated region
    $region25: #{_forward.106} parent=5 // pred_check
      %p205 = pneg %p204
    $region26: #{_forward.106} parent=5 // pred_check_branch
      %207 = sbr.rel (%p205) target = $region28
    $region27: #{_forward.106} parent=5 // pred_region
      // Predicated region
      $region29: #{_forward.106} parent=27 // pred_check
        %p208 = pneg %p51
      $region30: #{_forward.106} parent=27 // pred_check_branch
        %210 = sbr.rel (%p208) target = $region32
      $region31: #{_forward.106} parent=27 // pred_region
        %s211 = smul.u32 32, %s17
        %s212 = smul.u32 2, %s19
        %p213 = scmp.lt.s32.totalorder %s211, 63
        %s214 = scalar_select %p213, %s211, 63
        %p215 = scmp.lt.s32.totalorder %s212, 1
        %s216 = scalar_select %p215, %s212, 1
        %s217 = smul.addr %s214, 2
        %s218 = sadd.s32 %s216, %s217
        %s219 = smul.addr %s218, 4
        %s220 = scalar_lea.vmem %s0, %s219
        %s221 = smul.u32 32, %s17
        %s222 = smul.u32 2, %s19
      $region32: #{_forward.106} parent=27 // pred_fallthru
        _
    $region28: #{_forward.106} parent=5 // pred_fallthru
      _
    %p223 = scmp.le.s32.totalorder 1, %s10
    %p224 = scmp.lt.s32.totalorder %s10, 3
    %p225 = pnand %p223, %p224
    %p226 = pneg %p225
    // Predicated region
    $region33: #{_forward.106} parent=5 // pred_check
      _
    $region34: #{_forward.106} parent=5 // pred_check_branch
      %228 = sbr.rel (%p225) target = $region36
    $region35: #{_forward.106} parent=5 // pred_region
      %s229 = ssub.s32 %s10, 1
      %s230 = smul.u32 32, %s20
      %s231 = smul.u32 2, %s22
      %p232 = scmp.lt.s32.totalorder %s230, 63
      %s233 = scalar_select %p232, %s230, 63
      %p234 = scmp.lt.s32.totalorder %s231, 1
      %s235 = scalar_select %p234, %s231, 1
      %s236 = smul.addr %s233, 2
      %s237 = sadd.s32 %s235, %s236
      %s238 = smul.addr %s237, 4
      %s239 = scalar_lea.vmem %s0, %s238
      %p240 = pneg %p57
      %p241 = pneg %p54
      %s242 = smul.u32 32, %s22
      %p243 = scmp.lt.s32.totalorder %s242, 31
      %s244 = scalar_select %p243, %s242, 31
      %p245 = scmp.lt.s32.totalorder %s21, 0
      %s246 = scalar_select %p245, %s21, 0
      %s247 = sadd.s32 %s246, %s244
      %s248 = smul.addr %s247, 4
      %s249 = scalar_lea.vmem %s1, %s248
      %p250 = pneg %p85
      %p251 = pneg %p82
      %p252 = scmp.lt.s32.totalorder %s21, 0
      %s253 = scalar_select %p252, %s21, 0
      %s254 = scalar_lea.vmem %s2, %s253
      %p255 = pneg %p111
      %p256 = pneg %p108
      %p257 = scmp.lt.s32.totalorder %s21, 0
      %s258 = scalar_select %p257, %s21, 0
      %s259 = scalar_lea.vmem %s3, %s258
      %p260 = pneg %p137
      %p261 = pneg %p134
      %p262 = pneg %p165
      %p263 = pneg %p162
      %s264 = smul.u32 32, %s20
      %p265 = scmp.lt.s32.totalorder %s264, 63
      %s266 = scalar_select %p265, %s264, 63
      %p267 = scmp.lt.s32.totalorder %s21, 0
      %s268 = scalar_select %p267, %s21, 0
      %s269 = sadd.s32 %s268, %s266
      %s270 = smul.addr %s269, 4
      %s271 = scalar_lea.vmem %s4, %s270
      %s272 = smul.u32 32, %s20
      %s273 = smul.u32 2, %s22
      %p274 = scmp.lt.s32.totalorder %s272, 63
      %s275 = scalar_select %p274, %s272, 63
      %p276 = scmp.lt.s32.totalorder %s273, 1
      %s277 = scalar_select %p276, %s273, 1
      %s278 = smul.addr %s275, 2
      %s279 = sadd.s32 %s277, %s278
      %s280 = smul.addr %s279, 4
      %s281 = scalar_lea.vmem %s0, %s280
      %s282 = smul.u32 32, %s20
      %s283 = smul.u32 2, %s22
      %s284 = smul.u32 32, %s22
      %p285 = scmp.lt.s32.totalorder %s284, 31
      %s286 = scalar_select %p285, %s284, 31
      %p287 = scmp.lt.s32.totalorder %s21, 0
      %s288 = scalar_select %p287, %s21, 0
      %s289 = sadd.s32 %s288, %s286
      %s290 = smul.addr %s289, 4
      %s291 = scalar_lea.vmem %s1, %s290
      %s292 = smul.u32 32, %s22
      %p293 = scmp.lt.s32.totalorder %s21, 0
      %s294 = scalar_select %p293, %s21, 0
      %s295 = scalar_lea.vmem %s2, %s294
      %p296 = scmp.lt.s32.totalorder %s21, 0
      %s297 = scalar_select %p296, %s21, 0
      %s298 = scalar_lea.vmem %s3, %s297
      %s299 = smul.u32 32, %s20
      %p300 = scmp.lt.s32.totalorder %s299, 63
      %s301 = scalar_select %p300, %s299, 63
      %p302 = scmp.lt.s32.totalorder %s21, 0
      %s303 = scalar_select %p302, %s21, 0
      %s304 = sadd.s32 %s303, %s301
      %s305 = smul.addr %s304, 4
      %s306 = scalar_lea.vmem %s4, %s305
      %s307 = smul.u32 32, %s20
      %p309 = scmp.eq.s32.totalorder %s22, 0
      // Predicated region
      $region37: #{_forward.106} parent=35 // pred_check
        %p310 = pneg %p309
      $region38: #{_forward.106} parent=35 // pred_check_branch
        %312 = sbr.rel (%p310) target = $region40
      $region39: #{_forward.106} parent=35 // pred_region
        %313 = vst [vmem:[#allocation2] sm:$0xff] 0.0
        %314 = vst [vmem:[#allocation2 + $0x8] sm:$0xff] 0.0
        %315 = vst [vmem:[#allocation2 + $0x10] sm:$0xff] 0.0
        %316 = vst [vmem:[#allocation2 + $0x18] sm:$0xff] 0.0
        %317 = vst [vmem:[#allocation2 + $0x20] sm:$0xff] 0.0
        %318 = vst [vmem:[#allocation2 + $0x28] sm:$0xff] 0.0
        %319 = vst [vmem:[#allocation2 + $0x30] sm:$0xff] 0.0
        %320 = vst [vmem:[#allocation2 + $0x38] sm:$0xff] 0.0
        %321 = vst [vmem:[#allocation2 + $0x40] sm:$0xff] 0.0
        %322 = vst [vmem:[#allocation2 + $0x48] sm:$0xff] 0.0
        %323 = vst [vmem:[#allocation2 + $0x50] sm:$0xff] 0.0
        %324 = vst [vmem:[#allocation2 + $0x58] sm:$0xff] 0.0
        %325 = vst [vmem:[#allocation2 + $0x60] sm:$0xff] 0.0
        %326 = vst [vmem:[#allocation2 + $0x68] sm:$0xff] 0.0
        %327 = vst [vmem:[#allocation2 + $0x70] sm:$0xff] 0.0
        %328 = vst [vmem:[#allocation2 + $0x78] sm:$0xff] 0.0
        %329 = vst [vmem:[#allocation2 + $0x80] sm:$0xff] 0.0
        %330 = vst [vmem:[#allocation2 + $0x88] sm:$0xff] 0.0
        %331 = vst [vmem:[#allocation2 + $0x90] sm:$0xff] 0.0
        %332 = vst [vmem:[#allocation2 + $0x98] sm:$0xff] 0.0
        %333 = vst [vmem:[#allocation2 + $0xa0] sm:$0xff] 0.0
        %334 = vst [vmem:[#allocation2 + $0xa8] sm:$0xff] 0.0
        %335 = vst [vmem:[#allocation2 + $0xb0] sm:$0xff] 0.0
        %336 = vst [vmem:[#allocation2 + $0xb8] sm:$0xff] 0.0
        %337 = vst [vmem:[#allocation2 + $0xc0] sm:$0xff] 0.0
        %338 = vst [vmem:[#allocation2 + $0xc8] sm:$0xff] 0.0
        %339 = vst [vmem:[#allocation2 + $0xd0] sm:$0xff] 0.0
        %340 = vst [vmem:[#allocation2 + $0xd8] sm:$0xff] 0.0
        %341 = vst [vmem:[#allocation2 + $0xe0] sm:$0xff] 0.0
        %342 = vst [vmem:[#allocation2 + $0xe8] sm:$0xff] 0.0
        %343 = vst [vmem:[#allocation2 + $0xf0] sm:$0xff] 0.0
        %344 = vst [vmem:[#allocation2 + $0xf8] sm:$0xff] 0.0
      $region40: #{_forward.106} parent=35 // pred_fallthru
        _
      %v345 = vld [vmem:[#allocation2] sm:$0xff]
      %v346 = vld [vmem:[#allocation2 + $0x8] sm:$0xff]
      %v347 = vld [vmem:[#allocation2 + $0x10] sm:$0xff]
      %v348 = vld [vmem:[#allocation2 + $0x18] sm:$0xff]
      %v349 = vld [vmem:[#allocation2 + $0x20] sm:$0xff]
      %v350 = vld [vmem:[#allocation2 + $0x28] sm:$0xff]
      %v351 = vld [vmem:[#allocation2 + $0x30] sm:$0xff]
      %v352 = vld [vmem:[#allocation2 + $0x38] sm:$0xff]
      %v353 = vld [vmem:[#allocation2 + $0x40] sm:$0xff]
      %v354 = vld [vmem:[#allocation2 + $0x48] sm:$0xff]
      %v355 = vld [vmem:[#allocation2 + $0x50] sm:$0xff]
      %v356 = vld [vmem:[#allocation2 + $0x58] sm:$0xff]
      %v357 = vld [vmem:[#allocation2 + $0x60] sm:$0xff]
      %v358 = vld [vmem:[#allocation2 + $0x68] sm:$0xff]
      %v359 = vld [vmem:[#allocation2 + $0x70] sm:$0xff]
      %v360 = vld [vmem:[#allocation2 + $0x78] sm:$0xff]
      %v361 = vld [vmem:[#allocation2 + $0x80] sm:$0xff]
      %v362 = vld [vmem:[#allocation2 + $0x88] sm:$0xff]
      %v363 = vld [vmem:[#allocation2 + $0x90] sm:$0xff]
      %v364 = vld [vmem:[#allocation2 + $0x98] sm:$0xff]
      %v365 = vld [vmem:[#allocation2 + $0xa0] sm:$0xff]
      %v366 = vld [vmem:[#allocation2 + $0xa8] sm:$0xff]
      %v367 = vld [vmem:[#allocation2 + $0xb0] sm:$0xff]
      %v368 = vld [vmem:[#allocation2 + $0xb8] sm:$0xff]
      %v369 = vld [vmem:[#allocation2 + $0xc0] sm:$0xff]
      %v370 = vld [vmem:[#allocation2 + $0xc8] sm:$0xff]
      %v371 = vld [vmem:[#allocation2 + $0xd0] sm:$0xff]
      %v372 = vld [vmem:[#allocation2 + $0xd8] sm:$0xff]
      %v373 = vld [vmem:[#allocation2 + $0xe0] sm:$0xff]
      %v374 = vld [vmem:[#allocation2 + $0xe8] sm:$0xff]
      %v375 = vld [vmem:[#allocation2 + $0xf0] sm:$0xff]
      %v376 = vld [vmem:[#allocation2 + $0xf8] sm:$0xff]
      %v377 = vld [vmem:[%s281] sm:$0xff]
      %v378 = vld [vmem:[%s281 + $0x8] sm:$0xff]
      %v379 = vld [vmem:[%s281 + $0x10] sm:$0xff]
      %v380 = vld [vmem:[%s281 + $0x18] sm:$0xff]
      %v381 = vld [vmem:[%s281 + $0x20] sm:$0xff]
      %v382 = vld [vmem:[%s281 + $0x28] sm:$0xff]
      %v383 = vld [vmem:[%s281 + $0x30] sm:$0xff]
      %v384 = vld [vmem:[%s281 + $0x38] sm:$0xff]
      %v385 = vld [vmem:[%s281 + $0x40] sm:$0xff]
      %v386 = vld [vmem:[%s281 + $0x48] sm:$0xff]
      %v387 = vld [vmem:[%s281 + $0x50] sm:$0xff]
      %v388 = vld [vmem:[%s281 + $0x58] sm:$0xff]
      %v389 = vld [vmem:[%s281 + $0x60] sm:$0xff]
      %v390 = vld [vmem:[%s281 + $0x68] sm:$0xff]
      %v391 = vld [vmem:[%s281 + $0x70] sm:$0xff]
      %v392 = vld [vmem:[%s281 + $0x78] sm:$0xff]
      %v393 = vld [vmem:[%s281 + $0x80] sm:$0xff]
      %v394 = vld [vmem:[%s281 + $0x88] sm:$0xff]
      %v395 = vld [vmem:[%s281 + $0x90] sm:$0xff]
      %v396 = vld [vmem:[%s281 + $0x98] sm:$0xff]
      %v397 = vld [vmem:[%s281 + $0xa0] sm:$0xff]
      %v398 = vld [vmem:[%s281 + $0xa8] sm:$0xff]
      %v399 = vld [vmem:[%s281 + $0xb0] sm:$0xff]
      %v400 = vld [vmem:[%s281 + $0xb8] sm:$0xff]
      %v401 = vld [vmem:[%s281 + $0xc0] sm:$0xff]
      %v402 = vld [vmem:[%s281 + $0xc8] sm:$0xff]
      %v403 = vld [vmem:[%s281 + $0xd0] sm:$0xff]
      %v404 = vld [vmem:[%s281 + $0xd8] sm:$0xff]
      %v405 = vld [vmem:[%s281 + $0xe0] sm:$0xff]
      %v406 = vld [vmem:[%s281 + $0xe8] sm:$0xff]
      %v407 = vld [vmem:[%s281 + $0xf0] sm:$0xff]
      %v408 = vld [vmem:[%s281 + $0xf8] sm:$0xff]
      %v409 = vld [vmem:[%s291] sm:$0xf]
      %v410 = vld [vmem:[%s291 + $0x4] sm:$0xf]
      %v411 = vld [vmem:[%s291 + $0x8] sm:$0xf]
      %v412 = vld [vmem:[%s291 + $0xc] sm:$0xf]
      %v413 = vld [vmem:[%s291 + $0x10] sm:$0xf]
      %v414 = vld [vmem:[%s291 + $0x14] sm:$0xf]
      %v415 = vld [vmem:[%s291 + $0x18] sm:$0xf]
      %v416 = vld [vmem:[%s291 + $0x1c] sm:$0xf]
      %v417 = vld [vmem:[%s291 + $0x20] sm:$0xf]
      %v418 = vld [vmem:[%s291 + $0x24] sm:$0xf]
      %v419 = vld [vmem:[%s291 + $0x28] sm:$0xf]
      %v420 = vld [vmem:[%s291 + $0x2c] sm:$0xf]
      %v421 = vld [vmem:[%s291 + $0x30] sm:$0xf]
      %v422 = vld [vmem:[%s291 + $0x34] sm:$0xf]
      %v423 = vld [vmem:[%s291 + $0x38] sm:$0xf]
      %v424 = vld [vmem:[%s291 + $0x3c] sm:$0xf]
      %v425 = vld [vmem:[%s291 + $0x40] sm:$0xf]
      %v426 = vld [vmem:[%s291 + $0x44] sm:$0xf]
      %v427 = vld [vmem:[%s291 + $0x48] sm:$0xf]
      %v428 = vld [vmem:[%s291 + $0x4c] sm:$0xf]
      %v429 = vld [vmem:[%s291 + $0x50] sm:$0xf]
      %v430 = vld [vmem:[%s291 + $0x54] sm:$0xf]
      %v431 = vld [vmem:[%s291 + $0x58] sm:$0xf]
      %v432 = vld [vmem:[%s291 + $0x5c] sm:$0xf]
      %v433 = vld [vmem:[%s291 + $0x60] sm:$0xf]
      %v434 = vld [vmem:[%s291 + $0x64] sm:$0xf]
      %v435 = vld [vmem:[%s291 + $0x68] sm:$0xf]
      %v436 = vld [vmem:[%s291 + $0x6c] sm:$0xf]
      %v437 = vld [vmem:[%s291 + $0x70] sm:$0xf]
      %v438 = vld [vmem:[%s291 + $0x74] sm:$0xf]
      %v439 = vld [vmem:[%s291 + $0x78] sm:$0xf]
      %v440 = vld [vmem:[%s291 + $0x7c] sm:$0xf]
      %v473 = vunpack.c.l.b16 %v377
      %v474 = vunpack.c.h.b16 %v377
      %v475 = vunpack.c.l.b16 %v378
      %v476 = vunpack.c.h.b16 %v378
      %v477 = vunpack.c.l.b16 %v379
      %v478 = vunpack.c.h.b16 %v379
      %v479 = vunpack.c.l.b16 %v380
      %v480 = vunpack.c.h.b16 %v380
      %v481 = vunpack.c.l.b16 %v381
      %v482 = vunpack.c.h.b16 %v381
      %v483 = vunpack.c.l.b16 %v382
      %v484 = vunpack.c.h.b16 %v382
      %v485 = vunpack.c.l.b16 %v383
      %v486 = vunpack.c.h.b16 %v383
      %v487 = vunpack.c.l.b16 %v384
      %v488 = vunpack.c.h.b16 %v384
      %v489 = vunpack.c.l.b16 %v385
      %v490 = vunpack.c.h.b16 %v385
      %v491 = vunpack.c.l.b16 %v386
      %v492 = vunpack.c.h.b16 %v386
      %v493 = vunpack.c.l.b16 %v387
      %v494 = vunpack.c.h.b16 %v387
      %v495 = vunpack.c.l.b16 %v388
      %v496 = vunpack.c.h.b16 %v388
      %v497 = vunpack.c.l.b16 %v389
      %v498 = vunpack.c.h.b16 %v389
      %v499 = vunpack.c.l.b16 %v390
      %v500 = vunpack.c.h.b16 %v390
      %v501 = vunpack.c.l.b16 %v391
      %v502 = vunpack.c.h.b16 %v391
      %v503 = vunpack.c.l.b16 %v392
      %v504 = vunpack.c.h.b16 %v392
      %v505 = vunpack.c.l.b16 %v393
      %v506 = vunpack.c.h.b16 %v393
      %v507 = vunpack.c.l.b16 %v394
      %v508 = vunpack.c.h.b16 %v394
      %v509 = vunpack.c.l.b16 %v395
      %v510 = vunpack.c.h.b16 %v395
      %v511 = vunpack.c.l.b16 %v396
      %v512 = vunpack.c.h.b16 %v396
      %v513 = vunpack.c.l.b16 %v397
      %v514 = vunpack.c.h.b16 %v397
      %v515 = vunpack.c.l.b16 %v398
      %v516 = vunpack.c.h.b16 %v398
      %v517 = vunpack.c.l.b16 %v399
      %v518 = vunpack.c.h.b16 %v399
      %v519 = vunpack.c.l.b16 %v400
      %v520 = vunpack.c.h.b16 %v400
      %v521 = vunpack.c.l.b16 %v401
      %v522 = vunpack.c.h.b16 %v401
      %v523 = vunpack.c.l.b16 %v402
      %v524 = vunpack.c.h.b16 %v402
      %v525 = vunpack.c.l.b16 %v403
      %v526 = vunpack.c.h.b16 %v403
      %v527 = vunpack.c.l.b16 %v404
      %v528 = vunpack.c.h.b16 %v404
      %v529 = vunpack.c.l.b16 %v405
      %v530 = vunpack.c.h.b16 %v405
      %v531 = vunpack.c.l.b16 %v406
      %v532 = vunpack.c.h.b16 %v406
      %v533 = vunpack.c.l.b16 %v407
      %v534 = vunpack.c.h.b16 %v407
      %v535 = vunpack.c.l.b16 %v408
      %v536 = vunpack.c.h.b16 %v408
      %v537 = vpack.c.b16 %v475, %v473
      %v538 = vpack.c.b16 %v476, %v474
      %v539 = vpack.c.b16 %v479, %v477
      %v540 = vpack.c.b16 %v480, %v478
      %v541 = vpack.c.b16 %v483, %v481
      %v542 = vpack.c.b16 %v484, %v482
      %v543 = vpack.c.b16 %v487, %v485
      %v544 = vpack.c.b16 %v488, %v486
      %v545 = vpack.c.b16 %v491, %v489
      %v546 = vpack.c.b16 %v492, %v490
      %v547 = vpack.c.b16 %v495, %v493
      %v548 = vpack.c.b16 %v496, %v494
      %v549 = vpack.c.b16 %v499, %v497
      %v550 = vpack.c.b16 %v500, %v498
      %v551 = vpack.c.b16 %v503, %v501
      %v552 = vpack.c.b16 %v504, %v502
      %v553 = vpack.c.b16 %v507, %v505
      %v554 = vpack.c.b16 %v508, %v506
      %v555 = vpack.c.b16 %v511, %v509
      %v556 = vpack.c.b16 %v512, %v510
      %v557 = vpack.c.b16 %v515, %v513
      %v558 = vpack.c.b16 %v516, %v514
      %v559 = vpack.c.b16 %v519, %v517
      %v560 = vpack.c.b16 %v520, %v518
      %v561 = vpack.c.b16 %v523, %v521
      %v562 = vpack.c.b16 %v524, %v522
      %v563 = vpack.c.b16 %v527, %v525
      %v564 = vpack.c.b16 %v528, %v526
      %v565 = vpack.c.b16 %v531, %v529
      %v566 = vpack.c.b16 %v532, %v530
      %v567 = vpack.c.b16 %v535, %v533
      %v568 = vpack.c.b16 %v536, %v534
      %v633 = vunpack.c.l.b16 %v409
      %v634 = vunpack.c.l.b16 %v410
      %v635 = vunpack.c.l.b16 %v411
      %v636 = vunpack.c.l.b16 %v412
      %v637 = vunpack.c.l.b16 %v413
      %v638 = vunpack.c.l.b16 %v414
      %v639 = vunpack.c.l.b16 %v415
      %v640 = vunpack.c.l.b16 %v416
      %v641 = vunpack.c.l.b16 %v417
      %v642 = vunpack.c.l.b16 %v418
      %v643 = vunpack.c.l.b16 %v419
      %v644 = vunpack.c.l.b16 %v420
      %v645 = vunpack.c.l.b16 %v421
      %v646 = vunpack.c.l.b16 %v422
      %v647 = vunpack.c.l.b16 %v423
      %v648 = vunpack.c.l.b16 %v424
      %v649 = vunpack.c.l.b16 %v425
      %v650 = vunpack.c.l.b16 %v426
      %v651 = vunpack.c.l.b16 %v427
      %v652 = vunpack.c.l.b16 %v428
      %v653 = vunpack.c.l.b16 %v429
      %v654 = vunpack.c.l.b16 %v430
      %v655 = vunpack.c.l.b16 %v431
      %v656 = vunpack.c.l.b16 %v432
      %v657 = vunpack.c.l.b16 %v433
      %v658 = vunpack.c.l.b16 %v434
      %v659 = vunpack.c.l.b16 %v435
      %v660 = vunpack.c.l.b16 %v436
      %v661 = vunpack.c.l.b16 %v437
      %v662 = vunpack.c.l.b16 %v438
      %v663 = vunpack.c.l.b16 %v439
      %v664 = vunpack.c.l.b16 %v440
      %v665 = vpack.c.b16 %v634, %v633
      %v666 = vpack.c.b16 %v636, %v635
      %v667 = vpack.c.b16 %v638, %v637
      %v668 = vpack.c.b16 %v640, %v639
      %v669 = vpack.c.b16 %v642, %v641
      %v670 = vpack.c.b16 %v644, %v643
      %v671 = vpack.c.b16 %v646, %v645
      %v672 = vpack.c.b16 %v648, %v647
      %v673 = vpack.c.b16 %v650, %v649
      %v674 = vpack.c.b16 %v652, %v651
      %v675 = vpack.c.b16 %v654, %v653
      %v676 = vpack.c.b16 %v656, %v655
      %v677 = vpack.c.b16 %v658, %v657
      %v678 = vpack.c.b16 %v660, %v659
      %v679 = vpack.c.b16 %v662, %v661
      %v680 = vpack.c.b16 %v664, %v663
      %697 = vmatprep.subr.bf16.mxu0 0
      %698 = vmatpush1.bf16.msra.mxu0 %v672
      %699 = vmatprep.subr.bf16.mxu0 0
      %700 = vmatpush1.bf16.msra.mxu0 %v671
      %701 = vmatprep.subr.bf16.mxu0 0
      %702 = vmatpush1.bf16.msra.mxu0 %v670
      %703 = vmatprep.subr.bf16.mxu0 0
      %704 = vmatpush1.bf16.msra.mxu0 %v669
      %705 = vmatprep.subr.bf16.mxu0 0
      %706 = vmatpush1.bf16.msra.mxu0 %v668
      %707 = vmatprep.subr.bf16.mxu0 0
      %708 = vmatpush1.bf16.msra.mxu0 %v667
      %709 = vmatprep.subr.bf16.mxu0 0
      %710 = vmatpush1.bf16.msra.mxu0 %v666
      %711 = vmatprep.subr.bf16.mxu0 0
      %712 = vmatpush1.bf16.msra.mxu0 %v665
      %713 = vmatprep.subr.bf16.mxu0 0
      %714 = vmatpush2.bf16.msra.mxu0 %v680
      %715 = vmatprep.subr.bf16.mxu0 0
      %716 = vmatpush2.bf16.msra.mxu0 %v679
      %717 = vmatprep.subr.bf16.mxu0 0
      %718 = vmatpush2.bf16.msra.mxu0 %v678
      %719 = vmatprep.subr.bf16.mxu0 0
      %720 = vmatpush2.bf16.msra.mxu0 %v677
      %721 = vmatprep.subr.bf16.mxu0 0
      %722 = vmatpush2.bf16.msra.mxu0 %v676
      %723 = vmatprep.subr.bf16.mxu0 0
      %724 = vmatpush2.bf16.msra.mxu0 %v675
      %725 = vmatprep.subr.bf16.mxu0 0
      %726 = vmatpush2.bf16.msra.mxu0 %v674
      %727 = vmatprep.subr.bf16.mxu0 0
      %728 = vmatpush2.bf16.msra.mxu0 %v673
      %729 = vmatprep.mubr.bf16.mxu0 %v538
      %730 = vmatmul.mubr.bf16.gmra.mxu0 %v537
      %v731 = vpop.f32.mrf.mxu0
      %v732 = vadd.f32 0.0, %v731
      %v733 = vpop.f32.mrf.mxu0
      %v734 = vpop.f32.mrf.mxu0
      %v735 = vadd.f32 0.0, %v734
      %v736 = vpop.f32.mrf.mxu0
      %737 = vmatprep.mubr.bf16.mxu0 %v540
      %738 = vmatmul.mubr.bf16.gmra.mxu0 %v539
      %v739 = vpop.f32.mrf.mxu0
      %v740 = vadd.f32 0.0, %v739
      %v741 = vpop.f32.mrf.mxu0
      %v742 = vpop.f32.mrf.mxu0
      %v743 = vadd.f32 0.0, %v742
      %v744 = vpop.f32.mrf.mxu0
      %745 = vmatprep.mubr.bf16.mxu0 %v542
      %746 = vmatmul.mubr.bf16.gmra.mxu0 %v541
      %v747 = vpop.f32.mrf.mxu0
      %v748 = vadd.f32 0.0, %v747
      %v749 = vpop.f32.mrf.mxu0
      %v750 = vpop.f32.mrf.mxu0
      %v751 = vadd.f32 0.0, %v750
      %v752 = vpop.f32.mrf.mxu0
      %753 = vmatprep.mubr.bf16.mxu0 %v544
      %754 = vmatmul.mubr.bf16.gmra.mxu0 %v543
      %v755 = vpop.f32.mrf.mxu0
      %v756 = vadd.f32 0.0, %v755
      %v757 = vpop.f32.mrf.mxu0
      %v758 = vpop.f32.mrf.mxu0
      %v759 = vadd.f32 0.0, %v758
      %v760 = vpop.f32.mrf.mxu0
      %761 = vmatprep.mubr.bf16.mxu0 %v546
      %762 = vmatmul.mubr.bf16.gmra.mxu0 %v545
      %v763 = vpop.f32.mrf.mxu0
      %v764 = vadd.f32 0.0, %v763
      %v765 = vpop.f32.mrf.mxu0
      %v766 = vpop.f32.mrf.mxu0
      %v767 = vadd.f32 0.0, %v766
      %v768 = vpop.f32.mrf.mxu0
      %769 = vmatprep.mubr.bf16.mxu0 %v548
      %770 = vmatmul.mubr.bf16.gmra.mxu0 %v547
      %v771 = vpop.f32.mrf.mxu0
      %v772 = vadd.f32 0.0, %v771
      %v773 = vpop.f32.mrf.mxu0
      %v774 = vpop.f32.mrf.mxu0
      %v775 = vadd.f32 0.0, %v774
      %v776 = vpop.f32.mrf.mxu0
      %777 = vmatprep.mubr.bf16.mxu0 %v550
      %778 = vmatmul.mubr.bf16.gmra.mxu0 %v549
      %v779 = vpop.f32.mrf.mxu0
      %v780 = vadd.f32 0.0, %v779
      %v781 = vpop.f32.mrf.mxu0
      %v782 = vpop.f32.mrf.mxu0
      %v783 = vadd.f32 0.0, %v782
      %v784 = vpop.f32.mrf.mxu0
      %785 = vmatprep.mubr.bf16.mxu0 %v552
      %786 = vmatmul.mubr.bf16.gmra.mxu0 %v551
      %v787 = vpop.f32.mrf.mxu0
      %v788 = vadd.f32 0.0, %v787
      %v789 = vpop.f32.mrf.mxu0
      %v790 = vpop.f32.mrf.mxu0
      %v791 = vadd.f32 0.0, %v790
      %v792 = vpop.f32.mrf.mxu0
      %793 = vmatprep.mubr.bf16.mxu0 %v554
      %794 = vmatmul.mubr.bf16.gmra.mxu0 %v553
      %v795 = vpop.f32.mrf.mxu0
      %v796 = vadd.f32 0.0, %v795
      %v797 = vpop.f32.mrf.mxu0
      %v798 = vpop.f32.mrf.mxu0
      %v799 = vadd.f32 0.0, %v798
      %v800 = vpop.f32.mrf.mxu0
      %801 = vmatprep.mubr.bf16.mxu0 %v556
      %802 = vmatmul.mubr.bf16.gmra.mxu0 %v555
      %v803 = vpop.f32.mrf.mxu0
      %v804 = vadd.f32 0.0, %v803
      %v805 = vpop.f32.mrf.mxu0
      %v806 = vpop.f32.mrf.mxu0
      %v807 = vadd.f32 0.0, %v806
      %v808 = vpop.f32.mrf.mxu0
      %809 = vmatprep.mubr.bf16.mxu0 %v558
      %810 = vmatmul.mubr.bf16.gmra.mxu0 %v557
      %v811 = vpop.f32.mrf.mxu0
      %v812 = vadd.f32 0.0, %v811
      %v813 = vpop.f32.mrf.mxu0
      %v814 = vpop.f32.mrf.mxu0
      %v815 = vadd.f32 0.0, %v814
      %v816 = vpop.f32.mrf.mxu0
      %817 = vmatprep.mubr.bf16.mxu0 %v560
      %818 = vmatmul.mubr.bf16.gmra.mxu0 %v559
      %v819 = vpop.f32.mrf.mxu0
      %v820 = vadd.f32 0.0, %v819
      %v821 = vpop.f32.mrf.mxu0
      %v822 = vpop.f32.mrf.mxu0
      %v823 = vadd.f32 0.0, %v822
      %v824 = vpop.f32.mrf.mxu0
      %825 = vmatprep.mubr.bf16.mxu0 %v562
      %826 = vmatmul.mubr.bf16.gmra.mxu0 %v561
      %v827 = vpop.f32.mrf.mxu0
      %v828 = vadd.f32 0.0, %v827
      %v829 = vpop.f32.mrf.mxu0
      %v830 = vpop.f32.mrf.mxu0
      %v831 = vadd.f32 0.0, %v830
      %v832 = vpop.f32.mrf.mxu0
      %833 = vmatprep.mubr.bf16.mxu0 %v564
      %834 = vmatmul.mubr.bf16.gmra.mxu0 %v563
      %v835 = vpop.f32.mrf.mxu0
      %v836 = vadd.f32 0.0, %v835
      %v837 = vpop.f32.mrf.mxu0
      %v838 = vpop.f32.mrf.mxu0
      %v839 = vadd.f32 0.0, %v838
      %v840 = vpop.f32.mrf.mxu0
      %841 = vmatprep.mubr.bf16.mxu0 %v566
      %842 = vmatmul.mubr.bf16.gmra.mxu0 %v565
      %v843 = vpop.f32.mrf.mxu0
      %v844 = vadd.f32 0.0, %v843
      %v845 = vpop.f32.mrf.mxu0
      %v846 = vpop.f32.mrf.mxu0
      %v847 = vadd.f32 0.0, %v846
      %v848 = vpop.f32.mrf.mxu0
      %849 = vmatprep.mubr.bf16.mxu0 %v568
      %850 = vmatmul.mubr.bf16.gmra.mxu0 %v567
      %v851 = vpop.f32.mrf.mxu0
      %v852 = vadd.f32 0.0, %v851
      %v853 = vpop.f32.mrf.mxu0
      %v854 = vpop.f32.mrf.mxu0
      %v855 = vadd.f32 0.0, %v854
      %v856 = vpop.f32.mrf.mxu0
      %857 = vdwg.mxu0
      %v858 = vadd.f32 %v345, %v732
      %v859 = vadd.f32 %v346, %v735
      %v860 = vadd.f32 %v347, %v740
      %v861 = vadd.f32 %v348, %v743
      %v862 = vadd.f32 %v349, %v748
      %v863 = vadd.f32 %v350, %v751
      %v864 = vadd.f32 %v351, %v756
      %v865 = vadd.f32 %v352, %v759
      %v866 = vadd.f32 %v353, %v764
      %v867 = vadd.f32 %v354, %v767
      %v868 = vadd.f32 %v355, %v772
      %v869 = vadd.f32 %v356, %v775
      %v870 = vadd.f32 %v357, %v780
      %v871 = vadd.f32 %v358, %v783
      %v872 = vadd.f32 %v359, %v788
      %v873 = vadd.f32 %v360, %v791
      %v874 = vadd.f32 %v361, %v796
      %v875 = vadd.f32 %v362, %v799
      %v876 = vadd.f32 %v363, %v804
      %v877 = vadd.f32 %v364, %v807
      %v878 = vadd.f32 %v365, %v812
      %v879 = vadd.f32 %v366, %v815
      %v880 = vadd.f32 %v367, %v820
      %v881 = vadd.f32 %v368, %v823
      %v882 = vadd.f32 %v369, %v828
      %v883 = vadd.f32 %v370, %v831
      %v884 = vadd.f32 %v371, %v836
      %v885 = vadd.f32 %v372, %v839
      %v886 = vadd.f32 %v373, %v844
      %v887 = vadd.f32 %v374, %v847
      %v888 = vadd.f32 %v375, %v852
      %v889 = vadd.f32 %v376, %v855
      %890 = vst [vmem:[#allocation2] sm:$0xff] %v858
      %891 = vst [vmem:[#allocation2 + $0x8] sm:$0xff] %v859
      %892 = vst [vmem:[#allocation2 + $0x10] sm:$0xff] %v860
      %893 = vst [vmem:[#allocation2 + $0x18] sm:$0xff] %v861
      %894 = vst [vmem:[#allocation2 + $0x20] sm:$0xff] %v862
      %895 = vst [vmem:[#allocation2 + $0x28] sm:$0xff] %v863
      %896 = vst [vmem:[#allocation2 + $0x30] sm:$0xff] %v864
      %897 = vst [vmem:[#allocation2 + $0x38] sm:$0xff] %v865
      %898 = vst [vmem:[#allocation2 + $0x40] sm:$0xff] %v866
      %899 = vst [vmem:[#allocation2 + $0x48] sm:$0xff] %v867
      %900 = vst [vmem:[#allocation2 + $0x50] sm:$0xff] %v868
      %901 = vst [vmem:[#allocation2 + $0x58] sm:$0xff] %v869
      %902 = vst [vmem:[#allocation2 + $0x60] sm:$0xff] %v870
      %903 = vst [vmem:[#allocation2 + $0x68] sm:$0xff] %v871
      %904 = vst [vmem:[#allocation2 + $0x70] sm:$0xff] %v872
      %905 = vst [vmem:[#allocation2 + $0x78] sm:$0xff] %v873
      %906 = vst [vmem:[#allocation2 + $0x80] sm:$0xff] %v874
      %907 = vst [vmem:[#allocation2 + $0x88] sm:$0xff] %v875
      %908 = vst [vmem:[#allocation2 + $0x90] sm:$0xff] %v876
      %909 = vst [vmem:[#allocation2 + $0x98] sm:$0xff] %v877
      %910 = vst [vmem:[#allocation2 + $0xa0] sm:$0xff] %v878
      %911 = vst [vmem:[#allocation2 + $0xa8] sm:$0xff] %v879
      %912 = vst [vmem:[#allocation2 + $0xb0] sm:$0xff] %v880
      %913 = vst [vmem:[#allocation2 + $0xb8] sm:$0xff] %v881
      %914 = vst [vmem:[#allocation2 + $0xc0] sm:$0xff] %v882
      %915 = vst [vmem:[#allocation2 + $0xc8] sm:$0xff] %v883
      %916 = vst [vmem:[#allocation2 + $0xd0] sm:$0xff] %v884
      %917 = vst [vmem:[#allocation2 + $0xd8] sm:$0xff] %v885
      %918 = vst [vmem:[#allocation2 + $0xe0] sm:$0xff] %v886
      %919 = vst [vmem:[#allocation2 + $0xe8] sm:$0xff] %v887
      %920 = vst [vmem:[#allocation2 + $0xf0] sm:$0xff] %v888
      %921 = vst [vmem:[#allocation2 + $0xf8] sm:$0xff] %v889
      // Predicated region
      $region41: #{_forward.106} parent=35 // pred_check
        %p922 = pneg %p309
      $region42: #{_forward.106} parent=35 // pred_check_branch
        %924 = sbr.rel (%p922) target = $region44
      $region43: #{_forward.106} parent=35 // pred_region
        %v925 = vld [vmem:[#allocation2] sm:$0xff]
        %v926 = vld [vmem:[#allocation2 + $0x8] sm:$0xff]
        %v927 = vld [vmem:[#allocation2 + $0x10] sm:$0xff]
        %v928 = vld [vmem:[#allocation2 + $0x18] sm:$0xff]
        %v929 = vld [vmem:[#allocation2 + $0x20] sm:$0xff]
        %v930 = vld [vmem:[#allocation2 + $0x28] sm:$0xff]
        %v931 = vld [vmem:[#allocation2 + $0x30] sm:$0xff]
        %v932 = vld [vmem:[#allocation2 + $0x38] sm:$0xff]
        %v933 = vld [vmem:[#allocation2 + $0x40] sm:$0xff]
        %v934 = vld [vmem:[#allocation2 + $0x48] sm:$0xff]
        %v935 = vld [vmem:[#allocation2 + $0x50] sm:$0xff]
        %v936 = vld [vmem:[#allocation2 + $0x58] sm:$0xff]
        %v937 = vld [vmem:[#allocation2 + $0x60] sm:$0xff]
        %v938 = vld [vmem:[#allocation2 + $0x68] sm:$0xff]
        %v939 = vld [vmem:[#allocation2 + $0x70] sm:$0xff]
        %v940 = vld [vmem:[#allocation2 + $0x78] sm:$0xff]
        %v941 = vld [vmem:[#allocation2 + $0x80] sm:$0xff]
        %v942 = vld [vmem:[#allocation2 + $0x88] sm:$0xff]
        %v943 = vld [vmem:[#allocation2 + $0x90] sm:$0xff]
        %v944 = vld [vmem:[#allocation2 + $0x98] sm:$0xff]
        %v945 = vld [vmem:[#allocation2 + $0xa0] sm:$0xff]
        %v946 = vld [vmem:[#allocation2 + $0xa8] sm:$0xff]
        %v947 = vld [vmem:[#allocation2 + $0xb0] sm:$0xff]
        %v948 = vld [vmem:[#allocation2 + $0xb8] sm:$0xff]
        %v949 = vld [vmem:[#allocation2 + $0xc0] sm:$0xff]
        %v950 = vld [vmem:[#allocation2 + $0xc8] sm:$0xff]
        %v951 = vld [vmem:[#allocation2 + $0xd0] sm:$0xff]
        %v952 = vld [vmem:[#allocation2 + $0xd8] sm:$0xff]
        %v953 = vld [vmem:[#allocation2 + $0xe0] sm:$0xff]
        %v954 = vld [vmem:[#allocation2 + $0xe8] sm:$0xff]
        %v955 = vld [vmem:[#allocation2 + $0xf0] sm:$0xff]
        %v956 = vld [vmem:[#allocation2 + $0xf8] sm:$0xff]
        %v957 = vld [vmem:[%s295] sm:$0x1]
        %v959 = vlaneseq
        %v960 = vshrl.u32 %v959, 7
        %v961 = vsub.s32 0, %v960
        %v962 = vrot.slane %v957, %v961
        %v964 = vmul.f32 %v925, %v962
        %v965 = vmul.f32 %v926, %v962
        %v966 = vmul.f32 %v927, %v962
        %v967 = vmul.f32 %v928, %v962
        %v968 = vmul.f32 %v929, %v962
        %v969 = vmul.f32 %v930, %v962
        %v970 = vmul.f32 %v931, %v962
        %v971 = vmul.f32 %v932, %v962
        %v972 = vmul.f32 %v933, %v962
        %v973 = vmul.f32 %v934, %v962
        %v974 = vmul.f32 %v935, %v962
        %v975 = vmul.f32 %v936, %v962
        %v976 = vmul.f32 %v937, %v962
        %v977 = vmul.f32 %v938, %v962
        %v978 = vmul.f32 %v939, %v962
        %v979 = vmul.f32 %v940, %v962
        %v980 = vmul.f32 %v941, %v962
        %v981 = vmul.f32 %v942, %v962
        %v982 = vmul.f32 %v943, %v962
        %v983 = vmul.f32 %v944, %v962
        %v984 = vmul.f32 %v945, %v962
        %v985 = vmul.f32 %v946, %v962
        %v986 = vmul.f32 %v947, %v962
        %v987 = vmul.f32 %v948, %v962
        %v988 = vmul.f32 %v949, %v962
        %v989 = vmul.f32 %v950, %v962
        %v990 = vmul.f32 %v951, %v962
        %v991 = vmul.f32 %v952, %v962
        %v992 = vmul.f32 %v953, %v962
        %v993 = vmul.f32 %v954, %v962
        %v994 = vmul.f32 %v955, %v962
        %v995 = vmul.f32 %v956, %v962
        %v996 = vld [vmem:[%s298] sm:$0x1]
        %v998 = vlaneseq
        %v999 = vshrl.u32 %v998, 7
        %v1000 = vsub.s32 0, %v999
        %v1001 = vrot.slane %v996, %v1000
        %v1003 = vadd.f32 %v964, %v1001
        %v1004 = vadd.f32 %v965, %v1001
        %v1005 = vadd.f32 %v966, %v1001
        %v1006 = vadd.f32 %v967, %v1001
        %v1007 = vadd.f32 %v968, %v1001
        %v1008 = vadd.f32 %v969, %v1001
        %v1009 = vadd.f32 %v970, %v1001
        %v1010 = vadd.f32 %v971, %v1001
        %v1011 = vadd.f32 %v972, %v1001
        %v1012 = vadd.f32 %v973, %v1001
        %v1013 = vadd.f32 %v974, %v1001
        %v1014 = vadd.f32 %v975, %v1001
        %v1015 = vadd.f32 %v976, %v1001
        %v1016 = vadd.f32 %v977, %v1001
        %v1017 = vadd.f32 %v978, %v1001
        %v1018 = vadd.f32 %v979, %v1001
        %v1019 = vadd.f32 %v980, %v1001
        %v1020 = vadd.f32 %v981, %v1001
        %v1021 = vadd.f32 %v982, %v1001
        %v1022 = vadd.f32 %v983, %v1001
        %v1023 = vadd.f32 %v984, %v1001
        %v1024 = vadd.f32 %v985, %v1001
        %v1025 = vadd.f32 %v986, %v1001
        %v1026 = vadd.f32 %v987, %v1001
        %v1027 = vadd.f32 %v988, %v1001
        %v1028 = vadd.f32 %v989, %v1001
        %v1029 = vadd.f32 %v990, %v1001
        %v1030 = vadd.f32 %v991, %v1001
        %v1031 = vadd.f32 %v992, %v1001
        %v1032 = vadd.f32 %v993, %v1001
        %v1033 = vadd.f32 %v994, %v1001
        %v1034 = vadd.f32 %v995, %v1001
        %v1035 = vmax.f32 %v1003, 0.0
        %v1036 = vmax.f32 %v1004, 0.0
        %v1037 = vmax.f32 %v1005, 0.0
        %v1038 = vmax.f32 %v1006, 0.0
        %v1039 = vmax.f32 %v1007, 0.0
        %v1040 = vmax.f32 %v1008, 0.0
        %v1041 = vmax.f32 %v1009, 0.0
        %v1042 = vmax.f32 %v1010, 0.0
        %v1043 = vmax.f32 %v1011, 0.0
        %v1044 = vmax.f32 %v1012, 0.0
        %v1045 = vmax.f32 %v1013, 0.0
        %v1046 = vmax.f32 %v1014, 0.0
        %v1047 = vmax.f32 %v1015, 0.0
        %v1048 = vmax.f32 %v1016, 0.0
        %v1049 = vmax.f32 %v1017, 0.0
        %v1050 = vmax.f32 %v1018, 0.0
        %v1051 = vmax.f32 %v1019, 0.0
        %v1052 = vmax.f32 %v1020, 0.0
        %v1053 = vmax.f32 %v1021, 0.0
        %v1054 = vmax.f32 %v1022, 0.0
        %v1055 = vmax.f32 %v1023, 0.0
        %v1056 = vmax.f32 %v1024, 0.0
        %v1057 = vmax.f32 %v1025, 0.0
        %v1058 = vmax.f32 %v1026, 0.0
        %v1059 = vmax.f32 %v1027, 0.0
        %v1060 = vmax.f32 %v1028, 0.0
        %v1061 = vmax.f32 %v1029, 0.0
        %v1062 = vmax.f32 %v1030, 0.0
        %v1063 = vmax.f32 %v1031, 0.0
        %v1064 = vmax.f32 %v1032, 0.0
        %v1065 = vmax.f32 %v1033, 0.0
        %v1066 = vmax.f32 %v1034, 0.0
        %v1067 = vpack.c.bf16 %v1036, %v1035
        %v1068 = vpack.c.bf16 %v1038, %v1037
        %v1069 = vpack.c.bf16 %v1040, %v1039
        %v1070 = vpack.c.bf16 %v1042, %v1041
        %v1071 = vpack.c.bf16 %v1044, %v1043
        %v1072 = vpack.c.bf16 %v1046, %v1045
        %v1073 = vpack.c.bf16 %v1048, %v1047
        %v1074 = vpack.c.bf16 %v1050, %v1049
        %v1075 = vpack.c.bf16 %v1052, %v1051
        %v1076 = vpack.c.bf16 %v1054, %v1053
        %v1077 = vpack.c.bf16 %v1056, %v1055
        %v1078 = vpack.c.bf16 %v1058, %v1057
        %v1079 = vpack.c.bf16 %v1060, %v1059
        %v1080 = vpack.c.bf16 %v1062, %v1061
        %v1081 = vpack.c.bf16 %v1064, %v1063
        %v1082 = vpack.c.bf16 %v1066, %v1065
        %v1099 = vunpack.c.l.b16 %v1067
        %v1100 = vunpack.c.h.b16 %v1067
        %v1101 = vunpack.c.l.b16 %v1068
        %v1102 = vunpack.c.h.b16 %v1068
        %v1103 = vunpack.c.l.b16 %v1069
        %v1104 = vunpack.c.h.b16 %v1069
        %v1105 = vunpack.c.l.b16 %v1070
        %v1106 = vunpack.c.h.b16 %v1070
        %v1107 = vunpack.c.l.b16 %v1071
        %v1108 = vunpack.c.h.b16 %v1071
        %v1109 = vunpack.c.l.b16 %v1072
        %v1110 = vunpack.c.h.b16 %v1072
        %v1111 = vunpack.c.l.b16 %v1073
        %v1112 = vunpack.c.h.b16 %v1073
        %v1113 = vunpack.c.l.b16 %v1074
        %v1114 = vunpack.c.h.b16 %v1074
        %v1115 = vunpack.c.l.b16 %v1075
        %v1116 = vunpack.c.h.b16 %v1075
        %v1117 = vunpack.c.l.b16 %v1076
        %v1118 = vunpack.c.h.b16 %v1076
        %v1119 = vunpack.c.l.b16 %v1077
        %v1120 = vunpack.c.h.b16 %v1077
        %v1121 = vunpack.c.l.b16 %v1078
        %v1122 = vunpack.c.h.b16 %v1078
        %v1123 = vunpack.c.l.b16 %v1079
        %v1124 = vunpack.c.h.b16 %v1079
        %v1125 = vunpack.c.l.b16 %v1080
        %v1126 = vunpack.c.h.b16 %v1080
        %v1127 = vunpack.c.l.b16 %v1081
        %v1128 = vunpack.c.h.b16 %v1081
        %v1129 = vunpack.c.l.b16 %v1082
        %v1130 = vunpack.c.h.b16 %v1082
        %v1131 = vpack.c.b16 %v1099, %v1099
        %v1132 = vpack.c.b16 %v1100, %v1100
        %v1133 = vpack.c.b16 %v1101, %v1101
        %v1134 = vpack.c.b16 %v1102, %v1102
        %v1135 = vpack.c.b16 %v1103, %v1103
        %v1136 = vpack.c.b16 %v1104, %v1104
        %v1137 = vpack.c.b16 %v1105, %v1105
        %v1138 = vpack.c.b16 %v1106, %v1106
        %v1139 = vpack.c.b16 %v1107, %v1107
        %v1140 = vpack.c.b16 %v1108, %v1108
        %v1141 = vpack.c.b16 %v1109, %v1109
        %v1142 = vpack.c.b16 %v1110, %v1110
        %v1143 = vpack.c.b16 %v1111, %v1111
        %v1144 = vpack.c.b16 %v1112, %v1112
        %v1145 = vpack.c.b16 %v1113, %v1113
        %v1146 = vpack.c.b16 %v1114, %v1114
        %v1147 = vpack.c.b16 %v1115, %v1115
        %v1148 = vpack.c.b16 %v1116, %v1116
        %v1149 = vpack.c.b16 %v1117, %v1117
        %v1150 = vpack.c.b16 %v1118, %v1118
        %v1151 = vpack.c.b16 %v1119, %v1119
        %v1152 = vpack.c.b16 %v1120, %v1120
        %v1153 = vpack.c.b16 %v1121, %v1121
        %v1154 = vpack.c.b16 %v1122, %v1122
        %v1155 = vpack.c.b16 %v1123, %v1123
        %v1156 = vpack.c.b16 %v1124, %v1124
        %v1157 = vpack.c.b16 %v1125, %v1125
        %v1158 = vpack.c.b16 %v1126, %v1126
        %v1159 = vpack.c.b16 %v1127, %v1127
        %v1160 = vpack.c.b16 %v1128, %v1128
        %v1161 = vpack.c.b16 %v1129, %v1129
        %v1162 = vpack.c.b16 %v1130, %v1130
        %1195 = vst [vmem:[%s306] sm:$0xf] %v1131
        %1196 = vst [vmem:[%s306 + $0x4] sm:$0xf] %v1132
        %1197 = vst [vmem:[%s306 + $0x8] sm:$0xf] %v1133
        %1198 = vst [vmem:[%s306 + $0xc] sm:$0xf] %v1134
        %1199 = vst [vmem:[%s306 + $0x10] sm:$0xf] %v1135
        %1200 = vst [vmem:[%s306 + $0x14] sm:$0xf] %v1136
        %1201 = vst [vmem:[%s306 + $0x18] sm:$0xf] %v1137
        %1202 = vst [vmem:[%s306 + $0x1c] sm:$0xf] %v1138
        %1203 = vst [vmem:[%s306 + $0x20] sm:$0xf] %v1139
        %1204 = vst [vmem:[%s306 + $0x24] sm:$0xf] %v1140
        %1205 = vst [vmem:[%s306 + $0x28] sm:$0xf] %v1141
        %1206 = vst [vmem:[%s306 + $0x2c] sm:$0xf] %v1142
        %1207 = vst [vmem:[%s306 + $0x30] sm:$0xf] %v1143
        %1208 = vst [vmem:[%s306 + $0x34] sm:$0xf] %v1144
        %1209 = vst [vmem:[%s306 + $0x38] sm:$0xf] %v1145
        %1210 = vst [vmem:[%s306 + $0x3c] sm:$0xf] %v1146
        %1211 = vst [vmem:[%s306 + $0x40] sm:$0xf] %v1147
        %1212 = vst [vmem:[%s306 + $0x44] sm:$0xf] %v1148
        %1213 = vst [vmem:[%s306 + $0x48] sm:$0xf] %v1149
        %1214 = vst [vmem:[%s306 + $0x4c] sm:$0xf] %v1150
        %1215 = vst [vmem:[%s306 + $0x50] sm:$0xf] %v1151
        %1216 = vst [vmem:[%s306 + $0x54] sm:$0xf] %v1152
        %1217 = vst [vmem:[%s306 + $0x58] sm:$0xf] %v1153
        %1218 = vst [vmem:[%s306 + $0x5c] sm:$0xf] %v1154
        %1219 = vst [vmem:[%s306 + $0x60] sm:$0xf] %v1155
        %1220 = vst [vmem:[%s306 + $0x64] sm:$0xf] %v1156
        %1221 = vst [vmem:[%s306 + $0x68] sm:$0xf] %v1157
        %1222 = vst [vmem:[%s306 + $0x6c] sm:$0xf] %v1158
        %1223 = vst [vmem:[%s306 + $0x70] sm:$0xf] %v1159
        %1224 = vst [vmem:[%s306 + $0x74] sm:$0xf] %v1160
        %1225 = vst [vmem:[%s306 + $0x78] sm:$0xf] %v1161
        %1226 = vst [vmem:[%s306 + $0x7c] sm:$0xf] %v1162
      $region44: #{_forward.106} parent=35 // pred_fallthru
        _
      %s1227 = smul.u32 32, %s20
      %p1228 = scmp.lt.s32.totalorder %s1227, 63
      %s1229 = scalar_select %p1228, %s1227, 63
      %p1230 = scmp.lt.s32.totalorder %s21, 0
      %s1231 = scalar_select %p1230, %s21, 0
      %s1232 = sadd.s32 %s1231, %s1229
      %s1233 = smul.addr %s1232, 4
      %s1234 = scalar_lea.vmem %s4, %s1233
      // Predicated region
      $region45: #{_forward.106} parent=35 // pred_check
        %p1235 = pneg %p162
      $region46: #{_forward.106} parent=35 // pred_check_branch
        %1237 = sbr.rel (%p1235) target = $region48
      $region47: #{_forward.106} parent=35 // pred_region
        %s1238 = smul.u32 32, %s20
      $region48: #{_forward.106} parent=35 // pred_fallthru
        _
    $region36: #{_forward.106} parent=5 // pred_fallthru
      _
    %p1239 = scmp.le.s32.totalorder 2, %s10
    // Predicated region
    $region49: #{_forward.106} parent=5 // pred_check
      %p1240 = pneg %p1239
    $region50: #{_forward.106} parent=5 // pred_check_branch
      %1242 = sbr.rel (%p1240) target = $region52
    $region51: #{_forward.106} parent=5 // pred_region
      %s1243 = ssub.s32 %s10, 2
      // Predicated region
      $region53: #{_forward.106} parent=51 // pred_check
        %p1244 = pneg %p168
      $region54: #{_forward.106} parent=51 // pred_check_branch
        %1246 = sbr.rel (%p1244) target = $region56
      $region55: #{_forward.106} parent=51 // pred_region
        %s1247 = smul.u32 32, %s23
        %p1248 = scmp.lt.s32.totalorder %s1247, 63
        %s1249 = scalar_select %p1248, %s1247, 63
        %p1250 = scmp.lt.s32.totalorder %s24, 0
        %s1251 = scalar_select %p1250, %s24, 0
        %s1252 = sadd.s32 %s1251, %s1249
        %s1253 = smul.addr %s1252, 4
        %s1254 = scalar_lea.vmem %s4, %s1253
      $region56: #{_forward.106} parent=51 // pred_fallthru
        _
    $region52: #{_forward.106} parent=5 // pred_fallthru
      _
  $region6: #{_forward.106} parent=0 // loop_footer
    %s14 = sadd.s32 1, %s10
  $region7: #{_forward.106} parent=0 // loop_footer_branch
    %9 = sbr.rel target = $region3
  $region8: #{_forward.106} parent=0 // loop_exit
    _

// kernel: _forward.107
$region0: #{_forward.107}
  #allocation0 [shape = 'u32[]', space=smem, size = 0x4, offset = 0x4, fixed_abs, tag = 'smem constant byte address 0x4 - core index']
  #allocation1 [shape = 'u32[144,128]{1,0:T(1,128)}', space=vmem, size = 0x12000, scoped, tag = 'internal scratch']
  %s0 = inlined_call_operand.vmem [shape: bf16[9,128,128], index: 0, kind: input, shape index: {}]
  %s1 = inlined_call_operand.vmem [shape: bf16[128,128], index: 1, kind: output, shape index: {}]
  %s2 = sld [smem:[#allocation0]]
  $region14: #{_forward.107} parent=0
    _
  %s4 = ssub.s32 1, %s2
  %s5 = scalar_select 0, %s4, %s2
  // Predicated region
  $region2: #{_forward.107} parent=0 // pred_check
    _
  $region3: #{_forward.107} parent=0 // pred_check_branch
    %7 = sbr.rel (0) target = $region5
  $region4: #{_forward.107} parent=0 // pred_region
    _
  $region5: #{_forward.107} parent=0 // pred_fallthru
    _
  %v9 = vld [vmem:[%s0] sm:$0xf]
  %v10 = vld [vmem:[%s0 + $0x4] sm:$0xf]
  %v11 = vld [vmem:[%s0 + $0x8] sm:$0xf]
  %v12 = vld [vmem:[%s0 + $0xc] sm:$0xf]
  %v13 = vld [vmem:[%s0 + $0x10] sm:$0xf]
  %v14 = vld [vmem:[%s0 + $0x14] sm:$0xf]
  %v15 = vld [vmem:[%s0 + $0x18] sm:$0xf]
  %v16 = vld [vmem:[%s0 + $0x1c] sm:$0xf]
  %v17 = vld [vmem:[%s0 + $0x20] sm:$0xf]
  %v18 = vld [vmem:[%s0 + $0x24] sm:$0xf]
  %v19 = vld [vmem:[%s0 + $0x28] sm:$0xf]
  %v20 = vld [vmem:[%s0 + $0x2c] sm:$0xf]
  %v21 = vld [vmem:[%s0 + $0x30] sm:$0xf]
  %v22 = vld [vmem:[%s0 + $0x34] sm:$0xf]
  %v23 = vld [vmem:[%s0 + $0x38] sm:$0xf]
  %v24 = vld [vmem:[%s0 + $0x3c] sm:$0xf]
  %v25 = vld [vmem:[%s0 + $0x40] sm:$0xf]
  %v26 = vld [vmem:[%s0 + $0x44] sm:$0xf]
  %v27 = vld [vmem:[%s0 + $0x48] sm:$0xf]
  %v28 = vld [vmem:[%s0 + $0x4c] sm:$0xf]
  %v29 = vld [vmem:[%s0 + $0x50] sm:$0xf]
  %v30 = vld [vmem:[%s0 + $0x54] sm:$0xf]
  %v31 = vld [vmem:[%s0 + $0x58] sm:$0xf]
  %v32 = vld [vmem:[%s0 + $0x5c] sm:$0xf]
  %v33 = vld [vmem:[%s0 + $0x60] sm:$0xf]
  %v34 = vld [vmem:[%s0 + $0x64] sm:$0xf]
  %v35 = vld [vmem:[%s0 + $0x68] sm:$0xf]
  %v36 = vld [vmem:[%s0 + $0x6c] sm:$0xf]
  %v37 = vld [vmem:[%s0 + $0x70] sm:$0xf]
  %v38 = vld [vmem:[%s0 + $0x74] sm:$0xf]
  %v39 = vld [vmem:[%s0 + $0x78] sm:$0xf]
  %v40 = vld [vmem:[%s0 + $0x7c] sm:$0xf]
  %v41 = vld [vmem:[%s0 + $0x80] sm:$0xf]
  %v42 = vld [vmem:[%s0 + $0x84] sm:$0xf]
  %v43 = vld [vmem:[%s0 + $0x88] sm:$0xf]
  %v44 = vld [vmem:[%s0 + $0x8c] sm:$0xf]
  %v45 = vld [vmem:[%s0 + $0x90] sm:$0xf]
  %v46 = vld [vmem:[%s0 + $0x94] sm:$0xf]
  %v47 = vld [vmem:[%s0 + $0x98] sm:$0xf]
  %v48 = vld [vmem:[%s0 + $0x9c] sm:$0xf]
  %v49 = vld [vmem:[%s0 + $0xa0] sm:$0xf]
  %v50 = vld [vmem:[%s0 + $0xa4] sm:$0xf]
  %v51 = vld [vmem:[%s0 + $0xa8] sm:$0xf]
  %v52 = vld [vmem:[%s0 + $0xac] sm:$0xf]
  %v53 = vld [vmem:[%s0 + $0xb0] sm:$0xf]
  %v54 = vld [vmem:[%s0 + $0xb4] sm:$0xf]
  %v55 = vld [vmem:[%s0 + $0xb8] sm:$0xf]
  %v56 = vld [vmem:[%s0 + $0xbc] sm:$0xf]
  %v57 = vld [vmem:[%s0 + $0xc0] sm:$0xf]
  %v58 = vld [vmem:[%s0 + $0xc4] sm:$0xf]
  %v59 = vld [vmem:[%s0 + $0xc8] sm:$0xf]
  %v60 = vld [vmem:[%s0 + $0xcc] sm:$0xf]
  %v61 = vld [vmem:[%s0 + $0xd0] sm:$0xf]
  %v62 = vld [vmem:[%s0 + $0xd4] sm:$0xf]
  %v63 = vld [vmem:[%s0 + $0xd8] sm:$0xf]
  %v64 = vld [vmem:[%s0 + $0xdc] sm:$0xf]
  %v65 = vld [vmem:[%s0 + $0xe0] sm:$0xf]
  %v66 = vld [vmem:[%s0 + $0xe4] sm:$0xf]
  %v67 = vld [vmem:[%s0 + $0xe8] sm:$0xf]
  %v68 = vld [vmem:[%s0 + $0xec] sm:$0xf]
  %v69 = vld [vmem:[%s0 + $0xf0] sm:$0xf]
  %v70 = vld [vmem:[%s0 + $0xf4] sm:$0xf]
  %v71 = vld [vmem:[%s0 + $0xf8] sm:$0xf]
  %v72 = vld [vmem:[%s0 + $0xfc] sm:$0xf]
  %v73 = vld [vmem:[%s0 + $0x100] sm:$0xf]
  %v74 = vld [vmem:[%s0 + $0x104] sm:$0xf]
  %v75 = vld [vmem:[%s0 + $0x108] sm:$0xf]
  %v76 = vld [vmem:[%s0 + $0x10c] sm:$0xf]
  %v77 = vld [vmem:[%s0 + $0x110] sm:$0xf]
  %v78 = vld [vmem:[%s0 + $0x114] sm:$0xf]
  %v79 = vld [vmem:[%s0 + $0x118] sm:$0xf]
  %v80 = vld [vmem:[%s0 + $0x11c] sm:$0xf]
  %v81 = vld [vmem:[%s0 + $0x120] sm:$0xf]
  %v82 = vld [vmem:[%s0 + $0x124] sm:$0xf]
  %v83 = vld [vmem:[%s0 + $0x128] sm:$0xf]
  %v84 = vld [vmem:[%s0 + $0x12c] sm:$0xf]
  %v85 = vld [vmem:[%s0 + $0x130] sm:$0xf]
  %v86 = vld [vmem:[%s0 + $0x134] sm:$0xf]
  %v87 = vld [vmem:[%s0 + $0x138] sm:$0xf]
  %v88 = vld [vmem:[%s0 + $0x13c] sm:$0xf]
  %v89 = vld [vmem:[%s0 + $0x140] sm:$0xf]
  %v90 = vld [vmem:[%s0 + $0x144] sm:$0xf]
  %v91 = vld [vmem:[%s0 + $0x148] sm:$0xf]
  %v92 = vld [vmem:[%s0 + $0x14c] sm:$0xf]
  %v93 = vld [vmem:[%s0 + $0x150] sm:$0xf]
  %v94 = vld [vmem:[%s0 + $0x154] sm:$0xf]
  %v95 = vld [vmem:[%s0 + $0x158] sm:$0xf]
  %v96 = vld [vmem:[%s0 + $0x15c] sm:$0xf]
  %v97 = vld [vmem:[%s0 + $0x160] sm:$0xf]
  %v98 = vld [vmem:[%s0 + $0x164] sm:$0xf]
  %v99 = vld [vmem:[%s0 + $0x168] sm:$0xf]
  %v100 = vld [vmem:[%s0 + $0x16c] sm:$0xf]
  %v101 = vld [vmem:[%s0 + $0x170] sm:$0xf]
  %v102 = vld [vmem:[%s0 + $0x174] sm:$0xf]
  %v103 = vld [vmem:[%s0 + $0x178] sm:$0xf]
  %v104 = vld [vmem:[%s0 + $0x17c] sm:$0xf]
  %v105 = vld [vmem:[%s0 + $0x180] sm:$0xf]
  %v106 = vld [vmem:[%s0 + $0x184] sm:$0xf]
  %v107 = vld [vmem:[%s0 + $0x188] sm:$0xf]
  %v108 = vld [vmem:[%s0 + $0x18c] sm:$0xf]
  %v109 = vld [vmem:[%s0 + $0x190] sm:$0xf]
  %v110 = vld [vmem:[%s0 + $0x194] sm:$0xf]
  %v111 = vld [vmem:[%s0 + $0x198] sm:$0xf]
  %v112 = vld [vmem:[%s0 + $0x19c] sm:$0xf]
  %v113 = vld [vmem:[%s0 + $0x1a0] sm:$0xf]
  %v114 = vld [vmem:[%s0 + $0x1a4] sm:$0xf]
  %v115 = vld [vmem:[%s0 + $0x1a8] sm:$0xf]
  %v116 = vld [vmem:[%s0 + $0x1ac] sm:$0xf]
  %v117 = vld [vmem:[%s0 + $0x1b0] sm:$0xf]
  %v118 = vld [vmem:[%s0 + $0x1b4] sm:$0xf]
  %v119 = vld [vmem:[%s0 + $0x1b8] sm:$0xf]
  %v120 = vld [vmem:[%s0 + $0x1bc] sm:$0xf]
  %v121 = vld [vmem:[%s0 + $0x1c0] sm:$0xf]
  %v122 = vld [vmem:[%s0 + $0x1c4] sm:$0xf]
  %v123 = vld [vmem:[%s0 + $0x1c8] sm:$0xf]
  %v124 = vld [vmem:[%s0 + $0x1cc] sm:$0xf]
  %v125 = vld [vmem:[%s0 + $0x1d0] sm:$0xf]
  %v126 = vld [vmem:[%s0 + $0x1d4] sm:$0xf]
  %v127 = vld [vmem:[%s0 + $0x1d8] sm:$0xf]
  %v128 = vld [vmem:[%s0 + $0x1dc] sm:$0xf]
  %v129 = vld [vmem:[%s0 + $0x1e0] sm:$0xf]
  %v130 = vld [vmem:[%s0 + $0x1e4] sm:$0xf]
  %v131 = vld [vmem:[%s0 + $0x1e8] sm:$0xf]
  %v132 = vld [vmem:[%s0 + $0x1ec] sm:$0xf]
  %v133 = vld [vmem:[%s0 + $0x1f0] sm:$0xf]
  %v134 = vld [vmem:[%s0 + $0x1f4] sm:$0xf]
  %v135 = vld [vmem:[%s0 + $0x1f8] sm:$0xf]
  %v136 = vld [vmem:[%s0 + $0x1fc] sm:$0xf]
  %v137 = vld [vmem:[%s0 + $0x200] sm:$0xf]
  %v138 = vld [vmem:[%s0 + $0x204] sm:$0xf]
  %v139 = vld [vmem:[%s0 + $0x208] sm:$0xf]
  %v140 = vld [vmem:[%s0 + $0x20c] sm:$0xf]
  %v141 = vld [vmem:[%s0 + $0x210] sm:$0xf]
  %v142 = vld [vmem:[%s0 + $0x214] sm:$0xf]
  %v143 = vld [vmem:[%s0 + $0x218] sm:$0xf]
  %v144 = vld [vmem:[%s0 + $0x21c] sm:$0xf]
  %v145 = vld [vmem:[%s0 + $0x220] sm:$0xf]
  %v146 = vld [vmem:[%s0 + $0x224] sm:$0xf]
  %v147 = vld [vmem:[%s0 + $0x228] sm:$0xf]
  %v148 = vld [vmem:[%s0 + $0x22c] sm:$0xf]
  %v149 = vld [vmem:[%s0 + $0x230] sm:$0xf]
  %v150 = vld [vmem:[%s0 + $0x234] sm:$0xf]
  %v151 = vld [vmem:[%s0 + $0x238] sm:$0xf]
  %v152 = vld [vmem:[%s0 + $0x23c] sm:$0xf]
  %vm153 = vcmask 1043456
  %v156 = vsel %vm153, %v9, 4286644096
  %v159 = vsel %vm153, %v25, 4286644096
  %v161 = vmax.bf16 %v156, %v159
  %v163 = vsel %vm153, %v41, 4286644096
  %v165 = vmax.bf16 %v161, %v163
  %v167 = vsel %vm153, %v57, 4286644096
  %v169 = vmax.bf16 %v165, %v167
  %v171 = vsel %vm153, %v73, 4286644096
  %v173 = vmax.bf16 %v169, %v171
  %v175 = vsel %vm153, %v89, 4286644096
  %v177 = vmax.bf16 %v173, %v175
  %v179 = vsel %vm153, %v105, 4286644096
  %v181 = vmax.bf16 %v177, %v179
  %v183 = vsel %vm153, %v121, 4286644096
  %v185 = vmax.bf16 %v181, %v183
  %v187 = vsel %vm153, %v137, 4286644096
  %v189 = vmax.bf16 %v185, %v187
  %v191 = vsel %vm153, %v10, 4286644096
  %v194 = vsel %vm153, %v26, 4286644096
  %v196 = vmax.bf16 %v191, %v194
  %v198 = vsel %vm153, %v42, 4286644096
  %v200 = vmax.bf16 %v196, %v198
  %v202 = vsel %vm153, %v58, 4286644096
  %v204 = vmax.bf16 %v200, %v202
  %v206 = vsel %vm153, %v74, 4286644096
  %v208 = vmax.bf16 %v204, %v206
  %v210 = vsel %vm153, %v90, 4286644096
  %v212 = vmax.bf16 %v208, %v210
  %v214 = vsel %vm153, %v106, 4286644096
  %v216 = vmax.bf16 %v212, %v214
  %v218 = vsel %vm153, %v122, 4286644096
  %v220 = vmax.bf16 %v216, %v218
  %v222 = vsel %vm153, %v138, 4286644096
  %v224 = vmax.bf16 %v220, %v222
  %v226 = vsel %vm153, %v11, 4286644096
  %v229 = vsel %vm153, %v27, 4286644096
  %v231 = vmax.bf16 %v226, %v229
  %v233 = vsel %vm153, %v43, 4286644096
  %v235 = vmax.bf16 %v231, %v233
  %v237 = vsel %vm153, %v59, 4286644096
  %v239 = vmax.bf16 %v235, %v237
  %v241 = vsel %vm153, %v75, 4286644096
  %v243 = vmax.bf16 %v239, %v241
  %v245 = vsel %vm153, %v91, 4286644096
  %v247 = vmax.bf16 %v243, %v245
  %v249 = vsel %vm153, %v107, 4286644096
  %v251 = vmax.bf16 %v247, %v249
  %v253 = vsel %vm153, %v123, 4286644096
  %v255 = vmax.bf16 %v251, %v253
  %v257 = vsel %vm153, %v139, 4286644096
  %v259 = vmax.bf16 %v255, %v257
  %v261 = vsel %vm153, %v12, 4286644096
  %v264 = vsel %vm153, %v28, 4286644096
  %v266 = vmax.bf16 %v261, %v264
  %v268 = vsel %vm153, %v44, 4286644096
  %v270 = vmax.bf16 %v266, %v268
  %v272 = vsel %vm153, %v60, 4286644096
  %v274 = vmax.bf16 %v270, %v272
  %v276 = vsel %vm153, %v76, 4286644096
  %v278 = vmax.bf16 %v274, %v276
  %v280 = vsel %vm153, %v92, 4286644096
  %v282 = vmax.bf16 %v278, %v280
  %v284 = vsel %vm153, %v108, 4286644096
  %v286 = vmax.bf16 %v282, %v284
  %v288 = vsel %vm153, %v124, 4286644096
  %v290 = vmax.bf16 %v286, %v288
  %v292 = vsel %vm153, %v140, 4286644096
  %v294 = vmax.bf16 %v290, %v292
  %v296 = vsel %vm153, %v13, 4286644096
  %v299 = vsel %vm153, %v29, 4286644096
  %v301 = vmax.bf16 %v296, %v299
  %v303 = vsel %vm153, %v45, 4286644096
  %v305 = vmax.bf16 %v301, %v303
  %v307 = vsel %vm153, %v61, 4286644096
  %v309 = vmax.bf16 %v305, %v307
  %v311 = vsel %vm153, %v77, 4286644096
  %v313 = vmax.bf16 %v309, %v311
  %v315 = vsel %vm153, %v93, 4286644096
  %v317 = vmax.bf16 %v313, %v315
  %v319 = vsel %vm153, %v109, 4286644096
  %v321 = vmax.bf16 %v317, %v319
  %v323 = vsel %vm153, %v125, 4286644096
  %v325 = vmax.bf16 %v321, %v323
  %v327 = vsel %vm153, %v141, 4286644096
  %v329 = vmax.bf16 %v325, %v327
  %v331 = vsel %vm153, %v14, 4286644096
  %v334 = vsel %vm153, %v30, 4286644096
  %v336 = vmax.bf16 %v331, %v334
  %v338 = vsel %vm153, %v46, 4286644096
  %v340 = vmax.bf16 %v336, %v338
  %v342 = vsel %vm153, %v62, 4286644096
  %v344 = vmax.bf16 %v340, %v342
  %v346 = vsel %vm153, %v78, 4286644096
  %v348 = vmax.bf16 %v344, %v346
  %v350 = vsel %vm153, %v94, 4286644096
  %v352 = vmax.bf16 %v348, %v350
  %v354 = vsel %vm153, %v110, 4286644096
  %v356 = vmax.bf16 %v352, %v354
  %v358 = vsel %vm153, %v126, 4286644096
  %v360 = vmax.bf16 %v356, %v358
  %v362 = vsel %vm153, %v142, 4286644096
  %v364 = vmax.bf16 %v360, %v362
  %v366 = vsel %vm153, %v15, 4286644096
  %v369 = vsel %vm153, %v31, 4286644096
  %v371 = vmax.bf16 %v366, %v369
  %v373 = vsel %vm153, %v47, 4286644096
  %v375 = vmax.bf16 %v371, %v373
  %v377 = vsel %vm153, %v63, 4286644096
  %v379 = vmax.bf16 %v375, %v377
  %v381 = vsel %vm153, %v79, 4286644096
  %v383 = vmax.bf16 %v379, %v381
  %v385 = vsel %vm153, %v95, 4286644096
  %v387 = vmax.bf16 %v383, %v385
  %v389 = vsel %vm153, %v111, 4286644096
  %v391 = vmax.bf16 %v387, %v389
  %v393 = vsel %vm153, %v127, 4286644096
  %v395 = vmax.bf16 %v391, %v393
  %v397 = vsel %vm153, %v143, 4286644096
  %v399 = vmax.bf16 %v395, %v397
  %v401 = vsel %vm153, %v16, 4286644096
  %v404 = vsel %vm153, %v32, 4286644096
  %v406 = vmax.bf16 %v401, %v404
  %v408 = vsel %vm153, %v48, 4286644096
  %v410 = vmax.bf16 %v406, %v408
  %v412 = vsel %vm153, %v64, 4286644096
  %v414 = vmax.bf16 %v410, %v412
  %v416 = vsel %vm153, %v80, 4286644096
  %v418 = vmax.bf16 %v414, %v416
  %v420 = vsel %vm153, %v96, 4286644096
  %v422 = vmax.bf16 %v418, %v420
  %v424 = vsel %vm153, %v112, 4286644096
  %v426 = vmax.bf16 %v422, %v424
  %v428 = vsel %vm153, %v128, 4286644096
  %v430 = vmax.bf16 %v426, %v428
  %v432 = vsel %vm153, %v144, 4286644096
  %v434 = vmax.bf16 %v430, %v432
  %v436 = vsel %vm153, %v17, 4286644096
  %v439 = vsel %vm153, %v33, 4286644096
  %v441 = vmax.bf16 %v436, %v439
  %v443 = vsel %vm153, %v49, 4286644096
  %v445 = vmax.bf16 %v441, %v443
  %v447 = vsel %vm153, %v65, 4286644096
  %v449 = vmax.bf16 %v445, %v447
  %v451 = vsel %vm153, %v81, 4286644096
  %v453 = vmax.bf16 %v449, %v451
  %v455 = vsel %vm153, %v97, 4286644096
  %v457 = vmax.bf16 %v453, %v455
  %v459 = vsel %vm153, %v113, 4286644096
  %v461 = vmax.bf16 %v457, %v459
  %v463 = vsel %vm153, %v129, 4286644096
  %v465 = vmax.bf16 %v461, %v463
  %v467 = vsel %vm153, %v145, 4286644096
  %v469 = vmax.bf16 %v465, %v467
  %v471 = vsel %vm153, %v18, 4286644096
  %v474 = vsel %vm153, %v34, 4286644096
  %v476 = vmax.bf16 %v471, %v474
  %v478 = vsel %vm153, %v50, 4286644096
  %v480 = vmax.bf16 %v476, %v478
  %v482 = vsel %vm153, %v66, 4286644096
  %v484 = vmax.bf16 %v480, %v482
  %v486 = vsel %vm153, %v82, 4286644096
  %v488 = vmax.bf16 %v484, %v486
  %v490 = vsel %vm153, %v98, 4286644096
  %v492 = vmax.bf16 %v488, %v490
  %v494 = vsel %vm153, %v114, 4286644096
  %v496 = vmax.bf16 %v492, %v494
  %v498 = vsel %vm153, %v130, 4286644096
  %v500 = vmax.bf16 %v496, %v498
  %v502 = vsel %vm153, %v146, 4286644096
  %v504 = vmax.bf16 %v500, %v502
  %v506 = vsel %vm153, %v19, 4286644096
  %v509 = vsel %vm153, %v35, 4286644096
  %v511 = vmax.bf16 %v506, %v509
  %v513 = vsel %vm153, %v51, 4286644096
  %v515 = vmax.bf16 %v511, %v513
  %v517 = vsel %vm153, %v67, 4286644096
  %v519 = vmax.bf16 %v515, %v517
  %v521 = vsel %vm153, %v83, 4286644096
  %v523 = vmax.bf16 %v519, %v521
  %v525 = vsel %vm153, %v99, 4286644096
  %v527 = vmax.bf16 %v523, %v525
  %v529 = vsel %vm153, %v115, 4286644096
  %v531 = vmax.bf16 %v527, %v529
  %v533 = vsel %vm153, %v131, 4286644096
  %v535 = vmax.bf16 %v531, %v533
  %v537 = vsel %vm153, %v147, 4286644096
  %v539 = vmax.bf16 %v535, %v537
  %v541 = vsel %vm153, %v20, 4286644096
  %v544 = vsel %vm153, %v36, 4286644096
  %v546 = vmax.bf16 %v541, %v544
  %v548 = vsel %vm153, %v52, 4286644096
  %v550 = vmax.bf16 %v546, %v548
  %v552 = vsel %vm153, %v68, 4286644096
  %v554 = vmax.bf16 %v550, %v552
  %v556 = vsel %vm153, %v84, 4286644096
  %v558 = vmax.bf16 %v554, %v556
  %v560 = vsel %vm153, %v100, 4286644096
  %v562 = vmax.bf16 %v558, %v560
  %v564 = vsel %vm153, %v116, 4286644096
  %v566 = vmax.bf16 %v562, %v564
  %v568 = vsel %vm153, %v132, 4286644096
  %v570 = vmax.bf16 %v566, %v568
  %v572 = vsel %vm153, %v148, 4286644096
  %v574 = vmax.bf16 %v570, %v572
  %v576 = vsel %vm153, %v21, 4286644096
  %v579 = vsel %vm153, %v37, 4286644096
  %v581 = vmax.bf16 %v576, %v579
  %v583 = vsel %vm153, %v53, 4286644096
  %v585 = vmax.bf16 %v581, %v583
  %v587 = vsel %vm153, %v69, 4286644096
  %v589 = vmax.bf16 %v585, %v587
  %v591 = vsel %vm153, %v85, 4286644096
  %v593 = vmax.bf16 %v589, %v591
  %v595 = vsel %vm153, %v101, 4286644096
  %v597 = vmax.bf16 %v593, %v595
  %v599 = vsel %vm153, %v117, 4286644096
  %v601 = vmax.bf16 %v597, %v599
  %v603 = vsel %vm153, %v133, 4286644096
  %v605 = vmax.bf16 %v601, %v603
  %v607 = vsel %vm153, %v149, 4286644096
  %v609 = vmax.bf16 %v605, %v607
  %v611 = vsel %vm153, %v22, 4286644096
  %v614 = vsel %vm153, %v38, 4286644096
  %v616 = vmax.bf16 %v611, %v614
  %v618 = vsel %vm153, %v54, 4286644096
  %v620 = vmax.bf16 %v616, %v618
  %v622 = vsel %vm153, %v70, 4286644096
  %v624 = vmax.bf16 %v620, %v622
  %v626 = vsel %vm153, %v86, 4286644096
  %v628 = vmax.bf16 %v624, %v626
  %v630 = vsel %vm153, %v102, 4286644096
  %v632 = vmax.bf16 %v628, %v630
  %v634 = vsel %vm153, %v118, 4286644096
  %v636 = vmax.bf16 %v632, %v634
  %v638 = vsel %vm153, %v134, 4286644096
  %v640 = vmax.bf16 %v636, %v638
  %v642 = vsel %vm153, %v150, 4286644096
  %v644 = vmax.bf16 %v640, %v642
  %v646 = vsel %vm153, %v23, 4286644096
  %v649 = vsel %vm153, %v39, 4286644096
  %v651 = vmax.bf16 %v646, %v649
  %v653 = vsel %vm153, %v55, 4286644096
  %v655 = vmax.bf16 %v651, %v653
  %v657 = vsel %vm153, %v71, 4286644096
  %v659 = vmax.bf16 %v655, %v657
  %v661 = vsel %vm153, %v87, 4286644096
  %v663 = vmax.bf16 %v659, %v661
  %v665 = vsel %vm153, %v103, 4286644096
  %v667 = vmax.bf16 %v663, %v665
  %v669 = vsel %vm153, %v119, 4286644096
  %v671 = vmax.bf16 %v667, %v669
  %v673 = vsel %vm153, %v135, 4286644096
  %v675 = vmax.bf16 %v671, %v673
  %v677 = vsel %vm153, %v151, 4286644096
  %v679 = vmax.bf16 %v675, %v677
  %v681 = vsel %vm153, %v24, 4286644096
  %v684 = vsel %vm153, %v40, 4286644096
  %v686 = vmax.bf16 %v681, %v684
  %v688 = vsel %vm153, %v56, 4286644096
  %v690 = vmax.bf16 %v686, %v688
  %v692 = vsel %vm153, %v72, 4286644096
  %v694 = vmax.bf16 %v690, %v692
  %v696 = vsel %vm153, %v88, 4286644096
  %v698 = vmax.bf16 %v694, %v696
  %v700 = vsel %vm153, %v104, 4286644096
  %v702 = vmax.bf16 %v698, %v700
  %v704 = vsel %vm153, %v120, 4286644096
  %v706 = vmax.bf16 %v702, %v704
  %v708 = vsel %vm153, %v136, 4286644096
  %v710 = vmax.bf16 %v706, %v708
  %v712 = vsel %vm153, %v152, 4286644096
  %v714 = vmax.bf16 %v710, %v712
  %715 = vst [vmem:[%s1] sm:$0xf] %v189
  %716 = vst [vmem:[%s1 + $0x4] sm:$0xf] %v224
  %717 = vst [vmem:[%s1 + $0x8] sm:$0xf] %v259
  %718 = vst [vmem:[%s1 + $0xc] sm:$0xf] %v294
  %719 = vst [vmem:[%s1 + $0x10] sm:$0xf] %v329
  %720 = vst [vmem:[%s1 + $0x14] sm:$0xf] %v364
  %721 = vst [vmem:[%s1 + $0x18] sm:$0xf] %v399
  %722 = vst [vmem:[%s1 + $0x1c] sm:$0xf] %v434
  %723 = vst [vmem:[%s1 + $0x20] sm:$0xf] %v469
  %724 = vst [vmem:[%s1 + $0x24] sm:$0xf] %v504
  %725 = vst [vmem:[%s1 + $0x28] sm:$0xf] %v539
  %726 = vst [vmem:[%s1 + $0x2c] sm:$0xf] %v574
  %727 = vst [vmem:[%s1 + $0x30] sm:$0xf] %v609
  %728 = vst [vmem:[%s1 + $0x34] sm:$0xf] %v644
  %729 = vst [vmem:[%s1 + $0x38] sm:$0xf] %v679
  %730 = vst [vmem:[%s1 + $0x3c] sm:$0xf] %v714
  // Predicated region
  $region6: #{_forward.107} parent=0 // pred_check
    _
  $region7: #{_forward.107} parent=0 // pred_check_branch
    %732 = sbr.rel (0) target = $region9
  $region8: #{_forward.107} parent=0 // pred_region
    _
  $region9: #{_forward.107} parent=0 // pred_fallthru
    _
  // Predicated region
  $region10: #{_forward.107} parent=0 // pred_check
    _
  $region11: #{_forward.107} parent=0 // pred_check_branch
    %734 = sbr.rel (0) target = $region13
  $region12: #{_forward.107} parent=0 // pred_region
    _
  $region13: #{_forward.107} parent=0 // pred_fallthru
    _

// kernel: _forward.109
$region0: #{_forward.109}
  #allocation0 [shape = 'u32[]', space=smem, size = 0x4, offset = 0x4, fixed_abs, tag = 'smem constant byte address 0x4 - core index']
  #allocation1 [shape = 'u32[144,128]{1,0:T(1,128)}', space=vmem, size = 0x12000, scoped, tag = 'internal scratch']
  #allocation2 [shape = 'f32[128,128]{1,0:T(8,128)}', space=vmem, size = 0x10000, scoped, tag = 'scratch operand']
  %s0 = inlined_call_operand.vmem [shape: bf16[128,128], index: 0, kind: input, shape index: {}]
  %s1 = inlined_call_operand.vmem [shape: bf16[128,128], index: 1, kind: input, shape index: {}]
  %s2 = inlined_call_operand.vmem [shape: f32[1,128], index: 2, kind: input, shape index: {}]
  %s3 = inlined_call_operand.vmem [shape: f32[1,128], index: 3, kind: input, shape index: {}]
  %s4 = inlined_call_operand.vmem [shape: bf16[128,128], index: 4, kind: output, shape index: {}]
  %s5 = sld [smem:[#allocation0]]
  $region34: #{_forward.109} parent=0
    _
  %s7 = ssub.s32 1, %s5
  %s8 = scalar_select 0, %s7, %s5
  // Predicated region
  $region2: #{_forward.109} parent=0 // pred_check
    _
  $region3: #{_forward.109} parent=0 // pred_check_branch
    %10 = sbr.rel (0) target = $region5
  $region4: #{_forward.109} parent=0 // pred_region
    _
  $region5: #{_forward.109} parent=0 // pred_fallthru
    _
  // Predicated region
  $region6: #{_forward.109} parent=0 // pred_check
    _
  $region7: #{_forward.109} parent=0 // pred_check_branch
    %12 = sbr.rel (0) target = $region9
  $region8: #{_forward.109} parent=0 // pred_region
    _
  $region9: #{_forward.109} parent=0 // pred_fallthru
    _
  // Predicated region
  $region10: #{_forward.109} parent=0 // pred_check
    _
  $region11: #{_forward.109} parent=0 // pred_check_branch
    %14 = sbr.rel (0) target = $region13
  $region12: #{_forward.109} parent=0 // pred_region
    _
  $region13: #{_forward.109} parent=0 // pred_fallthru
    _
  // Predicated region
  $region14: #{_forward.109} parent=0 // pred_check
    _
  $region15: #{_forward.109} parent=0 // pred_check_branch
    %16 = sbr.rel (0) target = $region17
  $region16: #{_forward.109} parent=0 // pred_region
    _
  $region17: #{_forward.109} parent=0 // pred_fallthru
    _
  %p18 = scmp.eq.s32.totalorder 0, 0
  // Predicated region
  $region18: #{_forward.109} parent=0 // pred_check
    %p19 = pneg %p18
  $region19: #{_forward.109} parent=0 // pred_check_branch
    %21 = sbr.rel (%p19) target = $region21
  $region20: #{_forward.109} parent=0 // pred_region
    %22 = vst [vmem:[#allocation2] sm:$0xff] 0.0
    %23 = vst [vmem:[#allocation2 + $0x8] sm:$0xff] 0.0
    %24 = vst [vmem:[#allocation2 + $0x10] sm:$0xff] 0.0
    %25 = vst [vmem:[#allocation2 + $0x18] sm:$0xff] 0.0
    %26 = vst [vmem:[#allocation2 + $0x20] sm:$0xff] 0.0
    %27 = vst [vmem:[#allocation2 + $0x28] sm:$0xff] 0.0
    %28 = vst [vmem:[#allocation2 + $0x30] sm:$0xff] 0.0
    %29 = vst [vmem:[#allocation2 + $0x38] sm:$0xff] 0.0
    %30 = vst [vmem:[#allocation2 + $0x40] sm:$0xff] 0.0
    %31 = vst [vmem:[#allocation2 + $0x48] sm:$0xff] 0.0
    %32 = vst [vmem:[#allocation2 + $0x50] sm:$0xff] 0.0
    %33 = vst [vmem:[#allocation2 + $0x58] sm:$0xff] 0.0
    %34 = vst [vmem:[#allocation2 + $0x60] sm:$0xff] 0.0
    %35 = vst [vmem:[#allocation2 + $0x68] sm:$0xff] 0.0
    %36 = vst [vmem:[#allocation2 + $0x70] sm:$0xff] 0.0
    %37 = vst [vmem:[#allocation2 + $0x78] sm:$0xff] 0.0
  $region21: #{_forward.109} parent=0 // pred_fallthru
    _
  %v38 = vld [vmem:[#allocation2] sm:$0xff]
  %v39 = vld [vmem:[#allocation2 + $0x8] sm:$0xff]
  %v40 = vld [vmem:[#allocation2 + $0x10] sm:$0xff]
  %v41 = vld [vmem:[#allocation2 + $0x18] sm:$0xff]
  %v42 = vld [vmem:[#allocation2 + $0x20] sm:$0xff]
  %v43 = vld [vmem:[#allocation2 + $0x28] sm:$0xff]
  %v44 = vld [vmem:[#allocation2 + $0x30] sm:$0xff]
  %v45 = vld [vmem:[#allocation2 + $0x38] sm:$0xff]
  %v46 = vld [vmem:[#allocation2 + $0x40] sm:$0xff]
  %v47 = vld [vmem:[#allocation2 + $0x48] sm:$0xff]
  %v48 = vld [vmem:[#allocation2 + $0x50] sm:$0xff]
  %v49 = vld [vmem:[#allocation2 + $0x58] sm:$0xff]
  %v50 = vld [vmem:[#allocation2 + $0x60] sm:$0xff]
  %v51 = vld [vmem:[#allocation2 + $0x68] sm:$0xff]
  %v52 = vld [vmem:[#allocation2 + $0x70] sm:$0xff]
  %v53 = vld [vmem:[#allocation2 + $0x78] sm:$0xff]
  %v54 = vld [vmem:[%s0] sm:$0xf]
  %v55 = vld [vmem:[%s0 + $0x4] sm:$0xf]
  %v56 = vld [vmem:[%s0 + $0x8] sm:$0xf]
  %v57 = vld [vmem:[%s0 + $0xc] sm:$0xf]
  %v58 = vld [vmem:[%s0 + $0x10] sm:$0xf]
  %v59 = vld [vmem:[%s0 + $0x14] sm:$0xf]
  %v60 = vld [vmem:[%s0 + $0x18] sm:$0xf]
  %v61 = vld [vmem:[%s0 + $0x1c] sm:$0xf]
  %v62 = vld [vmem:[%s0 + $0x20] sm:$0xf]
  %v63 = vld [vmem:[%s0 + $0x24] sm:$0xf]
  %v64 = vld [vmem:[%s0 + $0x28] sm:$0xf]
  %v65 = vld [vmem:[%s0 + $0x2c] sm:$0xf]
  %v66 = vld [vmem:[%s0 + $0x30] sm:$0xf]
  %v67 = vld [vmem:[%s0 + $0x34] sm:$0xf]
  %v68 = vld [vmem:[%s0 + $0x38] sm:$0xf]
  %v69 = vld [vmem:[%s0 + $0x3c] sm:$0xf]
  %v70 = vld [vmem:[%s1] sm:$0xf]
  %v71 = vld [vmem:[%s1 + $0x4] sm:$0xf]
  %v72 = vld [vmem:[%s1 + $0x8] sm:$0xf]
  %v73 = vld [vmem:[%s1 + $0xc] sm:$0xf]
  %v74 = vld [vmem:[%s1 + $0x10] sm:$0xf]
  %v75 = vld [vmem:[%s1 + $0x14] sm:$0xf]
  %v76 = vld [vmem:[%s1 + $0x18] sm:$0xf]
  %v77 = vld [vmem:[%s1 + $0x1c] sm:$0xf]
  %v78 = vld [vmem:[%s1 + $0x20] sm:$0xf]
  %v79 = vld [vmem:[%s1 + $0x24] sm:$0xf]
  %v80 = vld [vmem:[%s1 + $0x28] sm:$0xf]
  %v81 = vld [vmem:[%s1 + $0x2c] sm:$0xf]
  %v82 = vld [vmem:[%s1 + $0x30] sm:$0xf]
  %v83 = vld [vmem:[%s1 + $0x34] sm:$0xf]
  %v84 = vld [vmem:[%s1 + $0x38] sm:$0xf]
  %v85 = vld [vmem:[%s1 + $0x3c] sm:$0xf]
  %v102 = vunpack.c.l.b16 %v54
  %v103 = vunpack.c.l.b16 %v55
  %v104 = vunpack.c.l.b16 %v56
  %v105 = vunpack.c.l.b16 %v57
  %v106 = vunpack.c.l.b16 %v58
  %v107 = vunpack.c.l.b16 %v59
  %v108 = vunpack.c.l.b16 %v60
  %v109 = vunpack.c.l.b16 %v61
  %v110 = vunpack.c.l.b16 %v62
  %v111 = vunpack.c.l.b16 %v63
  %v112 = vunpack.c.l.b16 %v64
  %v113 = vunpack.c.l.b16 %v65
  %v114 = vunpack.c.l.b16 %v66
  %v115 = vunpack.c.l.b16 %v67
  %v116 = vunpack.c.l.b16 %v68
  %v117 = vunpack.c.l.b16 %v69
  %v118 = vpack.c.b16 %v103, %v102
  %v119 = vpack.c.b16 %v105, %v104
  %v120 = vpack.c.b16 %v107, %v106
  %v121 = vpack.c.b16 %v109, %v108
  %v122 = vpack.c.b16 %v111, %v110
  %v123 = vpack.c.b16 %v113, %v112
  %v124 = vpack.c.b16 %v115, %v114
  %v125 = vpack.c.b16 %v117, %v116
  %v150 = vunpack.c.l.b16 %v70
  %v151 = vunpack.c.l.b16 %v71
  %v152 = vunpack.c.l.b16 %v72
  %v153 = vunpack.c.l.b16 %v73
  %v154 = vunpack.c.l.b16 %v74
  %v155 = vunpack.c.l.b16 %v75
  %v156 = vunpack.c.l.b16 %v76
  %v157 = vunpack.c.l.b16 %v77
  %v158 = vunpack.c.l.b16 %v78
  %v159 = vunpack.c.l.b16 %v79
  %v160 = vunpack.c.l.b16 %v80
  %v161 = vunpack.c.l.b16 %v81
  %v162 = vunpack.c.l.b16 %v82
  %v163 = vunpack.c.l.b16 %v83
  %v164 = vunpack.c.l.b16 %v84
  %v165 = vunpack.c.l.b16 %v85
  %v166 = vpack.c.b16 %v151, %v150
  %v167 = vpack.c.b16 %v153, %v152
  %v168 = vpack.c.b16 %v155, %v154
  %v169 = vpack.c.b16 %v157, %v156
  %v170 = vpack.c.b16 %v159, %v158
  %v171 = vpack.c.b16 %v161, %v160
  %v172 = vpack.c.b16 %v163, %v162
  %v173 = vpack.c.b16 %v165, %v164
  %182 = vmatprep.subr.bf16.mxu0 0
  %183 = vmatpush1.bf16.msra.mxu0 %v173
  %184 = vmatprep.subr.bf16.mxu0 0
  %185 = vmatpush1.bf16.msra.mxu0 %v172
  %186 = vmatprep.subr.bf16.mxu0 0
  %187 = vmatpush1.bf16.msra.mxu0 %v171
  %188 = vmatprep.subr.bf16.mxu0 0
  %189 = vmatpush1.bf16.msra.mxu0 %v170
  %190 = vmatprep.subr.bf16.mxu0 0
  %191 = vmatpush1.bf16.msra.mxu0 %v169
  %192 = vmatprep.subr.bf16.mxu0 0
  %193 = vmatpush1.bf16.msra.mxu0 %v168
  %194 = vmatprep.subr.bf16.mxu0 0
  %195 = vmatpush1.bf16.msra.mxu0 %v167
  %196 = vmatprep.subr.bf16.mxu0 0
  %197 = vmatpush1.bf16.msra.mxu0 %v166
  %198 = vmatprep.subr.bf16.mxu0 0
  %199 = vmatpush2.bf16.msra.mxu0 0
  %200 = vmatprep.subr.bf16.mxu0 0
  %201 = vmatpush2.bf16.msra.mxu0 0
  %202 = vmatprep.subr.bf16.mxu0 0
  %203 = vmatpush2.bf16.msra.mxu0 0
  %204 = vmatprep.subr.bf16.mxu0 0
  %205 = vmatpush2.bf16.msra.mxu0 0
  %206 = vmatprep.subr.bf16.mxu0 0
  %207 = vmatpush2.bf16.msra.mxu0 0
  %208 = vmatprep.subr.bf16.mxu0 0
  %209 = vmatpush2.bf16.msra.mxu0 0
  %210 = vmatprep.subr.bf16.mxu0 0
  %211 = vmatpush2.bf16.msra.mxu0 0
  %212 = vmatprep.subr.bf16.mxu0 0
  %213 = vmatpush2.bf16.msra.mxu0 0
  %214 = vmatprep.mubr.bf16.mxu0 0
  %215 = vmatmul.mubr.bf16.gmra.mxu0 %v118
  %v216 = vpop.f32.mrf.mxu0
  %v217 = vadd.f32 0.0, %v216
  %v218 = vpop.f32.mrf.mxu0
  %v219 = vpop.f32.mrf.mxu0
  %v220 = vadd.f32 0.0, %v219
  %v221 = vpop.f32.mrf.mxu0
  %222 = vmatprep.mubr.bf16.mxu0 0
  %223 = vmatmul.mubr.bf16.gmra.mxu0 %v119
  %v224 = vpop.f32.mrf.mxu0
  %v225 = vadd.f32 0.0, %v224
  %v226 = vpop.f32.mrf.mxu0
  %v227 = vpop.f32.mrf.mxu0
  %v228 = vadd.f32 0.0, %v227
  %v229 = vpop.f32.mrf.mxu0
  %230 = vmatprep.mubr.bf16.mxu0 0
  %231 = vmatmul.mubr.bf16.gmra.mxu0 %v120
  %v232 = vpop.f32.mrf.mxu0
  %v233 = vadd.f32 0.0, %v232
  %v234 = vpop.f32.mrf.mxu0
  %v235 = vpop.f32.mrf.mxu0
  %v236 = vadd.f32 0.0, %v235
  %v237 = vpop.f32.mrf.mxu0
  %238 = vmatprep.mubr.bf16.mxu0 0
  %239 = vmatmul.mubr.bf16.gmra.mxu0 %v121
  %v240 = vpop.f32.mrf.mxu0
  %v241 = vadd.f32 0.0, %v240
  %v242 = vpop.f32.mrf.mxu0
  %v243 = vpop.f32.mrf.mxu0
  %v244 = vadd.f32 0.0, %v243
  %v245 = vpop.f32.mrf.mxu0
  %246 = vmatprep.mubr.bf16.mxu0 0
  %247 = vmatmul.mubr.bf16.gmra.mxu0 %v122
  %v248 = vpop.f32.mrf.mxu0
  %v249 = vadd.f32 0.0, %v248
  %v250 = vpop.f32.mrf.mxu0
  %v251 = vpop.f32.mrf.mxu0
  %v252 = vadd.f32 0.0, %v251
  %v253 = vpop.f32.mrf.mxu0
  %254 = vmatprep.mubr.bf16.mxu0 0
  %255 = vmatmul.mubr.bf16.gmra.mxu0 %v123
  %v256 = vpop.f32.mrf.mxu0
  %v257 = vadd.f32 0.0, %v256
  %v258 = vpop.f32.mrf.mxu0
  %v259 = vpop.f32.mrf.mxu0
  %v260 = vadd.f32 0.0, %v259
  %v261 = vpop.f32.mrf.mxu0
  %262 = vmatprep.mubr.bf16.mxu0 0
  %263 = vmatmul.mubr.bf16.gmra.mxu0 %v124
  %v264 = vpop.f32.mrf.mxu0
  %v265 = vadd.f32 0.0, %v264
  %v266 = vpop.f32.mrf.mxu0
  %v267 = vpop.f32.mrf.mxu0
  %v268 = vadd.f32 0.0, %v267
  %v269 = vpop.f32.mrf.mxu0
  %270 = vmatprep.mubr.bf16.mxu0 0
  %271 = vmatmul.mubr.bf16.gmra.mxu0 %v125
  %v272 = vpop.f32.mrf.mxu0
  %v273 = vadd.f32 0.0, %v272
  %v274 = vpop.f32.mrf.mxu0
  %v275 = vpop.f32.mrf.mxu0
  %v276 = vadd.f32 0.0, %v275
  %v277 = vpop.f32.mrf.mxu0
  %278 = vdwg.mxu0
  %v279 = vadd.f32 %v38, %v217
  %v280 = vadd.f32 %v39, %v220
  %v281 = vadd.f32 %v40, %v225
  %v282 = vadd.f32 %v41, %v228
  %v283 = vadd.f32 %v42, %v233
  %v284 = vadd.f32 %v43, %v236
  %v285 = vadd.f32 %v44, %v241
  %v286 = vadd.f32 %v45, %v244
  %v287 = vadd.f32 %v46, %v249
  %v288 = vadd.f32 %v47, %v252
  %v289 = vadd.f32 %v48, %v257
  %v290 = vadd.f32 %v49, %v260
  %v291 = vadd.f32 %v50, %v265
  %v292 = vadd.f32 %v51, %v268
  %v293 = vadd.f32 %v52, %v273
  %v294 = vadd.f32 %v53, %v276
  %295 = vst [vmem:[#allocation2] sm:$0xff] %v279
  %296 = vst [vmem:[#allocation2 + $0x8] sm:$0xff] %v280
  %297 = vst [vmem:[#allocation2 + $0x10] sm:$0xff] %v281
  %298 = vst [vmem:[#allocation2 + $0x18] sm:$0xff] %v282
  %299 = vst [vmem:[#allocation2 + $0x20] sm:$0xff] %v283
  %300 = vst [vmem:[#allocation2 + $0x28] sm:$0xff] %v284
  %301 = vst [vmem:[#allocation2 + $0x30] sm:$0xff] %v285
  %302 = vst [vmem:[#allocation2 + $0x38] sm:$0xff] %v286
  %303 = vst [vmem:[#allocation2 + $0x40] sm:$0xff] %v287
  %304 = vst [vmem:[#allocation2 + $0x48] sm:$0xff] %v288
  %305 = vst [vmem:[#allocation2 + $0x50] sm:$0xff] %v289
  %306 = vst [vmem:[#allocation2 + $0x58] sm:$0xff] %v290
  %307 = vst [vmem:[#allocation2 + $0x60] sm:$0xff] %v291
  %308 = vst [vmem:[#allocation2 + $0x68] sm:$0xff] %v292
  %309 = vst [vmem:[#allocation2 + $0x70] sm:$0xff] %v293
  %310 = vst [vmem:[#allocation2 + $0x78] sm:$0xff] %v294
  // Predicated region
  $region22: #{_forward.109} parent=0 // pred_check
    %p311 = pneg %p18
  $region23: #{_forward.109} parent=0 // pred_check_branch
    %313 = sbr.rel (%p311) target = $region25
  $region24: #{_forward.109} parent=0 // pred_region
    %v314 = vld [vmem:[#allocation2] sm:$0xff]
    %v315 = vld [vmem:[#allocation2 + $0x8] sm:$0xff]
    %v316 = vld [vmem:[#allocation2 + $0x10] sm:$0xff]
    %v317 = vld [vmem:[#allocation2 + $0x18] sm:$0xff]
    %v318 = vld [vmem:[#allocation2 + $0x20] sm:$0xff]
    %v319 = vld [vmem:[#allocation2 + $0x28] sm:$0xff]
    %v320 = vld [vmem:[#allocation2 + $0x30] sm:$0xff]
    %v321 = vld [vmem:[#allocation2 + $0x38] sm:$0xff]
    %v322 = vld [vmem:[#allocation2 + $0x40] sm:$0xff]
    %v323 = vld [vmem:[#allocation2 + $0x48] sm:$0xff]
    %v324 = vld [vmem:[#allocation2 + $0x50] sm:$0xff]
    %v325 = vld [vmem:[#allocation2 + $0x58] sm:$0xff]
    %v326 = vld [vmem:[#allocation2 + $0x60] sm:$0xff]
    %v327 = vld [vmem:[#allocation2 + $0x68] sm:$0xff]
    %v328 = vld [vmem:[#allocation2 + $0x70] sm:$0xff]
    %v329 = vld [vmem:[#allocation2 + $0x78] sm:$0xff]
    %v330 = vld [vmem:[%s2] sm:$0x1]
    %v332 = vlaneseq
    %v333 = vshrl.u32 %v332, 7
    %v334 = vsub.s32 0, %v333
    %v335 = vrot.slane %v330, %v334
    %v337 = vmul.f32 %v314, %v335
    %v338 = vmul.f32 %v315, %v335
    %v339 = vmul.f32 %v316, %v335
    %v340 = vmul.f32 %v317, %v335
    %v341 = vmul.f32 %v318, %v335
    %v342 = vmul.f32 %v319, %v335
    %v343 = vmul.f32 %v320, %v335
    %v344 = vmul.f32 %v321, %v335
    %v345 = vmul.f32 %v322, %v335
    %v346 = vmul.f32 %v323, %v335
    %v347 = vmul.f32 %v324, %v335
    %v348 = vmul.f32 %v325, %v335
    %v349 = vmul.f32 %v326, %v335
    %v350 = vmul.f32 %v327, %v335
    %v351 = vmul.f32 %v328, %v335
    %v352 = vmul.f32 %v329, %v335
    %v353 = vld [vmem:[%s3] sm:$0x1]
    %v355 = vlaneseq
    %v356 = vshrl.u32 %v355, 7
    %v357 = vsub.s32 0, %v356
    %v358 = vrot.slane %v353, %v357
    %v360 = vadd.f32 %v337, %v358
    %v361 = vadd.f32 %v338, %v358
    %v362 = vadd.f32 %v339, %v358
    %v363 = vadd.f32 %v340, %v358
    %v364 = vadd.f32 %v341, %v358
    %v365 = vadd.f32 %v342, %v358
    %v366 = vadd.f32 %v343, %v358
    %v367 = vadd.f32 %v344, %v358
    %v368 = vadd.f32 %v345, %v358
    %v369 = vadd.f32 %v346, %v358
    %v370 = vadd.f32 %v347, %v358
    %v371 = vadd.f32 %v348, %v358
    %v372 = vadd.f32 %v349, %v358
    %v373 = vadd.f32 %v350, %v358
    %v374 = vadd.f32 %v351, %v358
    %v375 = vadd.f32 %v352, %v358
    %v376 = vmax.f32 %v360, 0.0
    %v377 = vmax.f32 %v361, 0.0
    %v378 = vmax.f32 %v362, 0.0
    %v379 = vmax.f32 %v363, 0.0
    %v380 = vmax.f32 %v364, 0.0
    %v381 = vmax.f32 %v365, 0.0
    %v382 = vmax.f32 %v366, 0.0
    %v383 = vmax.f32 %v367, 0.0
    %v384 = vmax.f32 %v368, 0.0
    %v385 = vmax.f32 %v369, 0.0
    %v386 = vmax.f32 %v370, 0.0
    %v387 = vmax.f32 %v371, 0.0
    %v388 = vmax.f32 %v372, 0.0
    %v389 = vmax.f32 %v373, 0.0
    %v390 = vmax.f32 %v374, 0.0
    %v391 = vmax.f32 %v375, 0.0
    %v392 = vpack.c.bf16 %v377, %v376
    %v393 = vpack.c.bf16 %v379, %v378
    %v394 = vpack.c.bf16 %v381, %v380
    %v395 = vpack.c.bf16 %v383, %v382
    %v396 = vpack.c.bf16 %v385, %v384
    %v397 = vpack.c.bf16 %v387, %v386
    %v398 = vpack.c.bf16 %v389, %v388
    %v399 = vpack.c.bf16 %v391, %v390
    %v408 = vunpack.c.l.b16 %v392
    %v409 = vunpack.c.h.b16 %v392
    %v410 = vunpack.c.l.b16 %v393
    %v411 = vunpack.c.h.b16 %v393
    %v412 = vunpack.c.l.b16 %v394
    %v413 = vunpack.c.h.b16 %v394
    %v414 = vunpack.c.l.b16 %v395
    %v415 = vunpack.c.h.b16 %v395
    %v416 = vunpack.c.l.b16 %v396
    %v417 = vunpack.c.h.b16 %v396
    %v418 = vunpack.c.l.b16 %v397
    %v419 = vunpack.c.h.b16 %v397
    %v420 = vunpack.c.l.b16 %v398
    %v421 = vunpack.c.h.b16 %v398
    %v422 = vunpack.c.l.b16 %v399
    %v423 = vunpack.c.h.b16 %v399
    %v424 = vpack.c.b16 %v408, %v408
    %v425 = vpack.c.b16 %v409, %v409
    %v426 = vpack.c.b16 %v410, %v410
    %v427 = vpack.c.b16 %v411, %v411
    %v428 = vpack.c.b16 %v412, %v412
    %v429 = vpack.c.b16 %v413, %v413
    %v430 = vpack.c.b16 %v414, %v414
    %v431 = vpack.c.b16 %v415, %v415
    %v432 = vpack.c.b16 %v416, %v416
    %v433 = vpack.c.b16 %v417, %v417
    %v434 = vpack.c.b16 %v418, %v418
    %v435 = vpack.c.b16 %v419, %v419
    %v436 = vpack.c.b16 %v420, %v420
    %v437 = vpack.c.b16 %v421, %v421
    %v438 = vpack.c.b16 %v422, %v422
    %v439 = vpack.c.b16 %v423, %v423
    %456 = vst [vmem:[%s4] sm:$0xf] %v424
    %457 = vst [vmem:[%s4 + $0x4] sm:$0xf] %v425
    %458 = vst [vmem:[%s4 + $0x8] sm:$0xf] %v426
    %459 = vst [vmem:[%s4 + $0xc] sm:$0xf] %v427
    %460 = vst [vmem:[%s4 + $0x10] sm:$0xf] %v428
    %461 = vst [vmem:[%s4 + $0x14] sm:$0xf] %v429
    %462 = vst [vmem:[%s4 + $0x18] sm:$0xf] %v430
    %463 = vst [vmem:[%s4 + $0x1c] sm:$0xf] %v431
    %464 = vst [vmem:[%s4 + $0x20] sm:$0xf] %v432
    %465 = vst [vmem:[%s4 + $0x24] sm:$0xf] %v433
    %466 = vst [vmem:[%s4 + $0x28] sm:$0xf] %v434
    %467 = vst [vmem:[%s4 + $0x2c] sm:$0xf] %v435
    %468 = vst [vmem:[%s4 + $0x30] sm:$0xf] %v436
    %469 = vst [vmem:[%s4 + $0x34] sm:$0xf] %v437
    %470 = vst [vmem:[%s4 + $0x38] sm:$0xf] %v438
    %471 = vst [vmem:[%s4 + $0x3c] sm:$0xf] %v439
  $region25: #{_forward.109} parent=0 // pred_fallthru
    _
  // Predicated region
  $region26: #{_forward.109} parent=0 // pred_check
    _
  $region27: #{_forward.109} parent=0 // pred_check_branch
    %473 = sbr.rel (0) target = $region29
  $region28: #{_forward.109} parent=0 // pred_region
    _
  $region29: #{_forward.109} parent=0 // pred_fallthru
    _
  // Predicated region
  $region30: #{_forward.109} parent=0 // pred_check
    _
  $region31: #{_forward.109} parent=0 // pred_check_branch
    %475 = sbr.rel (0) target = $region33
  $region32: #{_forward.109} parent=0 // pred_region
    _
  $region33: #{_forward.109} parent=0 // pred_fallthru
    _

// kernel: _forward.110
$region0: #{_forward.110}
  #allocation0 [shape = 'u32[]', space=smem, size = 0x4, offset = 0x4, fixed_abs, tag = 'smem constant byte address 0x4 - core index']
  #allocation1 [shape = 'u32[144,128]{1,0:T(1,128)}', space=vmem, size = 0x12000, scoped, tag = 'internal scratch']
  #allocation2 [shape = 'f32[128,128]{1,0:T(8,128)}', space=vmem, size = 0x10000, scoped, tag = 'scratch operand']
  %s0 = inlined_call_operand.vmem [shape: bf16[128,1152], index: 0, kind: input, shape index: {}]
  %s1 = inlined_call_operand.vmem [shape: bf16[1152,128], index: 1, kind: input, shape index: {}]
  %s2 = inlined_call_operand.vmem [shape: f32[1,128], index: 2, kind: input, shape index: {}]
  %s3 = inlined_call_operand.vmem [shape: f32[1,128], index: 3, kind: input, shape index: {}]
  %s4 = inlined_call_operand.vmem [shape: bf16[128,128], index: 4, kind: output, shape index: {}]
  %s5 = sld [smem:[#allocation0]]
  $region83: #{_forward.110} parent=0
    _
  %s7 = ssub.s32 1, %s5
  %s8 = scalar_select 0, %s7, %s5
  $region1: #{_forward.110} parent=0
    #allocation3 [shape = 'u8[196608]{0}', space=vmem, size = 0x30000, scoped, tag = 'input window, operand 0']
    loop: start=0, step=1, limit=5
    $region2: #{_forward.110} parent=1 // loop_pre_header
      _
    $region3: #{_forward.110} parent=1 // loop_header
      %s10 = sphi 0, %s14
      %p11 = scmp.ge.s32.totalorder %s10, 5
      %s17 = sphi 0, %s36
      %s18 = sphi 0, %s32
      %s19 = sphi 0, %s28
      %s20 = sphi 0, %s17
      %s21 = sphi 0, %s18
      %s22 = sphi 0, %s19
      %s23 = sphi 0, %s20
      %s24 = sphi 0, %s21
      %s25 = sphi 0, %s22
      %s41 = sphi 0, %s43
      %s44 = sphi 0, %s41
      %s45 = sphi 0, %s44
      %s61 = sphi 0, %s45
      %s69 = sphi 0, %s71
      %s72 = sphi 0, %s69
      %s73 = sphi 0, %s72
      %s89 = sphi 0, %s73
      %s95 = sphi 0, %s97
      %s98 = sphi 0, %s95
      %s99 = sphi 0, %s98
      %s115 = sphi 0, %s99
      %s121 = sphi 0, %s123
      %s124 = sphi 0, %s121
      %s125 = sphi 0, %s124
      %s141 = sphi 0, %s125
      %s149 = sphi 0, %s151
      %s152 = sphi 0, %s149
      %s153 = sphi 0, %s152
      %s169 = sphi 0, %s153
    $region4: #{_forward.110} parent=1 // loop_header_branch
      %13 = sbr.rel (%p11) target = $region8
    $region5: #{_forward.110} parent=1 // loop_body
      %s15 = ssub.s32 %s10, 1
      %s16 = ssub.s32 %s10, 2
      %s26 = sadd.s32 1, %s19
      %p27 = scmp.ge.s32.totalorder %s26, 3
      %s28 = scalar_select %p27, 0, %s26
      %s29 = sadd.s32 1, %s18
      %s30 = scalar_select %p27, %s29, %s18
      %p31 = scmp.ge.s32.totalorder %s30, 1
      %s32 = scalar_select %p31, 0, %s30
      %s33 = sadd.s32 1, %s17
      %s34 = scalar_select %p31, %s33, %s17
      %p35 = scmp.ge.s32.totalorder %s34, 1
      %s36 = scalar_select %p35, 0, %s34
      %s37 = ssub.s32 %s17, %s36
      %s38 = ssub.s32 %s19, %s28
      %s39 = sor.u32 %s37, %s38
      %p40 = scmp.eq.s32.totalorder %s39, 0
      %s42 = sadd.s32 %s41, 1
      %s43 = scalar_select %p40, %s41, %s42
      %p46 = pneg %p40
      %p47 = scmp.eq.s32.totalorder %s10, 2
      %p48 = por %p46, %p47
      %p49 = scmp.ne.s32.totalorder %s41, %s44
      %p50 = scmp.eq.s32.totalorder %s10, 0
      %p51 = por %p49, %p50
      %p52 = scmp.ne.s32.totalorder %s41, %s44
      %p53 = scmp.eq.s32.totalorder %s15, 2
      %p54 = por %p52, %p53
      %p55 = scmp.ne.s32.totalorder %s44, %s45
      %p56 = scmp.eq.s32.totalorder %s15, 0
      %p57 = por %p55, %p56
      %p58 = scmp.ne.s32.totalorder %s44, %s45
      %p59 = scmp.eq.s32.totalorder %s16, 2
      %p60 = por %p58, %p59
      %p62 = scmp.ne.s32.totalorder %s45, %s61
      %p63 = scmp.eq.s32.totalorder %s16, 0
      %p64 = por %p62, %p63
      %s65 = ssub.s32 %s19, %s28
      %s66 = ssub.s32 %s18, %s32
      %s67 = sor.u32 %s65, %s66
      %p68 = scmp.eq.s32.totalorder %s67, 0
      %s70 = sadd.s32 %s69, 1
      %s71 = scalar_select %p68, %s69, %s70
      %p74 = pneg %p68
      %p75 = scmp.eq.s32.totalorder %s10, 2
      %p76 = por %p74, %p75
      %p77 = scmp.ne.s32.totalorder %s69, %s72
      %p78 = scmp.eq.s32.totalorder %s10, 0
      %p79 = por %p77, %p78
      %p80 = scmp.ne.s32.totalorder %s69, %s72
      %p81 = scmp.eq.s32.totalorder %s15, 2
      %p82 = por %p80, %p81
      %p83 = scmp.ne.s32.totalorder %s72, %s73
      %p84 = scmp.eq.s32.totalorder %s15, 0
      %p85 = por %p83, %p84
      %p86 = scmp.ne.s32.totalorder %s72, %s73
      %p87 = scmp.eq.s32.totalorder %s16, 2
      %p88 = por %p86, %p87
      %p90 = scmp.ne.s32.totalorder %s73, %s89
      %p91 = scmp.eq.s32.totalorder %s16, 0
      %p92 = por %p90, %p91
      %s93 = ssub.s32 %s18, %s32
      %p94 = scmp.eq.s32.totalorder %s93, 0
      %s96 = sadd.s32 %s95, 1
      %s97 = scalar_select %p94, %s95, %s96
      %p100 = pneg %p94
      %p101 = scmp.eq.s32.totalorder %s10, 2
      %p102 = por %p100, %p101
      %p103 = scmp.ne.s32.totalorder %s95, %s98
      %p104 = scmp.eq.s32.totalorder %s10, 0
      %p105 = por %p103, %p104
      %p106 = scmp.ne.s32.totalorder %s95, %s98
      %p107 = scmp.eq.s32.totalorder %s15, 2
      %p108 = por %p106, %p107
      %p109 = scmp.ne.s32.totalorder %s98, %s99
      %p110 = scmp.eq.s32.totalorder %s15, 0
      %p111 = por %p109, %p110
      %p112 = scmp.ne.s32.totalorder %s98, %s99
      %p113 = scmp.eq.s32.totalorder %s16, 2
      %p114 = por %p112, %p113
      %p116 = scmp.ne.s32.totalorder %s99, %s115
      %p117 = scmp.eq.s32.totalorder %s16, 0
      %p118 = por %p116, %p117
      %s119 = ssub.s32 %s18, %s32
      %p120 = scmp.eq.s32.totalorder %s119, 0
      %s122 = sadd.s32 %s121, 1
      %s123 = scalar_select %p120, %s121, %s122
      %p126 = pneg %p120
      %p127 = scmp.eq.s32.totalorder %s10, 2
      %p128 = por %p126, %p127
      %p129 = scmp.ne.s32.totalorder %s121, %s124
      %p130 = scmp.eq.s32.totalorder %s10, 0
      %p131 = por %p129, %p130
      %p132 = scmp.ne.s32.totalorder %s121, %s124
      %p133 = scmp.eq.s32.totalorder %s15, 2
      %p134 = por %p132, %p133
      %p135 = scmp.ne.s32.totalorder %s124, %s125
      %p136 = scmp.eq.s32.totalorder %s15, 0
      %p137 = por %p135, %p136
      %p138 = scmp.ne.s32.totalorder %s124, %s125
      %p139 = scmp.eq.s32.totalorder %s16, 2
      %p140 = por %p138, %p139
      %p142 = scmp.ne.s32.totalorder %s125, %s141
      %p143 = scmp.eq.s32.totalorder %s16, 0
      %p144 = por %p142, %p143
      %s145 = ssub.s32 %s17, %s36
      %s146 = ssub.s32 %s18, %s32
      %s147 = sor.u32 %s145, %s146
      %p148 = scmp.eq.s32.totalorder %s147, 0
      %s150 = sadd.s32 %s149, 1
      %s151 = scalar_select %p148, %s149, %s150
      %p154 = pneg %p148
      %p155 = scmp.eq.s32.totalorder %s10, 2
      %p156 = por %p154, %p155
      %p157 = scmp.ne.s32.totalorder %s149, %s152
      %p158 = scmp.eq.s32.totalorder %s10, 0
      %p159 = por %p157, %p158
      %p160 = scmp.ne.s32.totalorder %s149, %s152
      %p161 = scmp.eq.s32.totalorder %s15, 2
      %p162 = por %p160, %p161
      %p163 = scmp.ne.s32.totalorder %s152, %s153
      %p164 = scmp.eq.s32.totalorder %s15, 0
      %p165 = por %p163, %p164
      %p166 = scmp.ne.s32.totalorder %s152, %s153
      %p167 = scmp.eq.s32.totalorder %s16, 2
      %p168 = por %p166, %p167
      %p170 = scmp.ne.s32.totalorder %s153, %s169
      %p171 = scmp.eq.s32.totalorder %s16, 0
      %p172 = por %p170, %p171
      %p173 = scmp.le.s32.totalorder 1, %s10
      %p174 = scmp.lt.s32.totalorder %s10, 4
      %p175 = pnand %p173, %p174
      %p176 = pneg %p175
      // Predicated region
      $region9: #{_forward.110} parent=5 // pred_check
        _
      $region10: #{_forward.110} parent=5 // pred_check_branch
        %178 = sbr.rel (%p175) target = $region12
      $region11: #{_forward.110} parent=5 // pred_region
        %s179 = ssub.s32 %s10, 1
        // Predicated region
        $region13: #{_forward.110} parent=11 // pred_check
          %p180 = pneg %p111
        $region14: #{_forward.110} parent=11 // pred_check_branch
          %182 = sbr.rel (%p180) target = $region16
        $region15: #{_forward.110} parent=11 // pred_region
          %p183 = scmp.lt.s32.totalorder %s21, 0
          %s184 = scalar_select %p183, %s21, 0
          %s185 = scalar_lea.vmem %s2, %s184
        $region16: #{_forward.110} parent=11 // pred_fallthru
          _
        // Predicated region
        $region17: #{_forward.110} parent=11 // pred_check
          %p186 = pneg %p137
        $region18: #{_forward.110} parent=11 // pred_check_branch
          %188 = sbr.rel (%p186) target = $region20
        $region19: #{_forward.110} parent=11 // pred_region
          %p189 = scmp.lt.s32.totalorder %s21, 0
          %s190 = scalar_select %p189, %s21, 0
          %s191 = scalar_lea.vmem %s3, %s190
        $region20: #{_forward.110} parent=11 // pred_fallthru
          _
      $region12: #{_forward.110} parent=5 // pred_fallthru
        _
      %p192 = scmp.lt.s32.totalorder %s10, 3
      // Predicated region
      $region21: #{_forward.110} parent=5 // pred_check
        %p193 = pneg %p192
      $region22: #{_forward.110} parent=5 // pred_check_branch
        %195 = sbr.rel (%p193) target = $region24
      $region23: #{_forward.110} parent=5 // pred_region
        // Predicated region
        $region25: #{_forward.110} parent=23 // pred_check
          %p196 = pneg %p51
        $region26: #{_forward.110} parent=23 // pred_check_branch
          %198 = sbr.rel (%p196) target = $region28
        $region27: #{_forward.110} parent=23 // pred_region
          %s199 = sand.u32 %s41, 1
          %s200 = sand.u32 %s41, 1
          %s201 = smul.addr %s200, 192
          %s202 = scalar_lea.vmem [#allocation3], %s201
          %s203 = smul.u32 16, %s17
          %s204 = smul.u32 3, %s19
          %s205 = smul.addr %s203, 9
          %s206 = sadd.s32 %s204, %s205
          %s207 = smul.addr %s206, 4
          %s208 = scalar_lea.vmem %s0, %s207
          // Predicated region
          $region29: #{_forward.110} parent=27 // pred_check
            _
          $region30: #{_forward.110} parent=27 // pred_check_branch
            %210 = sbr.rel (0) target = $region32
          $region31: #{_forward.110} parent=27 // pred_region
            // Predicated region
            $region33: #{_forward.110} parent=31 // pred_check
              _
            $region34: #{_forward.110} parent=31 // pred_check_branch
              %212 = sbr.rel (0) target = $region36
            $region35: #{_forward.110} parent=31 // pred_region
              %s213 = scalar_lea.vmem %s208, 8
              %s214 = scalar_lea.vmem %s202, 8 [#allocation3]
              loop: start=0, step=1, limit=1
              $region37: #{_forward.110} parent=35 // loop_pre_header
                _
              $region38: #{_forward.110} parent=35 // loop_header
                %s216 = sphi 0, %s220
                %p217 = scmp.ge.s32.totalorder %s216, 1
                %s221 = sphi %s208, %s208
                %s222 = sphi %s202, %s202
              $region39: #{_forward.110} parent=35 // loop_header_branch
                %219 = sbr.rel (%p217) target = $region43
              $region40: #{_forward.110} parent=35 // loop_body
                %v223 = vld [vmem:[%s221] sm:$0xff]
                %224 = vst [vmem:[%s222] sm:$0xff] %v223
                %v225 = vld [vmem:[%s221 + $0x24] sm:$0xff]
                %226 = vst [vmem:[%s222 + $0xc] sm:$0xff] %v225
                %v227 = vld [vmem:[%s221 + $0x48] sm:$0xff]
                %228 = vst [vmem:[%s222 + $0x18] sm:$0xff] %v227
                %v229 = vld [vmem:[%s221 + $0x6c] sm:$0xff]
                %230 = vst [vmem:[%s222 + $0x24] sm:$0xff] %v229
                %v231 = vld [vmem:[%s221 + $0x90] sm:$0xff]
                %232 = vst [vmem:[%s222 + $0x30] sm:$0xff] %v231
                %v233 = vld [vmem:[%s221 + $0xb4] sm:$0xff]
                %234 = vst [vmem:[%s222 + $0x3c] sm:$0xff] %v233
                %v235 = vld [vmem:[%s221 + $0xd8] sm:$0xff]
                %236 = vst [vmem:[%s222 + $0x48] sm:$0xff] %v235
                %v237 = vld [vmem:[%s221 + $0xfc] sm:$0xff]
                %238 = vst [vmem:[%s222 + $0x54] sm:$0xff] %v237
                %v239 = vld [vmem:[%s221 + $0x120] sm:$0xff]
                %240 = vst [vmem:[%s222 + $0x60] sm:$0xff] %v239
                %v241 = vld [vmem:[%s221 + $0x144] sm:$0xff]
                %242 = vst [vmem:[%s222 + $0x6c] sm:$0xff] %v241
                %v243 = vld [vmem:[%s221 + $0x168] sm:$0xff]
                %244 = vst [vmem:[%s222 + $0x78] sm:$0xff] %v243
                %v245 = vld [vmem:[%s221 + $0x18c] sm:$0xff]
                %246 = vst [vmem:[%s222 + $0x84] sm:$0xff] %v245
                %v247 = vld [vmem:[%s221 + $0x1b0] sm:$0xff]
                %248 = vst [vmem:[%s222 + $0x90] sm:$0xff] %v247
                %v249 = vld [vmem:[%s221 + $0x1d4] sm:$0xff]
                %250 = vst [vmem:[%s222 + $0x9c] sm:$0xff] %v249
                %v251 = vld [vmem:[%s221 + $0x1f8] sm:$0xff]
                %252 = vst [vmem:[%s222 + $0xa8] sm:$0xff] %v251
                %v253 = vld [vmem:[%s221 + $0x21c] sm:$0xff]
                %254 = vst [vmem:[%s222 + $0xb4] sm:$0xff] %v253
              $region41: #{_forward.110} parent=35 // loop_footer
                %s220 = sadd.s32 1, %s216
              $region42: #{_forward.110} parent=35 // loop_footer_branch
                %215 = sbr.rel target = $region38
              $region43: #{_forward.110} parent=35 // loop_exit
                _
              %s256 = ssub.s32 16, 1
              loop: start=0, step=1, limit=1
              $region44: #{_forward.110} parent=35 // loop_pre_header
                _
              $region45: #{_forward.110} parent=35 // loop_header
                %s258 = sphi 0, %s262
                %p259 = scmp.ge.s32.totalorder %s258, 1
                %s263 = sphi %s213, %s213
                %s264 = sphi %s214, %s214
              $region46: #{_forward.110} parent=35 // loop_header_branch
                %261 = sbr.rel (%p259) target = $region50
              $region47: #{_forward.110} parent=35 // loop_body
                %v265 = vld [vmem:[%s263] sm:%s256]
                %266 = vst [vmem:[%s264] sm:%s256] %v265
                %v267 = vld [vmem:[%s263 + $0x24] sm:%s256]
                %268 = vst [vmem:[%s264 + $0xc] sm:%s256] %v267
                %v269 = vld [vmem:[%s263 + $0x48] sm:%s256]
                %270 = vst [vmem:[%s264 + $0x18] sm:%s256] %v269
                %v271 = vld [vmem:[%s263 + $0x6c] sm:%s256]
                %272 = vst [vmem:[%s264 + $0x24] sm:%s256] %v271
                %v273 = vld [vmem:[%s263 + $0x90] sm:%s256]
                %274 = vst [vmem:[%s264 + $0x30] sm:%s256] %v273
                %v275 = vld [vmem:[%s263 + $0xb4] sm:%s256]
                %276 = vst [vmem:[%s264 + $0x3c] sm:%s256] %v275
                %v277 = vld [vmem:[%s263 + $0xd8] sm:%s256]
                %278 = vst [vmem:[%s264 + $0x48] sm:%s256] %v277
                %v279 = vld [vmem:[%s263 + $0xfc] sm:%s256]
                %280 = vst [vmem:[%s264 + $0x54] sm:%s256] %v279
                %v281 = vld [vmem:[%s263 + $0x120] sm:%s256]
                %282 = vst [vmem:[%s264 + $0x60] sm:%s256] %v281
                %v283 = vld [vmem:[%s263 + $0x144] sm:%s256]
                %284 = vst [vmem:[%s264 + $0x6c] sm:%s256] %v283
                %v285 = vld [vmem:[%s263 + $0x168] sm:%s256]
                %286 = vst [vmem:[%s264 + $0x78] sm:%s256] %v285
                %v287 = vld [vmem:[%s263 + $0x18c] sm:%s256]
                %288 = vst [vmem:[%s264 + $0x84] sm:%s256] %v287
                %v289 = vld [vmem:[%s263 + $0x1b0] sm:%s256]
                %290 = vst [vmem:[%s264 + $0x90] sm:%s256] %v289
                %v291 = vld [vmem:[%s263 + $0x1d4] sm:%s256]
                %292 = vst [vmem:[%s264 + $0x9c] sm:%s256] %v291
                %v293 = vld [vmem:[%s263 + $0x1f8] sm:%s256]
                %294 = vst [vmem:[%s264 + $0xa8] sm:%s256] %v293
                %v295 = vld [vmem:[%s263 + $0x21c] sm:%s256]
                %296 = vst [vmem:[%s264 + $0xb4] sm:%s256] %v295
              $region48: #{_forward.110} parent=35 // loop_footer
                %s262 = sadd.s32 1, %s258
              $region49: #{_forward.110} parent=35 // loop_footer_branch
                %257 = sbr.rel target = $region45
              $region50: #{_forward.110} parent=35 // loop_exit
                _
            $region36: #{_forward.110} parent=31 // pred_fallthru
              _
          $region32: #{_forward.110} parent=27 // pred_fallthru
            _
          %297 = vnop
        $region28: #{_forward.110} parent=23 // pred_fallthru
          _
        // Predicated region
        $region51: #{_forward.110} parent=23 // pred_check
          %p298 = pneg %p79
        $region52: #{_forward.110} parent=23 // pred_check_branch
          %300 = sbr.rel (%p298) target = $region54
        $region53: #{_forward.110} parent=23 // pred_region
          %s301 = smul.u32 48, %s19
          %p302 = scmp.lt.s32.totalorder %s301, 143
          %s303 = scalar_select %p302, %s301, 143
          %p304 = scmp.lt.s32.totalorder %s18, 0
          %s305 = scalar_select %p304, %s18, 0
          %s306 = sadd.s32 %s305, %s303
          %s307 = smul.addr %s306, 4
          %s308 = scalar_lea.vmem %s1, %s307
          %s309 = smul.u32 48, %s19
        $region54: #{_forward.110} parent=23 // pred_fallthru
          _
      $region24: #{_forward.110} parent=5 // pred_fallthru
        _
      %p310 = scmp.le.s32.totalorder 1, %s10
      %p311 = scmp.lt.s32.totalorder %s10, 4
      %p312 = pnand %p310, %p311
      %p313 = pneg %p312
      // Predicated region
      $region55: #{_forward.110} parent=5 // pred_check
        _
      $region56: #{_forward.110} parent=5 // pred_check_branch
        %315 = sbr.rel (%p312) target = $region58
      $region57: #{_forward.110} parent=5 // pred_region
        %s316 = ssub.s32 %s10, 1
        %s317 = sand.u32 %s44, 1
        %s318 = sand.u32 %s44, 1
        %s319 = smul.addr %s318, 192
        %s320 = scalar_lea.vmem [#allocation3], %s319
        // Predicated region
        $region59: #{_forward.110} parent=57 // pred_check
          %p321 = pneg %p57
        $region60: #{_forward.110} parent=57 // pred_check_branch
          %323 = sbr.rel (%p321) target = $region62
        $region61: #{_forward.110} parent=57 // pred_region
          _
        $region62: #{_forward.110} parent=57 // pred_fallthru
          _
        %s324 = sand.u32 %s44, 1
        %s325 = sand.u32 %s44, 1
        %s326 = smul.addr %s325, 192
        %s327 = scalar_lea.vmem [#allocation3], %s326
        %p328 = pneg %p57
        %p329 = pneg %p54
        %s330 = smul.u32 48, %s22
        %p331 = scmp.lt.s32.totalorder %s330, 143
        %s332 = scalar_select %p331, %s330, 143
        %p333 = scmp.lt.s32.totalorder %s21, 0
        %s334 = scalar_select %p333, %s21, 0
        %s335 = sadd.s32 %s334, %s332
        %s336 = smul.addr %s335, 4
        %s337 = scalar_lea.vmem %s1, %s336
        %p338 = pneg %p85
        %p339 = pneg %p82
        %p340 = scmp.lt.s32.totalorder %s21, 0
        %s341 = scalar_select %p340, %s21, 0
        %s342 = scalar_lea.vmem %s2, %s341
        %p343 = pneg %p111
        %p344 = pneg %p108
        %p345 = scmp.lt.s32.totalorder %s21, 0
        %s346 = scalar_select %p345, %s21, 0
        %s347 = scalar_lea.vmem %s3, %s346
        %p348 = pneg %p137
        %p349 = pneg %p134
        %p350 = pneg %p165
        %p351 = pneg %p162
        %s352 = smul.u32 16, %s20
        %p353 = scmp.lt.s32.totalorder %s352, 15
        %s354 = scalar_select %p353, %s352, 15
        %p355 = scmp.lt.s32.totalorder %s21, 0
        %s356 = scalar_select %p355, %s21, 0
        %s357 = sadd.s32 %s356, %s354
        %s358 = smul.addr %s357, 4
        %s359 = scalar_lea.vmem %s4, %s358
        %s360 = smul.u32 16, %s20
        %s361 = smul.u32 3, %s22
        %s362 = smul.u32 48, %s22
        %p363 = scmp.lt.s32.totalorder %s362, 143
        %s364 = scalar_select %p363, %s362, 143
        %p365 = scmp.lt.s32.totalorder %s21, 0
        %s366 = scalar_select %p365, %s21, 0
        %s367 = sadd.s32 %s366, %s364
        %s368 = smul.addr %s367, 4
        %s369 = scalar_lea.vmem %s1, %s368
        %s370 = smul.u32 48, %s22
        %p371 = scmp.lt.s32.totalorder %s21, 0
        %s372 = scalar_select %p371, %s21, 0
        %s373 = scalar_lea.vmem %s2, %s372
        %p374 = scmp.lt.s32.totalorder %s21, 0
        %s375 = scalar_select %p374, %s21, 0
        %s376 = scalar_lea.vmem %s3, %s375
        %s377 = smul.u32 16, %s20
        %p378 = scmp.lt.s32.totalorder %s377, 15
        %s379 = scalar_select %p378, %s377, 15
        %p380 = scmp.lt.s32.totalorder %s21, 0
        %s381 = scalar_select %p380, %s21, 0
        %s382 = sadd.s32 %s381, %s379
        %s383 = smul.addr %s382, 4
        %s384 = scalar_lea.vmem %s4, %s383
        %s385 = smul.u32 16, %s20
        %p387 = scmp.eq.s32.totalorder %s22, 0
        // Predicated region
        $region63: #{_forward.110} parent=57 // pred_check
          %p388 = pneg %p387
        $region64: #{_forward.110} parent=57 // pred_check_branch
          %390 = sbr.rel (%p388) target = $region66
        $region65: #{_forward.110} parent=57 // pred_region
          %391 = vst [vmem:[#allocation2] sm:$0xff] 0.0
          %392 = vst [vmem:[#allocation2 + $0x8] sm:$0xff] 0.0
          %393 = vst [vmem:[#allocation2 + $0x10] sm:$0xff] 0.0
          %394 = vst [vmem:[#allocation2 + $0x18] sm:$0xff] 0.0
          %395 = vst [vmem:[#allocation2 + $0x20] sm:$0xff] 0.0
          %396 = vst [vmem:[#allocation2 + $0x28] sm:$0xff] 0.0
          %397 = vst [vmem:[#allocation2 + $0x30] sm:$0xff] 0.0
          %398 = vst [vmem:[#allocation2 + $0x38] sm:$0xff] 0.0
          %399 = vst [vmem:[#allocation2 + $0x40] sm:$0xff] 0.0
          %400 = vst [vmem:[#allocation2 + $0x48] sm:$0xff] 0.0
          %401 = vst [vmem:[#allocation2 + $0x50] sm:$0xff] 0.0
          %402 = vst [vmem:[#allocation2 + $0x58] sm:$0xff] 0.0
          %403 = vst [vmem:[#allocation2 + $0x60] sm:$0xff] 0.0
          %404 = vst [vmem:[#allocation2 + $0x68] sm:$0xff] 0.0
          %405 = vst [vmem:[#allocation2 + $0x70] sm:$0xff] 0.0
          %406 = vst [vmem:[#allocation2 + $0x78] sm:$0xff] 0.0
        $region66: #{_forward.110} parent=57 // pred_fallthru
          _
        %v407 = vld [vmem:[#allocation2] sm:$0xff]
        %v408 = vld [vmem:[#allocation2 + $0x8] sm:$0xff]
        %v409 = vld [vmem:[#allocation2 + $0x10] sm:$0xff]
        %v410 = vld [vmem:[#allocation2 + $0x18] sm:$0xff]
        %v411 = vld [vmem:[#allocation2 + $0x20] sm:$0xff]
        %v412 = vld [vmem:[#allocation2 + $0x28] sm:$0xff]
        %v413 = vld [vmem:[#allocation2 + $0x30] sm:$0xff]
        %v414 = vld [vmem:[#allocation2 + $0x38] sm:$0xff]
        %v415 = vld [vmem:[#allocation2 + $0x40] sm:$0xff]
        %v416 = vld [vmem:[#allocation2 + $0x48] sm:$0xff]
        %v417 = vld [vmem:[#allocation2 + $0x50] sm:$0xff]
        %v418 = vld [vmem:[#allocation2 + $0x58] sm:$0xff]
        %v419 = vld [vmem:[#allocation2 + $0x60] sm:$0xff]
        %v420 = vld [vmem:[#allocation2 + $0x68] sm:$0xff]
        %v421 = vld [vmem:[#allocation2 + $0x70] sm:$0xff]
        %v422 = vld [vmem:[#allocation2 + $0x78] sm:$0xff]
        %v423 = vld [vmem:[%s320] sm:$0xff]
        %v424 = vld [vmem:[%s320 + $0x8] sm:$0xf]
        %v425 = vld [vmem:[%s320 + $0xc] sm:$0xff]
        %v426 = vld [vmem:[%s320 + $0x14] sm:$0xf]
        %v427 = vld [vmem:[%s320 + $0x18] sm:$0xff]
        %v428 = vld [vmem:[%s320 + $0x20] sm:$0xf]
        %v429 = vld [vmem:[%s320 + $0x24] sm:$0xff]
        %v430 = vld [vmem:[%s320 + $0x2c] sm:$0xf]
        %v431 = vld [vmem:[%s320 + $0x30] sm:$0xff]
        %v432 = vld [vmem:[%s320 + $0x38] sm:$0xf]
        %v433 = vld [vmem:[%s320 + $0x3c] sm:$0xff]
        %v434 = vld [vmem:[%s320 + $0x44] sm:$0xf]
        %v435 = vld [vmem:[%s320 + $0x48] sm:$0xff]
        %v436 = vld [vmem:[%s320 + $0x50] sm:$0xf]
        %v437 = vld [vmem:[%s320 + $0x54] sm:$0xff]
        %v438 = vld [vmem:[%s320 + $0x5c] sm:$0xf]
        %v439 = vld [vmem:[%s320 + $0x60] sm:$0xff]
        %v440 = vld [vmem:[%s320 + $0x68] sm:$0xf]
        %v441 = vld [vmem:[%s320 + $0x6c] sm:$0xff]
        %v442 = vld [vmem:[%s320 + $0x74] sm:$0xf]
        %v443 = vld [vmem:[%s320 + $0x78] sm:$0xff]
        %v444 = vld [vmem:[%s320 + $0x80] sm:$0xf]
        %v445 = vld [vmem:[%s320 + $0x84] sm:$0xff]
        %v446 = vld [vmem:[%s320 + $0x8c] sm:$0xf]
        %v447 = vld [vmem:[%s320 + $0x90] sm:$0xff]
        %v448 = vld [vmem:[%s320 + $0x98] sm:$0xf]
        %v449 = vld [vmem:[%s320 + $0x9c] sm:$0xff]
        %v450 = vld [vmem:[%s320 + $0xa4] sm:$0xf]
        %v451 = vld [vmem:[%s320 + $0xa8] sm:$0xff]
        %v452 = vld [vmem:[%s320 + $0xb0] sm:$0xf]
        %v453 = vld [vmem:[%s320 + $0xb4] sm:$0xff]
        %v454 = vld [vmem:[%s320 + $0xbc] sm:$0xf]
        %v455 = vld [vmem:[%s369] sm:$0xf]
        %v456 = vld [vmem:[%s369 + $0x4] sm:$0xf]
        %v457 = vld [vmem:[%s369 + $0x8] sm:$0xf]
        %v458 = vld [vmem:[%s369 + $0xc] sm:$0xf]
        %v459 = vld [vmem:[%s369 + $0x10] sm:$0xf]
        %v460 = vld [vmem:[%s369 + $0x14] sm:$0xf]
        %v461 = vld [vmem:[%s369 + $0x18] sm:$0xf]
        %v462 = vld [vmem:[%s369 + $0x1c] sm:$0xf]
        %v463 = vld [vmem:[%s369 + $0x20] sm:$0xf]
        %v464 = vld [vmem:[%s369 + $0x24] sm:$0xf]
        %v465 = vld [vmem:[%s369 + $0x28] sm:$0xf]
        %v466 = vld [vmem:[%s369 + $0x2c] sm:$0xf]
        %v467 = vld [vmem:[%s369 + $0x30] sm:$0xf]
        %v468 = vld [vmem:[%s369 + $0x34] sm:$0xf]
        %v469 = vld [vmem:[%s369 + $0x38] sm:$0xf]
        %v470 = vld [vmem:[%s369 + $0x3c] sm:$0xf]
        %v471 = vld [vmem:[%s369 + $0x40] sm:$0xf]
        %v472 = vld [vmem:[%s369 + $0x44] sm:$0xf]
        %v473 = vld [vmem:[%s369 + $0x48] sm:$0xf]
        %v474 = vld [vmem:[%s369 + $0x4c] sm:$0xf]
        %v475 = vld [vmem:[%s369 + $0x50] sm:$0xf]
        %v476 = vld [vmem:[%s369 + $0x54] sm:$0xf]
        %v477 = vld [vmem:[%s369 + $0x58] sm:$0xf]
        %v478 = vld [vmem:[%s369 + $0x5c] sm:$0xf]
        %v479 = vld [vmem:[%s369 + $0x60] sm:$0xf]
        %v480 = vld [vmem:[%s369 + $0x64] sm:$0xf]
        %v481 = vld [vmem:[%s369 + $0x68] sm:$0xf]
        %v482 = vld [vmem:[%s369 + $0x6c] sm:$0xf]
        %v483 = vld [vmem:[%s369 + $0x70] sm:$0xf]
        %v484 = vld [vmem:[%s369 + $0x74] sm:$0xf]
        %v485 = vld [vmem:[%s369 + $0x78] sm:$0xf]
        %v486 = vld [vmem:[%s369 + $0x7c] sm:$0xf]
        %v487 = vld [vmem:[%s369 + $0x80] sm:$0xf]
        %v488 = vld [vmem:[%s369 + $0x84] sm:$0xf]
        %v489 = vld [vmem:[%s369 + $0x88] sm:$0xf]
        %v490 = vld [vmem:[%s369 + $0x8c] sm:$0xf]
        %v491 = vld [vmem:[%s369 + $0x90] sm:$0xf]
        %v492 = vld [vmem:[%s369 + $0x94] sm:$0xf]
        %v493 = vld [vmem:[%s369 + $0x98] sm:$0xf]
        %v494 = vld [vmem:[%s369 + $0x9c] sm:$0xf]
        %v495 = vld [vmem:[%s369 + $0xa0] sm:$0xf]
        %v496 = vld [vmem:[%s369 + $0xa4] sm:$0xf]
        %v497 = vld [vmem:[%s369 + $0xa8] sm:$0xf]
        %v498 = vld [vmem:[%s369 + $0xac] sm:$0xf]
        %v499 = vld [vmem:[%s369 + $0xb0] sm:$0xf]
        %v500 = vld [vmem:[%s369 + $0xb4] sm:$0xf]
        %v501 = vld [vmem:[%s369 + $0xb8] sm:$0xf]
        %v502 = vld [vmem:[%s369 + $0xbc] sm:$0xf]
        %v535 = vunpack.c.l.b16 %v423
        %v536 = vunpack.c.h.b16 %v423
        %v537 = vunpack.c.l.b16 %v424
        %v538 = vunpack.c.l.b16 %v425
        %v539 = vunpack.c.h.b16 %v425
        %v540 = vunpack.c.l.b16 %v426
        %v541 = vunpack.c.l.b16 %v427
        %v542 = vunpack.c.h.b16 %v427
        %v543 = vunpack.c.l.b16 %v428
        %v544 = vunpack.c.l.b16 %v429
        %v545 = vunpack.c.h.b16 %v429
        %v546 = vunpack.c.l.b16 %v430
        %v547 = vunpack.c.l.b16 %v431
        %v548 = vunpack.c.h.b16 %v431
        %v549 = vunpack.c.l.b16 %v432
        %v550 = vunpack.c.l.b16 %v433
        %v551 = vunpack.c.h.b16 %v433
        %v552 = vunpack.c.l.b16 %v434
        %v553 = vunpack.c.l.b16 %v435
        %v554 = vunpack.c.h.b16 %v435
        %v555 = vunpack.c.l.b16 %v436
        %v556 = vunpack.c.l.b16 %v437
        %v557 = vunpack.c.h.b16 %v437
        %v558 = vunpack.c.l.b16 %v438
        %v559 = vunpack.c.l.b16 %v439
        %v560 = vunpack.c.h.b16 %v439
        %v561 = vunpack.c.l.b16 %v440
        %v562 = vunpack.c.l.b16 %v441
        %v563 = vunpack.c.h.b16 %v441
        %v564 = vunpack.c.l.b16 %v442
        %v565 = vunpack.c.l.b16 %v443
        %v566 = vunpack.c.h.b16 %v443
        %v567 = vunpack.c.l.b16 %v444
        %v568 = vunpack.c.l.b16 %v445
        %v569 = vunpack.c.h.b16 %v445
        %v570 = vunpack.c.l.b16 %v446
        %v571 = vunpack.c.l.b16 %v447
        %v572 = vunpack.c.h.b16 %v447
        %v573 = vunpack.c.l.b16 %v448
        %v574 = vunpack.c.l.b16 %v449
        %v575 = vunpack.c.h.b16 %v449
        %v576 = vunpack.c.l.b16 %v450
        %v577 = vunpack.c.l.b16 %v451
        %v578 = vunpack.c.h.b16 %v451
        %v579 = vunpack.c.l.b16 %v452
        %v580 = vunpack.c.l.b16 %v453
        %v581 = vunpack.c.h.b16 %v453
        %v582 = vunpack.c.l.b16 %v454
        %v583 = vpack.c.b16 %v538, %v535
        %v584 = vpack.c.b16 %v539, %v536
        %v585 = vpack.c.b16 %v540, %v537
        %v586 = vpack.c.b16 %v544, %v541
        %v587 = vpack.c.b16 %v545, %v542
        %v588 = vpack.c.b16 %v546, %v543
        %v589 = vpack.c.b16 %v550, %v547
        %v590 = vpack.c.b16 %v551, %v548
        %v591 = vpack.c.b16 %v552, %v549
        %v592 = vpack.c.b16 %v556, %v553
        %v593 = vpack.c.b16 %v557, %v554
        %v594 = vpack.c.b16 %v558, %v555
        %v595 = vpack.c.b16 %v562, %v559
        %v596 = vpack.c.b16 %v563, %v560
        %v597 = vpack.c.b16 %v564, %v561
        %v598 = vpack.c.b16 %v568, %v565
        %v599 = vpack.c.b16 %v569, %v566
        %v600 = vpack.c.b16 %v570, %v567
        %v601 = vpack.c.b16 %v574, %v571
        %v602 = vpack.c.b16 %v575, %v572
        %v603 = vpack.c.b16 %v576, %v573
        %v604 = vpack.c.b16 %v580, %v577
        %v605 = vpack.c.b16 %v581, %v578
        %v606 = vpack.c.b16 %v582, %v579
        %v679 = vunpack.c.l.b16 %v455
        %v680 = vunpack.c.l.b16 %v456
        %v681 = vunpack.c.l.b16 %v457
        %v682 = vunpack.c.l.b16 %v458
        %v683 = vunpack.c.l.b16 %v459
        %v684 = vunpack.c.l.b16 %v460
        %v685 = vunpack.c.l.b16 %v461
        %v686 = vunpack.c.l.b16 %v462
        %v687 = vunpack.c.l.b16 %v463
        %v688 = vunpack.c.l.b16 %v464
        %v689 = vunpack.c.l.b16 %v465
        %v690 = vunpack.c.l.b16 %v466
        %v691 = vunpack.c.l.b16 %v467
        %v692 = vunpack.c.l.b16 %v468
        %v693 = vunpack.c.l.b16 %v469
        %v694 = vunpack.c.l.b16 %v470
        %v695 = vunpack.c.l.b16 %v471
        %v696 = vunpack.c.l.b16 %v472
        %v697 = vunpack.c.l.b16 %v473
        %v698 = vunpack.c.l.b16 %v474
        %v699 = vunpack.c.l.b16 %v475
        %v700 = vunpack.c.l.b16 %v476
        %v701 = vunpack.c.l.b16 %v477
        %v702 = vunpack.c.l.b16 %v478
        %v703 = vunpack.c.l.b16 %v479
        %v704 = vunpack.c.l.b16 %v480
        %v705 = vunpack.c.l.b16 %v481
        %v706 = vunpack.c.l.b16 %v482
        %v707 = vunpack.c.l.b16 %v483
        %v708 = vunpack.c.l.b16 %v484
        %v709 = vunpack.c.l.b16 %v485
        %v710 = vunpack.c.l.b16 %v486
        %v711 = vunpack.c.l.b16 %v487
        %v712 = vunpack.c.l.b16 %v488
        %v713 = vunpack.c.l.b16 %v489
        %v714 = vunpack.c.l.b16 %v490
        %v715 = vunpack.c.l.b16 %v491
        %v716 = vunpack.c.l.b16 %v492
        %v717 = vunpack.c.l.b16 %v493
        %v718 = vunpack.c.l.b16 %v494
        %v719 = vunpack.c.l.b16 %v495
        %v720 = vunpack.c.l.b16 %v496
        %v721 = vunpack.c.l.b16 %v497
        %v722 = vunpack.c.l.b16 %v498
        %v723 = vunpack.c.l.b16 %v499
        %v724 = vunpack.c.l.b16 %v500
        %v725 = vunpack.c.l.b16 %v501
        %v726 = vunpack.c.l.b16 %v502
        %v727 = vpack.c.b16 %v680, %v679
        %v728 = vpack.c.b16 %v682, %v681
        %v729 = vpack.c.b16 %v684, %v683
        %v730 = vpack.c.b16 %v686, %v685
        %v731 = vpack.c.b16 %v688, %v687
        %v732 = vpack.c.b16 %v690, %v689
        %v733 = vpack.c.b16 %v692, %v691
        %v734 = vpack.c.b16 %v694, %v693
        %v735 = vpack.c.b16 %v696, %v695
        %v736 = vpack.c.b16 %v698, %v697
        %v737 = vpack.c.b16 %v700, %v699
        %v738 = vpack.c.b16 %v702, %v701
        %v739 = vpack.c.b16 %v704, %v703
        %v740 = vpack.c.b16 %v706, %v705
        %v741 = vpack.c.b16 %v708, %v707
        %v742 = vpack.c.b16 %v710, %v709
        %v743 = vpack.c.b16 %v712, %v711
        %v744 = vpack.c.b16 %v714, %v713
        %v745 = vpack.c.b16 %v716, %v715
        %v746 = vpack.c.b16 %v718, %v717
        %v747 = vpack.c.b16 %v720, %v719
        %v748 = vpack.c.b16 %v722, %v721
        %v749 = vpack.c.b16 %v724, %v723
        %v750 = vpack.c.b16 %v726, %v725
        %775 = vmatprep.subr.bf16.mxu0 0
        %776 = vmatpush1.bf16.msra.mxu0 %v734
        %777 = vmatprep.subr.bf16.mxu0 0
        %778 = vmatpush1.bf16.msra.mxu0 %v733
        %779 = vmatprep.subr.bf16.mxu0 0
        %780 = vmatpush1.bf16.msra.mxu0 %v732
        %781 = vmatprep.subr.bf16.mxu0 0
        %782 = vmatpush1.bf16.msra.mxu0 %v731
        %783 = vmatprep.subr.bf16.mxu0 0
        %784 = vmatpush1.bf16.msra.mxu0 %v730
        %785 = vmatprep.subr.bf16.mxu0 0
        %786 = vmatpush1.bf16.msra.mxu0 %v729
        %787 = vmatprep.subr.bf16.mxu0 0
        %788 = vmatpush1.bf16.msra.mxu0 %v728
        %789 = vmatprep.subr.bf16.mxu0 0
        %790 = vmatpush1.bf16.msra.mxu0 %v727
        %791 = vmatprep.subr.bf16.mxu0 0
        %792 = vmatpush2.bf16.msra.mxu0 %v742
        %793 = vmatprep.subr.bf16.mxu0 0
        %794 = vmatpush2.bf16.msra.mxu0 %v741
        %795 = vmatprep.subr.bf16.mxu0 0
        %796 = vmatpush2.bf16.msra.mxu0 %v740
        %797 = vmatprep.subr.bf16.mxu0 0
        %798 = vmatpush2.bf16.msra.mxu0 %v739
        %799 = vmatprep.subr.bf16.mxu0 0
        %800 = vmatpush2.bf16.msra.mxu0 %v738
        %801 = vmatprep.subr.bf16.mxu0 0
        %802 = vmatpush2.bf16.msra.mxu0 %v737
        %803 = vmatprep.subr.bf16.mxu0 0
        %804 = vmatpush2.bf16.msra.mxu0 %v736
        %805 = vmatprep.subr.bf16.mxu0 0
        %806 = vmatpush2.bf16.msra.mxu0 %v735
        %807 = vmatprep.mubr.bf16.mxu0 %v584
        %808 = vmatmul.mubr.bf16.gmra.mxu0 %v583
        %v809 = vpop.f32.mrf.mxu0
        %v810 = vadd.f32 0.0, %v809
        %v811 = vpop.f32.mrf.mxu0
        %v812 = vpop.f32.mrf.mxu0
        %v813 = vadd.f32 0.0, %v812
        %v814 = vpop.f32.mrf.mxu0
        %815 = vmatprep.mubr.bf16.mxu0 %v587
        %816 = vmatmul.mubr.bf16.gmra.mxu0 %v586
        %v817 = vpop.f32.mrf.mxu0
        %v818 = vadd.f32 0.0, %v817
        %v819 = vpop.f32.mrf.mxu0
        %v820 = vpop.f32.mrf.mxu0
        %v821 = vadd.f32 0.0, %v820
        %v822 = vpop.f32.mrf.mxu0
        %823 = vmatprep.mubr.bf16.mxu0 %v590
        %824 = vmatmul.mubr.bf16.gmra.mxu0 %v589
        %v825 = vpop.f32.mrf.mxu0
        %v826 = vadd.f32 0.0, %v825
        %v827 = vpop.f32.mrf.mxu0
        %v828 = vpop.f32.mrf.mxu0
        %v829 = vadd.f32 0.0, %v828
        %v830 = vpop.f32.mrf.mxu0
        %831 = vmatprep.mubr.bf16.mxu0 %v593
        %832 = vmatmul.mubr.bf16.gmra.mxu0 %v592
        %v833 = vpop.f32.mrf.mxu0
        %v834 = vadd.f32 0.0, %v833
        %v835 = vpop.f32.mrf.mxu0
        %v836 = vpop.f32.mrf.mxu0
        %v837 = vadd.f32 0.0, %v836
        %v838 = vpop.f32.mrf.mxu0
        %839 = vmatprep.mubr.bf16.mxu0 %v596
        %840 = vmatmul.mubr.bf16.gmra.mxu0 %v595
        %v841 = vpop.f32.mrf.mxu0
        %v842 = vadd.f32 0.0, %v841
        %v843 = vpop.f32.mrf.mxu0
        %v844 = vpop.f32.mrf.mxu0
        %v845 = vadd.f32 0.0, %v844
        %v846 = vpop.f32.mrf.mxu0
        %847 = vmatprep.mubr.bf16.mxu0 %v599
        %848 = vmatmul.mubr.bf16.gmra.mxu0 %v598
        %v849 = vpop.f32.mrf.mxu0
        %v850 = vadd.f32 0.0, %v849
        %v851 = vpop.f32.mrf.mxu0
        %v852 = vpop.f32.mrf.mxu0
        %v853 = vadd.f32 0.0, %v852
        %v854 = vpop.f32.mrf.mxu0
        %855 = vmatprep.mubr.bf16.mxu0 %v602
        %856 = vmatmul.mubr.bf16.gmra.mxu0 %v601
        %v857 = vpop.f32.mrf.mxu0
        %v858 = vadd.f32 0.0, %v857
        %v859 = vpop.f32.mrf.mxu0
        %v860 = vpop.f32.mrf.mxu0
        %v861 = vadd.f32 0.0, %v860
        %v862 = vpop.f32.mrf.mxu0
        %863 = vmatprep.mubr.bf16.mxu0 %v605
        %864 = vmatmul.mubr.bf16.gmra.mxu0 %v604
        %v865 = vpop.f32.mrf.mxu0
        %v866 = vadd.f32 0.0, %v865
        %v867 = vpop.f32.mrf.mxu0
        %v868 = vpop.f32.mrf.mxu0
        %v869 = vadd.f32 0.0, %v868
        %v870 = vpop.f32.mrf.mxu0
        %871 = vdwg.mxu0
        %872 = vmatprep.subr.bf16.mxu0 0
        %873 = vmatpush1.bf16.msra.mxu0 %v750
        %874 = vmatprep.subr.bf16.mxu0 0
        %875 = vmatpush1.bf16.msra.mxu0 %v749
        %876 = vmatprep.subr.bf16.mxu0 0
        %877 = vmatpush1.bf16.msra.mxu0 %v748
        %878 = vmatprep.subr.bf16.mxu0 0
        %879 = vmatpush1.bf16.msra.mxu0 %v747
        %880 = vmatprep.subr.bf16.mxu0 0
        %881 = vmatpush1.bf16.msra.mxu0 %v746
        %882 = vmatprep.subr.bf16.mxu0 0
        %883 = vmatpush1.bf16.msra.mxu0 %v745
        %884 = vmatprep.subr.bf16.mxu0 0
        %885 = vmatpush1.bf16.msra.mxu0 %v744
        %886 = vmatprep.subr.bf16.mxu0 0
        %887 = vmatpush1.bf16.msra.mxu0 %v743
        %888 = vmatprep.subr.bf16.mxu0 0
        %889 = vmatpush2.bf16.msra.mxu0 0
        %890 = vmatprep.subr.bf16.mxu0 0
        %891 = vmatpush2.bf16.msra.mxu0 0
        %892 = vmatprep.subr.bf16.mxu0 0
        %893 = vmatpush2.bf16.msra.mxu0 0
        %894 = vmatprep.subr.bf16.mxu0 0
        %895 = vmatpush2.bf16.msra.mxu0 0
        %896 = vmatprep.subr.bf16.mxu0 0
        %897 = vmatpush2.bf16.msra.mxu0 0
        %898 = vmatprep.subr.bf16.mxu0 0
        %899 = vmatpush2.bf16.msra.mxu0 0
        %900 = vmatprep.subr.bf16.mxu0 0
        %901 = vmatpush2.bf16.msra.mxu0 0
        %902 = vmatprep.subr.bf16.mxu0 0
        %903 = vmatpush2.bf16.msra.mxu0 0
        %904 = vmatprep.mubr.bf16.mxu0 0
        %905 = vmatmul.mubr.bf16.gmra.mxu0 %v585
        %v906 = vpop.f32.mrf.mxu0
        %v907 = vadd.f32 %v810, %v906
        %v908 = vpop.f32.mrf.mxu0
        %v909 = vpop.f32.mrf.mxu0
        %v910 = vadd.f32 %v813, %v909
        %v911 = vpop.f32.mrf.mxu0
        %912 = vmatprep.mubr.bf16.mxu0 0
        %913 = vmatmul.mubr.bf16.gmra.mxu0 %v588
        %v914 = vpop.f32.mrf.mxu0
        %v915 = vadd.f32 %v818, %v914
        %v916 = vpop.f32.mrf.mxu0
        %v917 = vpop.f32.mrf.mxu0
        %v918 = vadd.f32 %v821, %v917
        %v919 = vpop.f32.mrf.mxu0
        %920 = vmatprep.mubr.bf16.mxu0 0
        %921 = vmatmul.mubr.bf16.gmra.mxu0 %v591
        %v922 = vpop.f32.mrf.mxu0
        %v923 = vadd.f32 %v826, %v922
        %v924 = vpop.f32.mrf.mxu0
        %v925 = vpop.f32.mrf.mxu0
        %v926 = vadd.f32 %v829, %v925
        %v927 = vpop.f32.mrf.mxu0
        %928 = vmatprep.mubr.bf16.mxu0 0
        %929 = vmatmul.mubr.bf16.gmra.mxu0 %v594
        %v930 = vpop.f32.mrf.mxu0
        %v931 = vadd.f32 %v834, %v930
        %v932 = vpop.f32.mrf.mxu0
        %v933 = vpop.f32.mrf.mxu0
        %v934 = vadd.f32 %v837, %v933
        %v935 = vpop.f32.mrf.mxu0
        %936 = vmatprep.mubr.bf16.mxu0 0
        %937 = vmatmul.mubr.bf16.gmra.mxu0 %v597
        %v938 = vpop.f32.mrf.mxu0
        %v939 = vadd.f32 %v842, %v938
        %v940 = vpop.f32.mrf.mxu0
        %v941 = vpop.f32.mrf.mxu0
        %v942 = vadd.f32 %v845, %v941
        %v943 = vpop.f32.mrf.mxu0
        %944 = vmatprep.mubr.bf16.mxu0 0
        %945 = vmatmul.mubr.bf16.gmra.mxu0 %v600
        %v946 = vpop.f32.mrf.mxu0
        %v947 = vadd.f32 %v850, %v946
        %v948 = vpop.f32.mrf.mxu0
        %v949 = vpop.f32.mrf.mxu0
        %v950 = vadd.f32 %v853, %v949
        %v951 = vpop.f32.mrf.mxu0
        %952 = vmatprep.mubr.bf16.mxu0 0
        %953 = vmatmul.mubr.bf16.gmra.mxu0 %v603
        %v954 = vpop.f32.mrf.mxu0
        %v955 = vadd.f32 %v858, %v954
        %v956 = vpop.f32.mrf.mxu0
        %v957 = vpop.f32.mrf.mxu0
        %v958 = vadd.f32 %v861, %v957
        %v959 = vpop.f32.mrf.mxu0
        %960 = vmatprep.mubr.bf16.mxu0 0
        %961 = vmatmul.mubr.bf16.gmra.mxu0 %v606
        %v962 = vpop.f32.mrf.mxu0
        %v963 = vadd.f32 %v866, %v962
        %v964 = vpop.f32.mrf.mxu0
        %v965 = vpop.f32.mrf.mxu0
        %v966 = vadd.f32 %v869, %v965
        %v967 = vpop.f32.mrf.mxu0
        %968 = vdwg.mxu0
        %v969 = vadd.f32 %v407, %v907
        %v970 = vadd.f32 %v408, %v910
        %v971 = vadd.f32 %v409, %v915
        %v972 = vadd.f32 %v410, %v918
        %v973 = vadd.f32 %v411, %v923
        %v974 = vadd.f32 %v412, %v926
        %v975 = vadd.f32 %v413, %v931
        %v976 = vadd.f32 %v414, %v934
        %v977 = vadd.f32 %v415, %v939
        %v978 = vadd.f32 %v416, %v942
        %v979 = vadd.f32 %v417, %v947
        %v980 = vadd.f32 %v418, %v950
        %v981 = vadd.f32 %v419, %v955
        %v982 = vadd.f32 %v420, %v958
        %v983 = vadd.f32 %v421, %v963
        %v984 = vadd.f32 %v422, %v966
        %985 = vst [vmem:[#allocation2] sm:$0xff] %v969
        %986 = vst [vmem:[#allocation2 + $0x8] sm:$0xff] %v970
        %987 = vst [vmem:[#allocation2 + $0x10] sm:$0xff] %v971
        %988 = vst [vmem:[#allocation2 + $0x18] sm:$0xff] %v972
        %989 = vst [vmem:[#allocation2 + $0x20] sm:$0xff] %v973
        %990 = vst [vmem:[#allocation2 + $0x28] sm:$0xff] %v974
        %991 = vst [vmem:[#allocation2 + $0x30] sm:$0xff] %v975
        %992 = vst [vmem:[#allocation2 + $0x38] sm:$0xff] %v976
        %993 = vst [vmem:[#allocation2 + $0x40] sm:$0xff] %v977
        %994 = vst [vmem:[#allocation2 + $0x48] sm:$0xff] %v978
        %995 = vst [vmem:[#allocation2 + $0x50] sm:$0xff] %v979
        %996 = vst [vmem:[#allocation2 + $0x58] sm:$0xff] %v980
        %997 = vst [vmem:[#allocation2 + $0x60] sm:$0xff] %v981
        %998 = vst [vmem:[#allocation2 + $0x68] sm:$0xff] %v982
        %999 = vst [vmem:[#allocation2 + $0x70] sm:$0xff] %v983
        %1000 = vst [vmem:[#allocation2 + $0x78] sm:$0xff] %v984
        %p1001 = scmp.eq.s32.totalorder %s22, 2
        // Predicated region
        $region67: #{_forward.110} parent=57 // pred_check
          %p1002 = pneg %p1001
        $region68: #{_forward.110} parent=57 // pred_check_branch
          %1004 = sbr.rel (%p1002) target = $region70
        $region69: #{_forward.110} parent=57 // pred_region
          %v1005 = vld [vmem:[#allocation2] sm:$0xff]
          %v1006 = vld [vmem:[#allocation2 + $0x8] sm:$0xff]
          %v1007 = vld [vmem:[#allocation2 + $0x10] sm:$0xff]
          %v1008 = vld [vmem:[#allocation2 + $0x18] sm:$0xff]
          %v1009 = vld [vmem:[#allocation2 + $0x20] sm:$0xff]
          %v1010 = vld [vmem:[#allocation2 + $0x28] sm:$0xff]
          %v1011 = vld [vmem:[#allocation2 + $0x30] sm:$0xff]
          %v1012 = vld [vmem:[#allocation2 + $0x38] sm:$0xff]
          %v1013 = vld [vmem:[#allocation2 + $0x40] sm:$0xff]
          %v1014 = vld [vmem:[#allocation2 + $0x48] sm:$0xff]
          %v1015 = vld [vmem:[#allocation2 + $0x50] sm:$0xff]
          %v1016 = vld [vmem:[#allocation2 + $0x58] sm:$0xff]
          %v1017 = vld [vmem:[#allocation2 + $0x60] sm:$0xff]
          %v1018 = vld [vmem:[#allocation2 + $0x68] sm:$0xff]
          %v1019 = vld [vmem:[#allocation2 + $0x70] sm:$0xff]
          %v1020 = vld [vmem:[#allocation2 + $0x78] sm:$0xff]
          %v1021 = vld [vmem:[%s373] sm:$0x1]
          %v1023 = vlaneseq
          %v1024 = vshrl.u32 %v1023, 7
          %v1025 = vsub.s32 0, %v1024
          %v1026 = vrot.slane %v1021, %v1025
          %v1028 = vmul.f32 %v1005, %v1026
          %v1029 = vmul.f32 %v1006, %v1026
          %v1030 = vmul.f32 %v1007, %v1026
          %v1031 = vmul.f32 %v1008, %v1026
          %v1032 = vmul.f32 %v1009, %v1026
          %v1033 = vmul.f32 %v1010, %v1026
          %v1034 = vmul.f32 %v1011, %v1026
          %v1035 = vmul.f32 %v1012, %v1026
          %v1036 = vmul.f32 %v1013, %v1026
          %v1037 = vmul.f32 %v1014, %v1026
          %v1038 = vmul.f32 %v1015, %v1026
          %v1039 = vmul.f32 %v1016, %v1026
          %v1040 = vmul.f32 %v1017, %v1026
          %v1041 = vmul.f32 %v1018, %v1026
          %v1042 = vmul.f32 %v1019, %v1026
          %v1043 = vmul.f32 %v1020, %v1026
          %v1044 = vld [vmem:[%s376] sm:$0x1]
          %v1046 = vlaneseq
          %v1047 = vshrl.u32 %v1046, 7
          %v1048 = vsub.s32 0, %v1047
          %v1049 = vrot.slane %v1044, %v1048
          %v1051 = vadd.f32 %v1028, %v1049
          %v1052 = vadd.f32 %v1029, %v1049
          %v1053 = vadd.f32 %v1030, %v1049
          %v1054 = vadd.f32 %v1031, %v1049
          %v1055 = vadd.f32 %v1032, %v1049
          %v1056 = vadd.f32 %v1033, %v1049
          %v1057 = vadd.f32 %v1034, %v1049
          %v1058 = vadd.f32 %v1035, %v1049
          %v1059 = vadd.f32 %v1036, %v1049
          %v1060 = vadd.f32 %v1037, %v1049
          %v1061 = vadd.f32 %v1038, %v1049
          %v1062 = vadd.f32 %v1039, %v1049
          %v1063 = vadd.f32 %v1040, %v1049
          %v1064 = vadd.f32 %v1041, %v1049
          %v1065 = vadd.f32 %v1042, %v1049
          %v1066 = vadd.f32 %v1043, %v1049
          %v1067 = vmax.f32 %v1051, 0.0
          %v1068 = vmax.f32 %v1052, 0.0
          %v1069 = vmax.f32 %v1053, 0.0
          %v1070 = vmax.f32 %v1054, 0.0
          %v1071 = vmax.f32 %v1055, 0.0
          %v1072 = vmax.f32 %v1056, 0.0
          %v1073 = vmax.f32 %v1057, 0.0
          %v1074 = vmax.f32 %v1058, 0.0
          %v1075 = vmax.f32 %v1059, 0.0
          %v1076 = vmax.f32 %v1060, 0.0
          %v1077 = vmax.f32 %v1061, 0.0
          %v1078 = vmax.f32 %v1062, 0.0
          %v1079 = vmax.f32 %v1063, 0.0
          %v1080 = vmax.f32 %v1064, 0.0
          %v1081 = vmax.f32 %v1065, 0.0
          %v1082 = vmax.f32 %v1066, 0.0
          %v1083 = vpack.c.bf16 %v1068, %v1067
          %v1084 = vpack.c.bf16 %v1070, %v1069
          %v1085 = vpack.c.bf16 %v1072, %v1071
          %v1086 = vpack.c.bf16 %v1074, %v1073
          %v1087 = vpack.c.bf16 %v1076, %v1075
          %v1088 = vpack.c.bf16 %v1078, %v1077
          %v1089 = vpack.c.bf16 %v1080, %v1079
          %v1090 = vpack.c.bf16 %v1082, %v1081
          %v1099 = vunpack.c.l.b16 %v1083
          %v1100 = vunpack.c.h.b16 %v1083
          %v1101 = vunpack.c.l.b16 %v1084
          %v1102 = vunpack.c.h.b16 %v1084
          %v1103 = vunpack.c.l.b16 %v1085
          %v1104 = vunpack.c.h.b16 %v1085
          %v1105 = vunpack.c.l.b16 %v1086
          %v1106 = vunpack.c.h.b16 %v1086
          %v1107 = vunpack.c.l.b16 %v1087
          %v1108 = vunpack.c.h.b16 %v1087
          %v1109 = vunpack.c.l.b16 %v1088
          %v1110 = vunpack.c.h.b16 %v1088
          %v1111 = vunpack.c.l.b16 %v1089
          %v1112 = vunpack.c.h.b16 %v1089
          %v1113 = vunpack.c.l.b16 %v1090
          %v1114 = vunpack.c.h.b16 %v1090
          %v1115 = vpack.c.b16 %v1099, %v1099
          %v1116 = vpack.c.b16 %v1100, %v1100
          %v1117 = vpack.c.b16 %v1101, %v1101
          %v1118 = vpack.c.b16 %v1102, %v1102
          %v1119 = vpack.c.b16 %v1103, %v1103
          %v1120 = vpack.c.b16 %v1104, %v1104
          %v1121 = vpack.c.b16 %v1105, %v1105
          %v1122 = vpack.c.b16 %v1106, %v1106
          %v1123 = vpack.c.b16 %v1107, %v1107
          %v1124 = vpack.c.b16 %v1108, %v1108
          %v1125 = vpack.c.b16 %v1109, %v1109
          %v1126 = vpack.c.b16 %v1110, %v1110
          %v1127 = vpack.c.b16 %v1111, %v1111
          %v1128 = vpack.c.b16 %v1112, %v1112
          %v1129 = vpack.c.b16 %v1113, %v1113
          %v1130 = vpack.c.b16 %v1114, %v1114
          %1147 = vst [vmem:[%s384] sm:$0xf] %v1115
          %1148 = vst [vmem:[%s384 + $0x4] sm:$0xf] %v1116
          %1149 = vst [vmem:[%s384 + $0x8] sm:$0xf] %v1117
          %1150 = vst [vmem:[%s384 + $0xc] sm:$0xf] %v1118
          %1151 = vst [vmem:[%s384 + $0x10] sm:$0xf] %v1119
          %1152 = vst [vmem:[%s384 + $0x14] sm:$0xf] %v1120
          %1153 = vst [vmem:[%s384 + $0x18] sm:$0xf] %v1121
          %1154 = vst [vmem:[%s384 + $0x1c] sm:$0xf] %v1122
          %1155 = vst [vmem:[%s384 + $0x20] sm:$0xf] %v1123
          %1156 = vst [vmem:[%s384 + $0x24] sm:$0xf] %v1124
          %1157 = vst [vmem:[%s384 + $0x28] sm:$0xf] %v1125
          %1158 = vst [vmem:[%s384 + $0x2c] sm:$0xf] %v1126
          %1159 = vst [vmem:[%s384 + $0x30] sm:$0xf] %v1127
          %1160 = vst [vmem:[%s384 + $0x34] sm:$0xf] %v1128
          %1161 = vst [vmem:[%s384 + $0x38] sm:$0xf] %v1129
          %1162 = vst [vmem:[%s384 + $0x3c] sm:$0xf] %v1130
        $region70: #{_forward.110} parent=57 // pred_fallthru
          _
        %s1163 = smul.u32 16, %s20
        %p1164 = scmp.lt.s32.totalorder %s1163, 15
        %s1165 = scalar_select %p1164, %s1163, 15
        %p1166 = scmp.lt.s32.totalorder %s21, 0
        %s1167 = scalar_select %p1166, %s21, 0
        %s1168 = sadd.s32 %s1167, %s1165
        %s1169 = smul.addr %s1168, 4
        %s1170 = scalar_lea.vmem %s4, %s1169
        // Predicated region
        $region71: #{_forward.110} parent=57 // pred_check
          %p1171 = pneg %p162
        $region72: #{_forward.110} parent=57 // pred_check_branch
          %1173 = sbr.rel (%p1171) target = $region74
        $region73: #{_forward.110} parent=57 // pred_region
          %s1174 = smul.u32 16, %s20
        $region74: #{_forward.110} parent=57 // pred_fallthru
          _
        // Predicated region
        $region75: #{_forward.110} parent=57 // pred_check
          %p1175 = pneg %p162
        $region76: #{_forward.110} parent=57 // pred_check_branch
          %1177 = sbr.rel (%p1175) target = $region78
        $region77: #{_forward.110} parent=57 // pred_region
          %s1178 = smul.u32 16, %s20
          %p1179 = scmp.lt.s32.totalorder %s1178, 15
          %s1180 = scalar_select %p1179, %s1178, 15
          %p1181 = scmp.lt.s32.totalorder %s21, 0
          %s1182 = scalar_select %p1181, %s21, 0
          %s1183 = sadd.s32 %s1182, %s1180
          %s1184 = smul.addr %s1183, 4
          %s1185 = scalar_lea.vmem %s4, %s1184
        $region78: #{_forward.110} parent=57 // pred_fallthru
          _
      $region58: #{_forward.110} parent=5 // pred_fallthru
        _
      %p1186 = scmp.le.s32.totalorder 2, %s10
      // Predicated region
      $region79: #{_forward.110} parent=5 // pred_check
        %p1187 = pneg %p1186
      $region80: #{_forward.110} parent=5 // pred_check_branch
        %1189 = sbr.rel (%p1187) target = $region82
      $region81: #{_forward.110} parent=5 // pred_region
        %s1190 = ssub.s32 %s10, 2
      $region82: #{_forward.110} parent=5 // pred_fallthru
        _
    $region6: #{_forward.110} parent=1 // loop_footer
      %s14 = sadd.s32 1, %s10
    $region7: #{_forward.110} parent=1 // loop_footer_branch
      %9 = sbr.rel target = $region3
    $region8: #{_forward.110} parent=1 // loop_exit
      _

// kernel: _forward.111
$region0: #{_forward.111}
  #allocation0 [shape = 'u32[]', space=smem, size = 0x4, offset = 0x4, fixed_abs, tag = 'smem constant byte address 0x4 - core index']
  #allocation1 [shape = 'u32[144,128]{1,0:T(1,128)}', space=vmem, size = 0x12000, scoped, tag = 'internal scratch']
  #allocation2 [shape = 'f32[128,128]{1,0:T(8,128)}', space=vmem, size = 0x10000, scoped, tag = 'scratch operand']
  %s0 = inlined_call_operand.vmem [shape: bf16[128,128], index: 0, kind: input, shape index: {}]
  %s1 = inlined_call_operand.vmem [shape: bf16[128,128], index: 1, kind: input, shape index: {}]
  %s2 = inlined_call_operand.vmem [shape: f32[1,128], index: 2, kind: input, shape index: {}]
  %s3 = inlined_call_operand.vmem [shape: f32[1,128], index: 3, kind: input, shape index: {}]
  %s4 = inlined_call_operand.vmem [shape: bf16[128,128], index: 4, kind: input, shape index: {}]
  %s5 = inlined_call_operand.vmem [shape: bf16[128,128], index: 5, kind: output, shape index: {}]
  %s6 = sld [smem:[#allocation0]]
  $region38: #{_forward.111} parent=0
    _
  %s8 = ssub.s32 1, %s6
  %s9 = scalar_select 0, %s8, %s6
  // Predicated region
  $region2: #{_forward.111} parent=0 // pred_check
    _
  $region3: #{_forward.111} parent=0 // pred_check_branch
    %11 = sbr.rel (0) target = $region5
  $region4: #{_forward.111} parent=0 // pred_region
    _
  $region5: #{_forward.111} parent=0 // pred_fallthru
    _
  // Predicated region
  $region6: #{_forward.111} parent=0 // pred_check
    _
  $region7: #{_forward.111} parent=0 // pred_check_branch
    %13 = sbr.rel (0) target = $region9
  $region8: #{_forward.111} parent=0 // pred_region
    _
  $region9: #{_forward.111} parent=0 // pred_fallthru
    _
  // Predicated region
  $region10: #{_forward.111} parent=0 // pred_check
    _
  $region11: #{_forward.111} parent=0 // pred_check_branch
    %15 = sbr.rel (0) target = $region13
  $region12: #{_forward.111} parent=0 // pred_region
    _
  $region13: #{_forward.111} parent=0 // pred_fallthru
    _
  // Predicated region
  $region14: #{_forward.111} parent=0 // pred_check
    _
  $region15: #{_forward.111} parent=0 // pred_check_branch
    %17 = sbr.rel (0) target = $region17
  $region16: #{_forward.111} parent=0 // pred_region
    _
  $region17: #{_forward.111} parent=0 // pred_fallthru
    _
  // Predicated region
  $region18: #{_forward.111} parent=0 // pred_check
    _
  $region19: #{_forward.111} parent=0 // pred_check_branch
    %19 = sbr.rel (0) target = $region21
  $region20: #{_forward.111} parent=0 // pred_region
    _
  $region21: #{_forward.111} parent=0 // pred_fallthru
    _
  %p21 = scmp.eq.s32.totalorder 0, 0
  // Predicated region
  $region22: #{_forward.111} parent=0 // pred_check
    %p22 = pneg %p21
  $region23: #{_forward.111} parent=0 // pred_check_branch
    %24 = sbr.rel (%p22) target = $region25
  $region24: #{_forward.111} parent=0 // pred_region
    %25 = vst [vmem:[#allocation2] sm:$0xff] 0.0
    %26 = vst [vmem:[#allocation2 + $0x8] sm:$0xff] 0.0
    %27 = vst [vmem:[#allocation2 + $0x10] sm:$0xff] 0.0
    %28 = vst [vmem:[#allocation2 + $0x18] sm:$0xff] 0.0
    %29 = vst [vmem:[#allocation2 + $0x20] sm:$0xff] 0.0
    %30 = vst [vmem:[#allocation2 + $0x28] sm:$0xff] 0.0
    %31 = vst [vmem:[#allocation2 + $0x30] sm:$0xff] 0.0
    %32 = vst [vmem:[#allocation2 + $0x38] sm:$0xff] 0.0
    %33 = vst [vmem:[#allocation2 + $0x40] sm:$0xff] 0.0
    %34 = vst [vmem:[#allocation2 + $0x48] sm:$0xff] 0.0
    %35 = vst [vmem:[#allocation2 + $0x50] sm:$0xff] 0.0
    %36 = vst [vmem:[#allocation2 + $0x58] sm:$0xff] 0.0
    %37 = vst [vmem:[#allocation2 + $0x60] sm:$0xff] 0.0
    %38 = vst [vmem:[#allocation2 + $0x68] sm:$0xff] 0.0
    %39 = vst [vmem:[#allocation2 + $0x70] sm:$0xff] 0.0
    %40 = vst [vmem:[#allocation2 + $0x78] sm:$0xff] 0.0
  $region25: #{_forward.111} parent=0 // pred_fallthru
    _
  %v41 = vld [vmem:[#allocation2] sm:$0xff]
  %v42 = vld [vmem:[#allocation2 + $0x8] sm:$0xff]
  %v43 = vld [vmem:[#allocation2 + $0x10] sm:$0xff]
  %v44 = vld [vmem:[#allocation2 + $0x18] sm:$0xff]
  %v45 = vld [vmem:[#allocation2 + $0x20] sm:$0xff]
  %v46 = vld [vmem:[#allocation2 + $0x28] sm:$0xff]
  %v47 = vld [vmem:[#allocation2 + $0x30] sm:$0xff]
  %v48 = vld [vmem:[#allocation2 + $0x38] sm:$0xff]
  %v49 = vld [vmem:[#allocation2 + $0x40] sm:$0xff]
  %v50 = vld [vmem:[#allocation2 + $0x48] sm:$0xff]
  %v51 = vld [vmem:[#allocation2 + $0x50] sm:$0xff]
  %v52 = vld [vmem:[#allocation2 + $0x58] sm:$0xff]
  %v53 = vld [vmem:[#allocation2 + $0x60] sm:$0xff]
  %v54 = vld [vmem:[#allocation2 + $0x68] sm:$0xff]
  %v55 = vld [vmem:[#allocation2 + $0x70] sm:$0xff]
  %v56 = vld [vmem:[#allocation2 + $0x78] sm:$0xff]
  %v57 = vld [vmem:[%s0] sm:$0xf]
  %v58 = vld [vmem:[%s0 + $0x4] sm:$0xf]
  %v59 = vld [vmem:[%s0 + $0x8] sm:$0xf]
  %v60 = vld [vmem:[%s0 + $0xc] sm:$0xf]
  %v61 = vld [vmem:[%s0 + $0x10] sm:$0xf]
  %v62 = vld [vmem:[%s0 + $0x14] sm:$0xf]
  %v63 = vld [vmem:[%s0 + $0x18] sm:$0xf]
  %v64 = vld [vmem:[%s0 + $0x1c] sm:$0xf]
  %v65 = vld [vmem:[%s0 + $0x20] sm:$0xf]
  %v66 = vld [vmem:[%s0 + $0x24] sm:$0xf]
  %v67 = vld [vmem:[%s0 + $0x28] sm:$0xf]
  %v68 = vld [vmem:[%s0 + $0x2c] sm:$0xf]
  %v69 = vld [vmem:[%s0 + $0x30] sm:$0xf]
  %v70 = vld [vmem:[%s0 + $0x34] sm:$0xf]
  %v71 = vld [vmem:[%s0 + $0x38] sm:$0xf]
  %v72 = vld [vmem:[%s0 + $0x3c] sm:$0xf]
  %v73 = vld [vmem:[%s1] sm:$0xf]
  %v74 = vld [vmem:[%s1 + $0x4] sm:$0xf]
  %v75 = vld [vmem:[%s1 + $0x8] sm:$0xf]
  %v76 = vld [vmem:[%s1 + $0xc] sm:$0xf]
  %v77 = vld [vmem:[%s1 + $0x10] sm:$0xf]
  %v78 = vld [vmem:[%s1 + $0x14] sm:$0xf]
  %v79 = vld [vmem:[%s1 + $0x18] sm:$0xf]
  %v80 = vld [vmem:[%s1 + $0x1c] sm:$0xf]
  %v81 = vld [vmem:[%s1 + $0x20] sm:$0xf]
  %v82 = vld [vmem:[%s1 + $0x24] sm:$0xf]
  %v83 = vld [vmem:[%s1 + $0x28] sm:$0xf]
  %v84 = vld [vmem:[%s1 + $0x2c] sm:$0xf]
  %v85 = vld [vmem:[%s1 + $0x30] sm:$0xf]
  %v86 = vld [vmem:[%s1 + $0x34] sm:$0xf]
  %v87 = vld [vmem:[%s1 + $0x38] sm:$0xf]
  %v88 = vld [vmem:[%s1 + $0x3c] sm:$0xf]
  %v105 = vunpack.c.l.b16 %v57
  %v106 = vunpack.c.l.b16 %v58
  %v107 = vunpack.c.l.b16 %v59
  %v108 = vunpack.c.l.b16 %v60
  %v109 = vunpack.c.l.b16 %v61
  %v110 = vunpack.c.l.b16 %v62
  %v111 = vunpack.c.l.b16 %v63
  %v112 = vunpack.c.l.b16 %v64
  %v113 = vunpack.c.l.b16 %v65
  %v114 = vunpack.c.l.b16 %v66
  %v115 = vunpack.c.l.b16 %v67
  %v116 = vunpack.c.l.b16 %v68
  %v117 = vunpack.c.l.b16 %v69
  %v118 = vunpack.c.l.b16 %v70
  %v119 = vunpack.c.l.b16 %v71
  %v120 = vunpack.c.l.b16 %v72
  %v121 = vpack.c.b16 %v106, %v105
  %v122 = vpack.c.b16 %v108, %v107
  %v123 = vpack.c.b16 %v110, %v109
  %v124 = vpack.c.b16 %v112, %v111
  %v125 = vpack.c.b16 %v114, %v113
  %v126 = vpack.c.b16 %v116, %v115
  %v127 = vpack.c.b16 %v118, %v117
  %v128 = vpack.c.b16 %v120, %v119
  %v153 = vunpack.c.l.b16 %v73
  %v154 = vunpack.c.l.b16 %v74
  %v155 = vunpack.c.l.b16 %v75
  %v156 = vunpack.c.l.b16 %v76
  %v157 = vunpack.c.l.b16 %v77
  %v158 = vunpack.c.l.b16 %v78
  %v159 = vunpack.c.l.b16 %v79
  %v160 = vunpack.c.l.b16 %v80
  %v161 = vunpack.c.l.b16 %v81
  %v162 = vunpack.c.l.b16 %v82
  %v163 = vunpack.c.l.b16 %v83
  %v164 = vunpack.c.l.b16 %v84
  %v165 = vunpack.c.l.b16 %v85
  %v166 = vunpack.c.l.b16 %v86
  %v167 = vunpack.c.l.b16 %v87
  %v168 = vunpack.c.l.b16 %v88
  %v169 = vpack.c.b16 %v154, %v153
  %v170 = vpack.c.b16 %v156, %v155
  %v171 = vpack.c.b16 %v158, %v157
  %v172 = vpack.c.b16 %v160, %v159
  %v173 = vpack.c.b16 %v162, %v161
  %v174 = vpack.c.b16 %v164, %v163
  %v175 = vpack.c.b16 %v166, %v165
  %v176 = vpack.c.b16 %v168, %v167
  %185 = vmatprep.subr.bf16.mxu0 0
  %186 = vmatpush1.bf16.msra.mxu0 %v176
  %187 = vmatprep.subr.bf16.mxu0 0
  %188 = vmatpush1.bf16.msra.mxu0 %v175
  %189 = vmatprep.subr.bf16.mxu0 0
  %190 = vmatpush1.bf16.msra.mxu0 %v174
  %191 = vmatprep.subr.bf16.mxu0 0
  %192 = vmatpush1.bf16.msra.mxu0 %v173
  %193 = vmatprep.subr.bf16.mxu0 0
  %194 = vmatpush1.bf16.msra.mxu0 %v172
  %195 = vmatprep.subr.bf16.mxu0 0
  %196 = vmatpush1.bf16.msra.mxu0 %v171
  %197 = vmatprep.subr.bf16.mxu0 0
  %198 = vmatpush1.bf16.msra.mxu0 %v170
  %199 = vmatprep.subr.bf16.mxu0 0
  %200 = vmatpush1.bf16.msra.mxu0 %v169
  %201 = vmatprep.subr.bf16.mxu0 0
  %202 = vmatpush2.bf16.msra.mxu0 0
  %203 = vmatprep.subr.bf16.mxu0 0
  %204 = vmatpush2.bf16.msra.mxu0 0
  %205 = vmatprep.subr.bf16.mxu0 0
  %206 = vmatpush2.bf16.msra.mxu0 0
  %207 = vmatprep.subr.bf16.mxu0 0
  %208 = vmatpush2.bf16.msra.mxu0 0
  %209 = vmatprep.subr.bf16.mxu0 0
  %210 = vmatpush2.bf16.msra.mxu0 0
  %211 = vmatprep.subr.bf16.mxu0 0
  %212 = vmatpush2.bf16.msra.mxu0 0
  %213 = vmatprep.subr.bf16.mxu0 0
  %214 = vmatpush2.bf16.msra.mxu0 0
  %215 = vmatprep.subr.bf16.mxu0 0
  %216 = vmatpush2.bf16.msra.mxu0 0
  %217 = vmatprep.mubr.bf16.mxu0 0
  %218 = vmatmul.mubr.bf16.gmra.mxu0 %v121
  %v219 = vpop.f32.mrf.mxu0
  %v220 = vadd.f32 0.0, %v219
  %v221 = vpop.f32.mrf.mxu0
  %v222 = vpop.f32.mrf.mxu0
  %v223 = vadd.f32 0.0, %v222
  %v224 = vpop.f32.mrf.mxu0
  %225 = vmatprep.mubr.bf16.mxu0 0
  %226 = vmatmul.mubr.bf16.gmra.mxu0 %v122
  %v227 = vpop.f32.mrf.mxu0
  %v228 = vadd.f32 0.0, %v227
  %v229 = vpop.f32.mrf.mxu0
  %v230 = vpop.f32.mrf.mxu0
  %v231 = vadd.f32 0.0, %v230
  %v232 = vpop.f32.mrf.mxu0
  %233 = vmatprep.mubr.bf16.mxu0 0
  %234 = vmatmul.mubr.bf16.gmra.mxu0 %v123
  %v235 = vpop.f32.mrf.mxu0
  %v236 = vadd.f32 0.0, %v235
  %v237 = vpop.f32.mrf.mxu0
  %v238 = vpop.f32.mrf.mxu0
  %v239 = vadd.f32 0.0, %v238
  %v240 = vpop.f32.mrf.mxu0
  %241 = vmatprep.mubr.bf16.mxu0 0
  %242 = vmatmul.mubr.bf16.gmra.mxu0 %v124
  %v243 = vpop.f32.mrf.mxu0
  %v244 = vadd.f32 0.0, %v243
  %v245 = vpop.f32.mrf.mxu0
  %v246 = vpop.f32.mrf.mxu0
  %v247 = vadd.f32 0.0, %v246
  %v248 = vpop.f32.mrf.mxu0
  %249 = vmatprep.mubr.bf16.mxu0 0
  %250 = vmatmul.mubr.bf16.gmra.mxu0 %v125
  %v251 = vpop.f32.mrf.mxu0
  %v252 = vadd.f32 0.0, %v251
  %v253 = vpop.f32.mrf.mxu0
  %v254 = vpop.f32.mrf.mxu0
  %v255 = vadd.f32 0.0, %v254
  %v256 = vpop.f32.mrf.mxu0
  %257 = vmatprep.mubr.bf16.mxu0 0
  %258 = vmatmul.mubr.bf16.gmra.mxu0 %v126
  %v259 = vpop.f32.mrf.mxu0
  %v260 = vadd.f32 0.0, %v259
  %v261 = vpop.f32.mrf.mxu0
  %v262 = vpop.f32.mrf.mxu0
  %v263 = vadd.f32 0.0, %v262
  %v264 = vpop.f32.mrf.mxu0
  %265 = vmatprep.mubr.bf16.mxu0 0
  %266 = vmatmul.mubr.bf16.gmra.mxu0 %v127
  %v267 = vpop.f32.mrf.mxu0
  %v268 = vadd.f32 0.0, %v267
  %v269 = vpop.f32.mrf.mxu0
  %v270 = vpop.f32.mrf.mxu0
  %v271 = vadd.f32 0.0, %v270
  %v272 = vpop.f32.mrf.mxu0
  %273 = vmatprep.mubr.bf16.mxu0 0
  %274 = vmatmul.mubr.bf16.gmra.mxu0 %v128
  %v275 = vpop.f32.mrf.mxu0
  %v276 = vadd.f32 0.0, %v275
  %v277 = vpop.f32.mrf.mxu0
  %v278 = vpop.f32.mrf.mxu0
  %v279 = vadd.f32 0.0, %v278
  %v280 = vpop.f32.mrf.mxu0
  %281 = vdwg.mxu0
  %v282 = vadd.f32 %v41, %v220
  %v283 = vadd.f32 %v42, %v223
  %v284 = vadd.f32 %v43, %v228
  %v285 = vadd.f32 %v44, %v231
  %v286 = vadd.f32 %v45, %v236
  %v287 = vadd.f32 %v46, %v239
  %v288 = vadd.f32 %v47, %v244
  %v289 = vadd.f32 %v48, %v247
  %v290 = vadd.f32 %v49, %v252
  %v291 = vadd.f32 %v50, %v255
  %v292 = vadd.f32 %v51, %v260
  %v293 = vadd.f32 %v52, %v263
  %v294 = vadd.f32 %v53, %v268
  %v295 = vadd.f32 %v54, %v271
  %v296 = vadd.f32 %v55, %v276
  %v297 = vadd.f32 %v56, %v279
  %298 = vst [vmem:[#allocation2] sm:$0xff] %v282
  %299 = vst [vmem:[#allocation2 + $0x8] sm:$0xff] %v283
  %300 = vst [vmem:[#allocation2 + $0x10] sm:$0xff] %v284
  %301 = vst [vmem:[#allocation2 + $0x18] sm:$0xff] %v285
  %302 = vst [vmem:[#allocation2 + $0x20] sm:$0xff] %v286
  %303 = vst [vmem:[#allocation2 + $0x28] sm:$0xff] %v287
  %304 = vst [vmem:[#allocation2 + $0x30] sm:$0xff] %v288
  %305 = vst [vmem:[#allocation2 + $0x38] sm:$0xff] %v289
  %306 = vst [vmem:[#allocation2 + $0x40] sm:$0xff] %v290
  %307 = vst [vmem:[#allocation2 + $0x48] sm:$0xff] %v291
  %308 = vst [vmem:[#allocation2 + $0x50] sm:$0xff] %v292
  %309 = vst [vmem:[#allocation2 + $0x58] sm:$0xff] %v293
  %310 = vst [vmem:[#allocation2 + $0x60] sm:$0xff] %v294
  %311 = vst [vmem:[#allocation2 + $0x68] sm:$0xff] %v295
  %312 = vst [vmem:[#allocation2 + $0x70] sm:$0xff] %v296
  %313 = vst [vmem:[#allocation2 + $0x78] sm:$0xff] %v297
  // Predicated region
  $region26: #{_forward.111} parent=0 // pred_check
    %p314 = pneg %p21
  $region27: #{_forward.111} parent=0 // pred_check_branch
    %316 = sbr.rel (%p314) target = $region29
  $region28: #{_forward.111} parent=0 // pred_region
    %v317 = vld [vmem:[#allocation2] sm:$0xff]
    %v318 = vld [vmem:[#allocation2 + $0x8] sm:$0xff]
    %v319 = vld [vmem:[#allocation2 + $0x10] sm:$0xff]
    %v320 = vld [vmem:[#allocation2 + $0x18] sm:$0xff]
    %v321 = vld [vmem:[#allocation2 + $0x20] sm:$0xff]
    %v322 = vld [vmem:[#allocation2 + $0x28] sm:$0xff]
    %v323 = vld [vmem:[#allocation2 + $0x30] sm:$0xff]
    %v324 = vld [vmem:[#allocation2 + $0x38] sm:$0xff]
    %v325 = vld [vmem:[#allocation2 + $0x40] sm:$0xff]
    %v326 = vld [vmem:[#allocation2 + $0x48] sm:$0xff]
    %v327 = vld [vmem:[#allocation2 + $0x50] sm:$0xff]
    %v328 = vld [vmem:[#allocation2 + $0x58] sm:$0xff]
    %v329 = vld [vmem:[#allocation2 + $0x60] sm:$0xff]
    %v330 = vld [vmem:[#allocation2 + $0x68] sm:$0xff]
    %v331 = vld [vmem:[#allocation2 + $0x70] sm:$0xff]
    %v332 = vld [vmem:[#allocation2 + $0x78] sm:$0xff]
    %v333 = vld [vmem:[%s2] sm:$0x1]
    %v335 = vlaneseq
    %v336 = vshrl.u32 %v335, 7
    %v337 = vsub.s32 0, %v336
    %v338 = vrot.slane %v333, %v337
    %v340 = vmul.f32 %v317, %v338
    %v341 = vmul.f32 %v318, %v338
    %v342 = vmul.f32 %v319, %v338
    %v343 = vmul.f32 %v320, %v338
    %v344 = vmul.f32 %v321, %v338
    %v345 = vmul.f32 %v322, %v338
    %v346 = vmul.f32 %v323, %v338
    %v347 = vmul.f32 %v324, %v338
    %v348 = vmul.f32 %v325, %v338
    %v349 = vmul.f32 %v326, %v338
    %v350 = vmul.f32 %v327, %v338
    %v351 = vmul.f32 %v328, %v338
    %v352 = vmul.f32 %v329, %v338
    %v353 = vmul.f32 %v330, %v338
    %v354 = vmul.f32 %v331, %v338
    %v355 = vmul.f32 %v332, %v338
    %v356 = vld [vmem:[%s3] sm:$0x1]
    %v358 = vlaneseq
    %v359 = vshrl.u32 %v358, 7
    %v360 = vsub.s32 0, %v359
    %v361 = vrot.slane %v356, %v360
    %v363 = vadd.f32 %v340, %v361
    %v364 = vadd.f32 %v341, %v361
    %v365 = vadd.f32 %v342, %v361
    %v366 = vadd.f32 %v343, %v361
    %v367 = vadd.f32 %v344, %v361
    %v368 = vadd.f32 %v345, %v361
    %v369 = vadd.f32 %v346, %v361
    %v370 = vadd.f32 %v347, %v361
    %v371 = vadd.f32 %v348, %v361
    %v372 = vadd.f32 %v349, %v361
    %v373 = vadd.f32 %v350, %v361
    %v374 = vadd.f32 %v351, %v361
    %v375 = vadd.f32 %v352, %v361
    %v376 = vadd.f32 %v353, %v361
    %v377 = vadd.f32 %v354, %v361
    %v378 = vadd.f32 %v355, %v361
    %v379 = vld [vmem:[%s4] sm:$0xf]
    %v380 = vld [vmem:[%s4 + $0x4] sm:$0xf]
    %v381 = vld [vmem:[%s4 + $0x8] sm:$0xf]
    %v382 = vld [vmem:[%s4 + $0xc] sm:$0xf]
    %v383 = vld [vmem:[%s4 + $0x10] sm:$0xf]
    %v384 = vld [vmem:[%s4 + $0x14] sm:$0xf]
    %v385 = vld [vmem:[%s4 + $0x18] sm:$0xf]
    %v386 = vld [vmem:[%s4 + $0x1c] sm:$0xf]
    %v387 = vld [vmem:[%s4 + $0x20] sm:$0xf]
    %v388 = vld [vmem:[%s4 + $0x24] sm:$0xf]
    %v389 = vld [vmem:[%s4 + $0x28] sm:$0xf]
    %v390 = vld [vmem:[%s4 + $0x2c] sm:$0xf]
    %v391 = vld [vmem:[%s4 + $0x30] sm:$0xf]
    %v392 = vld [vmem:[%s4 + $0x34] sm:$0xf]
    %v393 = vld [vmem:[%s4 + $0x38] sm:$0xf]
    %v394 = vld [vmem:[%s4 + $0x3c] sm:$0xf]
    %v395 = vunpack.c.l.bf16 %v379
    %v396 = vunpack.c.l.bf16 %v380
    %v397 = vunpack.c.l.bf16 %v381
    %v398 = vunpack.c.l.bf16 %v382
    %v399 = vunpack.c.l.bf16 %v383
    %v400 = vunpack.c.l.bf16 %v384
    %v401 = vunpack.c.l.bf16 %v385
    %v402 = vunpack.c.l.bf16 %v386
    %v403 = vunpack.c.l.bf16 %v387
    %v404 = vunpack.c.l.bf16 %v388
    %v405 = vunpack.c.l.bf16 %v389
    %v406 = vunpack.c.l.bf16 %v390
    %v407 = vunpack.c.l.bf16 %v391
    %v408 = vunpack.c.l.bf16 %v392
    %v409 = vunpack.c.l.bf16 %v393
    %v410 = vunpack.c.l.bf16 %v394
    %v411 = vadd.f32 %v363, %v395
    %v412 = vadd.f32 %v364, %v396
    %v413 = vadd.f32 %v365, %v397
    %v414 = vadd.f32 %v366, %v398
    %v415 = vadd.f32 %v367, %v399
    %v416 = vadd.f32 %v368, %v400
    %v417 = vadd.f32 %v369, %v401
    %v418 = vadd.f32 %v370, %v402
    %v419 = vadd.f32 %v371, %v403
    %v420 = vadd.f32 %v372, %v404
    %v421 = vadd.f32 %v373, %v405
    %v422 = vadd.f32 %v374, %v406
    %v423 = vadd.f32 %v375, %v407
    %v424 = vadd.f32 %v376, %v408
    %v425 = vadd.f32 %v377, %v409
    %v426 = vadd.f32 %v378, %v410
    %v427 = vmax.f32 %v411, 0.0
    %v428 = vmax.f32 %v412, 0.0
    %v429 = vmax.f32 %v413, 0.0
    %v430 = vmax.f32 %v414, 0.0
    %v431 = vmax.f32 %v415, 0.0
    %v432 = vmax.f32 %v416, 0.0
    %v433 = vmax.f32 %v417, 0.0
    %v434 = vmax.f32 %v418, 0.0
    %v435 = vmax.f32 %v419, 0.0
    %v436 = vmax.f32 %v420, 0.0
    %v437 = vmax.f32 %v421, 0.0
    %v438 = vmax.f32 %v422, 0.0
    %v439 = vmax.f32 %v423, 0.0
    %v440 = vmax.f32 %v424, 0.0
    %v441 = vmax.f32 %v425, 0.0
    %v442 = vmax.f32 %v426, 0.0
    %v443 = vpack.c.bf16 %v428, %v427
    %v444 = vpack.c.bf16 %v430, %v429
    %v445 = vpack.c.bf16 %v432, %v431
    %v446 = vpack.c.bf16 %v434, %v433
    %v447 = vpack.c.bf16 %v436, %v435
    %v448 = vpack.c.bf16 %v438, %v437
    %v449 = vpack.c.bf16 %v440, %v439
    %v450 = vpack.c.bf16 %v442, %v441
    %v459 = vunpack.c.l.b16 %v443
    %v460 = vunpack.c.h.b16 %v443
    %v461 = vunpack.c.l.b16 %v444
    %v462 = vunpack.c.h.b16 %v444
    %v463 = vunpack.c.l.b16 %v445
    %v464 = vunpack.c.h.b16 %v445
    %v465 = vunpack.c.l.b16 %v446
    %v466 = vunpack.c.h.b16 %v446
    %v467 = vunpack.c.l.b16 %v447
    %v468 = vunpack.c.h.b16 %v447
    %v469 = vunpack.c.l.b16 %v448
    %v470 = vunpack.c.h.b16 %v448
    %v471 = vunpack.c.l.b16 %v449
    %v472 = vunpack.c.h.b16 %v449
    %v473 = vunpack.c.l.b16 %v450
    %v474 = vunpack.c.h.b16 %v450
    %v475 = vpack.c.b16 %v459, %v459
    %v476 = vpack.c.b16 %v460, %v460
    %v477 = vpack.c.b16 %v461, %v461
    %v478 = vpack.c.b16 %v462, %v462
    %v479 = vpack.c.b16 %v463, %v463
    %v480 = vpack.c.b16 %v464, %v464
    %v481 = vpack.c.b16 %v465, %v465
    %v482 = vpack.c.b16 %v466, %v466
    %v483 = vpack.c.b16 %v467, %v467
    %v484 = vpack.c.b16 %v468, %v468
    %v485 = vpack.c.b16 %v469, %v469
    %v486 = vpack.c.b16 %v470, %v470
    %v487 = vpack.c.b16 %v471, %v471
    %v488 = vpack.c.b16 %v472, %v472
    %v489 = vpack.c.b16 %v473, %v473
    %v490 = vpack.c.b16 %v474, %v474
    %507 = vst [vmem:[%s5] sm:$0xf] %v475
    %508 = vst [vmem:[%s5 + $0x4] sm:$0xf] %v476
    %509 = vst [vmem:[%s5 + $0x8] sm:$0xf] %v477
    %510 = vst [vmem:[%s5 + $0xc] sm:$0xf] %v478
    %511 = vst [vmem:[%s5 + $0x10] sm:$0xf] %v479
    %512 = vst [vmem:[%s5 + $0x14] sm:$0xf] %v480
    %513 = vst [vmem:[%s5 + $0x18] sm:$0xf] %v481
    %514 = vst [vmem:[%s5 + $0x1c] sm:$0xf] %v482
    %515 = vst [vmem:[%s5 + $0x20] sm:$0xf] %v483
    %516 = vst [vmem:[%s5 + $0x24] sm:$0xf] %v484
    %517 = vst [vmem:[%s5 + $0x28] sm:$0xf] %v485
    %518 = vst [vmem:[%s5 + $0x2c] sm:$0xf] %v486
    %519 = vst [vmem:[%s5 + $0x30] sm:$0xf] %v487
    %520 = vst [vmem:[%s5 + $0x34] sm:$0xf] %v488
    %521 = vst [vmem:[%s5 + $0x38] sm:$0xf] %v489
    %522 = vst [vmem:[%s5 + $0x3c] sm:$0xf] %v490
  $region29: #{_forward.111} parent=0 // pred_fallthru
    _
  // Predicated region
  $region30: #{_forward.111} parent=0 // pred_check
    _
  $region31: #{_forward.111} parent=0 // pred_check_branch
    %524 = sbr.rel (0) target = $region33
  $region32: #{_forward.111} parent=0 // pred_region
    _
  $region33: #{_forward.111} parent=0 // pred_fallthru
    _
  // Predicated region
  $region34: #{_forward.111} parent=0 // pred_check
    _
  $region35: #{_forward.111} parent=0 // pred_check_branch
    %526 = sbr.rel (0) target = $region37
  $region36: #{_forward.111} parent=0 // pred_region
    _
  $region37: #{_forward.111} parent=0 // pred_fallthru
    _

// kernel: _forward.108
$region0: #{_forward.108}
  #allocation0 [shape = 'u32[]', space=smem, size = 0x4, offset = 0x4, fixed_abs, tag = 'smem constant byte address 0x4 - core index']
  #allocation1 [shape = 'u32[144,128]{1,0:T(1,128)}', space=vmem, size = 0x12000, scoped, tag = 'internal scratch']
  #allocation2 [shape = 'f32[128,128]{1,0:T(8,128)}', space=vmem, size = 0x10000, scoped, tag = 'scratch operand']
  %s0 = inlined_call_operand.vmem [shape: bf16[128,128], index: 0, kind: input, shape index: {}]
  %s1 = inlined_call_operand.vmem [shape: bf16[128,128], index: 1, kind: input, shape index: {}]
  %s2 = inlined_call_operand.vmem [shape: f32[1,128], index: 2, kind: input, shape index: {}]
  %s3 = inlined_call_operand.vmem [shape: f32[1,128], index: 3, kind: input, shape index: {}]
  %s4 = inlined_call_operand.vmem [shape: bf16[128,128], index: 4, kind: output, shape index: {}]
  %s5 = sld [smem:[#allocation0]]
  $region34: #{_forward.108} parent=0
    _
  %s7 = ssub.s32 1, %s5
  %s8 = scalar_select 0, %s7, %s5
  // Predicated region
  $region2: #{_forward.108} parent=0 // pred_check
    _
  $region3: #{_forward.108} parent=0 // pred_check_branch
    %10 = sbr.rel (0) target = $region5
  $region4: #{_forward.108} parent=0 // pred_region
    _
  $region5: #{_forward.108} parent=0 // pred_fallthru
    _
  // Predicated region
  $region6: #{_forward.108} parent=0 // pred_check
    _
  $region7: #{_forward.108} parent=0 // pred_check_branch
    %12 = sbr.rel (0) target = $region9
  $region8: #{_forward.108} parent=0 // pred_region
    _
  $region9: #{_forward.108} parent=0 // pred_fallthru
    _
  // Predicated region
  $region10: #{_forward.108} parent=0 // pred_check
    _
  $region11: #{_forward.108} parent=0 // pred_check_branch
    %14 = sbr.rel (0) target = $region13
  $region12: #{_forward.108} parent=0 // pred_region
    _
  $region13: #{_forward.108} parent=0 // pred_fallthru
    _
  // Predicated region
  $region14: #{_forward.108} parent=0 // pred_check
    _
  $region15: #{_forward.108} parent=0 // pred_check_branch
    %16 = sbr.rel (0) target = $region17
  $region16: #{_forward.108} parent=0 // pred_region
    _
  $region17: #{_forward.108} parent=0 // pred_fallthru
    _
  %p18 = scmp.eq.s32.totalorder 0, 0
  // Predicated region
  $region18: #{_forward.108} parent=0 // pred_check
    %p19 = pneg %p18
  $region19: #{_forward.108} parent=0 // pred_check_branch
    %21 = sbr.rel (%p19) target = $region21
  $region20: #{_forward.108} parent=0 // pred_region
    %22 = vst [vmem:[#allocation2] sm:$0xff] 0.0
    %23 = vst [vmem:[#allocation2 + $0x8] sm:$0xff] 0.0
    %24 = vst [vmem:[#allocation2 + $0x10] sm:$0xff] 0.0
    %25 = vst [vmem:[#allocation2 + $0x18] sm:$0xff] 0.0
    %26 = vst [vmem:[#allocation2 + $0x20] sm:$0xff] 0.0
    %27 = vst [vmem:[#allocation2 + $0x28] sm:$0xff] 0.0
    %28 = vst [vmem:[#allocation2 + $0x30] sm:$0xff] 0.0
    %29 = vst [vmem:[#allocation2 + $0x38] sm:$0xff] 0.0
    %30 = vst [vmem:[#allocation2 + $0x40] sm:$0xff] 0.0
    %31 = vst [vmem:[#allocation2 + $0x48] sm:$0xff] 0.0
    %32 = vst [vmem:[#allocation2 + $0x50] sm:$0xff] 0.0
    %33 = vst [vmem:[#allocation2 + $0x58] sm:$0xff] 0.0
    %34 = vst [vmem:[#allocation2 + $0x60] sm:$0xff] 0.0
    %35 = vst [vmem:[#allocation2 + $0x68] sm:$0xff] 0.0
    %36 = vst [vmem:[#allocation2 + $0x70] sm:$0xff] 0.0
    %37 = vst [vmem:[#allocation2 + $0x78] sm:$0xff] 0.0
  $region21: #{_forward.108} parent=0 // pred_fallthru
    _
  %v38 = vld [vmem:[#allocation2] sm:$0xff]
  %v39 = vld [vmem:[#allocation2 + $0x8] sm:$0xff]
  %v40 = vld [vmem:[#allocation2 + $0x10] sm:$0xff]
  %v41 = vld [vmem:[#allocation2 + $0x18] sm:$0xff]
  %v42 = vld [vmem:[#allocation2 + $0x20] sm:$0xff]
  %v43 = vld [vmem:[#allocation2 + $0x28] sm:$0xff]
  %v44 = vld [vmem:[#allocation2 + $0x30] sm:$0xff]
  %v45 = vld [vmem:[#allocation2 + $0x38] sm:$0xff]
  %v46 = vld [vmem:[#allocation2 + $0x40] sm:$0xff]
  %v47 = vld [vmem:[#allocation2 + $0x48] sm:$0xff]
  %v48 = vld [vmem:[#allocation2 + $0x50] sm:$0xff]
  %v49 = vld [vmem:[#allocation2 + $0x58] sm:$0xff]
  %v50 = vld [vmem:[#allocation2 + $0x60] sm:$0xff]
  %v51 = vld [vmem:[#allocation2 + $0x68] sm:$0xff]
  %v52 = vld [vmem:[#allocation2 + $0x70] sm:$0xff]
  %v53 = vld [vmem:[#allocation2 + $0x78] sm:$0xff]
  %v54 = vld [vmem:[%s0] sm:$0xf]
  %v55 = vld [vmem:[%s0 + $0x4] sm:$0xf]
  %v56 = vld [vmem:[%s0 + $0x8] sm:$0xf]
  %v57 = vld [vmem:[%s0 + $0xc] sm:$0xf]
  %v58 = vld [vmem:[%s0 + $0x10] sm:$0xf]
  %v59 = vld [vmem:[%s0 + $0x14] sm:$0xf]
  %v60 = vld [vmem:[%s0 + $0x18] sm:$0xf]
  %v61 = vld [vmem:[%s0 + $0x1c] sm:$0xf]
  %v62 = vld [vmem:[%s0 + $0x20] sm:$0xf]
  %v63 = vld [vmem:[%s0 + $0x24] sm:$0xf]
  %v64 = vld [vmem:[%s0 + $0x28] sm:$0xf]
  %v65 = vld [vmem:[%s0 + $0x2c] sm:$0xf]
  %v66 = vld [vmem:[%s0 + $0x30] sm:$0xf]
  %v67 = vld [vmem:[%s0 + $0x34] sm:$0xf]
  %v68 = vld [vmem:[%s0 + $0x38] sm:$0xf]
  %v69 = vld [vmem:[%s0 + $0x3c] sm:$0xf]
  %v70 = vld [vmem:[%s1] sm:$0xf]
  %v71 = vld [vmem:[%s1 + $0x4] sm:$0xf]
  %v72 = vld [vmem:[%s1 + $0x8] sm:$0xf]
  %v73 = vld [vmem:[%s1 + $0xc] sm:$0xf]
  %v74 = vld [vmem:[%s1 + $0x10] sm:$0xf]
  %v75 = vld [vmem:[%s1 + $0x14] sm:$0xf]
  %v76 = vld [vmem:[%s1 + $0x18] sm:$0xf]
  %v77 = vld [vmem:[%s1 + $0x1c] sm:$0xf]
  %v78 = vld [vmem:[%s1 + $0x20] sm:$0xf]
  %v79 = vld [vmem:[%s1 + $0x24] sm:$0xf]
  %v80 = vld [vmem:[%s1 + $0x28] sm:$0xf]
  %v81 = vld [vmem:[%s1 + $0x2c] sm:$0xf]
  %v82 = vld [vmem:[%s1 + $0x30] sm:$0xf]
  %v83 = vld [vmem:[%s1 + $0x34] sm:$0xf]
  %v84 = vld [vmem:[%s1 + $0x38] sm:$0xf]
  %v85 = vld [vmem:[%s1 + $0x3c] sm:$0xf]
  %v102 = vunpack.c.l.b16 %v54
  %v103 = vunpack.c.l.b16 %v55
  %v104 = vunpack.c.l.b16 %v56
  %v105 = vunpack.c.l.b16 %v57
  %v106 = vunpack.c.l.b16 %v58
  %v107 = vunpack.c.l.b16 %v59
  %v108 = vunpack.c.l.b16 %v60
  %v109 = vunpack.c.l.b16 %v61
  %v110 = vunpack.c.l.b16 %v62
  %v111 = vunpack.c.l.b16 %v63
  %v112 = vunpack.c.l.b16 %v64
  %v113 = vunpack.c.l.b16 %v65
  %v114 = vunpack.c.l.b16 %v66
  %v115 = vunpack.c.l.b16 %v67
  %v116 = vunpack.c.l.b16 %v68
  %v117 = vunpack.c.l.b16 %v69
  %v118 = vpack.c.b16 %v103, %v102
  %v119 = vpack.c.b16 %v105, %v104
  %v120 = vpack.c.b16 %v107, %v106
  %v121 = vpack.c.b16 %v109, %v108
  %v122 = vpack.c.b16 %v111, %v110
  %v123 = vpack.c.b16 %v113, %v112
  %v124 = vpack.c.b16 %v115, %v114
  %v125 = vpack.c.b16 %v117, %v116
  %v150 = vunpack.c.l.b16 %v70
  %v151 = vunpack.c.l.b16 %v71
  %v152 = vunpack.c.l.b16 %v72
  %v153 = vunpack.c.l.b16 %v73
  %v154 = vunpack.c.l.b16 %v74
  %v155 = vunpack.c.l.b16 %v75
  %v156 = vunpack.c.l.b16 %v76
  %v157 = vunpack.c.l.b16 %v77
  %v158 = vunpack.c.l.b16 %v78
  %v159 = vunpack.c.l.b16 %v79
  %v160 = vunpack.c.l.b16 %v80
  %v161 = vunpack.c.l.b16 %v81
  %v162 = vunpack.c.l.b16 %v82
  %v163 = vunpack.c.l.b16 %v83
  %v164 = vunpack.c.l.b16 %v84
  %v165 = vunpack.c.l.b16 %v85
  %v166 = vpack.c.b16 %v151, %v150
  %v167 = vpack.c.b16 %v153, %v152
  %v168 = vpack.c.b16 %v155, %v154
  %v169 = vpack.c.b16 %v157, %v156
  %v170 = vpack.c.b16 %v159, %v158
  %v171 = vpack.c.b16 %v161, %v160
  %v172 = vpack.c.b16 %v163, %v162
  %v173 = vpack.c.b16 %v165, %v164
  %182 = vmatprep.subr.bf16.mxu0 0
  %183 = vmatpush1.bf16.msra.mxu0 %v173
  %184 = vmatprep.subr.bf16.mxu0 0
  %185 = vmatpush1.bf16.msra.mxu0 %v172
  %186 = vmatprep.subr.bf16.mxu0 0
  %187 = vmatpush1.bf16.msra.mxu0 %v171
  %188 = vmatprep.subr.bf16.mxu0 0
  %189 = vmatpush1.bf16.msra.mxu0 %v170
  %190 = vmatprep.subr.bf16.mxu0 0
  %191 = vmatpush1.bf16.msra.mxu0 %v169
  %192 = vmatprep.subr.bf16.mxu0 0
  %193 = vmatpush1.bf16.msra.mxu0 %v168
  %194 = vmatprep.subr.bf16.mxu0 0
  %195 = vmatpush1.bf16.msra.mxu0 %v167
  %196 = vmatprep.subr.bf16.mxu0 0
  %197 = vmatpush1.bf16.msra.mxu0 %v166
  %198 = vmatprep.subr.bf16.mxu0 0
  %199 = vmatpush2.bf16.msra.mxu0 0
  %200 = vmatprep.subr.bf16.mxu0 0
  %201 = vmatpush2.bf16.msra.mxu0 0
  %202 = vmatprep.subr.bf16.mxu0 0
  %203 = vmatpush2.bf16.msra.mxu0 0
  %204 = vmatprep.subr.bf16.mxu0 0
  %205 = vmatpush2.bf16.msra.mxu0 0
  %206 = vmatprep.subr.bf16.mxu0 0
  %207 = vmatpush2.bf16.msra.mxu0 0
  %208 = vmatprep.subr.bf16.mxu0 0
  %209 = vmatpush2.bf16.msra.mxu0 0
  %210 = vmatprep.subr.bf16.mxu0 0
  %211 = vmatpush2.bf16.msra.mxu0 0
  %212 = vmatprep.subr.bf16.mxu0 0
  %213 = vmatpush2.bf16.msra.mxu0 0
  %214 = vmatprep.mubr.bf16.mxu0 0
  %215 = vmatmul.mubr.bf16.gmra.mxu0 %v118
  %v216 = vpop.f32.mrf.mxu0
  %v217 = vadd.f32 0.0, %v216
  %v218 = vpop.f32.mrf.mxu0
  %v219 = vpop.f32.mrf.mxu0
  %v220 = vadd.f32 0.0, %v219
  %v221 = vpop.f32.mrf.mxu0
  %222 = vmatprep.mubr.bf16.mxu0 0
  %223 = vmatmul.mubr.bf16.gmra.mxu0 %v119
  %v224 = vpop.f32.mrf.mxu0
  %v225 = vadd.f32 0.0, %v224
  %v226 = vpop.f32.mrf.mxu0
  %v227 = vpop.f32.mrf.mxu0
  %v228 = vadd.f32 0.0, %v227
  %v229 = vpop.f32.mrf.mxu0
  %230 = vmatprep.mubr.bf16.mxu0 0
  %231 = vmatmul.mubr.bf16.gmra.mxu0 %v120
  %v232 = vpop.f32.mrf.mxu0
  %v233 = vadd.f32 0.0, %v232
  %v234 = vpop.f32.mrf.mxu0
  %v235 = vpop.f32.mrf.mxu0
  %v236 = vadd.f32 0.0, %v235
  %v237 = vpop.f32.mrf.mxu0
  %238 = vmatprep.mubr.bf16.mxu0 0
  %239 = vmatmul.mubr.bf16.gmra.mxu0 %v121
  %v240 = vpop.f32.mrf.mxu0
  %v241 = vadd.f32 0.0, %v240
  %v242 = vpop.f32.mrf.mxu0
  %v243 = vpop.f32.mrf.mxu0
  %v244 = vadd.f32 0.0, %v243
  %v245 = vpop.f32.mrf.mxu0
  %246 = vmatprep.mubr.bf16.mxu0 0
  %247 = vmatmul.mubr.bf16.gmra.mxu0 %v122
  %v248 = vpop.f32.mrf.mxu0
  %v249 = vadd.f32 0.0, %v248
  %v250 = vpop.f32.mrf.mxu0
  %v251 = vpop.f32.mrf.mxu0
  %v252 = vadd.f32 0.0, %v251
  %v253 = vpop.f32.mrf.mxu0
  %254 = vmatprep.mubr.bf16.mxu0 0
  %255 = vmatmul.mubr.bf16.gmra.mxu0 %v123
  %v256 = vpop.f32.mrf.mxu0
  %v257 = vadd.f32 0.0, %v256
  %v258 = vpop.f32.mrf.mxu0
  %v259 = vpop.f32.mrf.mxu0
  %v260 = vadd.f32 0.0, %v259
  %v261 = vpop.f32.mrf.mxu0
  %262 = vmatprep.mubr.bf16.mxu0 0
  %263 = vmatmul.mubr.bf16.gmra.mxu0 %v124
  %v264 = vpop.f32.mrf.mxu0
  %v265 = vadd.f32 0.0, %v264
  %v266 = vpop.f32.mrf.mxu0
  %v267 = vpop.f32.mrf.mxu0
  %v268 = vadd.f32 0.0, %v267
  %v269 = vpop.f32.mrf.mxu0
  %270 = vmatprep.mubr.bf16.mxu0 0
  %271 = vmatmul.mubr.bf16.gmra.mxu0 %v125
  %v272 = vpop.f32.mrf.mxu0
  %v273 = vadd.f32 0.0, %v272
  %v274 = vpop.f32.mrf.mxu0
  %v275 = vpop.f32.mrf.mxu0
  %v276 = vadd.f32 0.0, %v275
  %v277 = vpop.f32.mrf.mxu0
  %278 = vdwg.mxu0
  %v279 = vadd.f32 %v38, %v217
  %v280 = vadd.f32 %v39, %v220
  %v281 = vadd.f32 %v40, %v225
  %v282 = vadd.f32 %v41, %v228
  %v283 = vadd.f32 %v42, %v233
  %v284 = vadd.f32 %v43, %v236
  %v285 = vadd.f32 %v44, %v241
  %v286 = vadd.f32 %v45, %v244
  %v287 = vadd.f32 %v46, %v249
  %v288 = vadd.f32 %v47, %v252
  %v289 = vadd.f32 %v48, %v257
  %v290 = vadd.f32 %v49, %v260
  %v291 = vadd.f32 %v50, %v265
  %v292 = vadd.f32 %v51, %v268
  %v293 = vadd.f32 %v52, %v273
  %v294 = vadd.f32 %v53, %v276
  %295 = vst [vmem:[#allocation2] sm:$0xff] %v279
  %296 = vst [vmem:[#allocation2 + $0x8] sm:$0xff] %v280
  %297 = vst [vmem:[#allocation2 + $0x10] sm:$0xff] %v281
  %298 = vst [vmem:[#allocation2 + $0x18] sm:$0xff] %v282
  %299 = vst [vmem:[#allocation2 + $0x20] sm:$0xff] %v283
  %300 = vst [vmem:[#allocation2 + $0x28] sm:$0xff] %v284
  %301 = vst [vmem:[#allocation2 + $0x30] sm:$0xff] %v285
  %302 = vst [vmem:[#allocation2 + $0x38] sm:$0xff] %v286
  %303 = vst [vmem:[#allocation2 + $0x40] sm:$0xff] %v287
  %304 = vst [vmem:[#allocation2 + $0x48] sm:$0xff] %v288
  %305 = vst [vmem:[#allocation2 + $0x50] sm:$0xff] %v289
  %306 = vst [vmem:[#allocation2 + $0x58] sm:$0xff] %v290
  %307 = vst [vmem:[#allocation2 + $0x60] sm:$0xff] %v291
  %308 = vst [vmem:[#allocation2 + $0x68] sm:$0xff] %v292
  %309 = vst [vmem:[#allocation2 + $0x70] sm:$0xff] %v293
  %310 = vst [vmem:[#allocation2 + $0x78] sm:$0xff] %v294
  // Predicated region
  $region22: #{_forward.108} parent=0 // pred_check
    %p311 = pneg %p18
  $region23: #{_forward.108} parent=0 // pred_check_branch
    %313 = sbr.rel (%p311) target = $region25
  $region24: #{_forward.108} parent=0 // pred_region
    %v314 = vld [vmem:[#allocation2] sm:$0xff]
    %v315 = vld [vmem:[#allocation2 + $0x8] sm:$0xff]
    %v316 = vld [vmem:[#allocation2 + $0x10] sm:$0xff]
    %v317 = vld [vmem:[#allocation2 + $0x18] sm:$0xff]
    %v318 = vld [vmem:[#allocation2 + $0x20] sm:$0xff]
    %v319 = vld [vmem:[#allocation2 + $0x28] sm:$0xff]
    %v320 = vld [vmem:[#allocation2 + $0x30] sm:$0xff]
    %v321 = vld [vmem:[#allocation2 + $0x38] sm:$0xff]
    %v322 = vld [vmem:[#allocation2 + $0x40] sm:$0xff]
    %v323 = vld [vmem:[#allocation2 + $0x48] sm:$0xff]
    %v324 = vld [vmem:[#allocation2 + $0x50] sm:$0xff]
    %v325 = vld [vmem:[#allocation2 + $0x58] sm:$0xff]
    %v326 = vld [vmem:[#allocation2 + $0x60] sm:$0xff]
    %v327 = vld [vmem:[#allocation2 + $0x68] sm:$0xff]
    %v328 = vld [vmem:[#allocation2 + $0x70] sm:$0xff]
    %v329 = vld [vmem:[#allocation2 + $0x78] sm:$0xff]
    %v330 = vld [vmem:[%s2] sm:$0x1]
    %v332 = vlaneseq
    %v333 = vshrl.u32 %v332, 7
    %v334 = vsub.s32 0, %v333
    %v335 = vrot.slane %v330, %v334
    %v337 = vmul.f32 %v314, %v335
    %v338 = vmul.f32 %v315, %v335
    %v339 = vmul.f32 %v316, %v335
    %v340 = vmul.f32 %v317, %v335
    %v341 = vmul.f32 %v318, %v335
    %v342 = vmul.f32 %v319, %v335
    %v343 = vmul.f32 %v320, %v335
    %v344 = vmul.f32 %v321, %v335
    %v345 = vmul.f32 %v322, %v335
    %v346 = vmul.f32 %v323, %v335
    %v347 = vmul.f32 %v324, %v335
    %v348 = vmul.f32 %v325, %v335
    %v349 = vmul.f32 %v326, %v335
    %v350 = vmul.f32 %v327, %v335
    %v351 = vmul.f32 %v328, %v335
    %v352 = vmul.f32 %v329, %v335
    %v353 = vld [vmem:[%s3] sm:$0x1]
    %v355 = vlaneseq
    %v356 = vshrl.u32 %v355, 7
    %v357 = vsub.s32 0, %v356
    %v358 = vrot.slane %v353, %v357
    %v360 = vadd.f32 %v337, %v358
    %v361 = vadd.f32 %v338, %v358
    %v362 = vadd.f32 %v339, %v358
    %v363 = vadd.f32 %v340, %v358
    %v364 = vadd.f32 %v341, %v358
    %v365 = vadd.f32 %v342, %v358
    %v366 = vadd.f32 %v343, %v358
    %v367 = vadd.f32 %v344, %v358
    %v368 = vadd.f32 %v345, %v358
    %v369 = vadd.f32 %v346, %v358
    %v370 = vadd.f32 %v347, %v358
    %v371 = vadd.f32 %v348, %v358
    %v372 = vadd.f32 %v349, %v358
    %v373 = vadd.f32 %v350, %v358
    %v374 = vadd.f32 %v351, %v358
    %v375 = vadd.f32 %v352, %v358
    %v376 = vpack.c.bf16 %v361, %v360
    %v377 = vpack.c.bf16 %v363, %v362
    %v378 = vpack.c.bf16 %v365, %v364
    %v379 = vpack.c.bf16 %v367, %v366
    %v380 = vpack.c.bf16 %v369, %v368
    %v381 = vpack.c.bf16 %v371, %v370
    %v382 = vpack.c.bf16 %v373, %v372
    %v383 = vpack.c.bf16 %v375, %v374
    %v392 = vunpack.c.l.b16 %v376
    %v393 = vunpack.c.h.b16 %v376
    %v394 = vunpack.c.l.b16 %v377
    %v395 = vunpack.c.h.b16 %v377
    %v396 = vunpack.c.l.b16 %v378
    %v397 = vunpack.c.h.b16 %v378
    %v398 = vunpack.c.l.b16 %v379
    %v399 = vunpack.c.h.b16 %v379
    %v400 = vunpack.c.l.b16 %v380
    %v401 = vunpack.c.h.b16 %v380
    %v402 = vunpack.c.l.b16 %v381
    %v403 = vunpack.c.h.b16 %v381
    %v404 = vunpack.c.l.b16 %v382
    %v405 = vunpack.c.h.b16 %v382
    %v406 = vunpack.c.l.b16 %v383
    %v407 = vunpack.c.h.b16 %v383
    %v408 = vpack.c.b16 %v392, %v392
    %v409 = vpack.c.b16 %v393, %v393
    %v410 = vpack.c.b16 %v394, %v394
    %v411 = vpack.c.b16 %v395, %v395
    %v412 = vpack.c.b16 %v396, %v396
    %v413 = vpack.c.b16 %v397, %v397
    %v414 = vpack.c.b16 %v398, %v398
    %v415 = vpack.c.b16 %v399, %v399
    %v416 = vpack.c.b16 %v400, %v400
    %v417 = vpack.c.b16 %v401, %v401
    %v418 = vpack.c.b16 %v402, %v402
    %v419 = vpack.c.b16 %v403, %v403
    %v420 = vpack.c.b16 %v404, %v404
    %v421 = vpack.c.b16 %v405, %v405
    %v422 = vpack.c.b16 %v406, %v406
    %v423 = vpack.c.b16 %v407, %v407
    %440 = vst [vmem:[%s4] sm:$0xf] %v408
    %441 = vst [vmem:[%s4 + $0x4] sm:$0xf] %v409
    %442 = vst [vmem:[%s4 + $0x8] sm:$0xf] %v410
    %443 = vst [vmem:[%s4 + $0xc] sm:$0xf] %v411
    %444 = vst [vmem:[%s4 + $0x10] sm:$0xf] %v412
    %445 = vst [vmem:[%s4 + $0x14] sm:$0xf] %v413
    %446 = vst [vmem:[%s4 + $0x18] sm:$0xf] %v414
    %447 = vst [vmem:[%s4 + $0x1c] sm:$0xf] %v415
    %448 = vst [vmem:[%s4 + $0x20] sm:$0xf] %v416
    %449 = vst [vmem:[%s4 + $0x24] sm:$0xf] %v417
    %450 = vst [vmem:[%s4 + $0x28] sm:$0xf] %v418
    %451 = vst [vmem:[%s4 + $0x2c] sm:$0xf] %v419
    %452 = vst [vmem:[%s4 + $0x30] sm:$0xf] %v420
    %453 = vst [vmem:[%s4 + $0x34] sm:$0xf] %v421
    %454 = vst [vmem:[%s4 + $0x38] sm:$0xf] %v422
    %455 = vst [vmem:[%s4 + $0x3c] sm:$0xf] %v423
  $region25: #{_forward.108} parent=0 // pred_fallthru
    _
  // Predicated region
  $region26: #{_forward.108} parent=0 // pred_check
    _
  $region27: #{_forward.108} parent=0 // pred_check_branch
    %457 = sbr.rel (0) target = $region29
  $region28: #{_forward.108} parent=0 // pred_region
    _
  $region29: #{_forward.108} parent=0 // pred_fallthru
    _
  // Predicated region
  $region30: #{_forward.108} parent=0 // pred_check
    _
  $region31: #{_forward.108} parent=0 // pred_check_branch
    %459 = sbr.rel (0) target = $region33
  $region32: #{_forward.108} parent=0 // pred_region
    _
  $region33: #{_forward.108} parent=0 // pred_fallthru
    _

// kernel: _forward.118
$region0: #{_forward.118}
  #allocation0 [shape = 'u32[]', space=smem, size = 0x4, offset = 0x4, fixed_abs, tag = 'smem constant byte address 0x4 - core index']
  #allocation1 [shape = 'u32[144,128]{1,0:T(1,128)}', space=vmem, size = 0x12000, scoped, tag = 'internal scratch']
  #allocation2 [shape = 'f32[32,128]{1,0:T(8,128)}', space=vmem, size = 0x4000, scoped, tag = 'scratch operand']
  %s0 = inlined_call_operand.vmem [shape: bf16[32,128], index: 0, kind: input, shape index: {}]
  %s1 = inlined_call_operand.vmem [shape: bf16[128,128], index: 1, kind: input, shape index: {}]
  %s2 = inlined_call_operand.vmem [shape: f32[1,128], index: 2, kind: input, shape index: {}]
  %s3 = inlined_call_operand.vmem [shape: f32[1,128], index: 3, kind: input, shape index: {}]
  %s4 = inlined_call_operand.vmem [shape: bf16[32,128], index: 4, kind: output, shape index: {}]
  %s5 = sld [smem:[#allocation0]]
  $region34: #{_forward.118} parent=0
    _
  %s7 = ssub.s32 1, %s5
  %s8 = scalar_select 0, %s7, %s5
  // Predicated region
  $region2: #{_forward.118} parent=0 // pred_check
    _
  $region3: #{_forward.118} parent=0 // pred_check_branch
    %10 = sbr.rel (0) target = $region5
  $region4: #{_forward.118} parent=0 // pred_region
    _
  $region5: #{_forward.118} parent=0 // pred_fallthru
    _
  // Predicated region
  $region6: #{_forward.118} parent=0 // pred_check
    _
  $region7: #{_forward.118} parent=0 // pred_check_branch
    %12 = sbr.rel (0) target = $region9
  $region8: #{_forward.118} parent=0 // pred_region
    _
  $region9: #{_forward.118} parent=0 // pred_fallthru
    _
  // Predicated region
  $region10: #{_forward.118} parent=0 // pred_check
    _
  $region11: #{_forward.118} parent=0 // pred_check_branch
    %14 = sbr.rel (0) target = $region13
  $region12: #{_forward.118} parent=0 // pred_region
    _
  $region13: #{_forward.118} parent=0 // pred_fallthru
    _
  // Predicated region
  $region14: #{_forward.118} parent=0 // pred_check
    _
  $region15: #{_forward.118} parent=0 // pred_check_branch
    %16 = sbr.rel (0) target = $region17
  $region16: #{_forward.118} parent=0 // pred_region
    _
  $region17: #{_forward.118} parent=0 // pred_fallthru
    _
  %p18 = scmp.eq.s32.totalorder 0, 0
  // Predicated region
  $region18: #{_forward.118} parent=0 // pred_check
    %p19 = pneg %p18
  $region19: #{_forward.118} parent=0 // pred_check_branch
    %21 = sbr.rel (%p19) target = $region21
  $region20: #{_forward.118} parent=0 // pred_region
    %22 = vst [vmem:[#allocation2] sm:$0xff] 0.0
    %23 = vst [vmem:[#allocation2 + $0x8] sm:$0xff] 0.0
    %24 = vst [vmem:[#allocation2 + $0x10] sm:$0xff] 0.0
    %25 = vst [vmem:[#allocation2 + $0x18] sm:$0xff] 0.0
  $region21: #{_forward.118} parent=0 // pred_fallthru
    _
  %v26 = vld [vmem:[#allocation2] sm:$0xff]
  %v27 = vld [vmem:[#allocation2 + $0x8] sm:$0xff]
  %v28 = vld [vmem:[#allocation2 + $0x10] sm:$0xff]
  %v29 = vld [vmem:[#allocation2 + $0x18] sm:$0xff]
  %v30 = vld [vmem:[%s0] sm:$0xf]
  %v31 = vld [vmem:[%s0 + $0x4] sm:$0xf]
  %v32 = vld [vmem:[%s0 + $0x8] sm:$0xf]
  %v33 = vld [vmem:[%s0 + $0xc] sm:$0xf]
  %v34 = vld [vmem:[%s1] sm:$0xf]
  %v35 = vld [vmem:[%s1 + $0x4] sm:$0xf]
  %v36 = vld [vmem:[%s1 + $0x8] sm:$0xf]
  %v37 = vld [vmem:[%s1 + $0xc] sm:$0xf]
  %v38 = vld [vmem:[%s1 + $0x10] sm:$0xf]
  %v39 = vld [vmem:[%s1 + $0x14] sm:$0xf]
  %v40 = vld [vmem:[%s1 + $0x18] sm:$0xf]
  %v41 = vld [vmem:[%s1 + $0x1c] sm:$0xf]
  %v42 = vld [vmem:[%s1 + $0x20] sm:$0xf]
  %v43 = vld [vmem:[%s1 + $0x24] sm:$0xf]
  %v44 = vld [vmem:[%s1 + $0x28] sm:$0xf]
  %v45 = vld [vmem:[%s1 + $0x2c] sm:$0xf]
  %v46 = vld [vmem:[%s1 + $0x30] sm:$0xf]
  %v47 = vld [vmem:[%s1 + $0x34] sm:$0xf]
  %v48 = vld [vmem:[%s1 + $0x38] sm:$0xf]
  %v49 = vld [vmem:[%s1 + $0x3c] sm:$0xf]
  %v54 = vunpack.c.l.b16 %v30
  %v55 = vunpack.c.l.b16 %v31
  %v56 = vunpack.c.l.b16 %v32
  %v57 = vunpack.c.l.b16 %v33
  %v58 = vpack.c.b16 %v55, %v54
  %v59 = vpack.c.b16 %v57, %v56
  %v78 = vunpack.c.l.b16 %v34
  %v79 = vunpack.c.l.b16 %v35
  %v80 = vunpack.c.l.b16 %v36
  %v81 = vunpack.c.l.b16 %v37
  %v82 = vunpack.c.l.b16 %v38
  %v83 = vunpack.c.l.b16 %v39
  %v84 = vunpack.c.l.b16 %v40
  %v85 = vunpack.c.l.b16 %v41
  %v86 = vunpack.c.l.b16 %v42
  %v87 = vunpack.c.l.b16 %v43
  %v88 = vunpack.c.l.b16 %v44
  %v89 = vunpack.c.l.b16 %v45
  %v90 = vunpack.c.l.b16 %v46
  %v91 = vunpack.c.l.b16 %v47
  %v92 = vunpack.c.l.b16 %v48
  %v93 = vunpack.c.l.b16 %v49
  %v94 = vpack.c.b16 %v79, %v78
  %v95 = vpack.c.b16 %v81, %v80
  %v96 = vpack.c.b16 %v83, %v82
  %v97 = vpack.c.b16 %v85, %v84
  %v98 = vpack.c.b16 %v87, %v86
  %v99 = vpack.c.b16 %v89, %v88
  %v100 = vpack.c.b16 %v91, %v90
  %v101 = vpack.c.b16 %v93, %v92
  %110 = vmatprep.subr.bf16.mxu0 0
  %111 = vmatpush1.bf16.msra.mxu0 %v101
  %112 = vmatprep.subr.bf16.mxu0 0
  %113 = vmatpush1.bf16.msra.mxu0 %v100
  %114 = vmatprep.subr.bf16.mxu0 0
  %115 = vmatpush1.bf16.msra.mxu0 %v99
  %116 = vmatprep.subr.bf16.mxu0 0
  %117 = vmatpush1.bf16.msra.mxu0 %v98
  %118 = vmatprep.subr.bf16.mxu0 0
  %119 = vmatpush1.bf16.msra.mxu0 %v97
  %120 = vmatprep.subr.bf16.mxu0 0
  %121 = vmatpush1.bf16.msra.mxu0 %v96
  %122 = vmatprep.subr.bf16.mxu0 0
  %123 = vmatpush1.bf16.msra.mxu0 %v95
  %124 = vmatprep.subr.bf16.mxu0 0
  %125 = vmatpush1.bf16.msra.mxu0 %v94
  %126 = vmatprep.subr.bf16.mxu0 0
  %127 = vmatpush2.bf16.msra.mxu0 0
  %128 = vmatprep.subr.bf16.mxu0 0
  %129 = vmatpush2.bf16.msra.mxu0 0
  %130 = vmatprep.subr.bf16.mxu0 0
  %131 = vmatpush2.bf16.msra.mxu0 0
  %132 = vmatprep.subr.bf16.mxu0 0
  %133 = vmatpush2.bf16.msra.mxu0 0
  %134 = vmatprep.subr.bf16.mxu0 0
  %135 = vmatpush2.bf16.msra.mxu0 0
  %136 = vmatprep.subr.bf16.mxu0 0
  %137 = vmatpush2.bf16.msra.mxu0 0
  %138 = vmatprep.subr.bf16.mxu0 0
  %139 = vmatpush2.bf16.msra.mxu0 0
  %140 = vmatprep.subr.bf16.mxu0 0
  %141 = vmatpush2.bf16.msra.mxu0 0
  %142 = vmatprep.mubr.bf16.mxu0 0
  %143 = vmatmul.mubr.bf16.gmra.mxu0 %v58
  %v144 = vpop.f32.mrf.mxu0
  %v145 = vadd.f32 0.0, %v144
  %v146 = vpop.f32.mrf.mxu0
  %v147 = vpop.f32.mrf.mxu0
  %v148 = vadd.f32 0.0, %v147
  %v149 = vpop.f32.mrf.mxu0
  %150 = vmatprep.mubr.bf16.mxu0 0
  %151 = vmatmul.mubr.bf16.gmra.mxu0 %v59
  %v152 = vpop.f32.mrf.mxu0
  %v153 = vadd.f32 0.0, %v152
  %v154 = vpop.f32.mrf.mxu0
  %v155 = vpop.f32.mrf.mxu0
  %v156 = vadd.f32 0.0, %v155
  %v157 = vpop.f32.mrf.mxu0
  %158 = vdwg.mxu0
  %v159 = vadd.f32 %v26, %v145
  %v160 = vadd.f32 %v27, %v148
  %v161 = vadd.f32 %v28, %v153
  %v162 = vadd.f32 %v29, %v156
  %163 = vst [vmem:[#allocation2] sm:$0xff] %v159
  %164 = vst [vmem:[#allocation2 + $0x8] sm:$0xff] %v160
  %165 = vst [vmem:[#allocation2 + $0x10] sm:$0xff] %v161
  %166 = vst [vmem:[#allocation2 + $0x18] sm:$0xff] %v162
  // Predicated region
  $region22: #{_forward.118} parent=0 // pred_check
    %p167 = pneg %p18
  $region23: #{_forward.118} parent=0 // pred_check_branch
    %169 = sbr.rel (%p167) target = $region25
  $region24: #{_forward.118} parent=0 // pred_region
    %v170 = vld [vmem:[#allocation2] sm:$0xff]
    %v171 = vld [vmem:[#allocation2 + $0x8] sm:$0xff]
    %v172 = vld [vmem:[#allocation2 + $0x10] sm:$0xff]
    %v173 = vld [vmem:[#allocation2 + $0x18] sm:$0xff]
    %v174 = vld [vmem:[%s2] sm:$0x1]
    %v176 = vlaneseq
    %v177 = vshrl.u32 %v176, 7
    %v178 = vsub.s32 0, %v177
    %v179 = vrot.slane %v174, %v178
    %v181 = vmul.f32 %v170, %v179
    %v182 = vmul.f32 %v171, %v179
    %v183 = vmul.f32 %v172, %v179
    %v184 = vmul.f32 %v173, %v179
    %v185 = vld [vmem:[%s3] sm:$0x1]
    %v187 = vlaneseq
    %v188 = vshrl.u32 %v187, 7
    %v189 = vsub.s32 0, %v188
    %v190 = vrot.slane %v185, %v189
    %v192 = vadd.f32 %v181, %v190
    %v193 = vadd.f32 %v182, %v190
    %v194 = vadd.f32 %v183, %v190
    %v195 = vadd.f32 %v184, %v190
    %v196 = vpack.c.bf16 %v193, %v192
    %v197 = vpack.c.bf16 %v195, %v194
    %v200 = vunpack.c.l.b16 %v196
    %v201 = vunpack.c.h.b16 %v196
    %v202 = vunpack.c.l.b16 %v197
    %v203 = vunpack.c.h.b16 %v197
    %v204 = vpack.c.b16 %v200, %v200
    %v205 = vpack.c.b16 %v201, %v201
    %v206 = vpack.c.b16 %v202, %v202
    %v207 = vpack.c.b16 %v203, %v203
    %212 = vst [vmem:[%s4] sm:$0xf] %v204
    %213 = vst [vmem:[%s4 + $0x4] sm:$0xf] %v205
    %214 = vst [vmem:[%s4 + $0x8] sm:$0xf] %v206
    %215 = vst [vmem:[%s4 + $0xc] sm:$0xf] %v207
  $region25: #{_forward.118} parent=0 // pred_fallthru
    _
  // Predicated region
  $region26: #{_forward.118} parent=0 // pred_check
    _
  $region27: #{_forward.118} parent=0 // pred_check_branch
    %217 = sbr.rel (0) target = $region29
  $region28: #{_forward.118} parent=0 // pred_region
    _
  $region29: #{_forward.118} parent=0 // pred_fallthru
    _
  // Predicated region
  $region30: #{_forward.118} parent=0 // pred_check
    _
  $region31: #{_forward.118} parent=0 // pred_check_branch
    %219 = sbr.rel (0) target = $region33
  $region32: #{_forward.118} parent=0 // pred_region
    _
  $region33: #{_forward.118} parent=0 // pred_fallthru
    _

// kernel: _forward.121
$region0: #{_forward.121}
  #allocation0 [shape = 'u32[]', space=smem, size = 0x4, offset = 0x4, fixed_abs, tag = 'smem constant byte address 0x4 - core index']
  #allocation1 [shape = 'u32[144,128]{1,0:T(1,128)}', space=vmem, size = 0x12000, scoped, tag = 'internal scratch']
  #allocation2 [shape = 'f32[32,128]{1,0:T(8,128)}', space=vmem, size = 0x4000, scoped, tag = 'scratch operand']
  %s0 = inlined_call_operand.vmem [shape: bf16[32,128], index: 0, kind: input, shape index: {}]
  %s1 = inlined_call_operand.vmem [shape: bf16[128,128], index: 1, kind: input, shape index: {}]
  %s2 = inlined_call_operand.vmem [shape: f32[1,128], index: 2, kind: input, shape index: {}]
  %s3 = inlined_call_operand.vmem [shape: f32[1,128], index: 3, kind: input, shape index: {}]
  %s4 = inlined_call_operand.vmem [shape: bf16[32,128], index: 4, kind: input, shape index: {}]
  %s5 = inlined_call_operand.vmem [shape: bf16[32,128], index: 5, kind: output, shape index: {}]
  %s6 = sld [smem:[#allocation0]]
  $region38: #{_forward.121} parent=0
    _
  %s8 = ssub.s32 1, %s6
  %s9 = scalar_select 0, %s8, %s6
  // Predicated region
  $region2: #{_forward.121} parent=0 // pred_check
    _
  $region3: #{_forward.121} parent=0 // pred_check_branch
    %11 = sbr.rel (0) target = $region5
  $region4: #{_forward.121} parent=0 // pred_region
    _
  $region5: #{_forward.121} parent=0 // pred_fallthru
    _
  // Predicated region
  $region6: #{_forward.121} parent=0 // pred_check
    _
  $region7: #{_forward.121} parent=0 // pred_check_branch
    %13 = sbr.rel (0) target = $region9
  $region8: #{_forward.121} parent=0 // pred_region
    _
  $region9: #{_forward.121} parent=0 // pred_fallthru
    _
  // Predicated region
  $region10: #{_forward.121} parent=0 // pred_check
    _
  $region11: #{_forward.121} parent=0 // pred_check_branch
    %15 = sbr.rel (0) target = $region13
  $region12: #{_forward.121} parent=0 // pred_region
    _
  $region13: #{_forward.121} parent=0 // pred_fallthru
    _
  // Predicated region
  $region14: #{_forward.121} parent=0 // pred_check
    _
  $region15: #{_forward.121} parent=0 // pred_check_branch
    %17 = sbr.rel (0) target = $region17
  $region16: #{_forward.121} parent=0 // pred_region
    _
  $region17: #{_forward.121} parent=0 // pred_fallthru
    _
  // Predicated region
  $region18: #{_forward.121} parent=0 // pred_check
    _
  $region19: #{_forward.121} parent=0 // pred_check_branch
    %19 = sbr.rel (0) target = $region21
  $region20: #{_forward.121} parent=0 // pred_region
    _
  $region21: #{_forward.121} parent=0 // pred_fallthru
    _
  %p21 = scmp.eq.s32.totalorder 0, 0
  // Predicated region
  $region22: #{_forward.121} parent=0 // pred_check
    %p22 = pneg %p21
  $region23: #{_forward.121} parent=0 // pred_check_branch
    %24 = sbr.rel (%p22) target = $region25
  $region24: #{_forward.121} parent=0 // pred_region
    %25 = vst [vmem:[#allocation2] sm:$0xff] 0.0
    %26 = vst [vmem:[#allocation2 + $0x8] sm:$0xff] 0.0
    %27 = vst [vmem:[#allocation2 + $0x10] sm:$0xff] 0.0
    %28 = vst [vmem:[#allocation2 + $0x18] sm:$0xff] 0.0
  $region25: #{_forward.121} parent=0 // pred_fallthru
    _
  %v29 = vld [vmem:[#allocation2] sm:$0xff]
  %v30 = vld [vmem:[#allocation2 + $0x8] sm:$0xff]
  %v31 = vld [vmem:[#allocation2 + $0x10] sm:$0xff]
  %v32 = vld [vmem:[#allocation2 + $0x18] sm:$0xff]
  %v33 = vld [vmem:[%s0] sm:$0xf]
  %v34 = vld [vmem:[%s0 + $0x4] sm:$0xf]
  %v35 = vld [vmem:[%s0 + $0x8] sm:$0xf]
  %v36 = vld [vmem:[%s0 + $0xc] sm:$0xf]
  %v37 = vld [vmem:[%s1] sm:$0xf]
  %v38 = vld [vmem:[%s1 + $0x4] sm:$0xf]
  %v39 = vld [vmem:[%s1 + $0x8] sm:$0xf]
  %v40 = vld [vmem:[%s1 + $0xc] sm:$0xf]
  %v41 = vld [vmem:[%s1 + $0x10] sm:$0xf]
  %v42 = vld [vmem:[%s1 + $0x14] sm:$0xf]
  %v43 = vld [vmem:[%s1 + $0x18] sm:$0xf]
  %v44 = vld [vmem:[%s1 + $0x1c] sm:$0xf]
  %v45 = vld [vmem:[%s1 + $0x20] sm:$0xf]
  %v46 = vld [vmem:[%s1 + $0x24] sm:$0xf]
  %v47 = vld [vmem:[%s1 + $0x28] sm:$0xf]
  %v48 = vld [vmem:[%s1 + $0x2c] sm:$0xf]
  %v49 = vld [vmem:[%s1 + $0x30] sm:$0xf]
  %v50 = vld [vmem:[%s1 + $0x34] sm:$0xf]
  %v51 = vld [vmem:[%s1 + $0x38] sm:$0xf]
  %v52 = vld [vmem:[%s1 + $0x3c] sm:$0xf]
  %v57 = vunpack.c.l.b16 %v33
  %v58 = vunpack.c.l.b16 %v34
  %v59 = vunpack.c.l.b16 %v35
  %v60 = vunpack.c.l.b16 %v36
  %v61 = vpack.c.b16 %v58, %v57
  %v62 = vpack.c.b16 %v60, %v59
  %v81 = vunpack.c.l.b16 %v37
  %v82 = vunpack.c.l.b16 %v38
  %v83 = vunpack.c.l.b16 %v39
  %v84 = vunpack.c.l.b16 %v40
  %v85 = vunpack.c.l.b16 %v41
  %v86 = vunpack.c.l.b16 %v42
  %v87 = vunpack.c.l.b16 %v43
  %v88 = vunpack.c.l.b16 %v44
  %v89 = vunpack.c.l.b16 %v45
  %v90 = vunpack.c.l.b16 %v46
  %v91 = vunpack.c.l.b16 %v47
  %v92 = vunpack.c.l.b16 %v48
  %v93 = vunpack.c.l.b16 %v49
  %v94 = vunpack.c.l.b16 %v50
  %v95 = vunpack.c.l.b16 %v51
  %v96 = vunpack.c.l.b16 %v52
  %v97 = vpack.c.b16 %v82, %v81
  %v98 = vpack.c.b16 %v84, %v83
  %v99 = vpack.c.b16 %v86, %v85
  %v100 = vpack.c.b16 %v88, %v87
  %v101 = vpack.c.b16 %v90, %v89
  %v102 = vpack.c.b16 %v92, %v91
  %v103 = vpack.c.b16 %v94, %v93
  %v104 = vpack.c.b16 %v96, %v95
  %113 = vmatprep.subr.bf16.mxu0 0
  %114 = vmatpush1.bf16.msra.mxu0 %v104
  %115 = vmatprep.subr.bf16.mxu0 0
  %116 = vmatpush1.bf16.msra.mxu0 %v103
  %117 = vmatprep.subr.bf16.mxu0 0
  %118 = vmatpush1.bf16.msra.mxu0 %v102
  %119 = vmatprep.subr.bf16.mxu0 0
  %120 = vmatpush1.bf16.msra.mxu0 %v101
  %121 = vmatprep.subr.bf16.mxu0 0
  %122 = vmatpush1.bf16.msra.mxu0 %v100
  %123 = vmatprep.subr.bf16.mxu0 0
  %124 = vmatpush1.bf16.msra.mxu0 %v99
  %125 = vmatprep.subr.bf16.mxu0 0
  %126 = vmatpush1.bf16.msra.mxu0 %v98
  %127 = vmatprep.subr.bf16.mxu0 0
  %128 = vmatpush1.bf16.msra.mxu0 %v97
  %129 = vmatprep.subr.bf16.mxu0 0
  %130 = vmatpush2.bf16.msra.mxu0 0
  %131 = vmatprep.subr.bf16.mxu0 0
  %132 = vmatpush2.bf16.msra.mxu0 0
  %133 = vmatprep.subr.bf16.mxu0 0
  %134 = vmatpush2.bf16.msra.mxu0 0
  %135 = vmatprep.subr.bf16.mxu0 0
  %136 = vmatpush2.bf16.msra.mxu0 0
  %137 = vmatprep.subr.bf16.mxu0 0
  %138 = vmatpush2.bf16.msra.mxu0 0
  %139 = vmatprep.subr.bf16.mxu0 0
  %140 = vmatpush2.bf16.msra.mxu0 0
  %141 = vmatprep.subr.bf16.mxu0 0
  %142 = vmatpush2.bf16.msra.mxu0 0
  %143 = vmatprep.subr.bf16.mxu0 0
  %144 = vmatpush2.bf16.msra.mxu0 0
  %145 = vmatprep.mubr.bf16.mxu0 0
  %146 = vmatmul.mubr.bf16.gmra.mxu0 %v61
  %v147 = vpop.f32.mrf.mxu0
  %v148 = vadd.f32 0.0, %v147
  %v149 = vpop.f32.mrf.mxu0
  %v150 = vpop.f32.mrf.mxu0
  %v151 = vadd.f32 0.0, %v150
  %v152 = vpop.f32.mrf.mxu0
  %153 = vmatprep.mubr.bf16.mxu0 0
  %154 = vmatmul.mubr.bf16.gmra.mxu0 %v62
  %v155 = vpop.f32.mrf.mxu0
  %v156 = vadd.f32 0.0, %v155
  %v157 = vpop.f32.mrf.mxu0
  %v158 = vpop.f32.mrf.mxu0
  %v159 = vadd.f32 0.0, %v158
  %v160 = vpop.f32.mrf.mxu0
  %161 = vdwg.mxu0
  %v162 = vadd.f32 %v29, %v148
  %v163 = vadd.f32 %v30, %v151
  %v164 = vadd.f32 %v31, %v156
  %v165 = vadd.f32 %v32, %v159
  %166 = vst [vmem:[#allocation2] sm:$0xff] %v162
  %167 = vst [vmem:[#allocation2 + $0x8] sm:$0xff] %v163
  %168 = vst [vmem:[#allocation2 + $0x10] sm:$0xff] %v164
  %169 = vst [vmem:[#allocation2 + $0x18] sm:$0xff] %v165
  // Predicated region
  $region26: #{_forward.121} parent=0 // pred_check
    %p170 = pneg %p21
  $region27: #{_forward.121} parent=0 // pred_check_branch
    %172 = sbr.rel (%p170) target = $region29
  $region28: #{_forward.121} parent=0 // pred_region
    %v173 = vld [vmem:[#allocation2] sm:$0xff]
    %v174 = vld [vmem:[#allocation2 + $0x8] sm:$0xff]
    %v175 = vld [vmem:[#allocation2 + $0x10] sm:$0xff]
    %v176 = vld [vmem:[#allocation2 + $0x18] sm:$0xff]
    %v177 = vld [vmem:[%s2] sm:$0x1]
    %v179 = vlaneseq
    %v180 = vshrl.u32 %v179, 7
    %v181 = vsub.s32 0, %v180
    %v182 = vrot.slane %v177, %v181
    %v184 = vmul.f32 %v173, %v182
    %v185 = vmul.f32 %v174, %v182
    %v186 = vmul.f32 %v175, %v182
    %v187 = vmul.f32 %v176, %v182
    %v188 = vld [vmem:[%s3] sm:$0x1]
    %v190 = vlaneseq
    %v191 = vshrl.u32 %v190, 7
    %v192 = vsub.s32 0, %v191
    %v193 = vrot.slane %v188, %v192
    %v195 = vadd.f32 %v184, %v193
    %v196 = vadd.f32 %v185, %v193
    %v197 = vadd.f32 %v186, %v193
    %v198 = vadd.f32 %v187, %v193
    %v199 = vld [vmem:[%s4] sm:$0xf]
    %v200 = vld [vmem:[%s4 + $0x4] sm:$0xf]
    %v201 = vld [vmem:[%s4 + $0x8] sm:$0xf]
    %v202 = vld [vmem:[%s4 + $0xc] sm:$0xf]
    %v203 = vunpack.c.l.bf16 %v199
    %v204 = vunpack.c.l.bf16 %v200
    %v205 = vunpack.c.l.bf16 %v201
    %v206 = vunpack.c.l.bf16 %v202
    %v207 = vadd.f32 %v195, %v203
    %v208 = vadd.f32 %v196, %v204
    %v209 = vadd.f32 %v197, %v205
    %v210 = vadd.f32 %v198, %v206
    %v211 = vmax.f32 %v207, 0.0
    %v212 = vmax.f32 %v208, 0.0
    %v213 = vmax.f32 %v209, 0.0
    %v214 = vmax.f32 %v210, 0.0
    %v215 = vpack.c.bf16 %v212, %v211
    %v216 = vpack.c.bf16 %v214, %v213
    %v219 = vunpack.c.l.b16 %v215
    %v220 = vunpack.c.h.b16 %v215
    %v221 = vunpack.c.l.b16 %v216
    %v222 = vunpack.c.h.b16 %v216
    %v223 = vpack.c.b16 %v219, %v219
    %v224 = vpack.c.b16 %v220, %v220
    %v225 = vpack.c.b16 %v221, %v221
    %v226 = vpack.c.b16 %v222, %v222
    %231 = vst [vmem:[%s5] sm:$0xf] %v223
    %232 = vst [vmem:[%s5 + $0x4] sm:$0xf] %v224
    %233 = vst [vmem:[%s5 + $0x8] sm:$0xf] %v225
    %234 = vst [vmem:[%s5 + $0xc] sm:$0xf] %v226
  $region29: #{_forward.121} parent=0 // pred_fallthru
    _
  // Predicated region
  $region30: #{_forward.121} parent=0 // pred_check
    _
  $region31: #{_forward.121} parent=0 // pred_check_branch
    %236 = sbr.rel (0) target = $region33
  $region32: #{_forward.121} parent=0 // pred_region
    _
  $region33: #{_forward.121} parent=0 // pred_fallthru
    _
  // Predicated region
  $region34: #{_forward.121} parent=0 // pred_check
    _
  $region35: #{_forward.121} parent=0 // pred_check_branch
    %238 = sbr.rel (0) target = $region37
  $region36: #{_forward.121} parent=0 // pred_region
    _
  $region37: #{_forward.121} parent=0 // pred_fallthru
    _

// kernel: _forward.120
$region0: #{_forward.120}
  #allocation0 [shape = 'u32[]', space=smem, size = 0x4, offset = 0x4, fixed_abs, tag = 'smem constant byte address 0x4 - core index']
  #allocation1 [shape = 'u32[144,128]{1,0:T(1,128)}', space=vmem, size = 0x12000, scoped, tag = 'internal scratch']
  #allocation2 [shape = 'f32[32,128]{1,0:T(8,128)}', space=vmem, size = 0x4000, scoped, tag = 'scratch operand']
  %s0 = inlined_call_operand.vmem [shape: bf16[32,1152], index: 0, kind: input, shape index: {}]
  %s1 = inlined_call_operand.vmem [shape: bf16[1152,128], index: 1, kind: input, shape index: {}]
  %s2 = inlined_call_operand.vmem [shape: f32[1,128], index: 2, kind: input, shape index: {}]
  %s3 = inlined_call_operand.vmem [shape: f32[1,128], index: 3, kind: input, shape index: {}]
  %s4 = inlined_call_operand.vmem [shape: bf16[32,128], index: 4, kind: output, shape index: {}]
  %s5 = sld [smem:[#allocation0]]
  $region83: #{_forward.120} parent=0
    _
  %s7 = ssub.s32 1, %s5
  %s8 = scalar_select 0, %s7, %s5
  $region1: #{_forward.120} parent=0
    #allocation3 [shape = 'u8[49152]{0}', space=vmem, size = 0xc000, scoped, tag = 'input window, operand 0']
    loop: start=0, step=1, limit=5
    $region2: #{_forward.120} parent=1 // loop_pre_header
      _
    $region3: #{_forward.120} parent=1 // loop_header
      %s10 = sphi 0, %s14
      %p11 = scmp.ge.s32.totalorder %s10, 5
      %s17 = sphi 0, %s36
      %s18 = sphi 0, %s32
      %s19 = sphi 0, %s28
      %s20 = sphi 0, %s17
      %s21 = sphi 0, %s18
      %s22 = sphi 0, %s19
      %s23 = sphi 0, %s20
      %s24 = sphi 0, %s21
      %s25 = sphi 0, %s22
      %s41 = sphi 0, %s43
      %s44 = sphi 0, %s41
      %s45 = sphi 0, %s44
      %s61 = sphi 0, %s45
      %s69 = sphi 0, %s71
      %s72 = sphi 0, %s69
      %s73 = sphi 0, %s72
      %s89 = sphi 0, %s73
      %s95 = sphi 0, %s97
      %s98 = sphi 0, %s95
      %s99 = sphi 0, %s98
      %s115 = sphi 0, %s99
      %s121 = sphi 0, %s123
      %s124 = sphi 0, %s121
      %s125 = sphi 0, %s124
      %s141 = sphi 0, %s125
      %s149 = sphi 0, %s151
      %s152 = sphi 0, %s149
      %s153 = sphi 0, %s152
      %s169 = sphi 0, %s153
    $region4: #{_forward.120} parent=1 // loop_header_branch
      %13 = sbr.rel (%p11) target = $region8
    $region5: #{_forward.120} parent=1 // loop_body
      %s15 = ssub.s32 %s10, 1
      %s16 = ssub.s32 %s10, 2
      %s26 = sadd.s32 1, %s19
      %p27 = scmp.ge.s32.totalorder %s26, 3
      %s28 = scalar_select %p27, 0, %s26
      %s29 = sadd.s32 1, %s18
      %s30 = scalar_select %p27, %s29, %s18
      %p31 = scmp.ge.s32.totalorder %s30, 1
      %s32 = scalar_select %p31, 0, %s30
      %s33 = sadd.s32 1, %s17
      %s34 = scalar_select %p31, %s33, %s17
      %p35 = scmp.ge.s32.totalorder %s34, 1
      %s36 = scalar_select %p35, 0, %s34
      %s37 = ssub.s32 %s17, %s36
      %s38 = ssub.s32 %s19, %s28
      %s39 = sor.u32 %s37, %s38
      %p40 = scmp.eq.s32.totalorder %s39, 0
      %s42 = sadd.s32 %s41, 1
      %s43 = scalar_select %p40, %s41, %s42
      %p46 = pneg %p40
      %p47 = scmp.eq.s32.totalorder %s10, 2
      %p48 = por %p46, %p47
      %p49 = scmp.ne.s32.totalorder %s41, %s44
      %p50 = scmp.eq.s32.totalorder %s10, 0
      %p51 = por %p49, %p50
      %p52 = scmp.ne.s32.totalorder %s41, %s44
      %p53 = scmp.eq.s32.totalorder %s15, 2
      %p54 = por %p52, %p53
      %p55 = scmp.ne.s32.totalorder %s44, %s45
      %p56 = scmp.eq.s32.totalorder %s15, 0
      %p57 = por %p55, %p56
      %p58 = scmp.ne.s32.totalorder %s44, %s45
      %p59 = scmp.eq.s32.totalorder %s16, 2
      %p60 = por %p58, %p59
      %p62 = scmp.ne.s32.totalorder %s45, %s61
      %p63 = scmp.eq.s32.totalorder %s16, 0
      %p64 = por %p62, %p63
      %s65 = ssub.s32 %s19, %s28
      %s66 = ssub.s32 %s18, %s32
      %s67 = sor.u32 %s65, %s66
      %p68 = scmp.eq.s32.totalorder %s67, 0
      %s70 = sadd.s32 %s69, 1
      %s71 = scalar_select %p68, %s69, %s70
      %p74 = pneg %p68
      %p75 = scmp.eq.s32.totalorder %s10, 2
      %p76 = por %p74, %p75
      %p77 = scmp.ne.s32.totalorder %s69, %s72
      %p78 = scmp.eq.s32.totalorder %s10, 0
      %p79 = por %p77, %p78
      %p80 = scmp.ne.s32.totalorder %s69, %s72
      %p81 = scmp.eq.s32.totalorder %s15, 2
      %p82 = por %p80, %p81
      %p83 = scmp.ne.s32.totalorder %s72, %s73
      %p84 = scmp.eq.s32.totalorder %s15, 0
      %p85 = por %p83, %p84
      %p86 = scmp.ne.s32.totalorder %s72, %s73
      %p87 = scmp.eq.s32.totalorder %s16, 2
      %p88 = por %p86, %p87
      %p90 = scmp.ne.s32.totalorder %s73, %s89
      %p91 = scmp.eq.s32.totalorder %s16, 0
      %p92 = por %p90, %p91
      %s93 = ssub.s32 %s18, %s32
      %p94 = scmp.eq.s32.totalorder %s93, 0
      %s96 = sadd.s32 %s95, 1
      %s97 = scalar_select %p94, %s95, %s96
      %p100 = pneg %p94
      %p101 = scmp.eq.s32.totalorder %s10, 2
      %p102 = por %p100, %p101
      %p103 = scmp.ne.s32.totalorder %s95, %s98
      %p104 = scmp.eq.s32.totalorder %s10, 0
      %p105 = por %p103, %p104
      %p106 = scmp.ne.s32.totalorder %s95, %s98
      %p107 = scmp.eq.s32.totalorder %s15, 2
      %p108 = por %p106, %p107
      %p109 = scmp.ne.s32.totalorder %s98, %s99
      %p110 = scmp.eq.s32.totalorder %s15, 0
      %p111 = por %p109, %p110
      %p112 = scmp.ne.s32.totalorder %s98, %s99
      %p113 = scmp.eq.s32.totalorder %s16, 2
      %p114 = por %p112, %p113
      %p116 = scmp.ne.s32.totalorder %s99, %s115
      %p117 = scmp.eq.s32.totalorder %s16, 0
      %p118 = por %p116, %p117
      %s119 = ssub.s32 %s18, %s32
      %p120 = scmp.eq.s32.totalorder %s119, 0
      %s122 = sadd.s32 %s121, 1
      %s123 = scalar_select %p120, %s121, %s122
      %p126 = pneg %p120
      %p127 = scmp.eq.s32.totalorder %s10, 2
      %p128 = por %p126, %p127
      %p129 = scmp.ne.s32.totalorder %s121, %s124
      %p130 = scmp.eq.s32.totalorder %s10, 0
      %p131 = por %p129, %p130
      %p132 = scmp.ne.s32.totalorder %s121, %s124
      %p133 = scmp.eq.s32.totalorder %s15, 2
      %p134 = por %p132, %p133
      %p135 = scmp.ne.s32.totalorder %s124, %s125
      %p136 = scmp.eq.s32.totalorder %s15, 0
      %p137 = por %p135, %p136
      %p138 = scmp.ne.s32.totalorder %s124, %s125
      %p139 = scmp.eq.s32.totalorder %s16, 2
      %p140 = por %p138, %p139
      %p142 = scmp.ne.s32.totalorder %s125, %s141
      %p143 = scmp.eq.s32.totalorder %s16, 0
      %p144 = por %p142, %p143
      %s145 = ssub.s32 %s17, %s36
      %s146 = ssub.s32 %s18, %s32
      %s147 = sor.u32 %s145, %s146
      %p148 = scmp.eq.s32.totalorder %s147, 0
      %s150 = sadd.s32 %s149, 1
      %s151 = scalar_select %p148, %s149, %s150
      %p154 = pneg %p148
      %p155 = scmp.eq.s32.totalorder %s10, 2
      %p156 = por %p154, %p155
      %p157 = scmp.ne.s32.totalorder %s149, %s152
      %p158 = scmp.eq.s32.totalorder %s10, 0
      %p159 = por %p157, %p158
      %p160 = scmp.ne.s32.totalorder %s149, %s152
      %p161 = scmp.eq.s32.totalorder %s15, 2
      %p162 = por %p160, %p161
      %p163 = scmp.ne.s32.totalorder %s152, %s153
      %p164 = scmp.eq.s32.totalorder %s15, 0
      %p165 = por %p163, %p164
      %p166 = scmp.ne.s32.totalorder %s152, %s153
      %p167 = scmp.eq.s32.totalorder %s16, 2
      %p168 = por %p166, %p167
      %p170 = scmp.ne.s32.totalorder %s153, %s169
      %p171 = scmp.eq.s32.totalorder %s16, 0
      %p172 = por %p170, %p171
      %p173 = scmp.le.s32.totalorder 1, %s10
      %p174 = scmp.lt.s32.totalorder %s10, 4
      %p175 = pnand %p173, %p174
      %p176 = pneg %p175
      // Predicated region
      $region9: #{_forward.120} parent=5 // pred_check
        _
      $region10: #{_forward.120} parent=5 // pred_check_branch
        %178 = sbr.rel (%p175) target = $region12
      $region11: #{_forward.120} parent=5 // pred_region
        %s179 = ssub.s32 %s10, 1
        // Predicated region
        $region13: #{_forward.120} parent=11 // pred_check
          %p180 = pneg %p111
        $region14: #{_forward.120} parent=11 // pred_check_branch
          %182 = sbr.rel (%p180) target = $region16
        $region15: #{_forward.120} parent=11 // pred_region
          %p183 = scmp.lt.s32.totalorder %s21, 0
          %s184 = scalar_select %p183, %s21, 0
          %s185 = scalar_lea.vmem %s2, %s184
        $region16: #{_forward.120} parent=11 // pred_fallthru
          _
        // Predicated region
        $region17: #{_forward.120} parent=11 // pred_check
          %p186 = pneg %p137
        $region18: #{_forward.120} parent=11 // pred_check_branch
          %188 = sbr.rel (%p186) target = $region20
        $region19: #{_forward.120} parent=11 // pred_region
          %p189 = scmp.lt.s32.totalorder %s21, 0
          %s190 = scalar_select %p189, %s21, 0
          %s191 = scalar_lea.vmem %s3, %s190
        $region20: #{_forward.120} parent=11 // pred_fallthru
          _
      $region12: #{_forward.120} parent=5 // pred_fallthru
        _
      %p192 = scmp.lt.s32.totalorder %s10, 3
      // Predicated region
      $region21: #{_forward.120} parent=5 // pred_check
        %p193 = pneg %p192
      $region22: #{_forward.120} parent=5 // pred_check_branch
        %195 = sbr.rel (%p193) target = $region24
      $region23: #{_forward.120} parent=5 // pred_region
        // Predicated region
        $region25: #{_forward.120} parent=23 // pred_check
          %p196 = pneg %p51
        $region26: #{_forward.120} parent=23 // pred_check_branch
          %198 = sbr.rel (%p196) target = $region28
        $region27: #{_forward.120} parent=23 // pred_region
          %s199 = sand.u32 %s41, 1
          %s200 = sand.u32 %s41, 1
          %s201 = smul.addr %s200, 48
          %s202 = scalar_lea.vmem [#allocation3], %s201
          %s203 = smul.u32 4, %s17
          %s204 = smul.u32 3, %s19
          %s205 = smul.addr %s203, 9
          %s206 = sadd.s32 %s204, %s205
          %s207 = smul.addr %s206, 4
          %s208 = scalar_lea.vmem %s0, %s207
          // Predicated region
          $region29: #{_forward.120} parent=27 // pred_check
            _
          $region30: #{_forward.120} parent=27 // pred_check_branch
            %210 = sbr.rel (0) target = $region32
          $region31: #{_forward.120} parent=27 // pred_region
            // Predicated region
            $region33: #{_forward.120} parent=31 // pred_check
              _
            $region34: #{_forward.120} parent=31 // pred_check_branch
              %212 = sbr.rel (0) target = $region36
            $region35: #{_forward.120} parent=31 // pred_region
              %s213 = scalar_lea.vmem %s208, 8
              %s214 = scalar_lea.vmem %s202, 8 [#allocation3]
              loop: start=0, step=1, limit=1
              $region37: #{_forward.120} parent=35 // loop_pre_header
                _
              $region38: #{_forward.120} parent=35 // loop_header
                %s216 = sphi 0, %s220
                %p217 = scmp.ge.s32.totalorder %s216, 1
                %s221 = sphi %s208, %s208
                %s222 = sphi %s202, %s202
              $region39: #{_forward.120} parent=35 // loop_header_branch
                %219 = sbr.rel (%p217) target = $region43
              $region40: #{_forward.120} parent=35 // loop_body
                %v223 = vld [vmem:[%s221] sm:$0xff]
                %224 = vst [vmem:[%s222] sm:$0xff] %v223
                %v225 = vld [vmem:[%s221 + $0x24] sm:$0xff]
                %226 = vst [vmem:[%s222 + $0xc] sm:$0xff] %v225
                %v227 = vld [vmem:[%s221 + $0x48] sm:$0xff]
                %228 = vst [vmem:[%s222 + $0x18] sm:$0xff] %v227
                %v229 = vld [vmem:[%s221 + $0x6c] sm:$0xff]
                %230 = vst [vmem:[%s222 + $0x24] sm:$0xff] %v229
              $region41: #{_forward.120} parent=35 // loop_footer
                %s220 = sadd.s32 1, %s216
              $region42: #{_forward.120} parent=35 // loop_footer_branch
                %215 = sbr.rel target = $region38
              $region43: #{_forward.120} parent=35 // loop_exit
                _
              %s232 = ssub.s32 16, 1
              loop: start=0, step=1, limit=1
              $region44: #{_forward.120} parent=35 // loop_pre_header
                _
              $region45: #{_forward.120} parent=35 // loop_header
                %s234 = sphi 0, %s238
                %p235 = scmp.ge.s32.totalorder %s234, 1
                %s239 = sphi %s213, %s213
                %s240 = sphi %s214, %s214
              $region46: #{_forward.120} parent=35 // loop_header_branch
                %237 = sbr.rel (%p235) target = $region50
              $region47: #{_forward.120} parent=35 // loop_body
                %v241 = vld [vmem:[%s239] sm:%s232]
                %242 = vst [vmem:[%s240] sm:%s232] %v241
                %v243 = vld [vmem:[%s239 + $0x24] sm:%s232]
                %244 = vst [vmem:[%s240 + $0xc] sm:%s232] %v243
                %v245 = vld [vmem:[%s239 + $0x48] sm:%s232]
                %246 = vst [vmem:[%s240 + $0x18] sm:%s232] %v245
                %v247 = vld [vmem:[%s239 + $0x6c] sm:%s232]
                %248 = vst [vmem:[%s240 + $0x24] sm:%s232] %v247
              $region48: #{_forward.120} parent=35 // loop_footer
                %s238 = sadd.s32 1, %s234
              $region49: #{_forward.120} parent=35 // loop_footer_branch
                %233 = sbr.rel target = $region45
              $region50: #{_forward.120} parent=35 // loop_exit
                _
            $region36: #{_forward.120} parent=31 // pred_fallthru
              _
          $region32: #{_forward.120} parent=27 // pred_fallthru
            _
          %249 = vnop
        $region28: #{_forward.120} parent=23 // pred_fallthru
          _
        // Predicated region
        $region51: #{_forward.120} parent=23 // pred_check
          %p250 = pneg %p79
        $region52: #{_forward.120} parent=23 // pred_check_branch
          %252 = sbr.rel (%p250) target = $region54
        $region53: #{_forward.120} parent=23 // pred_region
          %s253 = smul.u32 48, %s19
          %p254 = scmp.lt.s32.totalorder %s253, 143
          %s255 = scalar_select %p254, %s253, 143
          %p256 = scmp.lt.s32.totalorder %s18, 0
          %s257 = scalar_select %p256, %s18, 0
          %s258 = sadd.s32 %s257, %s255
          %s259 = smul.addr %s258, 4
          %s260 = scalar_lea.vmem %s1, %s259
          %s261 = smul.u32 48, %s19
        $region54: #{_forward.120} parent=23 // pred_fallthru
          _
      $region24: #{_forward.120} parent=5 // pred_fallthru
        _
      %p262 = scmp.le.s32.totalorder 1, %s10
      %p263 = scmp.lt.s32.totalorder %s10, 4
      %p264 = pnand %p262, %p263
      %p265 = pneg %p264
      // Predicated region
      $region55: #{_forward.120} parent=5 // pred_check
        _
      $region56: #{_forward.120} parent=5 // pred_check_branch
        %267 = sbr.rel (%p264) target = $region58
      $region57: #{_forward.120} parent=5 // pred_region
        %s268 = ssub.s32 %s10, 1
        %s269 = sand.u32 %s44, 1
        %s270 = sand.u32 %s44, 1
        %s271 = smul.addr %s270, 48
        %s272 = scalar_lea.vmem [#allocation3], %s271
        // Predicated region
        $region59: #{_forward.120} parent=57 // pred_check
          %p273 = pneg %p57
        $region60: #{_forward.120} parent=57 // pred_check_branch
          %275 = sbr.rel (%p273) target = $region62
        $region61: #{_forward.120} parent=57 // pred_region
          _
        $region62: #{_forward.120} parent=57 // pred_fallthru
          _
        %s276 = sand.u32 %s44, 1
        %s277 = sand.u32 %s44, 1
        %s278 = smul.addr %s277, 48
        %s279 = scalar_lea.vmem [#allocation3], %s278
        %p280 = pneg %p57
        %p281 = pneg %p54
        %s282 = smul.u32 48, %s22
        %p283 = scmp.lt.s32.totalorder %s282, 143
        %s284 = scalar_select %p283, %s282, 143
        %p285 = scmp.lt.s32.totalorder %s21, 0
        %s286 = scalar_select %p285, %s21, 0
        %s287 = sadd.s32 %s286, %s284
        %s288 = smul.addr %s287, 4
        %s289 = scalar_lea.vmem %s1, %s288
        %p290 = pneg %p85
        %p291 = pneg %p82
        %p292 = scmp.lt.s32.totalorder %s21, 0
        %s293 = scalar_select %p292, %s21, 0
        %s294 = scalar_lea.vmem %s2, %s293
        %p295 = pneg %p111
        %p296 = pneg %p108
        %p297 = scmp.lt.s32.totalorder %s21, 0
        %s298 = scalar_select %p297, %s21, 0
        %s299 = scalar_lea.vmem %s3, %s298
        %p300 = pneg %p137
        %p301 = pneg %p134
        %p302 = pneg %p165
        %p303 = pneg %p162
        %s304 = smul.u32 4, %s20
        %p305 = scmp.lt.s32.totalorder %s304, 3
        %s306 = scalar_select %p305, %s304, 3
        %p307 = scmp.lt.s32.totalorder %s21, 0
        %s308 = scalar_select %p307, %s21, 0
        %s309 = sadd.s32 %s308, %s306
        %s310 = smul.addr %s309, 4
        %s311 = scalar_lea.vmem %s4, %s310
        %s312 = smul.u32 4, %s20
        %s313 = smul.u32 3, %s22
        %s314 = smul.u32 48, %s22
        %p315 = scmp.lt.s32.totalorder %s314, 143
        %s316 = scalar_select %p315, %s314, 143
        %p317 = scmp.lt.s32.totalorder %s21, 0
        %s318 = scalar_select %p317, %s21, 0
        %s319 = sadd.s32 %s318, %s316
        %s320 = smul.addr %s319, 4
        %s321 = scalar_lea.vmem %s1, %s320
        %s322 = smul.u32 48, %s22
        %p323 = scmp.lt.s32.totalorder %s21, 0
        %s324 = scalar_select %p323, %s21, 0
        %s325 = scalar_lea.vmem %s2, %s324
        %p326 = scmp.lt.s32.totalorder %s21, 0
        %s327 = scalar_select %p326, %s21, 0
        %s328 = scalar_lea.vmem %s3, %s327
        %s329 = smul.u32 4, %s20
        %p330 = scmp.lt.s32.totalorder %s329, 3
        %s331 = scalar_select %p330, %s329, 3
        %p332 = scmp.lt.s32.totalorder %s21, 0
        %s333 = scalar_select %p332, %s21, 0
        %s334 = sadd.s32 %s333, %s331
        %s335 = smul.addr %s334, 4
        %s336 = scalar_lea.vmem %s4, %s335
        %s337 = smul.u32 4, %s20
        %p339 = scmp.eq.s32.totalorder %s22, 0
        // Predicated region
        $region63: #{_forward.120} parent=57 // pred_check
          %p340 = pneg %p339
        $region64: #{_forward.120} parent=57 // pred_check_branch
          %342 = sbr.rel (%p340) target = $region66
        $region65: #{_forward.120} parent=57 // pred_region
          %343 = vst [vmem:[#allocation2] sm:$0xff] 0.0
          %344 = vst [vmem:[#allocation2 + $0x8] sm:$0xff] 0.0
          %345 = vst [vmem:[#allocation2 + $0x10] sm:$0xff] 0.0
          %346 = vst [vmem:[#allocation2 + $0x18] sm:$0xff] 0.0
        $region66: #{_forward.120} parent=57 // pred_fallthru
          _
        %v347 = vld [vmem:[#allocation2] sm:$0xff]
        %v348 = vld [vmem:[#allocation2 + $0x8] sm:$0xff]
        %v349 = vld [vmem:[#allocation2 + $0x10] sm:$0xff]
        %v350 = vld [vmem:[#allocation2 + $0x18] sm:$0xff]
        %v351 = vld [vmem:[%s272] sm:$0xff]
        %v352 = vld [vmem:[%s272 + $0x8] sm:$0xf]
        %v353 = vld [vmem:[%s272 + $0xc] sm:$0xff]
        %v354 = vld [vmem:[%s272 + $0x14] sm:$0xf]
        %v355 = vld [vmem:[%s272 + $0x18] sm:$0xff]
        %v356 = vld [vmem:[%s272 + $0x20] sm:$0xf]
        %v357 = vld [vmem:[%s272 + $0x24] sm:$0xff]
        %v358 = vld [vmem:[%s272 + $0x2c] sm:$0xf]
        %v359 = vld [vmem:[%s321] sm:$0xf]
        %v360 = vld [vmem:[%s321 + $0x4] sm:$0xf]
        %v361 = vld [vmem:[%s321 + $0x8] sm:$0xf]
        %v362 = vld [vmem:[%s321 + $0xc] sm:$0xf]
        %v363 = vld [vmem:[%s321 + $0x10] sm:$0xf]
        %v364 = vld [vmem:[%s321 + $0x14] sm:$0xf]
        %v365 = vld [vmem:[%s321 + $0x18] sm:$0xf]
        %v366 = vld [vmem:[%s321 + $0x1c] sm:$0xf]
        %v367 = vld [vmem:[%s321 + $0x20] sm:$0xf]
        %v368 = vld [vmem:[%s321 + $0x24] sm:$0xf]
        %v369 = vld [vmem:[%s321 + $0x28] sm:$0xf]
        %v370 = vld [vmem:[%s321 + $0x2c] sm:$0xf]
        %v371 = vld [vmem:[%s321 + $0x30] sm:$0xf]
        %v372 = vld [vmem:[%s321 + $0x34] sm:$0xf]
        %v373 = vld [vmem:[%s321 + $0x38] sm:$0xf]
        %v374 = vld [vmem:[%s321 + $0x3c] sm:$0xf]
        %v375 = vld [vmem:[%s321 + $0x40] sm:$0xf]
        %v376 = vld [vmem:[%s321 + $0x44] sm:$0xf]
        %v377 = vld [vmem:[%s321 + $0x48] sm:$0xf]
        %v378 = vld [vmem:[%s321 + $0x4c] sm:$0xf]
        %v379 = vld [vmem:[%s321 + $0x50] sm:$0xf]
        %v380 = vld [vmem:[%s321 + $0x54] sm:$0xf]
        %v381 = vld [vmem:[%s321 + $0x58] sm:$0xf]
        %v382 = vld [vmem:[%s321 + $0x5c] sm:$0xf]
        %v383 = vld [vmem:[%s321 + $0x60] sm:$0xf]
        %v384 = vld [vmem:[%s321 + $0x64] sm:$0xf]
        %v385 = vld [vmem:[%s321 + $0x68] sm:$0xf]
        %v386 = vld [vmem:[%s321 + $0x6c] sm:$0xf]
        %v387 = vld [vmem:[%s321 + $0x70] sm:$0xf]
        %v388 = vld [vmem:[%s321 + $0x74] sm:$0xf]
        %v389 = vld [vmem:[%s321 + $0x78] sm:$0xf]
        %v390 = vld [vmem:[%s321 + $0x7c] sm:$0xf]
        %v391 = vld [vmem:[%s321 + $0x80] sm:$0xf]
        %v392 = vld [vmem:[%s321 + $0x84] sm:$0xf]
        %v393 = vld [vmem:[%s321 + $0x88] sm:$0xf]
        %v394 = vld [vmem:[%s321 + $0x8c] sm:$0xf]
        %v395 = vld [vmem:[%s321 + $0x90] sm:$0xf]
        %v396 = vld [vmem:[%s321 + $0x94] sm:$0xf]
        %v397 = vld [vmem:[%s321 + $0x98] sm:$0xf]
        %v398 = vld [vmem:[%s321 + $0x9c] sm:$0xf]
        %v399 = vld [vmem:[%s321 + $0xa0] sm:$0xf]
        %v400 = vld [vmem:[%s321 + $0xa4] sm:$0xf]
        %v401 = vld [vmem:[%s321 + $0xa8] sm:$0xf]
        %v402 = vld [vmem:[%s321 + $0xac] sm:$0xf]
        %v403 = vld [vmem:[%s321 + $0xb0] sm:$0xf]
        %v404 = vld [vmem:[%s321 + $0xb4] sm:$0xf]
        %v405 = vld [vmem:[%s321 + $0xb8] sm:$0xf]
        %v406 = vld [vmem:[%s321 + $0xbc] sm:$0xf]
        %v415 = vunpack.c.l.b16 %v351
        %v416 = vunpack.c.h.b16 %v351
        %v417 = vunpack.c.l.b16 %v352
        %v418 = vunpack.c.l.b16 %v353
        %v419 = vunpack.c.h.b16 %v353
        %v420 = vunpack.c.l.b16 %v354
        %v421 = vunpack.c.l.b16 %v355
        %v422 = vunpack.c.h.b16 %v355
        %v423 = vunpack.c.l.b16 %v356
        %v424 = vunpack.c.l.b16 %v357
        %v425 = vunpack.c.h.b16 %v357
        %v426 = vunpack.c.l.b16 %v358
        %v427 = vpack.c.b16 %v418, %v415
        %v428 = vpack.c.b16 %v419, %v416
        %v429 = vpack.c.b16 %v420, %v417
        %v430 = vpack.c.b16 %v424, %v421
        %v431 = vpack.c.b16 %v425, %v422
        %v432 = vpack.c.b16 %v426, %v423
        %v487 = vunpack.c.l.b16 %v359
        %v488 = vunpack.c.l.b16 %v360
        %v489 = vunpack.c.l.b16 %v361
        %v490 = vunpack.c.l.b16 %v362
        %v491 = vunpack.c.l.b16 %v363
        %v492 = vunpack.c.l.b16 %v364
        %v493 = vunpack.c.l.b16 %v365
        %v494 = vunpack.c.l.b16 %v366
        %v495 = vunpack.c.l.b16 %v367
        %v496 = vunpack.c.l.b16 %v368
        %v497 = vunpack.c.l.b16 %v369
        %v498 = vunpack.c.l.b16 %v370
        %v499 = vunpack.c.l.b16 %v371
        %v500 = vunpack.c.l.b16 %v372
        %v501 = vunpack.c.l.b16 %v373
        %v502 = vunpack.c.l.b16 %v374
        %v503 = vunpack.c.l.b16 %v375
        %v504 = vunpack.c.l.b16 %v376
        %v505 = vunpack.c.l.b16 %v377
        %v506 = vunpack.c.l.b16 %v378
        %v507 = vunpack.c.l.b16 %v379
        %v508 = vunpack.c.l.b16 %v380
        %v509 = vunpack.c.l.b16 %v381
        %v510 = vunpack.c.l.b16 %v382
        %v511 = vunpack.c.l.b16 %v383
        %v512 = vunpack.c.l.b16 %v384
        %v513 = vunpack.c.l.b16 %v385
        %v514 = vunpack.c.l.b16 %v386
        %v515 = vunpack.c.l.b16 %v387
        %v516 = vunpack.c.l.b16 %v388
        %v517 = vunpack.c.l.b16 %v389
        %v518 = vunpack.c.l.b16 %v390
        %v519 = vunpack.c.l.b16 %v391
        %v520 = vunpack.c.l.b16 %v392
        %v521 = vunpack.c.l.b16 %v393
        %v522 = vunpack.c.l.b16 %v394
        %v523 = vunpack.c.l.b16 %v395
        %v524 = vunpack.c.l.b16 %v396
        %v525 = vunpack.c.l.b16 %v397
        %v526 = vunpack.c.l.b16 %v398
        %v527 = vunpack.c.l.b16 %v399
        %v528 = vunpack.c.l.b16 %v400
        %v529 = vunpack.c.l.b16 %v401
        %v530 = vunpack.c.l.b16 %v402
        %v531 = vunpack.c.l.b16 %v403
        %v532 = vunpack.c.l.b16 %v404
        %v533 = vunpack.c.l.b16 %v405
        %v534 = vunpack.c.l.b16 %v406
        %v535 = vpack.c.b16 %v488, %v487
        %v536 = vpack.c.b16 %v490, %v489
        %v537 = vpack.c.b16 %v492, %v491
        %v538 = vpack.c.b16 %v494, %v493
        %v539 = vpack.c.b16 %v496, %v495
        %v540 = vpack.c.b16 %v498, %v497
        %v541 = vpack.c.b16 %v500, %v499
        %v542 = vpack.c.b16 %v502, %v501
        %v543 = vpack.c.b16 %v504, %v503
        %v544 = vpack.c.b16 %v506, %v505
        %v545 = vpack.c.b16 %v508, %v507
        %v546 = vpack.c.b16 %v510, %v509
        %v547 = vpack.c.b16 %v512, %v511
        %v548 = vpack.c.b16 %v514, %v513
        %v549 = vpack.c.b16 %v516, %v515
        %v550 = vpack.c.b16 %v518, %v517
        %v551 = vpack.c.b16 %v520, %v519
        %v552 = vpack.c.b16 %v522, %v521
        %v553 = vpack.c.b16 %v524, %v523
        %v554 = vpack.c.b16 %v526, %v525
        %v555 = vpack.c.b16 %v528, %v527
        %v556 = vpack.c.b16 %v530, %v529
        %v557 = vpack.c.b16 %v532, %v531
        %v558 = vpack.c.b16 %v534, %v533
        %583 = vmatprep.subr.bf16.mxu0 0
        %584 = vmatpush1.bf16.msra.mxu0 %v542
        %585 = vmatprep.subr.bf16.mxu0 0
        %586 = vmatpush1.bf16.msra.mxu0 %v541
        %587 = vmatprep.subr.bf16.mxu0 0
        %588 = vmatpush1.bf16.msra.mxu0 %v540
        %589 = vmatprep.subr.bf16.mxu0 0
        %590 = vmatpush1.bf16.msra.mxu0 %v539
        %591 = vmatprep.subr.bf16.mxu0 0
        %592 = vmatpush1.bf16.msra.mxu0 %v538
        %593 = vmatprep.subr.bf16.mxu0 0
        %594 = vmatpush1.bf16.msra.mxu0 %v537
        %595 = vmatprep.subr.bf16.mxu0 0
        %596 = vmatpush1.bf16.msra.mxu0 %v536
        %597 = vmatprep.subr.bf16.mxu0 0
        %598 = vmatpush1.bf16.msra.mxu0 %v535
        %599 = vmatprep.subr.bf16.mxu0 0
        %600 = vmatpush2.bf16.msra.mxu0 %v550
        %601 = vmatprep.subr.bf16.mxu0 0
        %602 = vmatpush2.bf16.msra.mxu0 %v549
        %603 = vmatprep.subr.bf16.mxu0 0
        %604 = vmatpush2.bf16.msra.mxu0 %v548
        %605 = vmatprep.subr.bf16.mxu0 0
        %606 = vmatpush2.bf16.msra.mxu0 %v547
        %607 = vmatprep.subr.bf16.mxu0 0
        %608 = vmatpush2.bf16.msra.mxu0 %v546
        %609 = vmatprep.subr.bf16.mxu0 0
        %610 = vmatpush2.bf16.msra.mxu0 %v545
        %611 = vmatprep.subr.bf16.mxu0 0
        %612 = vmatpush2.bf16.msra.mxu0 %v544
        %613 = vmatprep.subr.bf16.mxu0 0
        %614 = vmatpush2.bf16.msra.mxu0 %v543
        %615 = vmatprep.mubr.bf16.mxu0 %v428
        %616 = vmatmul.mubr.bf16.gmra.mxu0 %v427
        %v617 = vpop.f32.mrf.mxu0
        %v618 = vadd.f32 0.0, %v617
        %v619 = vpop.f32.mrf.mxu0
        %v620 = vpop.f32.mrf.mxu0
        %v621 = vadd.f32 0.0, %v620
        %v622 = vpop.f32.mrf.mxu0
        %623 = vmatprep.mubr.bf16.mxu0 %v431
        %624 = vmatmul.mubr.bf16.gmra.mxu0 %v430
        %v625 = vpop.f32.mrf.mxu0
        %v626 = vadd.f32 0.0, %v625
        %v627 = vpop.f32.mrf.mxu0
        %v628 = vpop.f32.mrf.mxu0
        %v629 = vadd.f32 0.0, %v628
        %v630 = vpop.f32.mrf.mxu0
        %631 = vdwg.mxu0
        %632 = vmatprep.subr.bf16.mxu0 0
        %633 = vmatpush1.bf16.msra.mxu0 %v558
        %634 = vmatprep.subr.bf16.mxu0 0
        %635 = vmatpush1.bf16.msra.mxu0 %v557
        %636 = vmatprep.subr.bf16.mxu0 0
        %637 = vmatpush1.bf16.msra.mxu0 %v556
        %638 = vmatprep.subr.bf16.mxu0 0
        %639 = vmatpush1.bf16.msra.mxu0 %v555
        %640 = vmatprep.subr.bf16.mxu0 0
        %641 = vmatpush1.bf16.msra.mxu0 %v554
        %642 = vmatprep.subr.bf16.mxu0 0
        %643 = vmatpush1.bf16.msra.mxu0 %v553
        %644 = vmatprep.subr.bf16.mxu0 0
        %645 = vmatpush1.bf16.msra.mxu0 %v552
        %646 = vmatprep.subr.bf16.mxu0 0
        %647 = vmatpush1.bf16.msra.mxu0 %v551
        %648 = vmatprep.subr.bf16.mxu0 0
        %649 = vmatpush2.bf16.msra.mxu0 0
        %650 = vmatprep.subr.bf16.mxu0 0
        %651 = vmatpush2.bf16.msra.mxu0 0
        %652 = vmatprep.subr.bf16.mxu0 0
        %653 = vmatpush2.bf16.msra.mxu0 0
        %654 = vmatprep.subr.bf16.mxu0 0
        %655 = vmatpush2.bf16.msra.mxu0 0
        %656 = vmatprep.subr.bf16.mxu0 0
        %657 = vmatpush2.bf16.msra.mxu0 0
        %658 = vmatprep.subr.bf16.mxu0 0
        %659 = vmatpush2.bf16.msra.mxu0 0
        %660 = vmatprep.subr.bf16.mxu0 0
        %661 = vmatpush2.bf16.msra.mxu0 0
        %662 = vmatprep.subr.bf16.mxu0 0
        %663 = vmatpush2.bf16.msra.mxu0 0
        %664 = vmatprep.mubr.bf16.mxu0 0
        %665 = vmatmul.mubr.bf16.gmra.mxu0 %v429
        %v666 = vpop.f32.mrf.mxu0
        %v667 = vadd.f32 %v618, %v666
        %v668 = vpop.f32.mrf.mxu0
        %v669 = vpop.f32.mrf.mxu0
        %v670 = vadd.f32 %v621, %v669
        %v671 = vpop.f32.mrf.mxu0
        %672 = vmatprep.mubr.bf16.mxu0 0
        %673 = vmatmul.mubr.bf16.gmra.mxu0 %v432
        %v674 = vpop.f32.mrf.mxu0
        %v675 = vadd.f32 %v626, %v674
        %v676 = vpop.f32.mrf.mxu0
        %v677 = vpop.f32.mrf.mxu0
        %v678 = vadd.f32 %v629, %v677
        %v679 = vpop.f32.mrf.mxu0
        %680 = vdwg.mxu0
        %v681 = vadd.f32 %v347, %v667
        %v682 = vadd.f32 %v348, %v670
        %v683 = vadd.f32 %v349, %v675
        %v684 = vadd.f32 %v350, %v678
        %685 = vst [vmem:[#allocation2] sm:$0xff] %v681
        %686 = vst [vmem:[#allocation2 + $0x8] sm:$0xff] %v682
        %687 = vst [vmem:[#allocation2 + $0x10] sm:$0xff] %v683
        %688 = vst [vmem:[#allocation2 + $0x18] sm:$0xff] %v684
        %p689 = scmp.eq.s32.totalorder %s22, 2
        // Predicated region
        $region67: #{_forward.120} parent=57 // pred_check
          %p690 = pneg %p689
        $region68: #{_forward.120} parent=57 // pred_check_branch
          %692 = sbr.rel (%p690) target = $region70
        $region69: #{_forward.120} parent=57 // pred_region
          %v693 = vld [vmem:[#allocation2] sm:$0xff]
          %v694 = vld [vmem:[#allocation2 + $0x8] sm:$0xff]
          %v695 = vld [vmem:[#allocation2 + $0x10] sm:$0xff]
          %v696 = vld [vmem:[#allocation2 + $0x18] sm:$0xff]
          %v697 = vld [vmem:[%s325] sm:$0x1]
          %v699 = vlaneseq
          %v700 = vshrl.u32 %v699, 7
          %v701 = vsub.s32 0, %v700
          %v702 = vrot.slane %v697, %v701
          %v704 = vmul.f32 %v693, %v702
          %v705 = vmul.f32 %v694, %v702
          %v706 = vmul.f32 %v695, %v702
          %v707 = vmul.f32 %v696, %v702
          %v708 = vld [vmem:[%s328] sm:$0x1]
          %v710 = vlaneseq
          %v711 = vshrl.u32 %v710, 7
          %v712 = vsub.s32 0, %v711
          %v713 = vrot.slane %v708, %v712
          %v715 = vadd.f32 %v704, %v713
          %v716 = vadd.f32 %v705, %v713
          %v717 = vadd.f32 %v706, %v713
          %v718 = vadd.f32 %v707, %v713
          %v719 = vmax.f32 %v715, 0.0
          %v720 = vmax.f32 %v716, 0.0
          %v721 = vmax.f32 %v717, 0.0
          %v722 = vmax.f32 %v718, 0.0
          %v723 = vpack.c.bf16 %v720, %v719
          %v724 = vpack.c.bf16 %v722, %v721
          %v727 = vunpack.c.l.b16 %v723
          %v728 = vunpack.c.h.b16 %v723
          %v729 = vunpack.c.l.b16 %v724
          %v730 = vunpack.c.h.b16 %v724
          %v731 = vpack.c.b16 %v727, %v727
          %v732 = vpack.c.b16 %v728, %v728
          %v733 = vpack.c.b16 %v729, %v729
          %v734 = vpack.c.b16 %v730, %v730
          %739 = vst [vmem:[%s336] sm:$0xf] %v731
          %740 = vst [vmem:[%s336 + $0x4] sm:$0xf] %v732
          %741 = vst [vmem:[%s336 + $0x8] sm:$0xf] %v733
          %742 = vst [vmem:[%s336 + $0xc] sm:$0xf] %v734
        $region70: #{_forward.120} parent=57 // pred_fallthru
          _
        %s743 = smul.u32 4, %s20
        %p744 = scmp.lt.s32.totalorder %s743, 3
        %s745 = scalar_select %p744, %s743, 3
        %p746 = scmp.lt.s32.totalorder %s21, 0
        %s747 = scalar_select %p746, %s21, 0
        %s748 = sadd.s32 %s747, %s745
        %s749 = smul.addr %s748, 4
        %s750 = scalar_lea.vmem %s4, %s749
        // Predicated region
        $region71: #{_forward.120} parent=57 // pred_check
          %p751 = pneg %p162
        $region72: #{_forward.120} parent=57 // pred_check_branch
          %753 = sbr.rel (%p751) target = $region74
        $region73: #{_forward.120} parent=57 // pred_region
          %s754 = smul.u32 4, %s20
        $region74: #{_forward.120} parent=57 // pred_fallthru
          _
        // Predicated region
        $region75: #{_forward.120} parent=57 // pred_check
          %p755 = pneg %p162
        $region76: #{_forward.120} parent=57 // pred_check_branch
          %757 = sbr.rel (%p755) target = $region78
        $region77: #{_forward.120} parent=57 // pred_region
          %s758 = smul.u32 4, %s20
          %p759 = scmp.lt.s32.totalorder %s758, 3
          %s760 = scalar_select %p759, %s758, 3
          %p761 = scmp.lt.s32.totalorder %s21, 0
          %s762 = scalar_select %p761, %s21, 0
          %s763 = sadd.s32 %s762, %s760
          %s764 = smul.addr %s763, 4
          %s765 = scalar_lea.vmem %s4, %s764
        $region78: #{_forward.120} parent=57 // pred_fallthru
          _
      $region58: #{_forward.120} parent=5 // pred_fallthru
        _
      %p766 = scmp.le.s32.totalorder 2, %s10
      // Predicated region
      $region79: #{_forward.120} parent=5 // pred_check
        %p767 = pneg %p766
      $region80: #{_forward.120} parent=5 // pred_check_branch
        %769 = sbr.rel (%p767) target = $region82
      $region81: #{_forward.120} parent=5 // pred_region
        %s770 = ssub.s32 %s10, 2
      $region82: #{_forward.120} parent=5 // pred_fallthru
        _
    $region6: #{_forward.120} parent=1 // loop_footer
      %s14 = sadd.s32 1, %s10
    $region7: #{_forward.120} parent=1 // loop_footer_branch
      %9 = sbr.rel target = $region3
    $region8: #{_forward.120} parent=1 // loop_exit
      _

// kernel: _forward.122
$region0: #{_forward.122}
  #allocation0 [shape = 'u32[]', space=smem, size = 0x4, offset = 0x4, fixed_abs, tag = 'smem constant byte address 0x4 - core index']
  #allocation1 [shape = 'u32[144,128]{1,0:T(1,128)}', space=vmem, size = 0x12000, scoped, tag = 'internal scratch']
  #allocation2 [shape = 'f32[32,128]{1,0:T(8,128)}', space=vmem, size = 0x4000, scoped, tag = 'scratch operand']
  %s0 = inlined_call_operand.vmem [shape: bf16[32,128], index: 0, kind: input, shape index: {}]
  %s1 = inlined_call_operand.vmem [shape: bf16[128,128], index: 1, kind: input, shape index: {}]
  %s2 = inlined_call_operand.vmem [shape: f32[1,128], index: 2, kind: input, shape index: {}]
  %s3 = inlined_call_operand.vmem [shape: f32[1,128], index: 3, kind: input, shape index: {}]
  %s4 = inlined_call_operand.vmem [shape: bf16[32,128], index: 4, kind: output, shape index: {}]
  %s5 = sld [smem:[#allocation0]]
  $region34: #{_forward.122} parent=0
    _
  %s7 = ssub.s32 1, %s5
  %s8 = scalar_select 0, %s7, %s5
  // Predicated region
  $region2: #{_forward.122} parent=0 // pred_check
    _
  $region3: #{_forward.122} parent=0 // pred_check_branch
    %10 = sbr.rel (0) target = $region5
  $region4: #{_forward.122} parent=0 // pred_region
    _
  $region5: #{_forward.122} parent=0 // pred_fallthru
    _
  // Predicated region
  $region6: #{_forward.122} parent=0 // pred_check
    _
  $region7: #{_forward.122} parent=0 // pred_check_branch
    %12 = sbr.rel (0) target = $region9
  $region8: #{_forward.122} parent=0 // pred_region
    _
  $region9: #{_forward.122} parent=0 // pred_fallthru
    _
  // Predicated region
  $region10: #{_forward.122} parent=0 // pred_check
    _
  $region11: #{_forward.122} parent=0 // pred_check_branch
    %14 = sbr.rel (0) target = $region13
  $region12: #{_forward.122} parent=0 // pred_region
    _
  $region13: #{_forward.122} parent=0 // pred_fallthru
    _
  // Predicated region
  $region14: #{_forward.122} parent=0 // pred_check
    _
  $region15: #{_forward.122} parent=0 // pred_check_branch
    %16 = sbr.rel (0) target = $region17
  $region16: #{_forward.122} parent=0 // pred_region
    _
  $region17: #{_forward.122} parent=0 // pred_fallthru
    _
  %p18 = scmp.eq.s32.totalorder 0, 0
  // Predicated region
  $region18: #{_forward.122} parent=0 // pred_check
    %p19 = pneg %p18
  $region19: #{_forward.122} parent=0 // pred_check_branch
    %21 = sbr.rel (%p19) target = $region21
  $region20: #{_forward.122} parent=0 // pred_region
    %22 = vst [vmem:[#allocation2] sm:$0xff] 0.0
    %23 = vst [vmem:[#allocation2 + $0x8] sm:$0xff] 0.0
    %24 = vst [vmem:[#allocation2 + $0x10] sm:$0xff] 0.0
    %25 = vst [vmem:[#allocation2 + $0x18] sm:$0xff] 0.0
  $region21: #{_forward.122} parent=0 // pred_fallthru
    _
  %v26 = vld [vmem:[#allocation2] sm:$0xff]
  %v27 = vld [vmem:[#allocation2 + $0x8] sm:$0xff]
  %v28 = vld [vmem:[#allocation2 + $0x10] sm:$0xff]
  %v29 = vld [vmem:[#allocation2 + $0x18] sm:$0xff]
  %v30 = vld [vmem:[%s0] sm:$0xf]
  %v31 = vld [vmem:[%s0 + $0x4] sm:$0xf]
  %v32 = vld [vmem:[%s0 + $0x8] sm:$0xf]
  %v33 = vld [vmem:[%s0 + $0xc] sm:$0xf]
  %v34 = vld [vmem:[%s1] sm:$0xf]
  %v35 = vld [vmem:[%s1 + $0x4] sm:$0xf]
  %v36 = vld [vmem:[%s1 + $0x8] sm:$0xf]
  %v37 = vld [vmem:[%s1 + $0xc] sm:$0xf]
  %v38 = vld [vmem:[%s1 + $0x10] sm:$0xf]
  %v39 = vld [vmem:[%s1 + $0x14] sm:$0xf]
  %v40 = vld [vmem:[%s1 + $0x18] sm:$0xf]
  %v41 = vld [vmem:[%s1 + $0x1c] sm:$0xf]
  %v42 = vld [vmem:[%s1 + $0x20] sm:$0xf]
  %v43 = vld [vmem:[%s1 + $0x24] sm:$0xf]
  %v44 = vld [vmem:[%s1 + $0x28] sm:$0xf]
  %v45 = vld [vmem:[%s1 + $0x2c] sm:$0xf]
  %v46 = vld [vmem:[%s1 + $0x30] sm:$0xf]
  %v47 = vld [vmem:[%s1 + $0x34] sm:$0xf]
  %v48 = vld [vmem:[%s1 + $0x38] sm:$0xf]
  %v49 = vld [vmem:[%s1 + $0x3c] sm:$0xf]
  %v54 = vunpack.c.l.b16 %v30
  %v55 = vunpack.c.l.b16 %v31
  %v56 = vunpack.c.l.b16 %v32
  %v57 = vunpack.c.l.b16 %v33
  %v58 = vpack.c.b16 %v55, %v54
  %v59 = vpack.c.b16 %v57, %v56
  %v78 = vunpack.c.l.b16 %v34
  %v79 = vunpack.c.l.b16 %v35
  %v80 = vunpack.c.l.b16 %v36
  %v81 = vunpack.c.l.b16 %v37
  %v82 = vunpack.c.l.b16 %v38
  %v83 = vunpack.c.l.b16 %v39
  %v84 = vunpack.c.l.b16 %v40
  %v85 = vunpack.c.l.b16 %v41
  %v86 = vunpack.c.l.b16 %v42
  %v87 = vunpack.c.l.b16 %v43
  %v88 = vunpack.c.l.b16 %v44
  %v89 = vunpack.c.l.b16 %v45
  %v90 = vunpack.c.l.b16 %v46
  %v91 = vunpack.c.l.b16 %v47
  %v92 = vunpack.c.l.b16 %v48
  %v93 = vunpack.c.l.b16 %v49
  %v94 = vpack.c.b16 %v79, %v78
  %v95 = vpack.c.b16 %v81, %v80
  %v96 = vpack.c.b16 %v83, %v82
  %v97 = vpack.c.b16 %v85, %v84
  %v98 = vpack.c.b16 %v87, %v86
  %v99 = vpack.c.b16 %v89, %v88
  %v100 = vpack.c.b16 %v91, %v90
  %v101 = vpack.c.b16 %v93, %v92
  %110 = vmatprep.subr.bf16.mxu0 0
  %111 = vmatpush1.bf16.msra.mxu0 %v101
  %112 = vmatprep.subr.bf16.mxu0 0
  %113 = vmatpush1.bf16.msra.mxu0 %v100
  %114 = vmatprep.subr.bf16.mxu0 0
  %115 = vmatpush1.bf16.msra.mxu0 %v99
  %116 = vmatprep.subr.bf16.mxu0 0
  %117 = vmatpush1.bf16.msra.mxu0 %v98
  %118 = vmatprep.subr.bf16.mxu0 0
  %119 = vmatpush1.bf16.msra.mxu0 %v97
  %120 = vmatprep.subr.bf16.mxu0 0
  %121 = vmatpush1.bf16.msra.mxu0 %v96
  %122 = vmatprep.subr.bf16.mxu0 0
  %123 = vmatpush1.bf16.msra.mxu0 %v95
  %124 = vmatprep.subr.bf16.mxu0 0
  %125 = vmatpush1.bf16.msra.mxu0 %v94
  %126 = vmatprep.subr.bf16.mxu0 0
  %127 = vmatpush2.bf16.msra.mxu0 0
  %128 = vmatprep.subr.bf16.mxu0 0
  %129 = vmatpush2.bf16.msra.mxu0 0
  %130 = vmatprep.subr.bf16.mxu0 0
  %131 = vmatpush2.bf16.msra.mxu0 0
  %132 = vmatprep.subr.bf16.mxu0 0
  %133 = vmatpush2.bf16.msra.mxu0 0
  %134 = vmatprep.subr.bf16.mxu0 0
  %135 = vmatpush2.bf16.msra.mxu0 0
  %136 = vmatprep.subr.bf16.mxu0 0
  %137 = vmatpush2.bf16.msra.mxu0 0
  %138 = vmatprep.subr.bf16.mxu0 0
  %139 = vmatpush2.bf16.msra.mxu0 0
  %140 = vmatprep.subr.bf16.mxu0 0
  %141 = vmatpush2.bf16.msra.mxu0 0
  %142 = vmatprep.mubr.bf16.mxu0 0
  %143 = vmatmul.mubr.bf16.gmra.mxu0 %v58
  %v144 = vpop.f32.mrf.mxu0
  %v145 = vadd.f32 0.0, %v144
  %v146 = vpop.f32.mrf.mxu0
  %v147 = vpop.f32.mrf.mxu0
  %v148 = vadd.f32 0.0, %v147
  %v149 = vpop.f32.mrf.mxu0
  %150 = vmatprep.mubr.bf16.mxu0 0
  %151 = vmatmul.mubr.bf16.gmra.mxu0 %v59
  %v152 = vpop.f32.mrf.mxu0
  %v153 = vadd.f32 0.0, %v152
  %v154 = vpop.f32.mrf.mxu0
  %v155 = vpop.f32.mrf.mxu0
  %v156 = vadd.f32 0.0, %v155
  %v157 = vpop.f32.mrf.mxu0
  %158 = vdwg.mxu0
  %v159 = vadd.f32 %v26, %v145
  %v160 = vadd.f32 %v27, %v148
  %v161 = vadd.f32 %v28, %v153
  %v162 = vadd.f32 %v29, %v156
  %163 = vst [vmem:[#allocation2] sm:$0xff] %v159
  %164 = vst [vmem:[#allocation2 + $0x8] sm:$0xff] %v160
  %165 = vst [vmem:[#allocation2 + $0x10] sm:$0xff] %v161
  %166 = vst [vmem:[#allocation2 + $0x18] sm:$0xff] %v162
  // Predicated region
  $region22: #{_forward.122} parent=0 // pred_check
    %p167 = pneg %p18
  $region23: #{_forward.122} parent=0 // pred_check_branch
    %169 = sbr.rel (%p167) target = $region25
  $region24: #{_forward.122} parent=0 // pred_region
    %v170 = vld [vmem:[#allocation2] sm:$0xff]
    %v171 = vld [vmem:[#allocation2 + $0x8] sm:$0xff]
    %v172 = vld [vmem:[#allocation2 + $0x10] sm:$0xff]
    %v173 = vld [vmem:[#allocation2 + $0x18] sm:$0xff]
    %v174 = vld [vmem:[%s2] sm:$0x1]
    %v176 = vlaneseq
    %v177 = vshrl.u32 %v176, 7
    %v178 = vsub.s32 0, %v177
    %v179 = vrot.slane %v174, %v178
    %v181 = vmul.f32 %v170, %v179
    %v182 = vmul.f32 %v171, %v179
    %v183 = vmul.f32 %v172, %v179
    %v184 = vmul.f32 %v173, %v179
    %v185 = vld [vmem:[%s3] sm:$0x1]
    %v187 = vlaneseq
    %v188 = vshrl.u32 %v187, 7
    %v189 = vsub.s32 0, %v188
    %v190 = vrot.slane %v185, %v189
    %v192 = vadd.f32 %v181, %v190
    %v193 = vadd.f32 %v182, %v190
    %v194 = vadd.f32 %v183, %v190
    %v195 = vadd.f32 %v184, %v190
    %v196 = vmax.f32 %v192, 0.0
    %v197 = vmax.f32 %v193, 0.0
    %v198 = vmax.f32 %v194, 0.0
    %v199 = vmax.f32 %v195, 0.0
    %v200 = vpack.c.bf16 %v197, %v196
    %v201 = vpack.c.bf16 %v199, %v198
    %v204 = vunpack.c.l.b16 %v200
    %v205 = vunpack.c.h.b16 %v200
    %v206 = vunpack.c.l.b16 %v201
    %v207 = vunpack.c.h.b16 %v201
    %v208 = vpack.c.b16 %v204, %v204
    %v209 = vpack.c.b16 %v205, %v205
    %v210 = vpack.c.b16 %v206, %v206
    %v211 = vpack.c.b16 %v207, %v207
    %216 = vst [vmem:[%s4] sm:$0xf] %v208
    %217 = vst [vmem:[%s4 + $0x4] sm:$0xf] %v209
    %218 = vst [vmem:[%s4 + $0x8] sm:$0xf] %v210
    %219 = vst [vmem:[%s4 + $0xc] sm:$0xf] %v211
  $region25: #{_forward.122} parent=0 // pred_fallthru
    _
  // Predicated region
  $region26: #{_forward.122} parent=0 // pred_check
    _
  $region27: #{_forward.122} parent=0 // pred_check_branch
    %221 = sbr.rel (0) target = $region29
  $region28: #{_forward.122} parent=0 // pred_region
    _
  $region29: #{_forward.122} parent=0 // pred_fallthru
    _
  // Predicated region
  $region30: #{_forward.122} parent=0 // pred_check
    _
  $region31: #{_forward.122} parent=0 // pred_check_branch
    %223 = sbr.rel (0) target = $region33
  $region32: #{_forward.122} parent=0 // pred_region
    _
  $region33: #{_forward.122} parent=0 // pred_fallthru
    _

// kernel: _forward.133
$region0: #{_forward.133}
  #allocation0 [shape = 'u32[]', space=smem, size = 0x4, offset = 0x4, fixed_abs, tag = 'smem constant byte address 0x4 - core index']
  #allocation1 [shape = 'u32[144,128]{1,0:T(1,128)}', space=vmem, size = 0x12000, scoped, tag = 'internal scratch']
  #allocation2 [shape = 'f32[8,128]{1,0:T(8,128)}', space=vmem, size = 0x1000, scoped, tag = 'scratch operand']
  %s0 = inlined_call_operand.vmem [shape: bf16[8,1152], index: 0, kind: input, shape index: {}]
  %s1 = inlined_call_operand.vmem [shape: bf16[1152,128], index: 1, kind: input, shape index: {}]
  %s2 = inlined_call_operand.vmem [shape: f32[1,128], index: 2, kind: input, shape index: {}]
  %s3 = inlined_call_operand.vmem [shape: f32[1,128], index: 3, kind: input, shape index: {}]
  %s4 = inlined_call_operand.vmem [shape: bf16[8,128], index: 4, kind: output, shape index: {}]
  %s5 = sld [smem:[#allocation0]]
  $region57: #{_forward.133} parent=0
    _
  %s7 = ssub.s32 1, %s5
  %s8 = scalar_select 0, %s7, %s5
  loop: start=0, step=1, limit=5
  $region2: #{_forward.133} parent=0 // loop_pre_header
    _
  $region3: #{_forward.133} parent=0 // loop_header
    %s10 = sphi 0, %s14
    %p11 = scmp.ge.s32.totalorder %s10, 5
    %s17 = sphi 0, %s36
    %s18 = sphi 0, %s32
    %s19 = sphi 0, %s28
    %s20 = sphi 0, %s17
    %s21 = sphi 0, %s18
    %s22 = sphi 0, %s19
    %s23 = sphi 0, %s20
    %s24 = sphi 0, %s21
    %s25 = sphi 0, %s22
    %s41 = sphi 0, %s43
    %s44 = sphi 0, %s41
    %s45 = sphi 0, %s44
    %s61 = sphi 0, %s45
    %s69 = sphi 0, %s71
    %s72 = sphi 0, %s69
    %s73 = sphi 0, %s72
    %s89 = sphi 0, %s73
    %s95 = sphi 0, %s97
    %s98 = sphi 0, %s95
    %s99 = sphi 0, %s98
    %s115 = sphi 0, %s99
    %s121 = sphi 0, %s123
    %s124 = sphi 0, %s121
    %s125 = sphi 0, %s124
    %s141 = sphi 0, %s125
    %s149 = sphi 0, %s151
    %s152 = sphi 0, %s149
    %s153 = sphi 0, %s152
    %s169 = sphi 0, %s153
  $region4: #{_forward.133} parent=0 // loop_header_branch
    %13 = sbr.rel (%p11) target = $region8
  $region5: #{_forward.133} parent=0 // loop_body
    %s15 = ssub.s32 %s10, 1
    %s16 = ssub.s32 %s10, 2
    %s26 = sadd.s32 1, %s19
    %p27 = scmp.ge.s32.totalorder %s26, 3
    %s28 = scalar_select %p27, 0, %s26
    %s29 = sadd.s32 1, %s18
    %s30 = scalar_select %p27, %s29, %s18
    %p31 = scmp.ge.s32.totalorder %s30, 1
    %s32 = scalar_select %p31, 0, %s30
    %s33 = sadd.s32 1, %s17
    %s34 = scalar_select %p31, %s33, %s17
    %p35 = scmp.ge.s32.totalorder %s34, 1
    %s36 = scalar_select %p35, 0, %s34
    %s37 = ssub.s32 %s17, %s36
    %s38 = ssub.s32 %s19, %s28
    %s39 = sor.u32 %s37, %s38
    %p40 = scmp.eq.s32.totalorder %s39, 0
    %s42 = sadd.s32 %s41, 1
    %s43 = scalar_select %p40, %s41, %s42
    %p46 = pneg %p40
    %p47 = scmp.eq.s32.totalorder %s10, 2
    %p48 = por %p46, %p47
    %p49 = scmp.ne.s32.totalorder %s41, %s44
    %p50 = scmp.eq.s32.totalorder %s10, 0
    %p51 = por %p49, %p50
    %p52 = scmp.ne.s32.totalorder %s41, %s44
    %p53 = scmp.eq.s32.totalorder %s15, 2
    %p54 = por %p52, %p53
    %p55 = scmp.ne.s32.totalorder %s44, %s45
    %p56 = scmp.eq.s32.totalorder %s15, 0
    %p57 = por %p55, %p56
    %p58 = scmp.ne.s32.totalorder %s44, %s45
    %p59 = scmp.eq.s32.totalorder %s16, 2
    %p60 = por %p58, %p59
    %p62 = scmp.ne.s32.totalorder %s45, %s61
    %p63 = scmp.eq.s32.totalorder %s16, 0
    %p64 = por %p62, %p63
    %s65 = ssub.s32 %s19, %s28
    %s66 = ssub.s32 %s18, %s32
    %s67 = sor.u32 %s65, %s66
    %p68 = scmp.eq.s32.totalorder %s67, 0
    %s70 = sadd.s32 %s69, 1
    %s71 = scalar_select %p68, %s69, %s70
    %p74 = pneg %p68
    %p75 = scmp.eq.s32.totalorder %s10, 2
    %p76 = por %p74, %p75
    %p77 = scmp.ne.s32.totalorder %s69, %s72
    %p78 = scmp.eq.s32.totalorder %s10, 0
    %p79 = por %p77, %p78
    %p80 = scmp.ne.s32.totalorder %s69, %s72
    %p81 = scmp.eq.s32.totalorder %s15, 2
    %p82 = por %p80, %p81
    %p83 = scmp.ne.s32.totalorder %s72, %s73
    %p84 = scmp.eq.s32.totalorder %s15, 0
    %p85 = por %p83, %p84
    %p86 = scmp.ne.s32.totalorder %s72, %s73
    %p87 = scmp.eq.s32.totalorder %s16, 2
    %p88 = por %p86, %p87
    %p90 = scmp.ne.s32.totalorder %s73, %s89
    %p91 = scmp.eq.s32.totalorder %s16, 0
    %p92 = por %p90, %p91
    %s93 = ssub.s32 %s18, %s32
    %p94 = scmp.eq.s32.totalorder %s93, 0
    %s96 = sadd.s32 %s95, 1
    %s97 = scalar_select %p94, %s95, %s96
    %p100 = pneg %p94
    %p101 = scmp.eq.s32.totalorder %s10, 2
    %p102 = por %p100, %p101
    %p103 = scmp.ne.s32.totalorder %s95, %s98
    %p104 = scmp.eq.s32.totalorder %s10, 0
    %p105 = por %p103, %p104
    %p106 = scmp.ne.s32.totalorder %s95, %s98
    %p107 = scmp.eq.s32.totalorder %s15, 2
    %p108 = por %p106, %p107
    %p109 = scmp.ne.s32.totalorder %s98, %s99
    %p110 = scmp.eq.s32.totalorder %s15, 0
    %p111 = por %p109, %p110
    %p112 = scmp.ne.s32.totalorder %s98, %s99
    %p113 = scmp.eq.s32.totalorder %s16, 2
    %p114 = por %p112, %p113
    %p116 = scmp.ne.s32.totalorder %s99, %s115
    %p117 = scmp.eq.s32.totalorder %s16, 0
    %p118 = por %p116, %p117
    %s119 = ssub.s32 %s18, %s32
    %p120 = scmp.eq.s32.totalorder %s119, 0
    %s122 = sadd.s32 %s121, 1
    %s123 = scalar_select %p120, %s121, %s122
    %p126 = pneg %p120
    %p127 = scmp.eq.s32.totalorder %s10, 2
    %p128 = por %p126, %p127
    %p129 = scmp.ne.s32.totalorder %s121, %s124
    %p130 = scmp.eq.s32.totalorder %s10, 0
    %p131 = por %p129, %p130
    %p132 = scmp.ne.s32.totalorder %s121, %s124
    %p133 = scmp.eq.s32.totalorder %s15, 2
    %p134 = por %p132, %p133
    %p135 = scmp.ne.s32.totalorder %s124, %s125
    %p136 = scmp.eq.s32.totalorder %s15, 0
    %p137 = por %p135, %p136
    %p138 = scmp.ne.s32.totalorder %s124, %s125
    %p139 = scmp.eq.s32.totalorder %s16, 2
    %p140 = por %p138, %p139
    %p142 = scmp.ne.s32.totalorder %s125, %s141
    %p143 = scmp.eq.s32.totalorder %s16, 0
    %p144 = por %p142, %p143
    %s145 = ssub.s32 %s17, %s36
    %s146 = ssub.s32 %s18, %s32
    %s147 = sor.u32 %s145, %s146
    %p148 = scmp.eq.s32.totalorder %s147, 0
    %s150 = sadd.s32 %s149, 1
    %s151 = scalar_select %p148, %s149, %s150
    %p154 = pneg %p148
    %p155 = scmp.eq.s32.totalorder %s10, 2
    %p156 = por %p154, %p155
    %p157 = scmp.ne.s32.totalorder %s149, %s152
    %p158 = scmp.eq.s32.totalorder %s10, 0
    %p159 = por %p157, %p158
    %p160 = scmp.ne.s32.totalorder %s149, %s152
    %p161 = scmp.eq.s32.totalorder %s15, 2
    %p162 = por %p160, %p161
    %p163 = scmp.ne.s32.totalorder %s152, %s153
    %p164 = scmp.eq.s32.totalorder %s15, 0
    %p165 = por %p163, %p164
    %p166 = scmp.ne.s32.totalorder %s152, %s153
    %p167 = scmp.eq.s32.totalorder %s16, 2
    %p168 = por %p166, %p167
    %p170 = scmp.ne.s32.totalorder %s153, %s169
    %p171 = scmp.eq.s32.totalorder %s16, 0
    %p172 = por %p170, %p171
    %p173 = scmp.le.s32.totalorder 1, %s10
    %p174 = scmp.lt.s32.totalorder %s10, 4
    %p175 = pnand %p173, %p174
    %p176 = pneg %p175
    // Predicated region
    $region9: #{_forward.133} parent=5 // pred_check
      _
    $region10: #{_forward.133} parent=5 // pred_check_branch
      %178 = sbr.rel (%p175) target = $region12
    $region11: #{_forward.133} parent=5 // pred_region
      %s179 = ssub.s32 %s10, 1
      // Predicated region
      $region13: #{_forward.133} parent=11 // pred_check
        %p180 = pneg %p111
      $region14: #{_forward.133} parent=11 // pred_check_branch
        %182 = sbr.rel (%p180) target = $region16
      $region15: #{_forward.133} parent=11 // pred_region
        %p183 = scmp.lt.s32.totalorder %s21, 0
        %s184 = scalar_select %p183, %s21, 0
        %s185 = scalar_lea.vmem %s2, %s184
      $region16: #{_forward.133} parent=11 // pred_fallthru
        _
      // Predicated region
      $region17: #{_forward.133} parent=11 // pred_check
        %p186 = pneg %p137
      $region18: #{_forward.133} parent=11 // pred_check_branch
        %188 = sbr.rel (%p186) target = $region20
      $region19: #{_forward.133} parent=11 // pred_region
        %p189 = scmp.lt.s32.totalorder %s21, 0
        %s190 = scalar_select %p189, %s21, 0
        %s191 = scalar_lea.vmem %s3, %s190
      $region20: #{_forward.133} parent=11 // pred_fallthru
        _
    $region12: #{_forward.133} parent=5 // pred_fallthru
      _
    %p192 = scmp.lt.s32.totalorder %s10, 3
    // Predicated region
    $region21: #{_forward.133} parent=5 // pred_check
      %p193 = pneg %p192
    $region22: #{_forward.133} parent=5 // pred_check_branch
      %195 = sbr.rel (%p193) target = $region24
    $region23: #{_forward.133} parent=5 // pred_region
      // Predicated region
      $region25: #{_forward.133} parent=23 // pred_check
        %p196 = pneg %p51
      $region26: #{_forward.133} parent=23 // pred_check_branch
        %198 = sbr.rel (%p196) target = $region28
      $region27: #{_forward.133} parent=23 // pred_region
        %s199 = smul.u32 3, %s19
        %p200 = scmp.lt.s32.totalorder %s17, 0
        %s201 = scalar_select %p200, %s17, 0
        %p202 = scmp.lt.s32.totalorder %s199, 8
        %s203 = scalar_select %p202, %s199, 8
        %s204 = smul.addr %s201, 9
        %s205 = sadd.s32 %s203, %s204
        %s206 = smul.addr %s205, 4
        %s207 = scalar_lea.vmem %s0, %s206
        %s208 = smul.u32 3, %s19
      $region28: #{_forward.133} parent=23 // pred_fallthru
        _
      // Predicated region
      $region29: #{_forward.133} parent=23 // pred_check
        %p209 = pneg %p79
      $region30: #{_forward.133} parent=23 // pred_check_branch
        %211 = sbr.rel (%p209) target = $region32
      $region31: #{_forward.133} parent=23 // pred_region
        %s212 = smul.u32 48, %s19
        %p213 = scmp.lt.s32.totalorder %s212, 143
        %s214 = scalar_select %p213, %s212, 143
        %p215 = scmp.lt.s32.totalorder %s18, 0
        %s216 = scalar_select %p215, %s18, 0
        %s217 = sadd.s32 %s216, %s214
        %s218 = smul.addr %s217, 4
        %s219 = scalar_lea.vmem %s1, %s218
        %s220 = smul.u32 48, %s19
      $region32: #{_forward.133} parent=23 // pred_fallthru
        _
    $region24: #{_forward.133} parent=5 // pred_fallthru
      _
    %p221 = scmp.le.s32.totalorder 1, %s10
    %p222 = scmp.lt.s32.totalorder %s10, 4
    %p223 = pnand %p221, %p222
    %p224 = pneg %p223
    // Predicated region
    $region33: #{_forward.133} parent=5 // pred_check
      _
    $region34: #{_forward.133} parent=5 // pred_check_branch
      %226 = sbr.rel (%p223) target = $region36
    $region35: #{_forward.133} parent=5 // pred_region
      %s227 = ssub.s32 %s10, 1
      %s228 = smul.u32 3, %s22
      %p229 = scmp.lt.s32.totalorder %s20, 0
      %s230 = scalar_select %p229, %s20, 0
      %p231 = scmp.lt.s32.totalorder %s228, 8
      %s232 = scalar_select %p231, %s228, 8
      %s233 = smul.addr %s230, 9
      %s234 = sadd.s32 %s232, %s233
      %s235 = smul.addr %s234, 4
      %s236 = scalar_lea.vmem %s0, %s235
      %p237 = pneg %p57
      %p238 = pneg %p54
      %s239 = smul.u32 48, %s22
      %p240 = scmp.lt.s32.totalorder %s239, 143
      %s241 = scalar_select %p240, %s239, 143
      %p242 = scmp.lt.s32.totalorder %s21, 0
      %s243 = scalar_select %p242, %s21, 0
      %s244 = sadd.s32 %s243, %s241
      %s245 = smul.addr %s244, 4
      %s246 = scalar_lea.vmem %s1, %s245
      %p247 = pneg %p85
      %p248 = pneg %p82
      %p249 = scmp.lt.s32.totalorder %s21, 0
      %s250 = scalar_select %p249, %s21, 0
      %s251 = scalar_lea.vmem %s2, %s250
      %p252 = pneg %p111
      %p253 = pneg %p108
      %p254 = scmp.lt.s32.totalorder %s21, 0
      %s255 = scalar_select %p254, %s21, 0
      %s256 = scalar_lea.vmem %s3, %s255
      %p257 = pneg %p137
      %p258 = pneg %p134
      %p259 = pneg %p165
      %p260 = pneg %p162
      %p261 = scmp.lt.s32.totalorder %s20, 0
      %s262 = scalar_select %p261, %s20, 0
      %p263 = scmp.lt.s32.totalorder %s21, 0
      %s264 = scalar_select %p263, %s21, 0
      %s265 = sadd.s32 %s264, %s262
      %s266 = smul.addr %s265, 4
      %s267 = scalar_lea.vmem %s4, %s266
      %s268 = smul.u32 3, %s22
      %p269 = scmp.lt.s32.totalorder %s20, 0
      %s270 = scalar_select %p269, %s20, 0
      %p271 = scmp.lt.s32.totalorder %s268, 8
      %s272 = scalar_select %p271, %s268, 8
      %s273 = smul.addr %s270, 9
      %s274 = sadd.s32 %s272, %s273
      %s275 = smul.addr %s274, 4
      %s276 = scalar_lea.vmem %s0, %s275
      %s277 = smul.u32 3, %s22
      %s278 = smul.u32 48, %s22
      %p279 = scmp.lt.s32.totalorder %s278, 143
      %s280 = scalar_select %p279, %s278, 143
      %p281 = scmp.lt.s32.totalorder %s21, 0
      %s282 = scalar_select %p281, %s21, 0
      %s283 = sadd.s32 %s282, %s280
      %s284 = smul.addr %s283, 4
      %s285 = scalar_lea.vmem %s1, %s284
      %s286 = smul.u32 48, %s22
      %p287 = scmp.lt.s32.totalorder %s21, 0
      %s288 = scalar_select %p287, %s21, 0
      %s289 = scalar_lea.vmem %s2, %s288
      %p290 = scmp.lt.s32.totalorder %s21, 0
      %s291 = scalar_select %p290, %s21, 0
      %s292 = scalar_lea.vmem %s3, %s291
      %p293 = scmp.lt.s32.totalorder %s20, 0
      %s294 = scalar_select %p293, %s20, 0
      %p295 = scmp.lt.s32.totalorder %s21, 0
      %s296 = scalar_select %p295, %s21, 0
      %s297 = sadd.s32 %s296, %s294
      %s298 = smul.addr %s297, 4
      %s299 = scalar_lea.vmem %s4, %s298
      %p301 = scmp.eq.s32.totalorder %s22, 0
      // Predicated region
      $region37: #{_forward.133} parent=35 // pred_check
        %p302 = pneg %p301
      $region38: #{_forward.133} parent=35 // pred_check_branch
        %304 = sbr.rel (%p302) target = $region40
      $region39: #{_forward.133} parent=35 // pred_region
        %305 = vst [vmem:[#allocation2] sm:$0xff] 0.0
      $region40: #{_forward.133} parent=35 // pred_fallthru
        _
      %v306 = vld [vmem:[#allocation2] sm:$0xff]
      %v307 = vld [vmem:[%s276] sm:$0xff]
      %v308 = vld [vmem:[%s276 + $0x8] sm:$0xf]
      %v309 = vld [vmem:[%s285] sm:$0xf]
      %v310 = vld [vmem:[%s285 + $0x4] sm:$0xf]
      %v311 = vld [vmem:[%s285 + $0x8] sm:$0xf]
      %v312 = vld [vmem:[%s285 + $0xc] sm:$0xf]
      %v313 = vld [vmem:[%s285 + $0x10] sm:$0xf]
      %v314 = vld [vmem:[%s285 + $0x14] sm:$0xf]
      %v315 = vld [vmem:[%s285 + $0x18] sm:$0xf]
      %v316 = vld [vmem:[%s285 + $0x1c] sm:$0xf]
      %v317 = vld [vmem:[%s285 + $0x20] sm:$0xf]
      %v318 = vld [vmem:[%s285 + $0x24] sm:$0xf]
      %v319 = vld [vmem:[%s285 + $0x28] sm:$0xf]
      %v320 = vld [vmem:[%s285 + $0x2c] sm:$0xf]
      %v321 = vld [vmem:[%s285 + $0x30] sm:$0xf]
      %v322 = vld [vmem:[%s285 + $0x34] sm:$0xf]
      %v323 = vld [vmem:[%s285 + $0x38] sm:$0xf]
      %v324 = vld [vmem:[%s285 + $0x3c] sm:$0xf]
      %v325 = vld [vmem:[%s285 + $0x40] sm:$0xf]
      %v326 = vld [vmem:[%s285 + $0x44] sm:$0xf]
      %v327 = vld [vmem:[%s285 + $0x48] sm:$0xf]
      %v328 = vld [vmem:[%s285 + $0x4c] sm:$0xf]
      %v329 = vld [vmem:[%s285 + $0x50] sm:$0xf]
      %v330 = vld [vmem:[%s285 + $0x54] sm:$0xf]
      %v331 = vld [vmem:[%s285 + $0x58] sm:$0xf]
      %v332 = vld [vmem:[%s285 + $0x5c] sm:$0xf]
      %v333 = vld [vmem:[%s285 + $0x60] sm:$0xf]
      %v334 = vld [vmem:[%s285 + $0x64] sm:$0xf]
      %v335 = vld [vmem:[%s285 + $0x68] sm:$0xf]
      %v336 = vld [vmem:[%s285 + $0x6c] sm:$0xf]
      %v337 = vld [vmem:[%s285 + $0x70] sm:$0xf]
      %v338 = vld [vmem:[%s285 + $0x74] sm:$0xf]
      %v339 = vld [vmem:[%s285 + $0x78] sm:$0xf]
      %v340 = vld [vmem:[%s285 + $0x7c] sm:$0xf]
      %v341 = vld [vmem:[%s285 + $0x80] sm:$0xf]
      %v342 = vld [vmem:[%s285 + $0x84] sm:$0xf]
      %v343 = vld [vmem:[%s285 + $0x88] sm:$0xf]
      %v344 = vld [vmem:[%s285 + $0x8c] sm:$0xf]
      %v345 = vld [vmem:[%s285 + $0x90] sm:$0xf]
      %v346 = vld [vmem:[%s285 + $0x94] sm:$0xf]
      %v347 = vld [vmem:[%s285 + $0x98] sm:$0xf]
      %v348 = vld [vmem:[%s285 + $0x9c] sm:$0xf]
      %v349 = vld [vmem:[%s285 + $0xa0] sm:$0xf]
      %v350 = vld [vmem:[%s285 + $0xa4] sm:$0xf]
      %v351 = vld [vmem:[%s285 + $0xa8] sm:$0xf]
      %v352 = vld [vmem:[%s285 + $0xac] sm:$0xf]
      %v353 = vld [vmem:[%s285 + $0xb0] sm:$0xf]
      %v354 = vld [vmem:[%s285 + $0xb4] sm:$0xf]
      %v355 = vld [vmem:[%s285 + $0xb8] sm:$0xf]
      %v356 = vld [vmem:[%s285 + $0xbc] sm:$0xf]
      %v359 = vunpack.c.l.b16 %v307
      %v360 = vunpack.c.h.b16 %v307
      %v361 = vunpack.c.l.b16 %v308
      %v362 = vpack.c.b16 %v359, %v359
      %v363 = vpack.c.b16 %v360, %v360
      %v364 = vpack.c.b16 %v361, %v361
      %v416 = vunpack.c.l.b16 %v309
      %v417 = vunpack.c.l.b16 %v310
      %v418 = vunpack.c.l.b16 %v311
      %v419 = vunpack.c.l.b16 %v312
      %v420 = vunpack.c.l.b16 %v313
      %v421 = vunpack.c.l.b16 %v314
      %v422 = vunpack.c.l.b16 %v315
      %v423 = vunpack.c.l.b16 %v316
      %v424 = vunpack.c.l.b16 %v317
      %v425 = vunpack.c.l.b16 %v318
      %v426 = vunpack.c.l.b16 %v319
      %v427 = vunpack.c.l.b16 %v320
      %v428 = vunpack.c.l.b16 %v321
      %v429 = vunpack.c.l.b16 %v322
      %v430 = vunpack.c.l.b16 %v323
      %v431 = vunpack.c.l.b16 %v324
      %v432 = vunpack.c.l.b16 %v325
      %v433 = vunpack.c.l.b16 %v326
      %v434 = vunpack.c.l.b16 %v327
      %v435 = vunpack.c.l.b16 %v328
      %v436 = vunpack.c.l.b16 %v329
      %v437 = vunpack.c.l.b16 %v330
      %v438 = vunpack.c.l.b16 %v331
      %v439 = vunpack.c.l.b16 %v332
      %v440 = vunpack.c.l.b16 %v333
      %v441 = vunpack.c.l.b16 %v334
      %v442 = vunpack.c.l.b16 %v335
      %v443 = vunpack.c.l.b16 %v336
      %v444 = vunpack.c.l.b16 %v337
      %v445 = vunpack.c.l.b16 %v338
      %v446 = vunpack.c.l.b16 %v339
      %v447 = vunpack.c.l.b16 %v340
      %v448 = vunpack.c.l.b16 %v341
      %v449 = vunpack.c.l.b16 %v342
      %v450 = vunpack.c.l.b16 %v343
      %v451 = vunpack.c.l.b16 %v344
      %v452 = vunpack.c.l.b16 %v345
      %v453 = vunpack.c.l.b16 %v346
      %v454 = vunpack.c.l.b16 %v347
      %v455 = vunpack.c.l.b16 %v348
      %v456 = vunpack.c.l.b16 %v349
      %v457 = vunpack.c.l.b16 %v350
      %v458 = vunpack.c.l.b16 %v351
      %v459 = vunpack.c.l.b16 %v352
      %v460 = vunpack.c.l.b16 %v353
      %v461 = vunpack.c.l.b16 %v354
      %v462 = vunpack.c.l.b16 %v355
      %v463 = vunpack.c.l.b16 %v356
      %v464 = vpack.c.b16 %v417, %v416
      %v465 = vpack.c.b16 %v419, %v418
      %v466 = vpack.c.b16 %v421, %v420
      %v467 = vpack.c.b16 %v423, %v422
      %v468 = vpack.c.b16 %v425, %v424
      %v469 = vpack.c.b16 %v427, %v426
      %v470 = vpack.c.b16 %v429, %v428
      %v471 = vpack.c.b16 %v431, %v430
      %v472 = vpack.c.b16 %v433, %v432
      %v473 = vpack.c.b16 %v435, %v434
      %v474 = vpack.c.b16 %v437, %v436
      %v475 = vpack.c.b16 %v439, %v438
      %v476 = vpack.c.b16 %v441, %v440
      %v477 = vpack.c.b16 %v443, %v442
      %v478 = vpack.c.b16 %v445, %v444
      %v479 = vpack.c.b16 %v447, %v446
      %v480 = vpack.c.b16 %v449, %v448
      %v481 = vpack.c.b16 %v451, %v450
      %v482 = vpack.c.b16 %v453, %v452
      %v483 = vpack.c.b16 %v455, %v454
      %v484 = vpack.c.b16 %v457, %v456
      %v485 = vpack.c.b16 %v459, %v458
      %v486 = vpack.c.b16 %v461, %v460
      %v487 = vpack.c.b16 %v463, %v462
      %512 = vmatprep.subr.bf16.mxu0 0
      %513 = vmatpush1.bf16.msra.mxu0 %v471
      %514 = vmatprep.subr.bf16.mxu0 0
      %515 = vmatpush1.bf16.msra.mxu0 %v470
      %516 = vmatprep.subr.bf16.mxu0 0
      %517 = vmatpush1.bf16.msra.mxu0 %v469
      %518 = vmatprep.subr.bf16.mxu0 0
      %519 = vmatpush1.bf16.msra.mxu0 %v468
      %520 = vmatprep.subr.bf16.mxu0 0
      %521 = vmatpush1.bf16.msra.mxu0 %v467
      %522 = vmatprep.subr.bf16.mxu0 0
      %523 = vmatpush1.bf16.msra.mxu0 %v466
      %524 = vmatprep.subr.bf16.mxu0 0
      %525 = vmatpush1.bf16.msra.mxu0 %v465
      %526 = vmatprep.subr.bf16.mxu0 0
      %527 = vmatpush1.bf16.msra.mxu0 %v464
      %528 = vmatprep.subr.bf16.mxu0 0
      %529 = vmatpush2.bf16.msra.mxu0 %v479
      %530 = vmatprep.subr.bf16.mxu0 0
      %531 = vmatpush2.bf16.msra.mxu0 %v478
      %532 = vmatprep.subr.bf16.mxu0 0
      %533 = vmatpush2.bf16.msra.mxu0 %v477
      %534 = vmatprep.subr.bf16.mxu0 0
      %535 = vmatpush2.bf16.msra.mxu0 %v476
      %536 = vmatprep.subr.bf16.mxu0 0
      %537 = vmatpush2.bf16.msra.mxu0 %v475
      %538 = vmatprep.subr.bf16.mxu0 0
      %539 = vmatpush2.bf16.msra.mxu0 %v474
      %540 = vmatprep.subr.bf16.mxu0 0
      %541 = vmatpush2.bf16.msra.mxu0 %v473
      %542 = vmatprep.subr.bf16.mxu0 0
      %543 = vmatpush2.bf16.msra.mxu0 %v472
      %544 = vmatprep.mubr.bf16.mxu0 %v363
      %545 = vmatmul.mubr.bf16.gmra.mxu0 %v362
      %v546 = vpop.f32.mrf.mxu0
      %v547 = vadd.f32 0.0, %v546
      %v548 = vpop.f32.mrf.mxu0
      %v549 = vpop.f32.mrf.mxu0
      %v550 = vpop.f32.mrf.mxu0
      %551 = vdwg.mxu0
      %552 = vmatprep.subr.bf16.mxu0 0
      %553 = vmatpush1.bf16.msra.mxu0 %v487
      %554 = vmatprep.subr.bf16.mxu0 0
      %555 = vmatpush1.bf16.msra.mxu0 %v486
      %556 = vmatprep.subr.bf16.mxu0 0
      %557 = vmatpush1.bf16.msra.mxu0 %v485
      %558 = vmatprep.subr.bf16.mxu0 0
      %559 = vmatpush1.bf16.msra.mxu0 %v484
      %560 = vmatprep.subr.bf16.mxu0 0
      %561 = vmatpush1.bf16.msra.mxu0 %v483
      %562 = vmatprep.subr.bf16.mxu0 0
      %563 = vmatpush1.bf16.msra.mxu0 %v482
      %564 = vmatprep.subr.bf16.mxu0 0
      %565 = vmatpush1.bf16.msra.mxu0 %v481
      %566 = vmatprep.subr.bf16.mxu0 0
      %567 = vmatpush1.bf16.msra.mxu0 %v480
      %568 = vmatprep.subr.bf16.mxu0 0
      %569 = vmatpush2.bf16.msra.mxu0 0
      %570 = vmatprep.subr.bf16.mxu0 0
      %571 = vmatpush2.bf16.msra.mxu0 0
      %572 = vmatprep.subr.bf16.mxu0 0
      %573 = vmatpush2.bf16.msra.mxu0 0
      %574 = vmatprep.subr.bf16.mxu0 0
      %575 = vmatpush2.bf16.msra.mxu0 0
      %576 = vmatprep.subr.bf16.mxu0 0
      %577 = vmatpush2.bf16.msra.mxu0 0
      %578 = vmatprep.subr.bf16.mxu0 0
      %579 = vmatpush2.bf16.msra.mxu0 0
      %580 = vmatprep.subr.bf16.mxu0 0
      %581 = vmatpush2.bf16.msra.mxu0 0
      %582 = vmatprep.subr.bf16.mxu0 0
      %583 = vmatpush2.bf16.msra.mxu0 0
      %584 = vmatprep.mubr.bf16.mxu0 0
      %585 = vmatmul.mubr.bf16.gmra.mxu0 %v364
      %v586 = vpop.f32.mrf.mxu0
      %v587 = vadd.f32 %v547, %v586
      %v588 = vpop.f32.mrf.mxu0
      %v589 = vpop.f32.mrf.mxu0
      %v590 = vpop.f32.mrf.mxu0
      %591 = vdwg.mxu0
      %v592 = vadd.f32 %v306, %v587
      %593 = vst [vmem:[#allocation2] sm:$0xff] %v592
      %p594 = scmp.eq.s32.totalorder %s22, 2
      // Predicated region
      $region41: #{_forward.133} parent=35 // pred_check
        %p595 = pneg %p594
      $region42: #{_forward.133} parent=35 // pred_check_branch
        %597 = sbr.rel (%p595) target = $region44
      $region43: #{_forward.133} parent=35 // pred_region
        %v598 = vld [vmem:[#allocation2] sm:$0xff]
        %v599 = vld [vmem:[%s289] sm:$0x1]
        %v601 = vlaneseq
        %v602 = vshrl.u32 %v601, 7
        %v603 = vsub.s32 0, %v602
        %v604 = vrot.slane %v599, %v603
        %v606 = vmul.f32 %v598, %v604
        %v607 = vld [vmem:[%s292] sm:$0x1]
        %v609 = vlaneseq
        %v610 = vshrl.u32 %v609, 7
        %v611 = vsub.s32 0, %v610
        %v612 = vrot.slane %v607, %v611
        %v614 = vadd.f32 %v606, %v612
        %v615 = vmax.f32 %v614, 0.0
        %v616 = vpack.c.bf16 %v615, %v615
        %617 = vst [vmem:[%s299] sm:$0xf] %v616
      $region44: #{_forward.133} parent=35 // pred_fallthru
        _
      %p618 = scmp.lt.s32.totalorder %s20, 0
      %s619 = scalar_select %p618, %s20, 0
      %p620 = scmp.lt.s32.totalorder %s21, 0
      %s621 = scalar_select %p620, %s21, 0
      %s622 = sadd.s32 %s621, %s619
      %s623 = smul.addr %s622, 4
      %s624 = scalar_lea.vmem %s4, %s623
      // Predicated region
      $region45: #{_forward.133} parent=35 // pred_check
        %p625 = pneg %p162
      $region46: #{_forward.133} parent=35 // pred_check_branch
        %627 = sbr.rel (%p625) target = $region48
      $region47: #{_forward.133} parent=35 // pred_region
        _
      $region48: #{_forward.133} parent=35 // pred_fallthru
        _
      // Predicated region
      $region49: #{_forward.133} parent=35 // pred_check
        %p628 = pneg %p162
      $region50: #{_forward.133} parent=35 // pred_check_branch
        %630 = sbr.rel (%p628) target = $region52
      $region51: #{_forward.133} parent=35 // pred_region
        %p631 = scmp.lt.s32.totalorder %s20, 0
        %s632 = scalar_select %p631, %s20, 0
        %p633 = scmp.lt.s32.totalorder %s21, 0
        %s634 = scalar_select %p633, %s21, 0
        %s635 = sadd.s32 %s634, %s632
        %s636 = smul.addr %s635, 4
        %s637 = scalar_lea.vmem %s4, %s636
      $region52: #{_forward.133} parent=35 // pred_fallthru
        _
    $region36: #{_forward.133} parent=5 // pred_fallthru
      _
    %p638 = scmp.le.s32.totalorder 2, %s10
    // Predicated region
    $region53: #{_forward.133} parent=5 // pred_check
      %p639 = pneg %p638
    $region54: #{_forward.133} parent=5 // pred_check_branch
      %641 = sbr.rel (%p639) target = $region56
    $region55: #{_forward.133} parent=5 // pred_region
      %s642 = ssub.s32 %s10, 2
    $region56: #{_forward.133} parent=5 // pred_fallthru
      _
  $region6: #{_forward.133} parent=0 // loop_footer
    %s14 = sadd.s32 1, %s10
  $region7: #{_forward.133} parent=0 // loop_footer_branch
    %9 = sbr.rel target = $region3
  $region8: #{_forward.133} parent=0 // loop_exit
    _

// kernel: _forward.131
$region0: #{_forward.131}
  #allocation0 [shape = 'u32[]', space=smem, size = 0x4, offset = 0x4, fixed_abs, tag = 'smem constant byte address 0x4 - core index']
  #allocation1 [shape = 'u32[144,128]{1,0:T(1,128)}', space=vmem, size = 0x12000, scoped, tag = 'internal scratch']
  #allocation2 [shape = 'f32[8,128]{1,0:T(8,128)}', space=vmem, size = 0x1000, scoped, tag = 'scratch operand']
  %s0 = inlined_call_operand.vmem [shape: bf16[8,128], index: 0, kind: input, shape index: {}]
  %s1 = inlined_call_operand.vmem [shape: bf16[128,128], index: 1, kind: input, shape index: {}]
  %s2 = inlined_call_operand.vmem [shape: f32[1,128], index: 2, kind: input, shape index: {}]
  %s3 = inlined_call_operand.vmem [shape: f32[1,128], index: 3, kind: input, shape index: {}]
  %s4 = inlined_call_operand.vmem [shape: bf16[8,128], index: 4, kind: output, shape index: {}]
  %s5 = sld [smem:[#allocation0]]
  $region34: #{_forward.131} parent=0
    _
  %s7 = ssub.s32 1, %s5
  %s8 = scalar_select 0, %s7, %s5
  // Predicated region
  $region2: #{_forward.131} parent=0 // pred_check
    _
  $region3: #{_forward.131} parent=0 // pred_check_branch
    %10 = sbr.rel (0) target = $region5
  $region4: #{_forward.131} parent=0 // pred_region
    _
  $region5: #{_forward.131} parent=0 // pred_fallthru
    _
  // Predicated region
  $region6: #{_forward.131} parent=0 // pred_check
    _
  $region7: #{_forward.131} parent=0 // pred_check_branch
    %12 = sbr.rel (0) target = $region9
  $region8: #{_forward.131} parent=0 // pred_region
    _
  $region9: #{_forward.131} parent=0 // pred_fallthru
    _
  // Predicated region
  $region10: #{_forward.131} parent=0 // pred_check
    _
  $region11: #{_forward.131} parent=0 // pred_check_branch
    %14 = sbr.rel (0) target = $region13
  $region12: #{_forward.131} parent=0 // pred_region
    _
  $region13: #{_forward.131} parent=0 // pred_fallthru
    _
  // Predicated region
  $region14: #{_forward.131} parent=0 // pred_check
    _
  $region15: #{_forward.131} parent=0 // pred_check_branch
    %16 = sbr.rel (0) target = $region17
  $region16: #{_forward.131} parent=0 // pred_region
    _
  $region17: #{_forward.131} parent=0 // pred_fallthru
    _
  %p18 = scmp.eq.s32.totalorder 0, 0
  // Predicated region
  $region18: #{_forward.131} parent=0 // pred_check
    %p19 = pneg %p18
  $region19: #{_forward.131} parent=0 // pred_check_branch
    %21 = sbr.rel (%p19) target = $region21
  $region20: #{_forward.131} parent=0 // pred_region
    %22 = vst [vmem:[#allocation2] sm:$0xff] 0.0
  $region21: #{_forward.131} parent=0 // pred_fallthru
    _
  %v23 = vld [vmem:[#allocation2] sm:$0xff]
  %v24 = vld [vmem:[%s0] sm:$0xf]
  %v25 = vld [vmem:[%s1] sm:$0xf]
  %v26 = vld [vmem:[%s1 + $0x4] sm:$0xf]
  %v27 = vld [vmem:[%s1 + $0x8] sm:$0xf]
  %v28 = vld [vmem:[%s1 + $0xc] sm:$0xf]
  %v29 = vld [vmem:[%s1 + $0x10] sm:$0xf]
  %v30 = vld [vmem:[%s1 + $0x14] sm:$0xf]
  %v31 = vld [vmem:[%s1 + $0x18] sm:$0xf]
  %v32 = vld [vmem:[%s1 + $0x1c] sm:$0xf]
  %v33 = vld [vmem:[%s1 + $0x20] sm:$0xf]
  %v34 = vld [vmem:[%s1 + $0x24] sm:$0xf]
  %v35 = vld [vmem:[%s1 + $0x28] sm:$0xf]
  %v36 = vld [vmem:[%s1 + $0x2c] sm:$0xf]
  %v37 = vld [vmem:[%s1 + $0x30] sm:$0xf]
  %v38 = vld [vmem:[%s1 + $0x34] sm:$0xf]
  %v39 = vld [vmem:[%s1 + $0x38] sm:$0xf]
  %v40 = vld [vmem:[%s1 + $0x3c] sm:$0xf]
  %v57 = vunpack.c.l.b16 %v25
  %v58 = vunpack.c.l.b16 %v26
  %v59 = vunpack.c.l.b16 %v27
  %v60 = vunpack.c.l.b16 %v28
  %v61 = vunpack.c.l.b16 %v29
  %v62 = vunpack.c.l.b16 %v30
  %v63 = vunpack.c.l.b16 %v31
  %v64 = vunpack.c.l.b16 %v32
  %v65 = vunpack.c.l.b16 %v33
  %v66 = vunpack.c.l.b16 %v34
  %v67 = vunpack.c.l.b16 %v35
  %v68 = vunpack.c.l.b16 %v36
  %v69 = vunpack.c.l.b16 %v37
  %v70 = vunpack.c.l.b16 %v38
  %v71 = vunpack.c.l.b16 %v39
  %v72 = vunpack.c.l.b16 %v40
  %v73 = vpack.c.b16 %v58, %v57
  %v74 = vpack.c.b16 %v60, %v59
  %v75 = vpack.c.b16 %v62, %v61
  %v76 = vpack.c.b16 %v64, %v63
  %v77 = vpack.c.b16 %v66, %v65
  %v78 = vpack.c.b16 %v68, %v67
  %v79 = vpack.c.b16 %v70, %v69
  %v80 = vpack.c.b16 %v72, %v71
  %89 = vmatprep.subr.bf16.mxu0 0
  %90 = vmatpush1.bf16.msra.mxu0 %v80
  %91 = vmatprep.subr.bf16.mxu0 0
  %92 = vmatpush1.bf16.msra.mxu0 %v79
  %93 = vmatprep.subr.bf16.mxu0 0
  %94 = vmatpush1.bf16.msra.mxu0 %v78
  %95 = vmatprep.subr.bf16.mxu0 0
  %96 = vmatpush1.bf16.msra.mxu0 %v77
  %97 = vmatprep.subr.bf16.mxu0 0
  %98 = vmatpush1.bf16.msra.mxu0 %v76
  %99 = vmatprep.subr.bf16.mxu0 0
  %100 = vmatpush1.bf16.msra.mxu0 %v75
  %101 = vmatprep.subr.bf16.mxu0 0
  %102 = vmatpush1.bf16.msra.mxu0 %v74
  %103 = vmatprep.subr.bf16.mxu0 0
  %104 = vmatpush1.bf16.msra.mxu0 %v73
  %105 = vmatprep.subr.bf16.mxu0 0
  %106 = vmatpush2.bf16.msra.mxu0 0
  %107 = vmatprep.subr.bf16.mxu0 0
  %108 = vmatpush2.bf16.msra.mxu0 0
  %109 = vmatprep.subr.bf16.mxu0 0
  %110 = vmatpush2.bf16.msra.mxu0 0
  %111 = vmatprep.subr.bf16.mxu0 0
  %112 = vmatpush2.bf16.msra.mxu0 0
  %113 = vmatprep.subr.bf16.mxu0 0
  %114 = vmatpush2.bf16.msra.mxu0 0
  %115 = vmatprep.subr.bf16.mxu0 0
  %116 = vmatpush2.bf16.msra.mxu0 0
  %117 = vmatprep.subr.bf16.mxu0 0
  %118 = vmatpush2.bf16.msra.mxu0 0
  %119 = vmatprep.subr.bf16.mxu0 0
  %120 = vmatpush2.bf16.msra.mxu0 0
  %121 = vmatprep.mubr.bf16.mxu0 0
  %122 = vmatmul.mubr.bf16.gmra.mxu0 %v24
  %v123 = vpop.f32.mrf.mxu0
  %v124 = vadd.f32 0.0, %v123
  %v125 = vpop.f32.mrf.mxu0
  %v126 = vpop.f32.mrf.mxu0
  %v127 = vpop.f32.mrf.mxu0
  %128 = vdwg.mxu0
  %v129 = vadd.f32 %v23, %v124
  %130 = vst [vmem:[#allocation2] sm:$0xff] %v129
  // Predicated region
  $region22: #{_forward.131} parent=0 // pred_check
    %p131 = pneg %p18
  $region23: #{_forward.131} parent=0 // pred_check_branch
    %133 = sbr.rel (%p131) target = $region25
  $region24: #{_forward.131} parent=0 // pred_region
    %v134 = vld [vmem:[#allocation2] sm:$0xff]
    %v135 = vld [vmem:[%s2] sm:$0x1]
    %v137 = vlaneseq
    %v138 = vshrl.u32 %v137, 7
    %v139 = vsub.s32 0, %v138
    %v140 = vrot.slane %v135, %v139
    %v142 = vmul.f32 %v134, %v140
    %v143 = vld [vmem:[%s3] sm:$0x1]
    %v145 = vlaneseq
    %v146 = vshrl.u32 %v145, 7
    %v147 = vsub.s32 0, %v146
    %v148 = vrot.slane %v143, %v147
    %v150 = vadd.f32 %v142, %v148
    %v151 = vpack.c.bf16 %v150, %v150
    %152 = vst [vmem:[%s4] sm:$0xf] %v151
  $region25: #{_forward.131} parent=0 // pred_fallthru
    _
  // Predicated region
  $region26: #{_forward.131} parent=0 // pred_check
    _
  $region27: #{_forward.131} parent=0 // pred_check_branch
    %154 = sbr.rel (0) target = $region29
  $region28: #{_forward.131} parent=0 // pred_region
    _
  $region29: #{_forward.131} parent=0 // pred_fallthru
    _
  // Predicated region
  $region30: #{_forward.131} parent=0 // pred_check
    _
  $region31: #{_forward.131} parent=0 // pred_check_branch
    %156 = sbr.rel (0) target = $region33
  $region32: #{_forward.131} parent=0 // pred_region
    _
  $region33: #{_forward.131} parent=0 // pred_fallthru
    _

// kernel: _forward.134
$region0: #{_forward.134}
  #allocation0 [shape = 'u32[]', space=smem, size = 0x4, offset = 0x4, fixed_abs, tag = 'smem constant byte address 0x4 - core index']
  #allocation1 [shape = 'u32[144,128]{1,0:T(1,128)}', space=vmem, size = 0x12000, scoped, tag = 'internal scratch']
  #allocation2 [shape = 'f32[8,128]{1,0:T(8,128)}', space=vmem, size = 0x1000, scoped, tag = 'scratch operand']
  %s0 = inlined_call_operand.vmem [shape: bf16[8,128], index: 0, kind: input, shape index: {}]
  %s1 = inlined_call_operand.vmem [shape: bf16[128,128], index: 1, kind: input, shape index: {}]
  %s2 = inlined_call_operand.vmem [shape: f32[1,128], index: 2, kind: input, shape index: {}]
  %s3 = inlined_call_operand.vmem [shape: f32[1,128], index: 3, kind: input, shape index: {}]
  %s4 = inlined_call_operand.vmem [shape: bf16[8,128], index: 4, kind: input, shape index: {}]
  %s5 = inlined_call_operand.vmem [shape: bf16[8,128], index: 5, kind: output, shape index: {}]
  %s6 = sld [smem:[#allocation0]]
  $region38: #{_forward.134} parent=0
    _
  %s8 = ssub.s32 1, %s6
  %s9 = scalar_select 0, %s8, %s6
  // Predicated region
  $region2: #{_forward.134} parent=0 // pred_check
    _
  $region3: #{_forward.134} parent=0 // pred_check_branch
    %11 = sbr.rel (0) target = $region5
  $region4: #{_forward.134} parent=0 // pred_region
    _
  $region5: #{_forward.134} parent=0 // pred_fallthru
    _
  // Predicated region
  $region6: #{_forward.134} parent=0 // pred_check
    _
  $region7: #{_forward.134} parent=0 // pred_check_branch
    %13 = sbr.rel (0) target = $region9
  $region8: #{_forward.134} parent=0 // pred_region
    _
  $region9: #{_forward.134} parent=0 // pred_fallthru
    _
  // Predicated region
  $region10: #{_forward.134} parent=0 // pred_check
    _
  $region11: #{_forward.134} parent=0 // pred_check_branch
    %15 = sbr.rel (0) target = $region13
  $region12: #{_forward.134} parent=0 // pred_region
    _
  $region13: #{_forward.134} parent=0 // pred_fallthru
    _
  // Predicated region
  $region14: #{_forward.134} parent=0 // pred_check
    _
  $region15: #{_forward.134} parent=0 // pred_check_branch
    %17 = sbr.rel (0) target = $region17
  $region16: #{_forward.134} parent=0 // pred_region
    _
  $region17: #{_forward.134} parent=0 // pred_fallthru
    _
  // Predicated region
  $region18: #{_forward.134} parent=0 // pred_check
    _
  $region19: #{_forward.134} parent=0 // pred_check_branch
    %19 = sbr.rel (0) target = $region21
  $region20: #{_forward.134} parent=0 // pred_region
    _
  $region21: #{_forward.134} parent=0 // pred_fallthru
    _
  %p21 = scmp.eq.s32.totalorder 0, 0
  // Predicated region
  $region22: #{_forward.134} parent=0 // pred_check
    %p22 = pneg %p21
  $region23: #{_forward.134} parent=0 // pred_check_branch
    %24 = sbr.rel (%p22) target = $region25
  $region24: #{_forward.134} parent=0 // pred_region
    %25 = vst [vmem:[#allocation2] sm:$0xff] 0.0
  $region25: #{_forward.134} parent=0 // pred_fallthru
    _
  %v26 = vld [vmem:[#allocation2] sm:$0xff]
  %v27 = vld [vmem:[%s0] sm:$0xf]
  %v28 = vld [vmem:[%s1] sm:$0xf]
  %v29 = vld [vmem:[%s1 + $0x4] sm:$0xf]
  %v30 = vld [vmem:[%s1 + $0x8] sm:$0xf]
  %v31 = vld [vmem:[%s1 + $0xc] sm:$0xf]
  %v32 = vld [vmem:[%s1 + $0x10] sm:$0xf]
  %v33 = vld [vmem:[%s1 + $0x14] sm:$0xf]
  %v34 = vld [vmem:[%s1 + $0x18] sm:$0xf]
  %v35 = vld [vmem:[%s1 + $0x1c] sm:$0xf]
  %v36 = vld [vmem:[%s1 + $0x20] sm:$0xf]
  %v37 = vld [vmem:[%s1 + $0x24] sm:$0xf]
  %v38 = vld [vmem:[%s1 + $0x28] sm:$0xf]
  %v39 = vld [vmem:[%s1 + $0x2c] sm:$0xf]
  %v40 = vld [vmem:[%s1 + $0x30] sm:$0xf]
  %v41 = vld [vmem:[%s1 + $0x34] sm:$0xf]
  %v42 = vld [vmem:[%s1 + $0x38] sm:$0xf]
  %v43 = vld [vmem:[%s1 + $0x3c] sm:$0xf]
  %v60 = vunpack.c.l.b16 %v28
  %v61 = vunpack.c.l.b16 %v29
  %v62 = vunpack.c.l.b16 %v30
  %v63 = vunpack.c.l.b16 %v31
  %v64 = vunpack.c.l.b16 %v32
  %v65 = vunpack.c.l.b16 %v33
  %v66 = vunpack.c.l.b16 %v34
  %v67 = vunpack.c.l.b16 %v35
  %v68 = vunpack.c.l.b16 %v36
  %v69 = vunpack.c.l.b16 %v37
  %v70 = vunpack.c.l.b16 %v38
  %v71 = vunpack.c.l.b16 %v39
  %v72 = vunpack.c.l.b16 %v40
  %v73 = vunpack.c.l.b16 %v41
  %v74 = vunpack.c.l.b16 %v42
  %v75 = vunpack.c.l.b16 %v43
  %v76 = vpack.c.b16 %v61, %v60
  %v77 = vpack.c.b16 %v63, %v62
  %v78 = vpack.c.b16 %v65, %v64
  %v79 = vpack.c.b16 %v67, %v66
  %v80 = vpack.c.b16 %v69, %v68
  %v81 = vpack.c.b16 %v71, %v70
  %v82 = vpack.c.b16 %v73, %v72
  %v83 = vpack.c.b16 %v75, %v74
  %92 = vmatprep.subr.bf16.mxu0 0
  %93 = vmatpush1.bf16.msra.mxu0 %v83
  %94 = vmatprep.subr.bf16.mxu0 0
  %95 = vmatpush1.bf16.msra.mxu0 %v82
  %96 = vmatprep.subr.bf16.mxu0 0
  %97 = vmatpush1.bf16.msra.mxu0 %v81
  %98 = vmatprep.subr.bf16.mxu0 0
  %99 = vmatpush1.bf16.msra.mxu0 %v80
  %100 = vmatprep.subr.bf16.mxu0 0
  %101 = vmatpush1.bf16.msra.mxu0 %v79
  %102 = vmatprep.subr.bf16.mxu0 0
  %103 = vmatpush1.bf16.msra.mxu0 %v78
  %104 = vmatprep.subr.bf16.mxu0 0
  %105 = vmatpush1.bf16.msra.mxu0 %v77
  %106 = vmatprep.subr.bf16.mxu0 0
  %107 = vmatpush1.bf16.msra.mxu0 %v76
  %108 = vmatprep.subr.bf16.mxu0 0
  %109 = vmatpush2.bf16.msra.mxu0 0
  %110 = vmatprep.subr.bf16.mxu0 0
  %111 = vmatpush2.bf16.msra.mxu0 0
  %112 = vmatprep.subr.bf16.mxu0 0
  %113 = vmatpush2.bf16.msra.mxu0 0
  %114 = vmatprep.subr.bf16.mxu0 0
  %115 = vmatpush2.bf16.msra.mxu0 0
  %116 = vmatprep.subr.bf16.mxu0 0
  %117 = vmatpush2.bf16.msra.mxu0 0
  %118 = vmatprep.subr.bf16.mxu0 0
  %119 = vmatpush2.bf16.msra.mxu0 0
  %120 = vmatprep.subr.bf16.mxu0 0
  %121 = vmatpush2.bf16.msra.mxu0 0
  %122 = vmatprep.subr.bf16.mxu0 0
  %123 = vmatpush2.bf16.msra.mxu0 0
  %124 = vmatprep.mubr.bf16.mxu0 0
  %125 = vmatmul.mubr.bf16.gmra.mxu0 %v27
  %v126 = vpop.f32.mrf.mxu0
  %v127 = vadd.f32 0.0, %v126
  %v128 = vpop.f32.mrf.mxu0
  %v129 = vpop.f32.mrf.mxu0
  %v130 = vpop.f32.mrf.mxu0
  %131 = vdwg.mxu0
  %v132 = vadd.f32 %v26, %v127
  %133 = vst [vmem:[#allocation2] sm:$0xff] %v132
  // Predicated region
  $region26: #{_forward.134} parent=0 // pred_check
    %p134 = pneg %p21
  $region27: #{_forward.134} parent=0 // pred_check_branch
    %136 = sbr.rel (%p134) target = $region29
  $region28: #{_forward.134} parent=0 // pred_region
    %v137 = vld [vmem:[#allocation2] sm:$0xff]
    %v138 = vld [vmem:[%s2] sm:$0x1]
    %v140 = vlaneseq
    %v141 = vshrl.u32 %v140, 7
    %v142 = vsub.s32 0, %v141
    %v143 = vrot.slane %v138, %v142
    %v145 = vmul.f32 %v137, %v143
    %v146 = vld [vmem:[%s3] sm:$0x1]
    %v148 = vlaneseq
    %v149 = vshrl.u32 %v148, 7
    %v150 = vsub.s32 0, %v149
    %v151 = vrot.slane %v146, %v150
    %v153 = vadd.f32 %v145, %v151
    %v154 = vld [vmem:[%s4] sm:$0xf]
    %v155 = vunpack.c.l.bf16 %v154
    %v156 = vadd.f32 %v153, %v155
    %v157 = vmax.f32 %v156, 0.0
    %v158 = vpack.c.bf16 %v157, %v157
    %159 = vst [vmem:[%s5] sm:$0xf] %v158
  $region29: #{_forward.134} parent=0 // pred_fallthru
    _
  // Predicated region
  $region30: #{_forward.134} parent=0 // pred_check
    _
  $region31: #{_forward.134} parent=0 // pred_check_branch
    %161 = sbr.rel (0) target = $region33
  $region32: #{_forward.134} parent=0 // pred_region
    _
  $region33: #{_forward.134} parent=0 // pred_fallthru
    _
  // Predicated region
  $region34: #{_forward.134} parent=0 // pred_check
    _
  $region35: #{_forward.134} parent=0 // pred_check_branch
    %163 = sbr.rel (0) target = $region37
  $region36: #{_forward.134} parent=0 // pred_region
    _
  $region37: #{_forward.134} parent=0 // pred_fallthru
    _

// kernel: _forward.135
$region0: #{_forward.135}
  #allocation0 [shape = 'u32[]', space=smem, size = 0x4, offset = 0x4, fixed_abs, tag = 'smem constant byte address 0x4 - core index']
  #allocation1 [shape = 'u32[144,128]{1,0:T(1,128)}', space=vmem, size = 0x12000, scoped, tag = 'internal scratch']
  #allocation2 [shape = 'f32[8,128]{1,0:T(8,128)}', space=vmem, size = 0x1000, scoped, tag = 'scratch operand']
  %s0 = inlined_call_operand.vmem [shape: bf16[8,128], index: 0, kind: input, shape index: {}]
  %s1 = inlined_call_operand.vmem [shape: bf16[128,128], index: 1, kind: input, shape index: {}]
  %s2 = inlined_call_operand.vmem [shape: f32[1,128], index: 2, kind: input, shape index: {}]
  %s3 = inlined_call_operand.vmem [shape: f32[1,128], index: 3, kind: input, shape index: {}]
  %s4 = inlined_call_operand.vmem [shape: bf16[8,128], index: 4, kind: output, shape index: {}]
  %s5 = sld [smem:[#allocation0]]
  $region34: #{_forward.135} parent=0
    _
  %s7 = ssub.s32 1, %s5
  %s8 = scalar_select 0, %s7, %s5
  // Predicated region
  $region2: #{_forward.135} parent=0 // pred_check
    _
  $region3: #{_forward.135} parent=0 // pred_check_branch
    %10 = sbr.rel (0) target = $region5
  $region4: #{_forward.135} parent=0 // pred_region
    _
  $region5: #{_forward.135} parent=0 // pred_fallthru
    _
  // Predicated region
  $region6: #{_forward.135} parent=0 // pred_check
    _
  $region7: #{_forward.135} parent=0 // pred_check_branch
    %12 = sbr.rel (0) target = $region9
  $region8: #{_forward.135} parent=0 // pred_region
    _
  $region9: #{_forward.135} parent=0 // pred_fallthru
    _
  // Predicated region
  $region10: #{_forward.135} parent=0 // pred_check
    _
  $region11: #{_forward.135} parent=0 // pred_check_branch
    %14 = sbr.rel (0) target = $region13
  $region12: #{_forward.135} parent=0 // pred_region
    _
  $region13: #{_forward.135} parent=0 // pred_fallthru
    _
  // Predicated region
  $region14: #{_forward.135} parent=0 // pred_check
    _
  $region15: #{_forward.135} parent=0 // pred_check_branch
    %16 = sbr.rel (0) target = $region17
  $region16: #{_forward.135} parent=0 // pred_region
    _
  $region17: #{_forward.135} parent=0 // pred_fallthru
    _
  %p18 = scmp.eq.s32.totalorder 0, 0
  // Predicated region
  $region18: #{_forward.135} parent=0 // pred_check
    %p19 = pneg %p18
  $region19: #{_forward.135} parent=0 // pred_check_branch
    %21 = sbr.rel (%p19) target = $region21
  $region20: #{_forward.135} parent=0 // pred_region
    %22 = vst [vmem:[#allocation2] sm:$0xff] 0.0
  $region21: #{_forward.135} parent=0 // pred_fallthru
    _
  %v23 = vld [vmem:[#allocation2] sm:$0xff]
  %v24 = vld [vmem:[%s0] sm:$0xf]
  %v25 = vld [vmem:[%s1] sm:$0xf]
  %v26 = vld [vmem:[%s1 + $0x4] sm:$0xf]
  %v27 = vld [vmem:[%s1 + $0x8] sm:$0xf]
  %v28 = vld [vmem:[%s1 + $0xc] sm:$0xf]
  %v29 = vld [vmem:[%s1 + $0x10] sm:$0xf]
  %v30 = vld [vmem:[%s1 + $0x14] sm:$0xf]
  %v31 = vld [vmem:[%s1 + $0x18] sm:$0xf]
  %v32 = vld [vmem:[%s1 + $0x1c] sm:$0xf]
  %v33 = vld [vmem:[%s1 + $0x20] sm:$0xf]
  %v34 = vld [vmem:[%s1 + $0x24] sm:$0xf]
  %v35 = vld [vmem:[%s1 + $0x28] sm:$0xf]
  %v36 = vld [vmem:[%s1 + $0x2c] sm:$0xf]
  %v37 = vld [vmem:[%s1 + $0x30] sm:$0xf]
  %v38 = vld [vmem:[%s1 + $0x34] sm:$0xf]
  %v39 = vld [vmem:[%s1 + $0x38] sm:$0xf]
  %v40 = vld [vmem:[%s1 + $0x3c] sm:$0xf]
  %v57 = vunpack.c.l.b16 %v25
  %v58 = vunpack.c.l.b16 %v26
  %v59 = vunpack.c.l.b16 %v27
  %v60 = vunpack.c.l.b16 %v28
  %v61 = vunpack.c.l.b16 %v29
  %v62 = vunpack.c.l.b16 %v30
  %v63 = vunpack.c.l.b16 %v31
  %v64 = vunpack.c.l.b16 %v32
  %v65 = vunpack.c.l.b16 %v33
  %v66 = vunpack.c.l.b16 %v34
  %v67 = vunpack.c.l.b16 %v35
  %v68 = vunpack.c.l.b16 %v36
  %v69 = vunpack.c.l.b16 %v37
  %v70 = vunpack.c.l.b16 %v38
  %v71 = vunpack.c.l.b16 %v39
  %v72 = vunpack.c.l.b16 %v40
  %v73 = vpack.c.b16 %v58, %v57
  %v74 = vpack.c.b16 %v60, %v59
  %v75 = vpack.c.b16 %v62, %v61
  %v76 = vpack.c.b16 %v64, %v63
  %v77 = vpack.c.b16 %v66, %v65
  %v78 = vpack.c.b16 %v68, %v67
  %v79 = vpack.c.b16 %v70, %v69
  %v80 = vpack.c.b16 %v72, %v71
  %89 = vmatprep.subr.bf16.mxu0 0
  %90 = vmatpush1.bf16.msra.mxu0 %v80
  %91 = vmatprep.subr.bf16.mxu0 0
  %92 = vmatpush1.bf16.msra.mxu0 %v79
  %93 = vmatprep.subr.bf16.mxu0 0
  %94 = vmatpush1.bf16.msra.mxu0 %v78
  %95 = vmatprep.subr.bf16.mxu0 0
  %96 = vmatpush1.bf16.msra.mxu0 %v77
  %97 = vmatprep.subr.bf16.mxu0 0
  %98 = vmatpush1.bf16.msra.mxu0 %v76
  %99 = vmatprep.subr.bf16.mxu0 0
  %100 = vmatpush1.bf16.msra.mxu0 %v75
  %101 = vmatprep.subr.bf16.mxu0 0
  %102 = vmatpush1.bf16.msra.mxu0 %v74
  %103 = vmatprep.subr.bf16.mxu0 0
  %104 = vmatpush1.bf16.msra.mxu0 %v73
  %105 = vmatprep.subr.bf16.mxu0 0
  %106 = vmatpush2.bf16.msra.mxu0 0
  %107 = vmatprep.subr.bf16.mxu0 0
  %108 = vmatpush2.bf16.msra.mxu0 0
  %109 = vmatprep.subr.bf16.mxu0 0
  %110 = vmatpush2.bf16.msra.mxu0 0
  %111 = vmatprep.subr.bf16.mxu0 0
  %112 = vmatpush2.bf16.msra.mxu0 0
  %113 = vmatprep.subr.bf16.mxu0 0
  %114 = vmatpush2.bf16.msra.mxu0 0
  %115 = vmatprep.subr.bf16.mxu0 0
  %116 = vmatpush2.bf16.msra.mxu0 0
  %117 = vmatprep.subr.bf16.mxu0 0
  %118 = vmatpush2.bf16.msra.mxu0 0
  %119 = vmatprep.subr.bf16.mxu0 0
  %120 = vmatpush2.bf16.msra.mxu0 0
  %121 = vmatprep.mubr.bf16.mxu0 0
  %122 = vmatmul.mubr.bf16.gmra.mxu0 %v24
  %v123 = vpop.f32.mrf.mxu0
  %v124 = vadd.f32 0.0, %v123
  %v125 = vpop.f32.mrf.mxu0
  %v126 = vpop.f32.mrf.mxu0
  %v127 = vpop.f32.mrf.mxu0
  %128 = vdwg.mxu0
  %v129 = vadd.f32 %v23, %v124
  %130 = vst [vmem:[#allocation2] sm:$0xff] %v129
  // Predicated region
  $region22: #{_forward.135} parent=0 // pred_check
    %p131 = pneg %p18
  $region23: #{_forward.135} parent=0 // pred_check_branch
    %133 = sbr.rel (%p131) target = $region25
  $region24: #{_forward.135} parent=0 // pred_region
    %v134 = vld [vmem:[#allocation2] sm:$0xff]
    %v135 = vld [vmem:[%s2] sm:$0x1]
    %v137 = vlaneseq
    %v138 = vshrl.u32 %v137, 7
    %v139 = vsub.s32 0, %v138
    %v140 = vrot.slane %v135, %v139
    %v142 = vmul.f32 %v134, %v140
    %v143 = vld [vmem:[%s3] sm:$0x1]
    %v145 = vlaneseq
    %v146 = vshrl.u32 %v145, 7
    %v147 = vsub.s32 0, %v146
    %v148 = vrot.slane %v143, %v147
    %v150 = vadd.f32 %v142, %v148
    %v151 = vmax.f32 %v150, 0.0
    %v152 = vpack.c.bf16 %v151, %v151
    %153 = vst [vmem:[%s4] sm:$0xf] %v152
  $region25: #{_forward.135} parent=0 // pred_fallthru
    _
  // Predicated region
  $region26: #{_forward.135} parent=0 // pred_check
    _
  $region27: #{_forward.135} parent=0 // pred_check_branch
    %155 = sbr.rel (0) target = $region29
  $region28: #{_forward.135} parent=0 // pred_region
    _
  $region29: #{_forward.135} parent=0 // pred_fallthru
    _
  // Predicated region
  $region30: #{_forward.135} parent=0 // pred_check
    _
  $region31: #{_forward.135} parent=0 // pred_check_branch
    %157 = sbr.rel (0) target = $region33
  $region32: #{_forward.135} parent=0 // pred_region
    _
  $region33: #{_forward.135} parent=0 // pred_fallthru
    _

// kernel: _forward.136
$region0: #{_forward.136}
  #allocation0 [shape = 'u32[]', space=smem, size = 0x4, offset = 0x4, fixed_abs, tag = 'smem constant byte address 0x4 - core index']
  #allocation1 [shape = 'u32[144,128]{1,0:T(1,128)}', space=vmem, size = 0x12000, scoped, tag = 'internal scratch']
  #allocation2 [shape = 'f32[8,128]{1,0:T(8,128)}', space=vmem, size = 0x1000, scoped, tag = 'scratch operand']
  %s0 = inlined_call_operand.hbm [shape: bf16[8,1152], index: 0, kind: input, shape index: {}]
  %s1 = inlined_call_operand.vmem [shape: bf16[1152,128], index: 1, kind: input, shape index: {}]
  %s2 = inlined_call_operand.vmem [shape: f32[1,128], index: 2, kind: input, shape index: {}]
  %s3 = inlined_call_operand.vmem [shape: f32[1,128], index: 3, kind: input, shape index: {}]
  %s4 = inlined_call_operand.vmem [shape: bf16[8,128], index: 4, kind: output, shape index: {}]
  %s5 = sld [smem:[#allocation0]]
  $region61: #{_forward.136} parent=0
    _
  %s7 = ssub.s32 1, %s5
  %s8 = scalar_select 0, %s7, %s5
  $region1: #{_forward.136} parent=0
    #allocation3 [shape = 'u8[12288]{0}', space=vmem, size = 0x3000, scoped, tag = 'input window, operand 0']
    #allocation4 [shape = 's32[2]{0}', space=sflag, size = 0x8, scoped, tag = 'scoped memory for _forward.136']
    %9 = vsyncpa [#allocation4], 0
    %s10 = scalar_lea.sflag [#allocation4], 1
    %11 = vsyncpa %s10, 0
    loop: start=0, step=1, limit=5
    $region2: #{_forward.136} parent=1 // loop_pre_header
      _
    $region3: #{_forward.136} parent=1 // loop_header
      %s13 = sphi 0, %s17
      %p14 = scmp.ge.s32.totalorder %s13, 5
      %s20 = sphi 0, %s39
      %s21 = sphi 0, %s35
      %s22 = sphi 0, %s31
      %s23 = sphi 0, %s20
      %s24 = sphi 0, %s21
      %s25 = sphi 0, %s22
      %s26 = sphi 0, %s23
      %s27 = sphi 0, %s24
      %s28 = sphi 0, %s25
      %s44 = sphi 0, %s46
      %s47 = sphi 0, %s44
      %s48 = sphi 0, %s47
      %s64 = sphi 0, %s48
      %s72 = sphi 0, %s74
      %s75 = sphi 0, %s72
      %s76 = sphi 0, %s75
      %s92 = sphi 0, %s76
      %s98 = sphi 0, %s100
      %s101 = sphi 0, %s98
      %s102 = sphi 0, %s101
      %s118 = sphi 0, %s102
      %s124 = sphi 0, %s126
      %s127 = sphi 0, %s124
      %s128 = sphi 0, %s127
      %s144 = sphi 0, %s128
      %s152 = sphi 0, %s154
      %s155 = sphi 0, %s152
      %s156 = sphi 0, %s155
      %s172 = sphi 0, %s156
    $region4: #{_forward.136} parent=1 // loop_header_branch
      %16 = sbr.rel (%p14) target = $region8
    $region5: #{_forward.136} parent=1 // loop_body
      %s18 = ssub.s32 %s13, 1
      %s19 = ssub.s32 %s13, 2
      %s29 = sadd.s32 1, %s22
      %p30 = scmp.ge.s32.totalorder %s29, 3
      %s31 = scalar_select %p30, 0, %s29
      %s32 = sadd.s32 1, %s21
      %s33 = scalar_select %p30, %s32, %s21
      %p34 = scmp.ge.s32.totalorder %s33, 1
      %s35 = scalar_select %p34, 0, %s33
      %s36 = sadd.s32 1, %s20
      %s37 = scalar_select %p34, %s36, %s20
      %p38 = scmp.ge.s32.totalorder %s37, 1
      %s39 = scalar_select %p38, 0, %s37
      %s40 = ssub.s32 %s20, %s39
      %s41 = ssub.s32 %s22, %s31
      %s42 = sor.u32 %s40, %s41
      %p43 = scmp.eq.s32.totalorder %s42, 0
      %s45 = sadd.s32 %s44, 1
      %s46 = scalar_select %p43, %s44, %s45
      %p49 = pneg %p43
      %p50 = scmp.eq.s32.totalorder %s13, 2
      %p51 = por %p49, %p50
      %p52 = scmp.ne.s32.totalorder %s44, %s47
      %p53 = scmp.eq.s32.totalorder %s13, 0
      %p54 = por %p52, %p53
      %p55 = scmp.ne.s32.totalorder %s44, %s47
      %p56 = scmp.eq.s32.totalorder %s18, 2
      %p57 = por %p55, %p56
      %p58 = scmp.ne.s32.totalorder %s47, %s48
      %p59 = scmp.eq.s32.totalorder %s18, 0
      %p60 = por %p58, %p59
      %p61 = scmp.ne.s32.totalorder %s47, %s48
      %p62 = scmp.eq.s32.totalorder %s19, 2
      %p63 = por %p61, %p62
      %p65 = scmp.ne.s32.totalorder %s48, %s64
      %p66 = scmp.eq.s32.totalorder %s19, 0
      %p67 = por %p65, %p66
      %s68 = ssub.s32 %s22, %s31
      %s69 = ssub.s32 %s21, %s35
      %s70 = sor.u32 %s68, %s69
      %p71 = scmp.eq.s32.totalorder %s70, 0
      %s73 = sadd.s32 %s72, 1
      %s74 = scalar_select %p71, %s72, %s73
      %p77 = pneg %p71
      %p78 = scmp.eq.s32.totalorder %s13, 2
      %p79 = por %p77, %p78
      %p80 = scmp.ne.s32.totalorder %s72, %s75
      %p81 = scmp.eq.s32.totalorder %s13, 0
      %p82 = por %p80, %p81
      %p83 = scmp.ne.s32.totalorder %s72, %s75
      %p84 = scmp.eq.s32.totalorder %s18, 2
      %p85 = por %p83, %p84
      %p86 = scmp.ne.s32.totalorder %s75, %s76
      %p87 = scmp.eq.s32.totalorder %s18, 0
      %p88 = por %p86, %p87
      %p89 = scmp.ne.s32.totalorder %s75, %s76
      %p90 = scmp.eq.s32.totalorder %s19, 2
      %p91 = por %p89, %p90
      %p93 = scmp.ne.s32.totalorder %s76, %s92
      %p94 = scmp.eq.s32.totalorder %s19, 0
      %p95 = por %p93, %p94
      %s96 = ssub.s32 %s21, %s35
      %p97 = scmp.eq.s32.totalorder %s96, 0
      %s99 = sadd.s32 %s98, 1
      %s100 = scalar_select %p97, %s98, %s99
      %p103 = pneg %p97
      %p104 = scmp.eq.s32.totalorder %s13, 2
      %p105 = por %p103, %p104
      %p106 = scmp.ne.s32.totalorder %s98, %s101
      %p107 = scmp.eq.s32.totalorder %s13, 0
      %p108 = por %p106, %p107
      %p109 = scmp.ne.s32.totalorder %s98, %s101
      %p110 = scmp.eq.s32.totalorder %s18, 2
      %p111 = por %p109, %p110
      %p112 = scmp.ne.s32.totalorder %s101, %s102
      %p113 = scmp.eq.s32.totalorder %s18, 0
      %p114 = por %p112, %p113
      %p115 = scmp.ne.s32.totalorder %s101, %s102
      %p116 = scmp.eq.s32.totalorder %s19, 2
      %p117 = por %p115, %p116
      %p119 = scmp.ne.s32.totalorder %s102, %s118
      %p120 = scmp.eq.s32.totalorder %s19, 0
      %p121 = por %p119, %p120
      %s122 = ssub.s32 %s21, %s35
      %p123 = scmp.eq.s32.totalorder %s122, 0
      %s125 = sadd.s32 %s124, 1
      %s126 = scalar_select %p123, %s124, %s125
      %p129 = pneg %p123
      %p130 = scmp.eq.s32.totalorder %s13, 2
      %p131 = por %p129, %p130
      %p132 = scmp.ne.s32.totalorder %s124, %s127
      %p133 = scmp.eq.s32.totalorder %s13, 0
      %p134 = por %p132, %p133
      %p135 = scmp.ne.s32.totalorder %s124, %s127
      %p136 = scmp.eq.s32.totalorder %s18, 2
      %p137 = por %p135, %p136
      %p138 = scmp.ne.s32.totalorder %s127, %s128
      %p139 = scmp.eq.s32.totalorder %s18, 0
      %p140 = por %p138, %p139
      %p141 = scmp.ne.s32.totalorder %s127, %s128
      %p142 = scmp.eq.s32.totalorder %s19, 2
      %p143 = por %p141, %p142
      %p145 = scmp.ne.s32.totalorder %s128, %s144
      %p146 = scmp.eq.s32.totalorder %s19, 0
      %p147 = por %p145, %p146
      %s148 = ssub.s32 %s20, %s39
      %s149 = ssub.s32 %s21, %s35
      %s150 = sor.u32 %s148, %s149
      %p151 = scmp.eq.s32.totalorder %s150, 0
      %s153 = sadd.s32 %s152, 1
      %s154 = scalar_select %p151, %s152, %s153
      %p157 = pneg %p151
      %p158 = scmp.eq.s32.totalorder %s13, 2
      %p159 = por %p157, %p158
      %p160 = scmp.ne.s32.totalorder %s152, %s155
      %p161 = scmp.eq.s32.totalorder %s13, 0
      %p162 = por %p160, %p161
      %p163 = scmp.ne.s32.totalorder %s152, %s155
      %p164 = scmp.eq.s32.totalorder %s18, 2
      %p165 = por %p163, %p164
      %p166 = scmp.ne.s32.totalorder %s155, %s156
      %p167 = scmp.eq.s32.totalorder %s18, 0
      %p168 = por %p166, %p167
      %p169 = scmp.ne.s32.totalorder %s155, %s156
      %p170 = scmp.eq.s32.totalorder %s19, 2
      %p171 = por %p169, %p170
      %p173 = scmp.ne.s32.totalorder %s156, %s172
      %p174 = scmp.eq.s32.totalorder %s19, 0
      %p175 = por %p173, %p174
      %p176 = scmp.le.s32.totalorder 1, %s13
      %p177 = scmp.lt.s32.totalorder %s13, 4
      %p178 = pnand %p176, %p177
      %p179 = pneg %p178
      // Predicated region
      $region9: #{_forward.136} parent=5 // pred_check
        _
      $region10: #{_forward.136} parent=5 // pred_check_branch
        %181 = sbr.rel (%p178) target = $region12
      $region11: #{_forward.136} parent=5 // pred_region
        %s182 = ssub.s32 %s13, 1
        // Predicated region
        $region13: #{_forward.136} parent=11 // pred_check
          %p183 = pneg %p114
        $region14: #{_forward.136} parent=11 // pred_check_branch
          %185 = sbr.rel (%p183) target = $region16
        $region15: #{_forward.136} parent=11 // pred_region
          %p186 = scmp.lt.s32.totalorder %s24, 0
          %s187 = scalar_select %p186, %s24, 0
          %s188 = scalar_lea.vmem %s2, %s187
        $region16: #{_forward.136} parent=11 // pred_fallthru
          _
        // Predicated region
        $region17: #{_forward.136} parent=11 // pred_check
          %p189 = pneg %p140
        $region18: #{_forward.136} parent=11 // pred_check_branch
          %191 = sbr.rel (%p189) target = $region20
        $region19: #{_forward.136} parent=11 // pred_region
          %p192 = scmp.lt.s32.totalorder %s24, 0
          %s193 = scalar_select %p192, %s24, 0
          %s194 = scalar_lea.vmem %s3, %s193
        $region20: #{_forward.136} parent=11 // pred_fallthru
          _
      $region12: #{_forward.136} parent=5 // pred_fallthru
        _
      %p195 = scmp.lt.s32.totalorder %s13, 3
      // Predicated region
      $region21: #{_forward.136} parent=5 // pred_check
        %p196 = pneg %p195
      $region22: #{_forward.136} parent=5 // pred_check_branch
        %198 = sbr.rel (%p196) target = $region24
      $region23: #{_forward.136} parent=5 // pred_region
        // Predicated region
        $region25: #{_forward.136} parent=23 // pred_check
          %p199 = pneg %p54
        $region26: #{_forward.136} parent=23 // pred_check_branch
          %201 = sbr.rel (%p199) target = $region28
        $region27: #{_forward.136} parent=23 // pred_region
          %s202 = sand.u32 %s44, 1
          %s203 = scalar_lea.sflag [#allocation4], %s202
          %s204 = sand.u32 %s44, 1
          %s205 = smul.addr %s204, 12
          %s206 = scalar_lea.vmem [#allocation3], %s205
          %s207 = smul.u32 3, %s22
          %s209 = ssub.s32 192, 192
          %210 = vsyncadd %s203, %s209
          %s211 = smul.addr %s20, 9
          %s212 = sadd.s32 %s207, %s211
          %s213 = smul.addr %s212, 64
          %s214 = scalar_lea.hbm %s0, %s213
          %s216 = sshll.u32 %s206, 4
          %s217 = int_to_ptr.vmem [resolvable:$true] %s216
          %219 = dma.hbm_to_vmem [thread:$0]  %s214, 192, %s217, %s203
        $region28: #{_forward.136} parent=23 // pred_fallthru
          _
        // Predicated region
        $region29: #{_forward.136} parent=23 // pred_check
          %p220 = pneg %p82
        $region30: #{_forward.136} parent=23 // pred_check_branch
          %222 = sbr.rel (%p220) target = $region32
        $region31: #{_forward.136} parent=23 // pred_region
          %s223 = smul.u32 48, %s22
          %p224 = scmp.lt.s32.totalorder %s223, 143
          %s225 = scalar_select %p224, %s223, 143
          %p226 = scmp.lt.s32.totalorder %s21, 0
          %s227 = scalar_select %p226, %s21, 0
          %s228 = sadd.s32 %s227, %s225
          %s229 = smul.addr %s228, 4
          %s230 = scalar_lea.vmem %s1, %s229
          %s231 = smul.u32 48, %s22
        $region32: #{_forward.136} parent=23 // pred_fallthru
          _
      $region24: #{_forward.136} parent=5 // pred_fallthru
        _
      %p232 = scmp.le.s32.totalorder 1, %s13
      %p233 = scmp.lt.s32.totalorder %s13, 4
      %p234 = pnand %p232, %p233
      %p235 = pneg %p234
      // Predicated region
      $region33: #{_forward.136} parent=5 // pred_check
        _
      $region34: #{_forward.136} parent=5 // pred_check_branch
        %237 = sbr.rel (%p234) target = $region36
      $region35: #{_forward.136} parent=5 // pred_region
        %s238 = ssub.s32 %s13, 1
        %s239 = sand.u32 %s47, 1
        %s240 = scalar_lea.sflag [#allocation4], %s239
        %s241 = sand.u32 %s47, 1
        %s242 = smul.addr %s241, 12
        %s243 = scalar_lea.vmem [#allocation3], %s242
        // Predicated region
        $region37: #{_forward.136} parent=35 // pred_check
          %p244 = pneg %p60
        $region38: #{_forward.136} parent=35 // pred_check_branch
          %246 = sbr.rel (%p244) target = $region40
        $region39: #{_forward.136} parent=35 // pred_region
          %247 = dma.done %s240, 192
        $region40: #{_forward.136} parent=35 // pred_fallthru
          _
        %s248 = sand.u32 %s47, 1
        %s249 = scalar_lea.sflag [#allocation4], %s248
        %s250 = sand.u32 %s47, 1
        %s251 = smul.addr %s250, 12
        %s252 = scalar_lea.vmem [#allocation3], %s251
        %p253 = pneg %p60
        %p254 = pneg %p57
        %s255 = smul.u32 48, %s25
        %p256 = scmp.lt.s32.totalorder %s255, 143
        %s257 = scalar_select %p256, %s255, 143
        %p258 = scmp.lt.s32.totalorder %s24, 0
        %s259 = scalar_select %p258, %s24, 0
        %s260 = sadd.s32 %s259, %s257
        %s261 = smul.addr %s260, 4
        %s262 = scalar_lea.vmem %s1, %s261
        %p263 = pneg %p88
        %p264 = pneg %p85
        %p265 = scmp.lt.s32.totalorder %s24, 0
        %s266 = scalar_select %p265, %s24, 0
        %s267 = scalar_lea.vmem %s2, %s266
        %p268 = pneg %p114
        %p269 = pneg %p111
        %p270 = scmp.lt.s32.totalorder %s24, 0
        %s271 = scalar_select %p270, %s24, 0
        %s272 = scalar_lea.vmem %s3, %s271
        %p273 = pneg %p140
        %p274 = pneg %p137
        %p275 = pneg %p168
        %p276 = pneg %p165
        %p277 = scmp.lt.s32.totalorder %s23, 0
        %s278 = scalar_select %p277, %s23, 0
        %p279 = scmp.lt.s32.totalorder %s24, 0
        %s280 = scalar_select %p279, %s24, 0
        %s281 = sadd.s32 %s280, %s278
        %s282 = smul.addr %s281, 4
        %s283 = scalar_lea.vmem %s4, %s282
        %s284 = smul.u32 3, %s25
        %s285 = smul.u32 48, %s25
        %p286 = scmp.lt.s32.totalorder %s285, 143
        %s287 = scalar_select %p286, %s285, 143
        %p288 = scmp.lt.s32.totalorder %s24, 0
        %s289 = scalar_select %p288, %s24, 0
        %s290 = sadd.s32 %s289, %s287
        %s291 = smul.addr %s290, 4
        %s292 = scalar_lea.vmem %s1, %s291
        %s293 = smul.u32 48, %s25
        %p294 = scmp.lt.s32.totalorder %s24, 0
        %s295 = scalar_select %p294, %s24, 0
        %s296 = scalar_lea.vmem %s2, %s295
        %p297 = scmp.lt.s32.totalorder %s24, 0
        %s298 = scalar_select %p297, %s24, 0
        %s299 = scalar_lea.vmem %s3, %s298
        %p300 = scmp.lt.s32.totalorder %s23, 0
        %s301 = scalar_select %p300, %s23, 0
        %p302 = scmp.lt.s32.totalorder %s24, 0
        %s303 = scalar_select %p302, %s24, 0
        %s304 = sadd.s32 %s303, %s301
        %s305 = smul.addr %s304, 4
        %s306 = scalar_lea.vmem %s4, %s305
        %p308 = scmp.eq.s32.totalorder %s25, 0
        // Predicated region
        $region41: #{_forward.136} parent=35 // pred_check
          %p309 = pneg %p308
        $region42: #{_forward.136} parent=35 // pred_check_branch
          %311 = sbr.rel (%p309) target = $region44
        $region43: #{_forward.136} parent=35 // pred_region
          %312 = vst [vmem:[#allocation2] sm:$0xff] 0.0
        $region44: #{_forward.136} parent=35 // pred_fallthru
          _
        %v313 = vld [vmem:[#allocation2] sm:$0xff]
        %v314 = vld [vmem:[%s243] sm:$0xff]
        %v315 = vld [vmem:[%s243 + $0x8] sm:$0xf]
        %v316 = vld [vmem:[%s292] sm:$0xf]
        %v317 = vld [vmem:[%s292 + $0x4] sm:$0xf]
        %v318 = vld [vmem:[%s292 + $0x8] sm:$0xf]
        %v319 = vld [vmem:[%s292 + $0xc] sm:$0xf]
        %v320 = vld [vmem:[%s292 + $0x10] sm:$0xf]
        %v321 = vld [vmem:[%s292 + $0x14] sm:$0xf]
        %v322 = vld [vmem:[%s292 + $0x18] sm:$0xf]
        %v323 = vld [vmem:[%s292 + $0x1c] sm:$0xf]
        %v324 = vld [vmem:[%s292 + $0x20] sm:$0xf]
        %v325 = vld [vmem:[%s292 + $0x24] sm:$0xf]
        %v326 = vld [vmem:[%s292 + $0x28] sm:$0xf]
        %v327 = vld [vmem:[%s292 + $0x2c] sm:$0xf]
        %v328 = vld [vmem:[%s292 + $0x30] sm:$0xf]
        %v329 = vld [vmem:[%s292 + $0x34] sm:$0xf]
        %v330 = vld [vmem:[%s292 + $0x38] sm:$0xf]
        %v331 = vld [vmem:[%s292 + $0x3c] sm:$0xf]
        %v332 = vld [vmem:[%s292 + $0x40] sm:$0xf]
        %v333 = vld [vmem:[%s292 + $0x44] sm:$0xf]
        %v334 = vld [vmem:[%s292 + $0x48] sm:$0xf]
        %v335 = vld [vmem:[%s292 + $0x4c] sm:$0xf]
        %v336 = vld [vmem:[%s292 + $0x50] sm:$0xf]
        %v337 = vld [vmem:[%s292 + $0x54] sm:$0xf]
        %v338 = vld [vmem:[%s292 + $0x58] sm:$0xf]
        %v339 = vld [vmem:[%s292 + $0x5c] sm:$0xf]
        %v340 = vld [vmem:[%s292 + $0x60] sm:$0xf]
        %v341 = vld [vmem:[%s292 + $0x64] sm:$0xf]
        %v342 = vld [vmem:[%s292 + $0x68] sm:$0xf]
        %v343 = vld [vmem:[%s292 + $0x6c] sm:$0xf]
        %v344 = vld [vmem:[%s292 + $0x70] sm:$0xf]
        %v345 = vld [vmem:[%s292 + $0x74] sm:$0xf]
        %v346 = vld [vmem:[%s292 + $0x78] sm:$0xf]
        %v347 = vld [vmem:[%s292 + $0x7c] sm:$0xf]
        %v348 = vld [vmem:[%s292 + $0x80] sm:$0xf]
        %v349 = vld [vmem:[%s292 + $0x84] sm:$0xf]
        %v350 = vld [vmem:[%s292 + $0x88] sm:$0xf]
        %v351 = vld [vmem:[%s292 + $0x8c] sm:$0xf]
        %v352 = vld [vmem:[%s292 + $0x90] sm:$0xf]
        %v353 = vld [vmem:[%s292 + $0x94] sm:$0xf]
        %v354 = vld [vmem:[%s292 + $0x98] sm:$0xf]
        %v355 = vld [vmem:[%s292 + $0x9c] sm:$0xf]
        %v356 = vld [vmem:[%s292 + $0xa0] sm:$0xf]
        %v357 = vld [vmem:[%s292 + $0xa4] sm:$0xf]
        %v358 = vld [vmem:[%s292 + $0xa8] sm:$0xf]
        %v359 = vld [vmem:[%s292 + $0xac] sm:$0xf]
        %v360 = vld [vmem:[%s292 + $0xb0] sm:$0xf]
        %v361 = vld [vmem:[%s292 + $0xb4] sm:$0xf]
        %v362 = vld [vmem:[%s292 + $0xb8] sm:$0xf]
        %v363 = vld [vmem:[%s292 + $0xbc] sm:$0xf]
        %v366 = vunpack.c.l.b16 %v314
        %v367 = vunpack.c.h.b16 %v314
        %v368 = vunpack.c.l.b16 %v315
        %v369 = vpack.c.b16 %v366, %v366
        %v370 = vpack.c.b16 %v367, %v367
        %v371 = vpack.c.b16 %v368, %v368
        %v423 = vunpack.c.l.b16 %v316
        %v424 = vunpack.c.l.b16 %v317
        %v425 = vunpack.c.l.b16 %v318
        %v426 = vunpack.c.l.b16 %v319
        %v427 = vunpack.c.l.b16 %v320
        %v428 = vunpack.c.l.b16 %v321
        %v429 = vunpack.c.l.b16 %v322
        %v430 = vunpack.c.l.b16 %v323
        %v431 = vunpack.c.l.b16 %v324
        %v432 = vunpack.c.l.b16 %v325
        %v433 = vunpack.c.l.b16 %v326
        %v434 = vunpack.c.l.b16 %v327
        %v435 = vunpack.c.l.b16 %v328
        %v436 = vunpack.c.l.b16 %v329
        %v437 = vunpack.c.l.b16 %v330
        %v438 = vunpack.c.l.b16 %v331
        %v439 = vunpack.c.l.b16 %v332
        %v440 = vunpack.c.l.b16 %v333
        %v441 = vunpack.c.l.b16 %v334
        %v442 = vunpack.c.l.b16 %v335
        %v443 = vunpack.c.l.b16 %v336
        %v444 = vunpack.c.l.b16 %v337
        %v445 = vunpack.c.l.b16 %v338
        %v446 = vunpack.c.l.b16 %v339
        %v447 = vunpack.c.l.b16 %v340
        %v448 = vunpack.c.l.b16 %v341
        %v449 = vunpack.c.l.b16 %v342
        %v450 = vunpack.c.l.b16 %v343
        %v451 = vunpack.c.l.b16 %v344
        %v452 = vunpack.c.l.b16 %v345
        %v453 = vunpack.c.l.b16 %v346
        %v454 = vunpack.c.l.b16 %v347
        %v455 = vunpack.c.l.b16 %v348
        %v456 = vunpack.c.l.b16 %v349
        %v457 = vunpack.c.l.b16 %v350
        %v458 = vunpack.c.l.b16 %v351
        %v459 = vunpack.c.l.b16 %v352
        %v460 = vunpack.c.l.b16 %v353
        %v461 = vunpack.c.l.b16 %v354
        %v462 = vunpack.c.l.b16 %v355
        %v463 = vunpack.c.l.b16 %v356
        %v464 = vunpack.c.l.b16 %v357
        %v465 = vunpack.c.l.b16 %v358
        %v466 = vunpack.c.l.b16 %v359
        %v467 = vunpack.c.l.b16 %v360
        %v468 = vunpack.c.l.b16 %v361
        %v469 = vunpack.c.l.b16 %v362
        %v470 = vunpack.c.l.b16 %v363
        %v471 = vpack.c.b16 %v424, %v423
        %v472 = vpack.c.b16 %v426, %v425
        %v473 = vpack.c.b16 %v428, %v427
        %v474 = vpack.c.b16 %v430, %v429
        %v475 = vpack.c.b16 %v432, %v431
        %v476 = vpack.c.b16 %v434, %v433
        %v477 = vpack.c.b16 %v436, %v435
        %v478 = vpack.c.b16 %v438, %v437
        %v479 = vpack.c.b16 %v440, %v439
        %v480 = vpack.c.b16 %v442, %v441
        %v481 = vpack.c.b16 %v444, %v443
        %v482 = vpack.c.b16 %v446, %v445
        %v483 = vpack.c.b16 %v448, %v447
        %v484 = vpack.c.b16 %v450, %v449
        %v485 = vpack.c.b16 %v452, %v451
        %v486 = vpack.c.b16 %v454, %v453
        %v487 = vpack.c.b16 %v456, %v455
        %v488 = vpack.c.b16 %v458, %v457
        %v489 = vpack.c.b16 %v460, %v459
        %v490 = vpack.c.b16 %v462, %v461
        %v491 = vpack.c.b16 %v464, %v463
        %v492 = vpack.c.b16 %v466, %v465
        %v493 = vpack.c.b16 %v468, %v467
        %v494 = vpack.c.b16 %v470, %v469
        %519 = vmatprep.subr.bf16.mxu0 0
        %520 = vmatpush1.bf16.msra.mxu0 %v478
        %521 = vmatprep.subr.bf16.mxu0 0
        %522 = vmatpush1.bf16.msra.mxu0 %v477
        %523 = vmatprep.subr.bf16.mxu0 0
        %524 = vmatpush1.bf16.msra.mxu0 %v476
        %525 = vmatprep.subr.bf16.mxu0 0
        %526 = vmatpush1.bf16.msra.mxu0 %v475
        %527 = vmatprep.subr.bf16.mxu0 0
        %528 = vmatpush1.bf16.msra.mxu0 %v474
        %529 = vmatprep.subr.bf16.mxu0 0
        %530 = vmatpush1.bf16.msra.mxu0 %v473
        %531 = vmatprep.subr.bf16.mxu0 0
        %532 = vmatpush1.bf16.msra.mxu0 %v472
        %533 = vmatprep.subr.bf16.mxu0 0
        %534 = vmatpush1.bf16.msra.mxu0 %v471
        %535 = vmatprep.subr.bf16.mxu0 0
        %536 = vmatpush2.bf16.msra.mxu0 %v486
        %537 = vmatprep.subr.bf16.mxu0 0
        %538 = vmatpush2.bf16.msra.mxu0 %v485
        %539 = vmatprep.subr.bf16.mxu0 0
        %540 = vmatpush2.bf16.msra.mxu0 %v484
        %541 = vmatprep.subr.bf16.mxu0 0
        %542 = vmatpush2.bf16.msra.mxu0 %v483
        %543 = vmatprep.subr.bf16.mxu0 0
        %544 = vmatpush2.bf16.msra.mxu0 %v482
        %545 = vmatprep.subr.bf16.mxu0 0
        %546 = vmatpush2.bf16.msra.mxu0 %v481
        %547 = vmatprep.subr.bf16.mxu0 0
        %548 = vmatpush2.bf16.msra.mxu0 %v480
        %549 = vmatprep.subr.bf16.mxu0 0
        %550 = vmatpush2.bf16.msra.mxu0 %v479
        %551 = vmatprep.mubr.bf16.mxu0 %v370
        %552 = vmatmul.mubr.bf16.gmra.mxu0 %v369
        %v553 = vpop.f32.mrf.mxu0
        %v554 = vadd.f32 0.0, %v553
        %v555 = vpop.f32.mrf.mxu0
        %v556 = vpop.f32.mrf.mxu0
        %v557 = vpop.f32.mrf.mxu0
        %558 = vdwg.mxu0
        %559 = vmatprep.subr.bf16.mxu0 0
        %560 = vmatpush1.bf16.msra.mxu0 %v494
        %561 = vmatprep.subr.bf16.mxu0 0
        %562 = vmatpush1.bf16.msra.mxu0 %v493
        %563 = vmatprep.subr.bf16.mxu0 0
        %564 = vmatpush1.bf16.msra.mxu0 %v492
        %565 = vmatprep.subr.bf16.mxu0 0
        %566 = vmatpush1.bf16.msra.mxu0 %v491
        %567 = vmatprep.subr.bf16.mxu0 0
        %568 = vmatpush1.bf16.msra.mxu0 %v490
        %569 = vmatprep.subr.bf16.mxu0 0
        %570 = vmatpush1.bf16.msra.mxu0 %v489
        %571 = vmatprep.subr.bf16.mxu0 0
        %572 = vmatpush1.bf16.msra.mxu0 %v488
        %573 = vmatprep.subr.bf16.mxu0 0
        %574 = vmatpush1.bf16.msra.mxu0 %v487
        %575 = vmatprep.subr.bf16.mxu0 0
        %576 = vmatpush2.bf16.msra.mxu0 0
        %577 = vmatprep.subr.bf16.mxu0 0
        %578 = vmatpush2.bf16.msra.mxu0 0
        %579 = vmatprep.subr.bf16.mxu0 0
        %580 = vmatpush2.bf16.msra.mxu0 0
        %581 = vmatprep.subr.bf16.mxu0 0
        %582 = vmatpush2.bf16.msra.mxu0 0
        %583 = vmatprep.subr.bf16.mxu0 0
        %584 = vmatpush2.bf16.msra.mxu0 0
        %585 = vmatprep.subr.bf16.mxu0 0
        %586 = vmatpush2.bf16.msra.mxu0 0
        %587 = vmatprep.subr.bf16.mxu0 0
        %588 = vmatpush2.bf16.msra.mxu0 0
        %589 = vmatprep.subr.bf16.mxu0 0
        %590 = vmatpush2.bf16.msra.mxu0 0
        %591 = vmatprep.mubr.bf16.mxu0 0
        %592 = vmatmul.mubr.bf16.gmra.mxu0 %v371
        %v593 = vpop.f32.mrf.mxu0
        %v594 = vadd.f32 %v554, %v593
        %v595 = vpop.f32.mrf.mxu0
        %v596 = vpop.f32.mrf.mxu0
        %v597 = vpop.f32.mrf.mxu0
        %598 = vdwg.mxu0
        %v599 = vadd.f32 %v313, %v594
        %600 = vst [vmem:[#allocation2] sm:$0xff] %v599
        %p601 = scmp.eq.s32.totalorder %s25, 2
        // Predicated region
        $region45: #{_forward.136} parent=35 // pred_check
          %p602 = pneg %p601
        $region46: #{_forward.136} parent=35 // pred_check_branch
          %604 = sbr.rel (%p602) target = $region48
        $region47: #{_forward.136} parent=35 // pred_region
          %v605 = vld [vmem:[#allocation2] sm:$0xff]
          %v606 = vld [vmem:[%s296] sm:$0x1]
          %v608 = vlaneseq
          %v609 = vshrl.u32 %v608, 7
          %v610 = vsub.s32 0, %v609
          %v611 = vrot.slane %v606, %v610
          %v613 = vmul.f32 %v605, %v611
          %v614 = vld [vmem:[%s299] sm:$0x1]
          %v616 = vlaneseq
          %v617 = vshrl.u32 %v616, 7
          %v618 = vsub.s32 0, %v617
          %v619 = vrot.slane %v614, %v618
          %v621 = vadd.f32 %v613, %v619
          %v622 = vmax.f32 %v621, 0.0
          %v623 = vpack.c.bf16 %v622, %v622
          %624 = vst [vmem:[%s306] sm:$0xf] %v623
        $region48: #{_forward.136} parent=35 // pred_fallthru
          _
        %p625 = scmp.lt.s32.totalorder %s23, 0
        %s626 = scalar_select %p625, %s23, 0
        %p627 = scmp.lt.s32.totalorder %s24, 0
        %s628 = scalar_select %p627, %s24, 0
        %s629 = sadd.s32 %s628, %s626
        %s630 = smul.addr %s629, 4
        %s631 = scalar_lea.vmem %s4, %s630
        // Predicated region
        $region49: #{_forward.136} parent=35 // pred_check
          %p632 = pneg %p165
        $region50: #{_forward.136} parent=35 // pred_check_branch
          %634 = sbr.rel (%p632) target = $region52
        $region51: #{_forward.136} parent=35 // pred_region
          _
        $region52: #{_forward.136} parent=35 // pred_fallthru
          _
        // Predicated region
        $region53: #{_forward.136} parent=35 // pred_check
          %p635 = pneg %p165
        $region54: #{_forward.136} parent=35 // pred_check_branch
          %637 = sbr.rel (%p635) target = $region56
        $region55: #{_forward.136} parent=35 // pred_region
          %p638 = scmp.lt.s32.totalorder %s23, 0
          %s639 = scalar_select %p638, %s23, 0
          %p640 = scmp.lt.s32.totalorder %s24, 0
          %s641 = scalar_select %p640, %s24, 0
          %s642 = sadd.s32 %s641, %s639
          %s643 = smul.addr %s642, 4
          %s644 = scalar_lea.vmem %s4, %s643
        $region56: #{_forward.136} parent=35 // pred_fallthru
          _
      $region36: #{_forward.136} parent=5 // pred_fallthru
        _
      %p645 = scmp.le.s32.totalorder 2, %s13
      // Predicated region
      $region57: #{_forward.136} parent=5 // pred_check
        %p646 = pneg %p645
      $region58: #{_forward.136} parent=5 // pred_check_branch
        %648 = sbr.rel (%p646) target = $region60
      $region59: #{_forward.136} parent=5 // pred_region
        %s649 = ssub.s32 %s13, 2
      $region60: #{_forward.136} parent=5 // pred_fallthru
        _
    $region6: #{_forward.136} parent=1 // loop_footer
      %s17 = sadd.s32 1, %s13
    $region7: #{_forward.136} parent=1 // loop_footer_branch
      %12 = sbr.rel target = $region3
    $region8: #{_forward.136} parent=1 // loop_exit
      _
    %650 = vsyncpa [#allocation4], 1
    %s651 = scalar_lea.sflag [#allocation4], 1
    %652 = vsyncpa %s651, 1

// kernel: _forward.201
$region0: #{_forward.201}
  #allocation0 [shape = 'u32[]', space=smem, size = 0x4, offset = 0x4, fixed_abs, tag = 'smem constant byte address 0x4 - core index']
  #allocation1 [shape = 'u32[144,128]{1,0:T(1,128)}', space=vmem, size = 0x12000, scoped, tag = 'internal scratch']
  #allocation2 [shape = 'f32[8,256]{1,0:T(8,128)}', space=vmem, size = 0x2000, scoped, tag = 'scratch operand']
  %s0 = inlined_call_operand.vmem [shape: bf16[8,128], index: 0, kind: input, shape index: {}]
  %s1 = inlined_call_operand.vmem [shape: bf16[128,256], index: 1, kind: input, shape index: {}]
  %s2 = inlined_call_operand.vmem [shape: f32[1,256], index: 2, kind: input, shape index: {}]
  %s3 = inlined_call_operand.vmem [shape: f32[1,256], index: 3, kind: input, shape index: {}]
  %s4 = inlined_call_operand.vmem [shape: bf16[8,256], index: 4, kind: output, shape index: {}]
  %s5 = sld [smem:[#allocation0]]
  $region34: #{_forward.201} parent=0
    _
  %s7 = ssub.s32 1, %s5
  %s8 = scalar_select 0, %s7, %s5
  // Predicated region
  $region2: #{_forward.201} parent=0 // pred_check
    _
  $region3: #{_forward.201} parent=0 // pred_check_branch
    %10 = sbr.rel (0) target = $region5
  $region4: #{_forward.201} parent=0 // pred_region
    _
  $region5: #{_forward.201} parent=0 // pred_fallthru
    _
  // Predicated region
  $region6: #{_forward.201} parent=0 // pred_check
    _
  $region7: #{_forward.201} parent=0 // pred_check_branch
    %12 = sbr.rel (0) target = $region9
  $region8: #{_forward.201} parent=0 // pred_region
    _
  $region9: #{_forward.201} parent=0 // pred_fallthru
    _
  // Predicated region
  $region10: #{_forward.201} parent=0 // pred_check
    _
  $region11: #{_forward.201} parent=0 // pred_check_branch
    %14 = sbr.rel (0) target = $region13
  $region12: #{_forward.201} parent=0 // pred_region
    _
  $region13: #{_forward.201} parent=0 // pred_fallthru
    _
  // Predicated region
  $region14: #{_forward.201} parent=0 // pred_check
    _
  $region15: #{_forward.201} parent=0 // pred_check_branch
    %16 = sbr.rel (0) target = $region17
  $region16: #{_forward.201} parent=0 // pred_region
    _
  $region17: #{_forward.201} parent=0 // pred_fallthru
    _
  %p18 = scmp.eq.s32.totalorder 0, 0
  // Predicated region
  $region18: #{_forward.201} parent=0 // pred_check
    %p19 = pneg %p18
  $region19: #{_forward.201} parent=0 // pred_check_branch
    %21 = sbr.rel (%p19) target = $region21
  $region20: #{_forward.201} parent=0 // pred_region
    %22 = vst [vmem:[#allocation2] sm:$0xff] 0.0
    %23 = vst [vmem:[#allocation2 + $0x8] sm:$0xff] 0.0
  $region21: #{_forward.201} parent=0 // pred_fallthru
    _
  %v24 = vld [vmem:[#allocation2] sm:$0xff]
  %v25 = vld [vmem:[#allocation2 + $0x8] sm:$0xff]
  %v26 = vld [vmem:[%s0] sm:$0xf]
  %v27 = vld [vmem:[%s1] sm:$0xff]
  %v28 = vld [vmem:[%s1 + $0x8] sm:$0xff]
  %v29 = vld [vmem:[%s1 + $0x10] sm:$0xff]
  %v30 = vld [vmem:[%s1 + $0x18] sm:$0xff]
  %v31 = vld [vmem:[%s1 + $0x20] sm:$0xff]
  %v32 = vld [vmem:[%s1 + $0x28] sm:$0xff]
  %v33 = vld [vmem:[%s1 + $0x30] sm:$0xff]
  %v34 = vld [vmem:[%s1 + $0x38] sm:$0xff]
  %v35 = vld [vmem:[%s1 + $0x40] sm:$0xff]
  %v36 = vld [vmem:[%s1 + $0x48] sm:$0xff]
  %v37 = vld [vmem:[%s1 + $0x50] sm:$0xff]
  %v38 = vld [vmem:[%s1 + $0x58] sm:$0xff]
  %v39 = vld [vmem:[%s1 + $0x60] sm:$0xff]
  %v40 = vld [vmem:[%s1 + $0x68] sm:$0xff]
  %v41 = vld [vmem:[%s1 + $0x70] sm:$0xff]
  %v42 = vld [vmem:[%s1 + $0x78] sm:$0xff]
  %v59 = vunpack.c.l.b16 %v27
  %v60 = vunpack.c.h.b16 %v27
  %v61 = vunpack.c.l.b16 %v28
  %v62 = vunpack.c.h.b16 %v28
  %v63 = vunpack.c.l.b16 %v29
  %v64 = vunpack.c.h.b16 %v29
  %v65 = vunpack.c.l.b16 %v30
  %v66 = vunpack.c.h.b16 %v30
  %v67 = vunpack.c.l.b16 %v31
  %v68 = vunpack.c.h.b16 %v31
  %v69 = vunpack.c.l.b16 %v32
  %v70 = vunpack.c.h.b16 %v32
  %v71 = vunpack.c.l.b16 %v33
  %v72 = vunpack.c.h.b16 %v33
  %v73 = vunpack.c.l.b16 %v34
  %v74 = vunpack.c.h.b16 %v34
  %v75 = vunpack.c.l.b16 %v35
  %v76 = vunpack.c.h.b16 %v35
  %v77 = vunpack.c.l.b16 %v36
  %v78 = vunpack.c.h.b16 %v36
  %v79 = vunpack.c.l.b16 %v37
  %v80 = vunpack.c.h.b16 %v37
  %v81 = vunpack.c.l.b16 %v38
  %v82 = vunpack.c.h.b16 %v38
  %v83 = vunpack.c.l.b16 %v39
  %v84 = vunpack.c.h.b16 %v39
  %v85 = vunpack.c.l.b16 %v40
  %v86 = vunpack.c.h.b16 %v40
  %v87 = vunpack.c.l.b16 %v41
  %v88 = vunpack.c.h.b16 %v41
  %v89 = vunpack.c.l.b16 %v42
  %v90 = vunpack.c.h.b16 %v42
  %v91 = vpack.c.b16 %v61, %v59
  %v92 = vpack.c.b16 %v62, %v60
  %v93 = vpack.c.b16 %v65, %v63
  %v94 = vpack.c.b16 %v66, %v64
  %v95 = vpack.c.b16 %v69, %v67
  %v96 = vpack.c.b16 %v70, %v68
  %v97 = vpack.c.b16 %v73, %v71
  %v98 = vpack.c.b16 %v74, %v72
  %v99 = vpack.c.b16 %v77, %v75
  %v100 = vpack.c.b16 %v78, %v76
  %v101 = vpack.c.b16 %v81, %v79
  %v102 = vpack.c.b16 %v82, %v80
  %v103 = vpack.c.b16 %v85, %v83
  %v104 = vpack.c.b16 %v86, %v84
  %v105 = vpack.c.b16 %v89, %v87
  %v106 = vpack.c.b16 %v90, %v88
  %123 = vmatprep.subr.bf16.mxu0 %v106
  %124 = vmatpush1.bf16.msra.mxu0 %v105
  %125 = vmatprep.subr.bf16.mxu0 %v104
  %126 = vmatpush1.bf16.msra.mxu0 %v103
  %127 = vmatprep.subr.bf16.mxu0 %v102
  %128 = vmatpush1.bf16.msra.mxu0 %v101
  %129 = vmatprep.subr.bf16.mxu0 %v100
  %130 = vmatpush1.bf16.msra.mxu0 %v99
  %131 = vmatprep.subr.bf16.mxu0 %v98
  %132 = vmatpush1.bf16.msra.mxu0 %v97
  %133 = vmatprep.subr.bf16.mxu0 %v96
  %134 = vmatpush1.bf16.msra.mxu0 %v95
  %135 = vmatprep.subr.bf16.mxu0 %v94
  %136 = vmatpush1.bf16.msra.mxu0 %v93
  %137 = vmatprep.subr.bf16.mxu0 %v92
  %138 = vmatpush1.bf16.msra.mxu0 %v91
  %139 = vmatprep.subr.bf16.mxu0 0
  %140 = vmatpush2.bf16.msra.mxu0 0
  %141 = vmatprep.subr.bf16.mxu0 0
  %142 = vmatpush2.bf16.msra.mxu0 0
  %143 = vmatprep.subr.bf16.mxu0 0
  %144 = vmatpush2.bf16.msra.mxu0 0
  %145 = vmatprep.subr.bf16.mxu0 0
  %146 = vmatpush2.bf16.msra.mxu0 0
  %147 = vmatprep.subr.bf16.mxu0 0
  %148 = vmatpush2.bf16.msra.mxu0 0
  %149 = vmatprep.subr.bf16.mxu0 0
  %150 = vmatpush2.bf16.msra.mxu0 0
  %151 = vmatprep.subr.bf16.mxu0 0
  %152 = vmatpush2.bf16.msra.mxu0 0
  %153 = vmatprep.subr.bf16.mxu0 0
  %154 = vmatpush2.bf16.msra.mxu0 0
  %155 = vmatprep.mubr.bf16.mxu0 0
  %156 = vmatmul.mubr.bf16.gmra.mxu0 %v26
  %v157 = vpop.f32.mrf.mxu0
  %v158 = vadd.f32 0.0, %v157
  %v159 = vpop.f32.mrf.mxu0
  %v160 = vadd.f32 0.0, %v159
  %v161 = vpop.f32.mrf.mxu0
  %v162 = vpop.f32.mrf.mxu0
  %163 = vdwg.mxu0
  %v164 = vadd.f32 %v24, %v158
  %v165 = vadd.f32 %v25, %v160
  %166 = vst [vmem:[#allocation2] sm:$0xff] %v164
  %167 = vst [vmem:[#allocation2 + $0x8] sm:$0xff] %v165
  // Predicated region
  $region22: #{_forward.201} parent=0 // pred_check
    %p168 = pneg %p18
  $region23: #{_forward.201} parent=0 // pred_check_branch
    %170 = sbr.rel (%p168) target = $region25
  $region24: #{_forward.201} parent=0 // pred_region
    %v171 = vld [vmem:[#allocation2] sm:$0xff]
    %v172 = vld [vmem:[#allocation2 + $0x8] sm:$0xff]
    %v173 = vld [vmem:[%s2] sm:$0x3]
    %v175 = vlaneseq
    %v176 = vshrl.u32 %v175, 7
    %v177 = vsub.s32 0, %v176
    %v178 = vrot.slane %v173, %v177
    %v179 = vlaneseq
    %v180 = vshrl.u32 %v179, 7
    %v181 = vsub.s32 1, %v180
    %v182 = vrot.slane %v173, %v181
    %v185 = vmul.f32 %v171, %v178
    %v186 = vmul.f32 %v172, %v182
    %v187 = vld [vmem:[%s3] sm:$0x3]
    %v189 = vlaneseq
    %v190 = vshrl.u32 %v189, 7
    %v191 = vsub.s32 0, %v190
    %v192 = vrot.slane %v187, %v191
    %v193 = vlaneseq
    %v194 = vshrl.u32 %v193, 7
    %v195 = vsub.s32 1, %v194
    %v196 = vrot.slane %v187, %v195
    %v199 = vadd.f32 %v185, %v192
    %v200 = vadd.f32 %v186, %v196
    %v201 = vpack.c.bf16 %v199, %v199
    %v202 = vpack.c.bf16 %v200, %v200
    %v205 = vunpack.c.l.b16 %v201
    %v206 = vunpack.c.l.b16 %v202
    %v207 = vpack.c.b16 %v206, %v205
    %209 = vst [vmem:[%s4] sm:$0xff] %v207
  $region25: #{_forward.201} parent=0 // pred_fallthru
    _
  // Predicated region
  $region26: #{_forward.201} parent=0 // pred_check
    _
  $region27: #{_forward.201} parent=0 // pred_check_branch
    %211 = sbr.rel (0) target = $region29
  $region28: #{_forward.201} parent=0 // pred_region
    _
  $region29: #{_forward.201} parent=0 // pred_fallthru
    _
  // Predicated region
  $region30: #{_forward.201} parent=0 // pred_check
    _
  $region31: #{_forward.201} parent=0 // pred_check_branch
    %213 = sbr.rel (0) target = $region33
  $region32: #{_forward.201} parent=0 // pred_region
    _
  $region33: #{_forward.201} parent=0 // pred_fallthru
    _

// kernel: _forward.204
$region0: #{_forward.204}
  #allocation0 [shape = 'u32[]', space=smem, size = 0x4, offset = 0x4, fixed_abs, tag = 'smem constant byte address 0x4 - core index']
  #allocation1 [shape = 'u32[144,128]{1,0:T(1,128)}', space=vmem, size = 0x12000, scoped, tag = 'internal scratch']
  #allocation2 [shape = 'f32[8,256]{1,0:T(8,128)}', space=vmem, size = 0x2000, scoped, tag = 'scratch operand']
  %s0 = inlined_call_operand.vmem [shape: bf16[8,128], index: 0, kind: input, shape index: {}]
  %s1 = inlined_call_operand.vmem [shape: bf16[128,256], index: 1, kind: input, shape index: {}]
  %s2 = inlined_call_operand.vmem [shape: f32[1,256], index: 2, kind: input, shape index: {}]
  %s3 = inlined_call_operand.vmem [shape: f32[1,256], index: 3, kind: input, shape index: {}]
  %s4 = inlined_call_operand.vmem [shape: bf16[8,256], index: 4, kind: input, shape index: {}]
  %s5 = inlined_call_operand.vmem [shape: bf16[8,256], index: 5, kind: output, shape index: {}]
  %s6 = sld [smem:[#allocation0]]
  $region38: #{_forward.204} parent=0
    _
  %s8 = ssub.s32 1, %s6
  %s9 = scalar_select 0, %s8, %s6
  // Predicated region
  $region2: #{_forward.204} parent=0 // pred_check
    _
  $region3: #{_forward.204} parent=0 // pred_check_branch
    %11 = sbr.rel (0) target = $region5
  $region4: #{_forward.204} parent=0 // pred_region
    _
  $region5: #{_forward.204} parent=0 // pred_fallthru
    _
  // Predicated region
  $region6: #{_forward.204} parent=0 // pred_check
    _
  $region7: #{_forward.204} parent=0 // pred_check_branch
    %13 = sbr.rel (0) target = $region9
  $region8: #{_forward.204} parent=0 // pred_region
    _
  $region9: #{_forward.204} parent=0 // pred_fallthru
    _
  // Predicated region
  $region10: #{_forward.204} parent=0 // pred_check
    _
  $region11: #{_forward.204} parent=0 // pred_check_branch
    %15 = sbr.rel (0) target = $region13
  $region12: #{_forward.204} parent=0 // pred_region
    _
  $region13: #{_forward.204} parent=0 // pred_fallthru
    _
  // Predicated region
  $region14: #{_forward.204} parent=0 // pred_check
    _
  $region15: #{_forward.204} parent=0 // pred_check_branch
    %17 = sbr.rel (0) target = $region17
  $region16: #{_forward.204} parent=0 // pred_region
    _
  $region17: #{_forward.204} parent=0 // pred_fallthru
    _
  // Predicated region
  $region18: #{_forward.204} parent=0 // pred_check
    _
  $region19: #{_forward.204} parent=0 // pred_check_branch
    %19 = sbr.rel (0) target = $region21
  $region20: #{_forward.204} parent=0 // pred_region
    _
  $region21: #{_forward.204} parent=0 // pred_fallthru
    _
  %p21 = scmp.eq.s32.totalorder 0, 0
  // Predicated region
  $region22: #{_forward.204} parent=0 // pred_check
    %p22 = pneg %p21
  $region23: #{_forward.204} parent=0 // pred_check_branch
    %24 = sbr.rel (%p22) target = $region25
  $region24: #{_forward.204} parent=0 // pred_region
    %25 = vst [vmem:[#allocation2] sm:$0xff] 0.0
    %26 = vst [vmem:[#allocation2 + $0x8] sm:$0xff] 0.0
  $region25: #{_forward.204} parent=0 // pred_fallthru
    _
  %v27 = vld [vmem:[#allocation2] sm:$0xff]
  %v28 = vld [vmem:[#allocation2 + $0x8] sm:$0xff]
  %v29 = vld [vmem:[%s0] sm:$0xf]
  %v30 = vld [vmem:[%s1] sm:$0xff]
  %v31 = vld [vmem:[%s1 + $0x8] sm:$0xff]
  %v32 = vld [vmem:[%s1 + $0x10] sm:$0xff]
  %v33 = vld [vmem:[%s1 + $0x18] sm:$0xff]
  %v34 = vld [vmem:[%s1 + $0x20] sm:$0xff]
  %v35 = vld [vmem:[%s1 + $0x28] sm:$0xff]
  %v36 = vld [vmem:[%s1 + $0x30] sm:$0xff]
  %v37 = vld [vmem:[%s1 + $0x38] sm:$0xff]
  %v38 = vld [vmem:[%s1 + $0x40] sm:$0xff]
  %v39 = vld [vmem:[%s1 + $0x48] sm:$0xff]
  %v40 = vld [vmem:[%s1 + $0x50] sm:$0xff]
  %v41 = vld [vmem:[%s1 + $0x58] sm:$0xff]
  %v42 = vld [vmem:[%s1 + $0x60] sm:$0xff]
  %v43 = vld [vmem:[%s1 + $0x68] sm:$0xff]
  %v44 = vld [vmem:[%s1 + $0x70] sm:$0xff]
  %v45 = vld [vmem:[%s1 + $0x78] sm:$0xff]
  %v62 = vunpack.c.l.b16 %v30
  %v63 = vunpack.c.h.b16 %v30
  %v64 = vunpack.c.l.b16 %v31
  %v65 = vunpack.c.h.b16 %v31
  %v66 = vunpack.c.l.b16 %v32
  %v67 = vunpack.c.h.b16 %v32
  %v68 = vunpack.c.l.b16 %v33
  %v69 = vunpack.c.h.b16 %v33
  %v70 = vunpack.c.l.b16 %v34
  %v71 = vunpack.c.h.b16 %v34
  %v72 = vunpack.c.l.b16 %v35
  %v73 = vunpack.c.h.b16 %v35
  %v74 = vunpack.c.l.b16 %v36
  %v75 = vunpack.c.h.b16 %v36
  %v76 = vunpack.c.l.b16 %v37
  %v77 = vunpack.c.h.b16 %v37
  %v78 = vunpack.c.l.b16 %v38
  %v79 = vunpack.c.h.b16 %v38
  %v80 = vunpack.c.l.b16 %v39
  %v81 = vunpack.c.h.b16 %v39
  %v82 = vunpack.c.l.b16 %v40
  %v83 = vunpack.c.h.b16 %v40
  %v84 = vunpack.c.l.b16 %v41
  %v85 = vunpack.c.h.b16 %v41
  %v86 = vunpack.c.l.b16 %v42
  %v87 = vunpack.c.h.b16 %v42
  %v88 = vunpack.c.l.b16 %v43
  %v89 = vunpack.c.h.b16 %v43
  %v90 = vunpack.c.l.b16 %v44
  %v91 = vunpack.c.h.b16 %v44
  %v92 = vunpack.c.l.b16 %v45
  %v93 = vunpack.c.h.b16 %v45
  %v94 = vpack.c.b16 %v64, %v62
  %v95 = vpack.c.b16 %v65, %v63
  %v96 = vpack.c.b16 %v68, %v66
  %v97 = vpack.c.b16 %v69, %v67
  %v98 = vpack.c.b16 %v72, %v70
  %v99 = vpack.c.b16 %v73, %v71
  %v100 = vpack.c.b16 %v76, %v74
  %v101 = vpack.c.b16 %v77, %v75
  %v102 = vpack.c.b16 %v80, %v78
  %v103 = vpack.c.b16 %v81, %v79
  %v104 = vpack.c.b16 %v84, %v82
  %v105 = vpack.c.b16 %v85, %v83
  %v106 = vpack.c.b16 %v88, %v86
  %v107 = vpack.c.b16 %v89, %v87
  %v108 = vpack.c.b16 %v92, %v90
  %v109 = vpack.c.b16 %v93, %v91
  %126 = vmatprep.subr.bf16.mxu0 %v109
  %127 = vmatpush1.bf16.msra.mxu0 %v108
  %128 = vmatprep.subr.bf16.mxu0 %v107
  %129 = vmatpush1.bf16.msra.mxu0 %v106
  %130 = vmatprep.subr.bf16.mxu0 %v105
  %131 = vmatpush1.bf16.msra.mxu0 %v104
  %132 = vmatprep.subr.bf16.mxu0 %v103
  %133 = vmatpush1.bf16.msra.mxu0 %v102
  %134 = vmatprep.subr.bf16.mxu0 %v101
  %135 = vmatpush1.bf16.msra.mxu0 %v100
  %136 = vmatprep.subr.bf16.mxu0 %v99
  %137 = vmatpush1.bf16.msra.mxu0 %v98
  %138 = vmatprep.subr.bf16.mxu0 %v97
  %139 = vmatpush1.bf16.msra.mxu0 %v96
  %140 = vmatprep.subr.bf16.mxu0 %v95
  %141 = vmatpush1.bf16.msra.mxu0 %v94
  %142 = vmatprep.subr.bf16.mxu0 0
  %143 = vmatpush2.bf16.msra.mxu0 0
  %144 = vmatprep.subr.bf16.mxu0 0
  %145 = vmatpush2.bf16.msra.mxu0 0
  %146 = vmatprep.subr.bf16.mxu0 0
  %147 = vmatpush2.bf16.msra.mxu0 0
  %148 = vmatprep.subr.bf16.mxu0 0
  %149 = vmatpush2.bf16.msra.mxu0 0
  %150 = vmatprep.subr.bf16.mxu0 0
  %151 = vmatpush2.bf16.msra.mxu0 0
  %152 = vmatprep.subr.bf16.mxu0 0
  %153 = vmatpush2.bf16.msra.mxu0 0
  %154 = vmatprep.subr.bf16.mxu0 0
  %155 = vmatpush2.bf16.msra.mxu0 0
  %156 = vmatprep.subr.bf16.mxu0 0
  %157 = vmatpush2.bf16.msra.mxu0 0
  %158 = vmatprep.mubr.bf16.mxu0 0
  %159 = vmatmul.mubr.bf16.gmra.mxu0 %v29
  %v160 = vpop.f32.mrf.mxu0
  %v161 = vadd.f32 0.0, %v160
  %v162 = vpop.f32.mrf.mxu0
  %v163 = vadd.f32 0.0, %v162
  %v164 = vpop.f32.mrf.mxu0
  %v165 = vpop.f32.mrf.mxu0
  %166 = vdwg.mxu0
  %v167 = vadd.f32 %v27, %v161
  %v168 = vadd.f32 %v28, %v163
  %169 = vst [vmem:[#allocation2] sm:$0xff] %v167
  %170 = vst [vmem:[#allocation2 + $0x8] sm:$0xff] %v168
  // Predicated region
  $region26: #{_forward.204} parent=0 // pred_check
    %p171 = pneg %p21
  $region27: #{_forward.204} parent=0 // pred_check_branch
    %173 = sbr.rel (%p171) target = $region29
  $region28: #{_forward.204} parent=0 // pred_region
    %v174 = vld [vmem:[#allocation2] sm:$0xff]
    %v175 = vld [vmem:[#allocation2 + $0x8] sm:$0xff]
    %v176 = vld [vmem:[%s2] sm:$0x3]
    %v178 = vlaneseq
    %v179 = vshrl.u32 %v178, 7
    %v180 = vsub.s32 0, %v179
    %v181 = vrot.slane %v176, %v180
    %v182 = vlaneseq
    %v183 = vshrl.u32 %v182, 7
    %v184 = vsub.s32 1, %v183
    %v185 = vrot.slane %v176, %v184
    %v188 = vmul.f32 %v174, %v181
    %v189 = vmul.f32 %v175, %v185
    %v190 = vld [vmem:[%s3] sm:$0x3]
    %v192 = vlaneseq
    %v193 = vshrl.u32 %v192, 7
    %v194 = vsub.s32 0, %v193
    %v195 = vrot.slane %v190, %v194
    %v196 = vlaneseq
    %v197 = vshrl.u32 %v196, 7
    %v198 = vsub.s32 1, %v197
    %v199 = vrot.slane %v190, %v198
    %v202 = vadd.f32 %v188, %v195
    %v203 = vadd.f32 %v189, %v199
    %v204 = vld [vmem:[%s4] sm:$0xff]
    %v205 = vunpack.c.l.bf16 %v204
    %v206 = vunpack.c.h.bf16 %v204
    %v207 = vadd.f32 %v202, %v205
    %v208 = vadd.f32 %v203, %v206
    %v209 = vmax.f32 %v207, 0.0
    %v210 = vmax.f32 %v208, 0.0
    %v211 = vpack.c.bf16 %v209, %v209
    %v212 = vpack.c.bf16 %v210, %v210
    %v215 = vunpack.c.l.b16 %v211
    %v216 = vunpack.c.l.b16 %v212
    %v217 = vpack.c.b16 %v216, %v215
    %219 = vst [vmem:[%s5] sm:$0xff] %v217
  $region29: #{_forward.204} parent=0 // pred_fallthru
    _
  // Predicated region
  $region30: #{_forward.204} parent=0 // pred_check
    _
  $region31: #{_forward.204} parent=0 // pred_check_branch
    %221 = sbr.rel (0) target = $region33
  $region32: #{_forward.204} parent=0 // pred_region
    _
  $region33: #{_forward.204} parent=0 // pred_fallthru
    _
  // Predicated region
  $region34: #{_forward.204} parent=0 // pred_check
    _
  $region35: #{_forward.204} parent=0 // pred_check_branch
    %223 = sbr.rel (0) target = $region37
  $region36: #{_forward.204} parent=0 // pred_region
    _
  $region37: #{_forward.204} parent=0 // pred_fallthru
    _

// kernel: _forward.205
$region0: #{_forward.205}
  #allocation0 [shape = 'u32[]', space=smem, size = 0x4, offset = 0x4, fixed_abs, tag = 'smem constant byte address 0x4 - core index']
  #allocation1 [shape = 'u32[144,128]{1,0:T(1,128)}', space=vmem, size = 0x12000, scoped, tag = 'internal scratch']
  #allocation2 [shape = 'f32[8,128]{1,0:T(8,128)}', space=vmem, size = 0x1000, scoped, tag = 'scratch operand']
  %s0 = inlined_call_operand.vmem [shape: bf16[8,256], index: 0, kind: input, shape index: {}]
  %s1 = inlined_call_operand.vmem [shape: bf16[256,128], index: 1, kind: input, shape index: {}]
  %s2 = inlined_call_operand.vmem [shape: f32[1,128], index: 2, kind: input, shape index: {}]
  %s3 = inlined_call_operand.vmem [shape: f32[1,128], index: 3, kind: input, shape index: {}]
  %s4 = inlined_call_operand.vmem [shape: bf16[8,128], index: 4, kind: output, shape index: {}]
  %s5 = sld [smem:[#allocation0]]
  $region34: #{_forward.205} parent=0
    _
  %s7 = ssub.s32 1, %s5
  %s8 = scalar_select 0, %s7, %s5
  // Predicated region
  $region2: #{_forward.205} parent=0 // pred_check
    _
  $region3: #{_forward.205} parent=0 // pred_check_branch
    %10 = sbr.rel (0) target = $region5
  $region4: #{_forward.205} parent=0 // pred_region
    _
  $region5: #{_forward.205} parent=0 // pred_fallthru
    _
  // Predicated region
  $region6: #{_forward.205} parent=0 // pred_check
    _
  $region7: #{_forward.205} parent=0 // pred_check_branch
    %12 = sbr.rel (0) target = $region9
  $region8: #{_forward.205} parent=0 // pred_region
    _
  $region9: #{_forward.205} parent=0 // pred_fallthru
    _
  // Predicated region
  $region10: #{_forward.205} parent=0 // pred_check
    _
  $region11: #{_forward.205} parent=0 // pred_check_branch
    %14 = sbr.rel (0) target = $region13
  $region12: #{_forward.205} parent=0 // pred_region
    _
  $region13: #{_forward.205} parent=0 // pred_fallthru
    _
  // Predicated region
  $region14: #{_forward.205} parent=0 // pred_check
    _
  $region15: #{_forward.205} parent=0 // pred_check_branch
    %16 = sbr.rel (0) target = $region17
  $region16: #{_forward.205} parent=0 // pred_region
    _
  $region17: #{_forward.205} parent=0 // pred_fallthru
    _
  %p18 = scmp.eq.s32.totalorder 0, 0
  // Predicated region
  $region18: #{_forward.205} parent=0 // pred_check
    %p19 = pneg %p18
  $region19: #{_forward.205} parent=0 // pred_check_branch
    %21 = sbr.rel (%p19) target = $region21
  $region20: #{_forward.205} parent=0 // pred_region
    %22 = vst [vmem:[#allocation2] sm:$0xff] 0.0
  $region21: #{_forward.205} parent=0 // pred_fallthru
    _
  %v23 = vld [vmem:[#allocation2] sm:$0xff]
  %v24 = vld [vmem:[%s0] sm:$0xff]
  %v25 = vld [vmem:[%s1] sm:$0xf]
  %v26 = vld [vmem:[%s1 + $0x4] sm:$0xf]
  %v27 = vld [vmem:[%s1 + $0x8] sm:$0xf]
  %v28 = vld [vmem:[%s1 + $0xc] sm:$0xf]
  %v29 = vld [vmem:[%s1 + $0x10] sm:$0xf]
  %v30 = vld [vmem:[%s1 + $0x14] sm:$0xf]
  %v31 = vld [vmem:[%s1 + $0x18] sm:$0xf]
  %v32 = vld [vmem:[%s1 + $0x1c] sm:$0xf]
  %v33 = vld [vmem:[%s1 + $0x20] sm:$0xf]
  %v34 = vld [vmem:[%s1 + $0x24] sm:$0xf]
  %v35 = vld [vmem:[%s1 + $0x28] sm:$0xf]
  %v36 = vld [vmem:[%s1 + $0x2c] sm:$0xf]
  %v37 = vld [vmem:[%s1 + $0x30] sm:$0xf]
  %v38 = vld [vmem:[%s1 + $0x34] sm:$0xf]
  %v39 = vld [vmem:[%s1 + $0x38] sm:$0xf]
  %v40 = vld [vmem:[%s1 + $0x3c] sm:$0xf]
  %v41 = vld [vmem:[%s1 + $0x40] sm:$0xf]
  %v42 = vld [vmem:[%s1 + $0x44] sm:$0xf]
  %v43 = vld [vmem:[%s1 + $0x48] sm:$0xf]
  %v44 = vld [vmem:[%s1 + $0x4c] sm:$0xf]
  %v45 = vld [vmem:[%s1 + $0x50] sm:$0xf]
  %v46 = vld [vmem:[%s1 + $0x54] sm:$0xf]
  %v47 = vld [vmem:[%s1 + $0x58] sm:$0xf]
  %v48 = vld [vmem:[%s1 + $0x5c] sm:$0xf]
  %v49 = vld [vmem:[%s1 + $0x60] sm:$0xf]
  %v50 = vld [vmem:[%s1 + $0x64] sm:$0xf]
  %v51 = vld [vmem:[%s1 + $0x68] sm:$0xf]
  %v52 = vld [vmem:[%s1 + $0x6c] sm:$0xf]
  %v53 = vld [vmem:[%s1 + $0x70] sm:$0xf]
  %v54 = vld [vmem:[%s1 + $0x74] sm:$0xf]
  %v55 = vld [vmem:[%s1 + $0x78] sm:$0xf]
  %v56 = vld [vmem:[%s1 + $0x7c] sm:$0xf]
  %v58 = vunpack.c.l.b16 %v24
  %v59 = vunpack.c.h.b16 %v24
  %v60 = vpack.c.b16 %v58, %v58
  %v61 = vpack.c.b16 %v59, %v59
  %v96 = vunpack.c.l.b16 %v25
  %v97 = vunpack.c.l.b16 %v26
  %v98 = vunpack.c.l.b16 %v27
  %v99 = vunpack.c.l.b16 %v28
  %v100 = vunpack.c.l.b16 %v29
  %v101 = vunpack.c.l.b16 %v30
  %v102 = vunpack.c.l.b16 %v31
  %v103 = vunpack.c.l.b16 %v32
  %v104 = vunpack.c.l.b16 %v33
  %v105 = vunpack.c.l.b16 %v34
  %v106 = vunpack.c.l.b16 %v35
  %v107 = vunpack.c.l.b16 %v36
  %v108 = vunpack.c.l.b16 %v37
  %v109 = vunpack.c.l.b16 %v38
  %v110 = vunpack.c.l.b16 %v39
  %v111 = vunpack.c.l.b16 %v40
  %v112 = vunpack.c.l.b16 %v41
  %v113 = vunpack.c.l.b16 %v42
  %v114 = vunpack.c.l.b16 %v43
  %v115 = vunpack.c.l.b16 %v44
  %v116 = vunpack.c.l.b16 %v45
  %v117 = vunpack.c.l.b16 %v46
  %v118 = vunpack.c.l.b16 %v47
  %v119 = vunpack.c.l.b16 %v48
  %v120 = vunpack.c.l.b16 %v49
  %v121 = vunpack.c.l.b16 %v50
  %v122 = vunpack.c.l.b16 %v51
  %v123 = vunpack.c.l.b16 %v52
  %v124 = vunpack.c.l.b16 %v53
  %v125 = vunpack.c.l.b16 %v54
  %v126 = vunpack.c.l.b16 %v55
  %v127 = vunpack.c.l.b16 %v56
  %v128 = vpack.c.b16 %v97, %v96
  %v129 = vpack.c.b16 %v99, %v98
  %v130 = vpack.c.b16 %v101, %v100
  %v131 = vpack.c.b16 %v103, %v102
  %v132 = vpack.c.b16 %v105, %v104
  %v133 = vpack.c.b16 %v107, %v106
  %v134 = vpack.c.b16 %v109, %v108
  %v135 = vpack.c.b16 %v111, %v110
  %v136 = vpack.c.b16 %v113, %v112
  %v137 = vpack.c.b16 %v115, %v114
  %v138 = vpack.c.b16 %v117, %v116
  %v139 = vpack.c.b16 %v119, %v118
  %v140 = vpack.c.b16 %v121, %v120
  %v141 = vpack.c.b16 %v123, %v122
  %v142 = vpack.c.b16 %v125, %v124
  %v143 = vpack.c.b16 %v127, %v126
  %160 = vmatprep.subr.bf16.mxu0 0
  %161 = vmatpush1.bf16.msra.mxu0 %v135
  %162 = vmatprep.subr.bf16.mxu0 0
  %163 = vmatpush1.bf16.msra.mxu0 %v134
  %164 = vmatprep.subr.bf16.mxu0 0
  %165 = vmatpush1.bf16.msra.mxu0 %v133
  %166 = vmatprep.subr.bf16.mxu0 0
  %167 = vmatpush1.bf16.msra.mxu0 %v132
  %168 = vmatprep.subr.bf16.mxu0 0
  %169 = vmatpush1.bf16.msra.mxu0 %v131
  %170 = vmatprep.subr.bf16.mxu0 0
  %171 = vmatpush1.bf16.msra.mxu0 %v130
  %172 = vmatprep.subr.bf16.mxu0 0
  %173 = vmatpush1.bf16.msra.mxu0 %v129
  %174 = vmatprep.subr.bf16.mxu0 0
  %175 = vmatpush1.bf16.msra.mxu0 %v128
  %176 = vmatprep.subr.bf16.mxu0 0
  %177 = vmatpush2.bf16.msra.mxu0 %v143
  %178 = vmatprep.subr.bf16.mxu0 0
  %179 = vmatpush2.bf16.msra.mxu0 %v142
  %180 = vmatprep.subr.bf16.mxu0 0
  %181 = vmatpush2.bf16.msra.mxu0 %v141
  %182 = vmatprep.subr.bf16.mxu0 0
  %183 = vmatpush2.bf16.msra.mxu0 %v140
  %184 = vmatprep.subr.bf16.mxu0 0
  %185 = vmatpush2.bf16.msra.mxu0 %v139
  %186 = vmatprep.subr.bf16.mxu0 0
  %187 = vmatpush2.bf16.msra.mxu0 %v138
  %188 = vmatprep.subr.bf16.mxu0 0
  %189 = vmatpush2.bf16.msra.mxu0 %v137
  %190 = vmatprep.subr.bf16.mxu0 0
  %191 = vmatpush2.bf16.msra.mxu0 %v136
  %192 = vmatprep.mubr.bf16.mxu0 %v61
  %193 = vmatmul.mubr.bf16.gmra.mxu0 %v60
  %v194 = vpop.f32.mrf.mxu0
  %v195 = vadd.f32 0.0, %v194
  %v196 = vpop.f32.mrf.mxu0
  %v197 = vpop.f32.mrf.mxu0
  %v198 = vpop.f32.mrf.mxu0
  %199 = vdwg.mxu0
  %v200 = vadd.f32 %v23, %v195
  %201 = vst [vmem:[#allocation2] sm:$0xff] %v200
  // Predicated region
  $region22: #{_forward.205} parent=0 // pred_check
    %p202 = pneg %p18
  $region23: #{_forward.205} parent=0 // pred_check_branch
    %204 = sbr.rel (%p202) target = $region25
  $region24: #{_forward.205} parent=0 // pred_region
    %v205 = vld [vmem:[#allocation2] sm:$0xff]
    %v206 = vld [vmem:[%s2] sm:$0x1]
    %v208 = vlaneseq
    %v209 = vshrl.u32 %v208, 7
    %v210 = vsub.s32 0, %v209
    %v211 = vrot.slane %v206, %v210
    %v213 = vmul.f32 %v205, %v211
    %v214 = vld [vmem:[%s3] sm:$0x1]
    %v216 = vlaneseq
    %v217 = vshrl.u32 %v216, 7
    %v218 = vsub.s32 0, %v217
    %v219 = vrot.slane %v214, %v218
    %v221 = vadd.f32 %v213, %v219
    %v222 = vmax.f32 %v221, 0.0
    %v223 = vpack.c.bf16 %v222, %v222
    %224 = vst [vmem:[%s4] sm:$0xf] %v223
  $region25: #{_forward.205} parent=0 // pred_fallthru
    _
  // Predicated region
  $region26: #{_forward.205} parent=0 // pred_check
    _
  $region27: #{_forward.205} parent=0 // pred_check_branch
    %226 = sbr.rel (0) target = $region29
  $region28: #{_forward.205} parent=0 // pred_region
    _
  $region29: #{_forward.205} parent=0 // pred_fallthru
    _
  // Predicated region
  $region30: #{_forward.205} parent=0 // pred_check
    _
  $region31: #{_forward.205} parent=0 // pred_check_branch
    %228 = sbr.rel (0) target = $region33
  $region32: #{_forward.205} parent=0 // pred_region
    _
  $region33: #{_forward.205} parent=0 // pred_fallthru
    _

// kernel: _forward.211
$region0: #{_forward.211}
  #allocation0 [shape = 'u32[]', space=smem, size = 0x4, offset = 0x4, fixed_abs, tag = 'smem constant byte address 0x4 - core index']
  #allocation1 [shape = 'u32[144,128]{1,0:T(1,128)}', space=vmem, size = 0x12000, scoped, tag = 'internal scratch']
  %s0 = inlined_call_operand.vmem [shape: bf16[2,1,256], index: 0, kind: input, shape index: {}]
  %s1 = inlined_call_operand.vmem [shape: f32[2,1,256], index: 1, kind: output, shape index: {}]
  %s2 = sld [smem:[#allocation0]]
  $region37: #{_forward.211} parent=0
    _
  %s4 = ssub.s32 1, %s2
  %s5 = scalar_select 0, %s4, %s2
  loop: start=0, step=1, limit=4
  $region2: #{_forward.211} parent=0 // loop_pre_header
    _
  $region3: #{_forward.211} parent=0 // loop_header
    %s7 = sphi 0, %s11
    %p8 = scmp.ge.s32.totalorder %s7, 4
    %s17 = sphi 0, %s19
    %s20 = sphi 0, %s17
    %s21 = sphi 0, %s20
    %s37 = sphi 0, %s21
    %s43 = sphi 0, %s45
    %s46 = sphi 0, %s43
    %s47 = sphi 0, %s46
    %s63 = sphi 0, %s47
  $region4: #{_forward.211} parent=0 // loop_header_branch
    %10 = sbr.rel (%p8) target = $region8
  $region5: #{_forward.211} parent=0 // loop_body
    %s12 = ssub.s32 %s7, 1
    %s13 = ssub.s32 %s7, 2
    %s14 = sadd.s32 %s7, 1
    %s15 = ssub.s32 %s7, %s14
    %p16 = scmp.eq.s32.totalorder %s15, 0
    %s18 = sadd.s32 %s17, 1
    %s19 = scalar_select %p16, %s17, %s18
    %p22 = pneg %p16
    %p23 = scmp.eq.s32.totalorder %s7, 1
    %p24 = por %p22, %p23
    %p25 = scmp.ne.s32.totalorder %s17, %s20
    %p26 = scmp.eq.s32.totalorder %s7, 0
    %p27 = por %p25, %p26
    %p28 = scmp.ne.s32.totalorder %s17, %s20
    %p29 = scmp.eq.s32.totalorder %s12, 1
    %p30 = por %p28, %p29
    %p31 = scmp.ne.s32.totalorder %s20, %s21
    %p32 = scmp.eq.s32.totalorder %s12, 0
    %p33 = por %p31, %p32
    %p34 = scmp.ne.s32.totalorder %s20, %s21
    %p35 = scmp.eq.s32.totalorder %s13, 1
    %p36 = por %p34, %p35
    %p38 = scmp.ne.s32.totalorder %s21, %s37
    %p39 = scmp.eq.s32.totalorder %s13, 0
    %p40 = por %p38, %p39
    %s41 = ssub.s32 %s7, %s14
    %p42 = scmp.eq.s32.totalorder %s41, 0
    %s44 = sadd.s32 %s43, 1
    %s45 = scalar_select %p42, %s43, %s44
    %p48 = pneg %p42
    %p49 = scmp.eq.s32.totalorder %s7, 1
    %p50 = por %p48, %p49
    %p51 = scmp.ne.s32.totalorder %s43, %s46
    %p52 = scmp.eq.s32.totalorder %s7, 0
    %p53 = por %p51, %p52
    %p54 = scmp.ne.s32.totalorder %s43, %s46
    %p55 = scmp.eq.s32.totalorder %s12, 1
    %p56 = por %p54, %p55
    %p57 = scmp.ne.s32.totalorder %s46, %s47
    %p58 = scmp.eq.s32.totalorder %s12, 0
    %p59 = por %p57, %p58
    %p60 = scmp.ne.s32.totalorder %s46, %s47
    %p61 = scmp.eq.s32.totalorder %s13, 1
    %p62 = por %p60, %p61
    %p64 = scmp.ne.s32.totalorder %s47, %s63
    %p65 = scmp.eq.s32.totalorder %s13, 0
    %p66 = por %p64, %p65
    %p67 = scmp.le.s32.totalorder 1, %s7
    %p68 = scmp.lt.s32.totalorder %s7, 3
    %p69 = pnand %p67, %p68
    %p70 = pneg %p69
    // Predicated region
    $region9: #{_forward.211} parent=5 // pred_check
      _
    $region10: #{_forward.211} parent=5 // pred_check_branch
      %72 = sbr.rel (%p69) target = $region12
    $region11: #{_forward.211} parent=5 // pred_region
      %s73 = ssub.s32 %s7, 1
    $region12: #{_forward.211} parent=5 // pred_fallthru
      _
    %p74 = scmp.lt.s32.totalorder %s7, 2
    // Predicated region
    $region13: #{_forward.211} parent=5 // pred_check
      %p75 = pneg %p74
    $region14: #{_forward.211} parent=5 // pred_check_branch
      %77 = sbr.rel (%p75) target = $region16
    $region15: #{_forward.211} parent=5 // pred_region
      // Predicated region
      $region17: #{_forward.211} parent=15 // pred_check
        %p78 = pneg %p27
      $region18: #{_forward.211} parent=15 // pred_check_branch
        %80 = sbr.rel (%p78) target = $region20
      $region19: #{_forward.211} parent=15 // pred_region
        %p81 = scmp.lt.s32.totalorder %s7, 1
        %s82 = scalar_select %p81, %s7, 1
        %s83 = smul.addr %s82, 2
        %s84 = scalar_lea.vmem %s0, %s83
      $region20: #{_forward.211} parent=15 // pred_fallthru
        _
    $region16: #{_forward.211} parent=5 // pred_fallthru
      _
    %p85 = scmp.le.s32.totalorder 1, %s7
    %p86 = scmp.lt.s32.totalorder %s7, 3
    %p87 = pnand %p85, %p86
    %p88 = pneg %p87
    // Predicated region
    $region21: #{_forward.211} parent=5 // pred_check
      _
    $region22: #{_forward.211} parent=5 // pred_check_branch
      %90 = sbr.rel (%p87) target = $region24
    $region23: #{_forward.211} parent=5 // pred_region
      %s91 = ssub.s32 %s7, 1
      %p92 = scmp.lt.s32.totalorder %s12, 1
      %s93 = scalar_select %p92, %s12, 1
      %s94 = smul.addr %s93, 2
      %s95 = scalar_lea.vmem %s0, %s94
      %p96 = pneg %p33
      %p97 = pneg %p30
      %p98 = pneg %p59
      %p99 = pneg %p56
      %p100 = scmp.lt.s32.totalorder %s12, 1
      %s101 = scalar_select %p100, %s12, 1
      %s102 = smul.addr %s101, 2
      %s103 = scalar_lea.vmem %s1, %s102
      %p104 = scmp.lt.s32.totalorder %s12, 1
      %s105 = scalar_select %p104, %s12, 1
      %s106 = smul.addr %s105, 2
      %s107 = scalar_lea.vmem %s0, %s106
      %p108 = scmp.lt.s32.totalorder %s12, 1
      %s109 = scalar_select %p108, %s12, 1
      %s110 = smul.addr %s109, 2
      %s111 = scalar_lea.vmem %s1, %s110
      %v112 = vld [vmem:[%s107] sm:$0x3]
      %v113 = vunpack.c.l.bf16 %v112
      %v114 = vadd.f32 %v113, 0.0
      %v117 = vunpack.c.l.s4 1966171168
      %v118 = vunpack.c.0.s8 %v117
      %v119 = vlaneseq
      %v120 = vshrl.u32 %v119, 7
      %v121 = vsub.s32 %v118, %v120
      %v122 = vrot.slane %v114, %v121
      %v124 = vlaneseq
      %vm125 = vcmp.ge.s32.totalorder %v124, 0
      %vm126 = vcmp.lt.s32.totalorder %v124, 256
      %vm127 = vmand %vm125, %vm126
      %128 = vst.msk [vmem:[%s111] sm:$0x3] %vm127, %v122
      %p129 = scmp.lt.s32.totalorder %s12, 1
      %s130 = scalar_select %p129, %s12, 1
      %s131 = smul.addr %s130, 2
      %s132 = scalar_lea.vmem %s1, %s131
      // Predicated region
      $region25: #{_forward.211} parent=23 // pred_check
        %p133 = pneg %p56
      $region26: #{_forward.211} parent=23 // pred_check_branch
        %135 = sbr.rel (%p133) target = $region28
      $region27: #{_forward.211} parent=23 // pred_region
        _
      $region28: #{_forward.211} parent=23 // pred_fallthru
        _
    $region24: #{_forward.211} parent=5 // pred_fallthru
      _
    %p136 = scmp.le.s32.totalorder 2, %s7
    // Predicated region
    $region29: #{_forward.211} parent=5 // pred_check
      %p137 = pneg %p136
    $region30: #{_forward.211} parent=5 // pred_check_branch
      %139 = sbr.rel (%p137) target = $region32
    $region31: #{_forward.211} parent=5 // pred_region
      %s140 = ssub.s32 %s7, 2
      // Predicated region
      $region33: #{_forward.211} parent=31 // pred_check
        %p141 = pneg %p62
      $region34: #{_forward.211} parent=31 // pred_check_branch
        %143 = sbr.rel (%p141) target = $region36
      $region35: #{_forward.211} parent=31 // pred_region
        %p144 = scmp.lt.s32.totalorder %s13, 1
        %s145 = scalar_select %p144, %s13, 1
        %s146 = smul.addr %s145, 2
        %s147 = scalar_lea.vmem %s1, %s146
      $region36: #{_forward.211} parent=31 // pred_fallthru
        _
    $region32: #{_forward.211} parent=5 // pred_fallthru
      _
  $region6: #{_forward.211} parent=0 // loop_footer
    %s11 = sadd.s32 1, %s7
  $region7: #{_forward.211} parent=0 // loop_footer_branch
    %6 = sbr.rel target = $region3
  $region8: #{_forward.211} parent=0 // loop_exit
    _

</llo_original>
